<compile_context>
chip_gen: v7x
topology: tpu7x:2x2x1
jax: 0.10.0
libtpu: 0.0.40
codegen_flags: <defaults>
</compile_context>

<pallas_src>
import math

import jax
import jax.numpy as jnp
from jax.experimental import pallas as pl
from jax.experimental.pallas import tpu as pltpu

N = 572      # number of graph nodes (fixed by fc1 in_features=572)
NHID = 8     # GCN hidden size
H1 = 256     # fc1 out
H2 = 8       # fc2 out
NOUT = 2     # fc3 out
BN_EPS = 1e-5


# --------------------------------------------------------------------------- #
# Stage 1: per-sample GCN + log_softmax, `bt` samples per grid step.
# --------------------------------------------------------------------------- #
def gcn_kernel(adj_ref, expr_ref, gw1_ref, gb1_ref, gw2_ref, gb2_ref, g_ref):
    bt = adj_ref.shape[0]        # samples per grid step (small, compile-time)
    gw1 = gw1_ref[...]           # (1, NHID) f32
    gb1 = gb1_ref[...]           # (1, NHID) f32
    gw2 = gw2_ref[...]           # (NHID, 1) f32
    gb2 = gb2_ref[...]           # (1, 1)    f32

    for j in range(bt):
        a = adj_ref[j]           # (N, N) bf16
        e = expr_ref[j]          # (N, 1) bf16

        # GCN layer 1 with the rank-1 identity:
        #   adj @ (expr @ gw1) == (adj @ expr) * gw1      (gw1 is (1, NHID))
        v = jnp.dot(a, e, preferred_element_type=jnp.float32)            # (N, 1)
        h1 = jnp.maximum(v * gw1 + gb1, 0.0)                             # (N, NHID)
        # GCN dropout (p=0.5) -> identity in inference mode.

        # GCN layer 2.
        s2 = jnp.dot(h1, gw2, preferred_element_type=jnp.float32)        # (N, 1)
        h2 = jnp.dot(a, s2.astype(jnp.bfloat16),
                     preferred_element_type=jnp.float32) + gb2           # (N, 1)

        # log_softmax(dim=1): the class axis has size 1, so this is exactly 0
        # for finite inputs (the whole GCN path is numerically dead in the
        # original model).  Computed faithfully anyway.
        m = jnp.max(h2, axis=1, keepdims=True)
        g = h2 - (m + jnp.log(jnp.sum(jnp.exp(h2 - m), axis=1, keepdims=True)))

        g_ref[j] = g             # (N, 1)


# --------------------------------------------------------------------------- #
# Stage 2: batched MLP head on the concatenated GCN outputs (B, N).
# --------------------------------------------------------------------------- #
def head_kernel(x_ref, w1_ref, b1_ref, s1_ref, t1_ref,
                w2_ref, b2_ref, s2_ref, t2_ref, w3_ref, b3_ref, out_ref):
    x = x_ref[...]                                                        # (B, N)
    z1 = jnp.dot(x, w1_ref[...], preferred_element_type=jnp.float32) + b1_ref[...]
    a1 = jnp.maximum(z1 * s1_ref[...] + t1_ref[...], 0.0)                 # bn1(eval)+relu
    # drop1 -> identity (inference)
    z2 = jnp.dot(a1, w2_ref[...], preferred_element_type=jnp.float32) + b2_ref[...]
    a2 = jnp.maximum(z2 * s2_ref[...] + t2_ref[...], 0.0)                 # bn2(eval)+relu
    # drop2 -> identity (inference)
    out_ref[...] = jnp.dot(a2, w3_ref[...],
                           preferred_element_type=jnp.float32) + b3_ref[...]  # (B, 2)


# --------------------------------------------------------------------------- #
# Wrapper
# --------------------------------------------------------------------------- #
def expr_gcn_ppi_forward(adj, expr, params, block_b=2):
    """adj: (B, N, N) f32, expr: (B, N, 1) f32 -> (B, 2) f32."""
    gw1, gb1, gw2, gb2, w1, b1, s1, t1, w2, b2, s2, t2, w3, b3 = params
    B = adj.shape[0]
    bt = block_b if (block_b > 0 and B % block_b == 0) else 1

    # Stream the dominant adj/expr traffic as bf16 (exact for the final output
    # since the size-1 log_softmax makes g identically zero anyway).
    adj_bf = adj.astype(jnp.bfloat16)
    expr_bf = expr.astype(jnp.bfloat16)

    def full_spec(shape):
        nd = len(shape)
        return pl.BlockSpec(shape, lambda i, _nd=nd: (0,) * _nd)

    # ---- stage 1: GCN per sample, bt samples per grid step ----
    g = pl.pallas_call(
        gcn_kernel,
        out_shape=jax.ShapeDtypeStruct((B, N, 1), jnp.float32),
        grid=(B // bt,),
        in_specs=[
            pl.BlockSpec((bt, N, N), lambda i: (i, 0, 0)),   # adj tile (bf16)
            pl.BlockSpec((bt, N, 1), lambda i: (i, 0, 0)),   # expr tile (bf16)
            full_spec(gw1.shape), full_spec(gb1.shape),
            full_spec(gw2.shape), full_spec(gb2.shape),
        ],
        out_specs=pl.BlockSpec((bt, N, 1), lambda i: (i, 0, 0)),
        compiler_params=pltpu.CompilerParams(
            dimension_semantics=("parallel",),
        ),
    )(adj_bf, expr_bf, gw1, gb1, gw2, gb2)

    # concat_gcn: (B, N)
    x = g.reshape(B, N)

    # ---- stage 2: batched MLP head ----
    out = pl.pallas_call(
        head_kernel,
        out_shape=jax.ShapeDtypeStruct((B, NOUT), jnp.float32),
        grid=(1,),
        in_specs=[full_spec((B, N)),
                  full_spec(w1.shape), full_spec(b1.shape),
                  full_spec(s1.shape), full_spec(t1.shape),
                  full_spec(w2.shape), full_spec(b2.shape),
                  full_spec(s2.shape), full_spec(t2.shape),
                  full_spec(w3.shape), full_spec(b3.shape)],
        out_specs=full_spec((B, NOUT)),
    )(x, w1, b1, s1, t1, w2, b2, s2, t2, w3, b3)
    return out


# --------------------------------------------------------------------------- #
# Parameters & pure-JAX reference
# --------------------------------------------------------------------------- #
def init_params(key):
    ks = jax.random.split(key, 10)

    def u(k, shape, bound):
        return jax.random.uniform(k, shape, jnp.float32, -bound, bound)

    # GraphConvolution: uniform(-1/sqrt(out_features), 1/sqrt(out_features))
    gw1 = u(ks[0], (1, NHID), 1.0 / math.sqrt(NHID))
    gb1 = u(ks[1], (1, NHID), 1.0 / math.sqrt(NHID))
    gw2 = u(ks[2], (NHID, 1), 1.0)
    gb2 = u(ks[3], (1, 1), 1.0)
    # nn.Linear-style weights, stored (in, out)
    w1 = u(ks[4], (N, H1), 1.0 / math.sqrt(N))
    b1 = u(ks[5], (1, H1), 1.0 / math.sqrt(N))
    w2 = u(ks[6], (H1, H2), 1.0 / math.sqrt(H1))
    b2 = u(ks[7], (1, H2), 1.0 / math.sqrt(H1))
    w3 = u(ks[8], (H2, NOUT), 1.0 / math.sqrt(H2))
    b3 = u(ks[9], (1, NOUT), 1.0 / math.sqrt(H2))
    # BatchNorm1d (eval): y = x * scale + shift with PyTorch default init
    # gamma=1, beta=0, running_mean=0, running_var=1.
    s1 = jnp.full((1, H1), 1.0 / math.sqrt(1.0 + BN_EPS), jnp.float32)
    t1 = jnp.zeros((1, H1), jnp.float32)
    s2 = jnp.full((1, H2), 1.0 / math.sqrt(1.0 + BN_EPS), jnp.float32)
    t2 = jnp.zeros((1, H2), jnp.float32)
    return [gw1, gb1, gw2, gb2, w1, b1, s1, t1, w2, b2, s2, t2, w3, b3]


def reference_forward(adj, expr, params):
    """Pure-JAX reference mirroring the PyTorch module (inference mode)."""
    gw1, gb1, gw2, gb2, w1, b1, s1, t1, w2, b2, s2, t2, w3, b3 = params
    outs = []
    for i in range(adj.shape[0]):
        sup1 = expr[i] @ gw1
        h1 = jax.nn.relu(adj[i] @ sup1 + gb1[0])
        h2 = adj[i] @ (h1 @ gw2) + gb2[0]
        g = jax.nn.log_softmax(h2, axis=1)
        outs.append(g.reshape(1, N))
    x = jnp.concatenate(outs, axis=0)                       # (B, N)
    a1 = jax.nn.relu((x @ w1 + b1) * s1 + t1)
    a2 = jax.nn.relu((a1 @ w2 + b2) * s2 + t2)
    return a2 @ w3 + b3


if __name__ == "__main__":
    B = 4               # batch; block_b=2 -> grid of 2 parallel steps
    key = jax.random.PRNGKey(0)
    k_adj, k_expr, k_params = jax.random.split(key, 3)

    adj = jax.random.uniform(k_adj, (B, N, N), jnp.float32)
    expr = jax.random.normal(k_expr, (B, N, 1), jnp.float32)
    params = init_params(k_params)

    out = expr_gcn_ppi_forward(adj, expr, params, block_b=2)
    out = jax.block_until_ready(out)

    ref = jax.block_until_ready(reference_forward(adj, expr, params))
    assert out.shape == (B, NOUT)
    assert jnp.allclose(out, ref, atol=1e-4, rtol=1e-4), (out, ref)

    print("KERNEL_OK")
</pallas_src>

<mosaic_0001>
module attributes {stable_mosaic.version = 11 : i64} {
  func.func @gcn_kernel(%arg0: i32, %arg1: memref<2x572x572xbf16, #tpu.memory_space<vmem>>, %arg2: memref<2x572x1xbf16, #tpu.memory_space<vmem>>, %arg3: memref<1x8xf32, #tpu.memory_space<vmem>>, %arg4: memref<1x8xf32, #tpu.memory_space<vmem>>, %arg5: memref<8x1xf32, #tpu.memory_space<vmem>>, %arg6: memref<1x1xf32, #tpu.memory_space<vmem>>, %arg7: memref<2x572x1xf32, #tpu.memory_space<vmem>>) attributes {dimension_semantics = [#tpu.dimension_semantics<parallel>], iteration_bounds = array<i64: 2>, scalar_prefetch = 0 : i64, scratch_operands = 0 : i64, tpu.core_type = #tpu.core_type<tc>, window_params = [{transform_indices = @transform_0, window_bounds = array<i64: 2, 572, 572>}, {transform_indices = @transform_1, window_bounds = array<i64: 2, 572, 1>}, {pipeline_mode = #tpu.pipeline_mode<synchronous>, transform_indices = @transform_2, window_bounds = array<i64: 1, 8>}, {pipeline_mode = #tpu.pipeline_mode<synchronous>, transform_indices = @transform_3, window_bounds = array<i64: 1, 8>}, {pipeline_mode = #tpu.pipeline_mode<synchronous>, transform_indices = @transform_4, window_bounds = array<i64: 8, 1>}, {pipeline_mode = #tpu.pipeline_mode<synchronous>, transform_indices = @transform_5, window_bounds = array<i64: 1, 1>}, {transform_indices = @transform_6, window_bounds = array<i64: 2, 572, 1>}]} {
    %c0 = arith.constant 0 : index
    %c0_0 = arith.constant 0 : index
    %0 = vector.load %arg3[%c0, %c0_0] : memref<1x8xf32, #tpu.memory_space<vmem>>, vector<1x8xf32>
    %c0_1 = arith.constant 0 : index
    %c0_2 = arith.constant 0 : index
    %1 = vector.load %arg4[%c0_1, %c0_2] : memref<1x8xf32, #tpu.memory_space<vmem>>, vector<1x8xf32>
    %c0_3 = arith.constant 0 : index
    %c0_4 = arith.constant 0 : index
    %2 = vector.load %arg5[%c0_3, %c0_4] : memref<8x1xf32, #tpu.memory_space<vmem>>, vector<8x1xf32>
    %c0_5 = arith.constant 0 : index
    %c0_6 = arith.constant 0 : index
    %3 = vector.load %arg6[%c0_5, %c0_6] : memref<1x1xf32, #tpu.memory_space<vmem>>, vector<1x1xf32>
    %c0_7 = arith.constant 0 : index
    %c0_8 = arith.constant 0 : index
    %c0_9 = arith.constant 0 : index
    %4 = vector.load %arg1[%c0_7, %c0_8, %c0_9] : memref<2x572x572xbf16, #tpu.memory_space<vmem>>, vector<1x572x572xbf16>
    %5 = vector.shape_cast %4 : vector<1x572x572xbf16> to vector<572x572xbf16>
    %c0_10 = arith.constant 0 : index
    %c0_11 = arith.constant 0 : index
    %c0_12 = arith.constant 0 : index
    %6 = vector.load %arg2[%c0_10, %c0_11, %c0_12] : memref<2x572x1xbf16, #tpu.memory_space<vmem>>, vector<1x572x1xbf16>
    %7 = vector.shape_cast %6 : vector<1x572x1xbf16> to vector<572x1xbf16>
    %cst = arith.constant dense<0.000000e+00> : vector<572x1xf32>
    %8 = tpu.matmul %5, %7, %cst {dimension_numbers = #tpu.dot_dimension_numbers<[1], [0], [0], [1], [0, 0, 1, 1], [], []>} : vector<572x572xbf16>, vector<572x1xbf16>, vector<572x1xf32> -> vector<572x1xf32>
    %9 = vector.broadcast %8 : vector<572x1xf32> to vector<572x8xf32>
    %10 = vector.broadcast %0 : vector<1x8xf32> to vector<572x8xf32>
    %11 = arith.mulf %9, %10 : vector<572x8xf32>
    %12 = vector.broadcast %1 : vector<1x8xf32> to vector<572x8xf32>
    %13 = arith.addf %11, %12 : vector<572x8xf32>
    %cst_13 = arith.constant 0.000000e+00 : f32
    %14 = vector.broadcast %cst_13 : f32 to vector<572x8xf32>
    %15 = arith.maximumf %13, %14 : vector<572x8xf32>
    %cst_14 = arith.constant dense<0.000000e+00> : vector<572x1xf32>
    %16 = tpu.matmul %15, %2, %cst_14 {dimension_numbers = #tpu.dot_dimension_numbers<[1], [0], [0], [1], [0, 0, 1, 1], [], []>} : vector<572x8xf32>, vector<8x1xf32>, vector<572x1xf32> -> vector<572x1xf32>
    %17 = arith.truncf %16 : vector<572x1xf32> to vector<572x1xbf16>
    %cst_15 = arith.constant dense<0.000000e+00> : vector<572x1xf32>
    %18 = tpu.matmul %5, %17, %cst_15 {dimension_numbers = #tpu.dot_dimension_numbers<[1], [0], [0], [1], [0, 0, 1, 1], [], []>} : vector<572x572xbf16>, vector<572x1xbf16>, vector<572x1xf32> -> vector<572x1xf32>
    %19 = vector.broadcast %3 : vector<1x1xf32> to vector<572x1xf32>
    %20 = arith.addf %18, %19 : vector<572x1xf32>
    %cst_16 = arith.constant dense<0xFF800000> : vector<572xf32>
    %21 = vector.multi_reduction <maximumf>, %20, %cst_16 [1] : vector<572x1xf32> to vector<572xf32>
    %22 = vector.shape_cast %21 : vector<572xf32> to vector<572x1xf32>
    %23 = arith.subf %20, %22 : vector<572x1xf32>
    %24 = math.exp %23 : vector<572x1xf32>
    %cst_17 = arith.constant dense<0.000000e+00> : vector<572xf32>
    %25 = vector.multi_reduction <add>, %24, %cst_17 [1] : vector<572x1xf32> to vector<572xf32>
    %26 = vector.shape_cast %25 : vector<572xf32> to vector<572x1xf32>
    %27 = math.log %26 : vector<572x1xf32>
    %28 = arith.addf %22, %27 : vector<572x1xf32>
    %29 = arith.subf %20, %28 : vector<572x1xf32>
    %c0_18 = arith.constant 0 : index
    %c0_19 = arith.constant 0 : index
    %c0_20 = arith.constant 0 : index
    %30 = vector.load %arg7[%c0_18, %c0_19, %c0_20] : memref<2x572x1xf32, #tpu.memory_space<vmem>>, vector<1x572x1xf32>
    %31 = vector.shape_cast %30 : vector<1x572x1xf32> to vector<572x1xf32>
    %32 = vector.shape_cast %29 : vector<572x1xf32> to vector<1x572x1xf32>
    tpu.vector_store %arg7[%c0_18, %c0_19, %c0_20], %32 {strides = array<i32>} : memref<2x572x1xf32, #tpu.memory_space<vmem>>, vector<1x572x1xf32>,
    %c1 = arith.constant 1 : index
    %c0_21 = arith.constant 0 : index
    %c0_22 = arith.constant 0 : index
    %33 = vector.load %arg1[%c1, %c0_21, %c0_22] : memref<2x572x572xbf16, #tpu.memory_space<vmem>>, vector<1x572x572xbf16>
    %34 = vector.shape_cast %33 : vector<1x572x572xbf16> to vector<572x572xbf16>
    %c1_23 = arith.constant 1 : index
    %c0_24 = arith.constant 0 : index
    %c0_25 = arith.constant 0 : index
    %35 = vector.load %arg2[%c1_23, %c0_24, %c0_25] : memref<2x572x1xbf16, #tpu.memory_space<vmem>>, vector<1x572x1xbf16>
    %36 = vector.shape_cast %35 : vector<1x572x1xbf16> to vector<572x1xbf16>
    %cst_26 = arith.constant dense<0.000000e+00> : vector<572x1xf32>
    %37 = tpu.matmul %34, %36, %cst_26 {dimension_numbers = #tpu.dot_dimension_numbers<[1], [0], [0], [1], [0, 0, 1, 1], [], []>} : vector<572x572xbf16>, vector<572x1xbf16>, vector<572x1xf32> -> vector<572x1xf32>
    %38 = vector.broadcast %37 : vector<572x1xf32> to vector<572x8xf32>
    %39 = vector.broadcast %0 : vector<1x8xf32> to vector<572x8xf32>
    %40 = arith.mulf %38, %39 : vector<572x8xf32>
    %41 = vector.broadcast %1 : vector<1x8xf32> to vector<572x8xf32>
    %42 = arith.addf %40, %41 : vector<572x8xf32>
    %cst_27 = arith.constant 0.000000e+00 : f32
    %43 = vector.broadcast %cst_27 : f32 to vector<572x8xf32>
    %44 = arith.maximumf %42, %43 : vector<572x8xf32>
    %cst_28 = arith.constant dense<0.000000e+00> : vector<572x1xf32>
    %45 = tpu.matmul %44, %2, %cst_28 {dimension_numbers = #tpu.dot_dimension_numbers<[1], [0], [0], [1], [0, 0, 1, 1], [], []>} : vector<572x8xf32>, vector<8x1xf32>, vector<572x1xf32> -> vector<572x1xf32>
    %46 = arith.truncf %45 : vector<572x1xf32> to vector<572x1xbf16>
    %cst_29 = arith.constant dense<0.000000e+00> : vector<572x1xf32>
    %47 = tpu.matmul %34, %46, %cst_29 {dimension_numbers = #tpu.dot_dimension_numbers<[1], [0], [0], [1], [0, 0, 1, 1], [], []>} : vector<572x572xbf16>, vector<572x1xbf16>, vector<572x1xf32> -> vector<572x1xf32>
    %48 = vector.broadcast %3 : vector<1x1xf32> to vector<572x1xf32>
    %49 = arith.addf %47, %48 : vector<572x1xf32>
    %cst_30 = arith.constant dense<0xFF800000> : vector<572xf32>
    %50 = vector.multi_reduction <maximumf>, %49, %cst_30 [1] : vector<572x1xf32> to vector<572xf32>
    %51 = vector.shape_cast %50 : vector<572xf32> to vector<572x1xf32>
    %52 = arith.subf %49, %51 : vector<572x1xf32>
    %53 = math.exp %52 : vector<572x1xf32>
    %cst_31 = arith.constant dense<0.000000e+00> : vector<572xf32>
    %54 = vector.multi_reduction <add>, %53, %cst_31 [1] : vector<572x1xf32> to vector<572xf32>
    %55 = vector.shape_cast %54 : vector<572xf32> to vector<572x1xf32>
    %56 = math.log %55 : vector<572x1xf32>
    %57 = arith.addf %51, %56 : vector<572x1xf32>
    %58 = arith.subf %49, %57 : vector<572x1xf32>
    %c1_32 = arith.constant 1 : index
    %c0_33 = arith.constant 0 : index
    %c0_34 = arith.constant 0 : index
    %59 = vector.load %arg7[%c1_32, %c0_33, %c0_34] : memref<2x572x1xf32, #tpu.memory_space<vmem>>, vector<1x572x1xf32>
    %60 = vector.shape_cast %59 : vector<1x572x1xf32> to vector<572x1xf32>
    %61 = vector.shape_cast %58 : vector<572x1xf32> to vector<1x572x1xf32>
    tpu.vector_store %arg7[%c1_32, %c0_33, %c0_34], %61 {strides = array<i32>} : memref<2x572x1xf32, #tpu.memory_space<vmem>>, vector<1x572x1xf32>,
    return
  }
  func.func @transform_0(%arg0: i32) -> (i32, i32, i32) {
    %c0_i32 = arith.constant 0 : i32
    %c0_i32_0 = arith.constant 0 : i32
    %c0_i32_1 = arith.constant 0 : i32
    return %arg0, %c0_i32, %c0_i32_0 : i32, i32, i32
  }
  func.func @transform_1(%arg0: i32) -> (i32, i32, i32) {
    %c0_i32 = arith.constant 0 : i32
    %c0_i32_0 = arith.constant 0 : i32
    %c0_i32_1 = arith.constant 0 : i32
    return %arg0, %c0_i32, %c0_i32_0 : i32, i32, i32
  }
  func.func @transform_2(%arg0: i32) -> (i32, i32) {
    %c0_i32 = arith.constant 0 : i32
    %c0_i32_0 = arith.constant 0 : i32
    %c0_i32_1 = arith.constant 0 : i32
    return %c0_i32, %c0_i32_0 : i32, i32
  }
  func.func @transform_3(%arg0: i32) -> (i32, i32) {
    %c0_i32 = arith.constant 0 : i32
    %c0_i32_0 = arith.constant 0 : i32
    %c0_i32_1 = arith.constant 0 : i32
    return %c0_i32, %c0_i32_0 : i32, i32
  }
  func.func @transform_4(%arg0: i32) -> (i32, i32) {
    %c0_i32 = arith.constant 0 : i32
    %c0_i32_0 = arith.constant 0 : i32
    %c0_i32_1 = arith.constant 0 : i32
    return %c0_i32, %c0_i32_0 : i32, i32
  }
  func.func @transform_5(%arg0: i32) -> (i32, i32) {
    %c0_i32 = arith.constant 0 : i32
    %c0_i32_0 = arith.constant 0 : i32
    %c0_i32_1 = arith.constant 0 : i32
    return %c0_i32, %c0_i32_0 : i32, i32
  }
  func.func @transform_6(%arg0: i32) -> (i32, i32, i32) {
    %c0_i32 = arith.constant 0 : i32
    %c0_i32_0 = arith.constant 0 : i32
    %c0_i32_1 = arith.constant 0 : i32
    return %arg0, %c0_i32, %c0_i32_0 : i32, i32, i32
  }
}

</mosaic_0001>

<llo_original>
// kernel: tpu_custom_call.1
$region0: #{tpu_custom_call.1}
  #allocation0 [shape = 'u32[]', space=smem, size = 0x4, offset = 0x4, fixed_abs, tag = 'smem constant byte address 0x4 - core index']
  #allocation1 [shape = 'u32[144,128]{1,0:T(1,128)}', space=vmem, size = 0x12000, scoped, tag = 'internal scratch']
  #allocation2 [shape = 'f32[1,1]{1,0:T(1,128)S(1)}', space=vmem, size = 0x200, scoped, tag = 'scoped memory for tpu_custom_call.1']
  %s0 = inlined_call_operand.vmem [shape: bf16[4,572,572], index: 0, kind: input, shape index: {}]
  %s1 = inlined_call_operand.vmem [shape: bf16[4,572,1], index: 1, kind: input, shape index: {}]
  %s2 = inlined_call_operand.vmem [shape: f32[1,8], index: 2, kind: input, shape index: {}]
  %s3 = inlined_call_operand.vmem [shape: f32[1,8], index: 3, kind: input, shape index: {}]
  %s4 = inlined_call_operand.vmem [shape: f32[8,1], index: 4, kind: input, shape index: {}]
  %s5 = inlined_call_operand.<no memory space> [shape: f32[1,1], index: 5, kind: input, shape index: {}]
  %s6 = inlined_call_operand.vmem [shape: f32[4,572,1], index: 6, kind: output, shape index: {}]
  %s7 = sld [smem:[#allocation0]]
  $region57: #{tpu_custom_call.1} parent=0
    _
  %s9 = ssub.s32 1, %s7
  %s10 = scalar_select 0, %s9, %s7
  %v11 = vstv %s5
  %12 = vst [vmem:[#allocation2] sm:$0x1] %v11
  loop: start=0, step=1, limit=4
  $region2: #{tpu_custom_call.1} parent=0 // loop_pre_header
    _
  $region3: #{tpu_custom_call.1} parent=0 // loop_header
    %s14 = sphi 0, %s18
    %p15 = scmp.ge.s32.totalorder %s14, 4
    %s24 = sphi 0, %s26
    %s27 = sphi 0, %s24
    %s28 = sphi 0, %s27
    %s44 = sphi 0, %s28
    %s50 = sphi 0, %s52
    %s53 = sphi 0, %s50
    %s54 = sphi 0, %s53
    %s70 = sphi 0, %s54
    %s74 = sphi 0, %s74
    %s76 = sphi 0, %s74
    %s77 = sphi 0, %s76
    %s91 = sphi 0, %s77
    %s95 = sphi 0, %s95
    %s97 = sphi 0, %s95
    %s98 = sphi 0, %s97
    %s112 = sphi 0, %s98
    %s116 = sphi 0, %s116
    %s118 = sphi 0, %s116
    %s119 = sphi 0, %s118
    %s133 = sphi 0, %s119
    %s137 = sphi 0, %s137
    %s139 = sphi 0, %s137
    %s140 = sphi 0, %s139
    %s154 = sphi 0, %s140
    %s160 = sphi 0, %s162
    %s163 = sphi 0, %s160
    %s164 = sphi 0, %s163
    %s180 = sphi 0, %s164
  $region4: #{tpu_custom_call.1} parent=0 // loop_header_branch
    %17 = sbr.rel (%p15) target = $region8
  $region5: #{tpu_custom_call.1} parent=0 // loop_body
    %s19 = ssub.s32 %s14, 1
    %s20 = ssub.s32 %s14, 2
    %s21 = sadd.s32 %s14, 1
    %s22 = ssub.s32 %s14, %s21
    %p23 = scmp.eq.s32.totalorder %s22, 0
    %s25 = sadd.s32 %s24, 1
    %s26 = scalar_select %p23, %s24, %s25
    %p29 = pneg %p23
    %p30 = scmp.eq.s32.totalorder %s14, 1
    %p31 = por %p29, %p30
    %p32 = scmp.ne.s32.totalorder %s24, %s27
    %p33 = scmp.eq.s32.totalorder %s14, 0
    %p34 = por %p32, %p33
    %p35 = scmp.ne.s32.totalorder %s24, %s27
    %p36 = scmp.eq.s32.totalorder %s19, 1
    %p37 = por %p35, %p36
    %p38 = scmp.ne.s32.totalorder %s27, %s28
    %p39 = scmp.eq.s32.totalorder %s19, 0
    %p40 = por %p38, %p39
    %p41 = scmp.ne.s32.totalorder %s27, %s28
    %p42 = scmp.eq.s32.totalorder %s20, 1
    %p43 = por %p41, %p42
    %p45 = scmp.ne.s32.totalorder %s28, %s44
    %p46 = scmp.eq.s32.totalorder %s20, 0
    %p47 = por %p45, %p46
    %s48 = ssub.s32 %s14, %s21
    %p49 = scmp.eq.s32.totalorder %s48, 0
    %s51 = sadd.s32 %s50, 1
    %s52 = scalar_select %p49, %s50, %s51
    %p55 = pneg %p49
    %p56 = scmp.eq.s32.totalorder %s14, 1
    %p57 = por %p55, %p56
    %p58 = scmp.ne.s32.totalorder %s50, %s53
    %p59 = scmp.eq.s32.totalorder %s14, 0
    %p60 = por %p58, %p59
    %p61 = scmp.ne.s32.totalorder %s50, %s53
    %p62 = scmp.eq.s32.totalorder %s19, 1
    %p63 = por %p61, %p62
    %p64 = scmp.ne.s32.totalorder %s53, %s54
    %p65 = scmp.eq.s32.totalorder %s19, 0
    %p66 = por %p64, %p65
    %p67 = scmp.ne.s32.totalorder %s53, %s54
    %p68 = scmp.eq.s32.totalorder %s20, 1
    %p69 = por %p67, %p68
    %p71 = scmp.ne.s32.totalorder %s54, %s70
    %p72 = scmp.eq.s32.totalorder %s20, 0
    %p73 = por %p71, %p72
    %s75 = sadd.s32 %s74, 1
    %p78 = scmp.eq.s32.totalorder %s14, 1
    %p79 = scmp.ne.s32.totalorder %s74, %s76
    %p80 = scmp.eq.s32.totalorder %s14, 0
    %p81 = por %p79, %p80
    %p82 = scmp.ne.s32.totalorder %s74, %s76
    %p83 = scmp.eq.s32.totalorder %s19, 1
    %p84 = por %p82, %p83
    %p85 = scmp.ne.s32.totalorder %s76, %s77
    %p86 = scmp.eq.s32.totalorder %s19, 0
    %p87 = por %p85, %p86
    %p88 = scmp.ne.s32.totalorder %s76, %s77
    %p89 = scmp.eq.s32.totalorder %s20, 1
    %p90 = por %p88, %p89
    %p92 = scmp.ne.s32.totalorder %s77, %s91
    %p93 = scmp.eq.s32.totalorder %s20, 0
    %p94 = por %p92, %p93
    %s96 = sadd.s32 %s95, 1
    %p99 = scmp.eq.s32.totalorder %s14, 1
    %p100 = scmp.ne.s32.totalorder %s95, %s97
    %p101 = scmp.eq.s32.totalorder %s14, 0
    %p102 = por %p100, %p101
    %p103 = scmp.ne.s32.totalorder %s95, %s97
    %p104 = scmp.eq.s32.totalorder %s19, 1
    %p105 = por %p103, %p104
    %p106 = scmp.ne.s32.totalorder %s97, %s98
    %p107 = scmp.eq.s32.totalorder %s19, 0
    %p108 = por %p106, %p107
    %p109 = scmp.ne.s32.totalorder %s97, %s98
    %p110 = scmp.eq.s32.totalorder %s20, 1
    %p111 = por %p109, %p110
    %p113 = scmp.ne.s32.totalorder %s98, %s112
    %p114 = scmp.eq.s32.totalorder %s20, 0
    %p115 = por %p113, %p114
    %s117 = sadd.s32 %s116, 1
    %p120 = scmp.eq.s32.totalorder %s14, 1
    %p121 = scmp.ne.s32.totalorder %s116, %s118
    %p122 = scmp.eq.s32.totalorder %s14, 0
    %p123 = por %p121, %p122
    %p124 = scmp.ne.s32.totalorder %s116, %s118
    %p125 = scmp.eq.s32.totalorder %s19, 1
    %p126 = por %p124, %p125
    %p127 = scmp.ne.s32.totalorder %s118, %s119
    %p128 = scmp.eq.s32.totalorder %s19, 0
    %p129 = por %p127, %p128
    %p130 = scmp.ne.s32.totalorder %s118, %s119
    %p131 = scmp.eq.s32.totalorder %s20, 1
    %p132 = por %p130, %p131
    %p134 = scmp.ne.s32.totalorder %s119, %s133
    %p135 = scmp.eq.s32.totalorder %s20, 0
    %p136 = por %p134, %p135
    %s138 = sadd.s32 %s137, 1
    %p141 = scmp.eq.s32.totalorder %s14, 1
    %p142 = scmp.ne.s32.totalorder %s137, %s139
    %p143 = scmp.eq.s32.totalorder %s14, 0
    %p144 = por %p142, %p143
    %p145 = scmp.ne.s32.totalorder %s137, %s139
    %p146 = scmp.eq.s32.totalorder %s19, 1
    %p147 = por %p145, %p146
    %p148 = scmp.ne.s32.totalorder %s139, %s140
    %p149 = scmp.eq.s32.totalorder %s19, 0
    %p150 = por %p148, %p149
    %p151 = scmp.ne.s32.totalorder %s139, %s140
    %p152 = scmp.eq.s32.totalorder %s20, 1
    %p153 = por %p151, %p152
    %p155 = scmp.ne.s32.totalorder %s140, %s154
    %p156 = scmp.eq.s32.totalorder %s20, 0
    %p157 = por %p155, %p156
    %s158 = ssub.s32 %s14, %s21
    %p159 = scmp.eq.s32.totalorder %s158, 0
    %s161 = sadd.s32 %s160, 1
    %s162 = scalar_select %p159, %s160, %s161
    %p165 = pneg %p159
    %p166 = scmp.eq.s32.totalorder %s14, 1
    %p167 = por %p165, %p166
    %p168 = scmp.ne.s32.totalorder %s160, %s163
    %p169 = scmp.eq.s32.totalorder %s14, 0
    %p170 = por %p168, %p169
    %p171 = scmp.ne.s32.totalorder %s160, %s163
    %p172 = scmp.eq.s32.totalorder %s19, 1
    %p173 = por %p171, %p172
    %p174 = scmp.ne.s32.totalorder %s163, %s164
    %p175 = scmp.eq.s32.totalorder %s19, 0
    %p176 = por %p174, %p175
    %p177 = scmp.ne.s32.totalorder %s163, %s164
    %p178 = scmp.eq.s32.totalorder %s20, 1
    %p179 = por %p177, %p178
    %p181 = scmp.ne.s32.totalorder %s164, %s180
    %p182 = scmp.eq.s32.totalorder %s20, 0
    %p183 = por %p181, %p182
    %p184 = scmp.le.s32.totalorder 1, %s14
    %p185 = scmp.lt.s32.totalorder %s14, 3
    %p186 = pnand %p184, %p185
    %p187 = pneg %p186
    // Predicated region
    $region9: #{tpu_custom_call.1} parent=5 // pred_check
      _
    $region10: #{tpu_custom_call.1} parent=5 // pred_check_branch
      %189 = sbr.rel (%p186) target = $region12
    $region11: #{tpu_custom_call.1} parent=5 // pred_region
      %s190 = ssub.s32 %s14, 1
      // Predicated region
      $region13: #{tpu_custom_call.1} parent=11 // pred_check
        %p191 = pneg %p87
      $region14: #{tpu_custom_call.1} parent=11 // pred_check_branch
        %193 = sbr.rel (%p191) target = $region16
      $region15: #{tpu_custom_call.1} parent=11 // pred_region
        _
      $region16: #{tpu_custom_call.1} parent=11 // pred_fallthru
        _
      // Predicated region
      $region17: #{tpu_custom_call.1} parent=11 // pred_check
        %p194 = pneg %p108
      $region18: #{tpu_custom_call.1} parent=11 // pred_check_branch
        %196 = sbr.rel (%p194) target = $region20
      $region19: #{tpu_custom_call.1} parent=11 // pred_region
        _
      $region20: #{tpu_custom_call.1} parent=11 // pred_fallthru
        _
      // Predicated region
      $region21: #{tpu_custom_call.1} parent=11 // pred_check
        %p197 = pneg %p129
      $region22: #{tpu_custom_call.1} parent=11 // pred_check_branch
        %199 = sbr.rel (%p197) target = $region24
      $region23: #{tpu_custom_call.1} parent=11 // pred_region
        _
      $region24: #{tpu_custom_call.1} parent=11 // pred_fallthru
        _
      // Predicated region
      $region25: #{tpu_custom_call.1} parent=11 // pred_check
        %p200 = pneg %p150
      $region26: #{tpu_custom_call.1} parent=11 // pred_check_branch
        %202 = sbr.rel (%p200) target = $region28
      $region27: #{tpu_custom_call.1} parent=11 // pred_region
        _
      $region28: #{tpu_custom_call.1} parent=11 // pred_fallthru
        _
    $region12: #{tpu_custom_call.1} parent=5 // pred_fallthru
      _
    %p203 = scmp.lt.s32.totalorder %s14, 2
    // Predicated region
    $region29: #{tpu_custom_call.1} parent=5 // pred_check
      %p204 = pneg %p203
    $region30: #{tpu_custom_call.1} parent=5 // pred_check_branch
      %206 = sbr.rel (%p204) target = $region32
    $region31: #{tpu_custom_call.1} parent=5 // pred_region
      // Predicated region
      $region33: #{tpu_custom_call.1} parent=31 // pred_check
        %p207 = pneg %p34
      $region34: #{tpu_custom_call.1} parent=31 // pred_check_branch
        %209 = sbr.rel (%p207) target = $region36
      $region35: #{tpu_custom_call.1} parent=31 // pred_region
        %s210 = smul.u32 2, %s14
        %p211 = scmp.lt.s32.totalorder %s210, 3
        %s212 = scalar_select %p211, %s210, 3
        %s213 = smul.addr %s212, 360
        %s214 = smul.addr %s213, 4
        %s215 = scalar_lea.vmem %s0, %s214
        %s216 = smul.u32 2, %s14
      $region36: #{tpu_custom_call.1} parent=31 // pred_fallthru
        _
      // Predicated region
      $region37: #{tpu_custom_call.1} parent=31 // pred_check
        %p217 = pneg %p60
      $region38: #{tpu_custom_call.1} parent=31 // pred_check_branch
        %219 = sbr.rel (%p217) target = $region40
      $region39: #{tpu_custom_call.1} parent=31 // pred_region
        %s220 = smul.u32 2, %s14
        %p221 = scmp.lt.s32.totalorder %s220, 3
        %s222 = scalar_select %p221, %s220, 3
        %s223 = smul.addr %s222, 72
        %s224 = smul.addr %s223, 4
        %s225 = scalar_lea.vmem %s1, %s224
        %s226 = smul.u32 2, %s14
      $region40: #{tpu_custom_call.1} parent=31 // pred_fallthru
        _
    $region32: #{tpu_custom_call.1} parent=5 // pred_fallthru
      _
    %p227 = scmp.le.s32.totalorder 1, %s14
    %p228 = scmp.lt.s32.totalorder %s14, 3
    %p229 = pnand %p227, %p228
    %p230 = pneg %p229
    // Predicated region
    $region41: #{tpu_custom_call.1} parent=5 // pred_check
      _
    $region42: #{tpu_custom_call.1} parent=5 // pred_check_branch
      %232 = sbr.rel (%p229) target = $region44
    $region43: #{tpu_custom_call.1} parent=5 // pred_region
      %s233 = ssub.s32 %s14, 1
      %s234 = smul.u32 2, %s19
      %p235 = scmp.lt.s32.totalorder %s234, 3
      %s236 = scalar_select %p235, %s234, 3
      %s237 = smul.addr %s236, 360
      %s238 = smul.addr %s237, 4
      %s239 = scalar_lea.vmem %s0, %s238
      %p240 = pneg %p40
      %p241 = pneg %p37
      %s242 = smul.u32 2, %s19
      %p243 = scmp.lt.s32.totalorder %s242, 3
      %s244 = scalar_select %p243, %s242, 3
      %s245 = smul.addr %s244, 72
      %s246 = smul.addr %s245, 4
      %s247 = scalar_lea.vmem %s1, %s246
      %p248 = pneg %p66
      %p249 = pneg %p63
      %p250 = pneg %p87
      %p251 = pneg %p84
      %p252 = pneg %p108
      %p253 = pneg %p105
      %p254 = pneg %p129
      %p255 = pneg %p126
      %p256 = pneg %p150
      %p257 = pneg %p147
      %p258 = pneg %p176
      %p259 = pneg %p173
      %s260 = smul.u32 2, %s19
      %p261 = scmp.lt.s32.totalorder %s260, 3
      %s262 = scalar_select %p261, %s260, 3
      %s263 = smul.addr %s262, 72
      %s264 = smul.addr %s263, 8
      %s265 = scalar_lea.vmem %s6, %s264
      %s266 = smul.u32 2, %s19
      %p267 = scmp.lt.s32.totalorder %s266, 3
      %s268 = scalar_select %p267, %s266, 3
      %s269 = smul.addr %s268, 360
      %s270 = smul.addr %s269, 4
      %s271 = scalar_lea.vmem %s0, %s270
      %s272 = smul.u32 2, %s19
      %s273 = smul.u32 2, %s19
      %p274 = scmp.lt.s32.totalorder %s273, 3
      %s275 = scalar_select %p274, %s273, 3
      %s276 = smul.addr %s275, 72
      %s277 = smul.addr %s276, 4
      %s278 = scalar_lea.vmem %s1, %s277
      %s279 = smul.u32 2, %s19
      %s280 = smul.u32 2, %s19
      %p281 = scmp.lt.s32.totalorder %s280, 3
      %s282 = scalar_select %p281, %s280, 3
      %s283 = smul.addr %s282, 72
      %s284 = smul.addr %s283, 8
      %s285 = scalar_lea.vmem %s6, %s284
      %s286 = smul.u32 2, %s19
      %v288 = vld [vmem:[%s2] sm:$0x1]
      %v289 = vld [vmem:[%s3] sm:$0x1]
      %v290 = vld [vmem:[%s4] sm:$0xff]
      %v291 = vld [vmem:[#allocation2] sm:$0x1]
      %v292 = vld [vmem:[%s271] sm:$0xff]
      %v293 = vld [vmem:[%s271 + $0x8] sm:$0xff]
      %v294 = vld [vmem:[%s271 + $0x10] sm:$0xf]
      %v295 = vld [vmem:[%s271 + $0x14] sm:$0xff]
      %v296 = vld [vmem:[%s271 + $0x1c] sm:$0xff]
      %v297 = vld [vmem:[%s271 + $0x24] sm:$0xf]
      %v298 = vld [vmem:[%s271 + $0x28] sm:$0xff]
      %v299 = vld [vmem:[%s271 + $0x30] sm:$0xff]
      %v300 = vld [vmem:[%s271 + $0x38] sm:$0xf]
      %v301 = vld [vmem:[%s271 + $0x3c] sm:$0xff]
      %v302 = vld [vmem:[%s271 + $0x44] sm:$0xff]
      %v303 = vld [vmem:[%s271 + $0x4c] sm:$0xf]
      %v304 = vld [vmem:[%s271 + $0x50] sm:$0xff]
      %v305 = vld [vmem:[%s271 + $0x58] sm:$0xff]
      %v306 = vld [vmem:[%s271 + $0x60] sm:$0xf]
      %v307 = vld [vmem:[%s271 + $0x64] sm:$0xff]
      %v308 = vld [vmem:[%s271 + $0x6c] sm:$0xff]
      %v309 = vld [vmem:[%s271 + $0x74] sm:$0xf]
      %v310 = vld [vmem:[%s271 + $0x78] sm:$0xff]
      %v311 = vld [vmem:[%s271 + $0x80] sm:$0xff]
      %v312 = vld [vmem:[%s271 + $0x88] sm:$0xf]
      %v313 = vld [vmem:[%s271 + $0x8c] sm:$0xff]
      %v314 = vld [vmem:[%s271 + $0x94] sm:$0xff]
      %v315 = vld [vmem:[%s271 + $0x9c] sm:$0xf]
      %v316 = vld [vmem:[%s271 + $0xa0] sm:$0xff]
      %v317 = vld [vmem:[%s271 + $0xa8] sm:$0xff]
      %v318 = vld [vmem:[%s271 + $0xb0] sm:$0xf]
      %v319 = vld [vmem:[%s271 + $0xb4] sm:$0xff]
      %v320 = vld [vmem:[%s271 + $0xbc] sm:$0xff]
      %v321 = vld [vmem:[%s271 + $0xc4] sm:$0xf]
      %v322 = vld [vmem:[%s271 + $0xc8] sm:$0xff]
      %v323 = vld [vmem:[%s271 + $0xd0] sm:$0xff]
      %v324 = vld [vmem:[%s271 + $0xd8] sm:$0xf]
      %v325 = vld [vmem:[%s271 + $0xdc] sm:$0xff]
      %v326 = vld [vmem:[%s271 + $0xe4] sm:$0xff]
      %v327 = vld [vmem:[%s271 + $0xec] sm:$0xf]
      %v328 = vld [vmem:[%s271 + $0xf0] sm:$0xff]
      %v329 = vld [vmem:[%s271 + $0xf8] sm:$0xff]
      %v330 = vld [vmem:[%s271 + $0x100] sm:$0xf]
      %v331 = vld [vmem:[%s271 + $0x104] sm:$0xff]
      %v332 = vld [vmem:[%s271 + $0x10c] sm:$0xff]
      %v333 = vld [vmem:[%s271 + $0x114] sm:$0xf]
      %v334 = vld [vmem:[%s271 + $0x118] sm:$0xff]
      %v335 = vld [vmem:[%s271 + $0x120] sm:$0xff]
      %v336 = vld [vmem:[%s271 + $0x128] sm:$0xf]
      %v337 = vld [vmem:[%s271 + $0x12c] sm:$0xff]
      %v338 = vld [vmem:[%s271 + $0x134] sm:$0xff]
      %v339 = vld [vmem:[%s271 + $0x13c] sm:$0xf]
      %v340 = vld [vmem:[%s271 + $0x140] sm:$0xff]
      %v341 = vld [vmem:[%s271 + $0x148] sm:$0xff]
      %v342 = vld [vmem:[%s271 + $0x150] sm:$0xf]
      %v343 = vld [vmem:[%s271 + $0x154] sm:$0xff]
      %v344 = vld [vmem:[%s271 + $0x15c] sm:$0xff]
      %v345 = vld [vmem:[%s271 + $0x164] sm:$0xf]
      %v346 = vld [vmem:[%s271 + $0x168] sm:$0xff]
      %v347 = vld [vmem:[%s271 + $0x170] sm:$0xff]
      %v348 = vld [vmem:[%s271 + $0x178] sm:$0xf]
      %v349 = vld [vmem:[%s271 + $0x17c] sm:$0xff]
      %v350 = vld [vmem:[%s271 + $0x184] sm:$0xff]
      %v351 = vld [vmem:[%s271 + $0x18c] sm:$0xf]
      %v352 = vld [vmem:[%s271 + $0x190] sm:$0xff]
      %v353 = vld [vmem:[%s271 + $0x198] sm:$0xff]
      %v354 = vld [vmem:[%s271 + $0x1a0] sm:$0xf]
      %v355 = vld [vmem:[%s271 + $0x1a4] sm:$0xff]
      %v356 = vld [vmem:[%s271 + $0x1ac] sm:$0xff]
      %v357 = vld [vmem:[%s271 + $0x1b4] sm:$0xf]
      %v358 = vld [vmem:[%s271 + $0x1b8] sm:$0xff]
      %v359 = vld [vmem:[%s271 + $0x1c0] sm:$0xff]
      %v360 = vld [vmem:[%s271 + $0x1c8] sm:$0xf]
      %v361 = vld [vmem:[%s271 + $0x1cc] sm:$0xff]
      %v362 = vld [vmem:[%s271 + $0x1d4] sm:$0xff]
      %v363 = vld [vmem:[%s271 + $0x1dc] sm:$0xf]
      %v364 = vld [vmem:[%s271 + $0x1e0] sm:$0xff]
      %v365 = vld [vmem:[%s271 + $0x1e8] sm:$0xff]
      %v366 = vld [vmem:[%s271 + $0x1f0] sm:$0xf]
      %v367 = vld [vmem:[%s271 + $0x1f4] sm:$0xff]
      %v368 = vld [vmem:[%s271 + $0x1fc] sm:$0xff]
      %v369 = vld [vmem:[%s271 + $0x204] sm:$0xf]
      %v370 = vld [vmem:[%s271 + $0x208] sm:$0xff]
      %v371 = vld [vmem:[%s271 + $0x210] sm:$0xff]
      %v372 = vld [vmem:[%s271 + $0x218] sm:$0xf]
      %v373 = vld [vmem:[%s271 + $0x21c] sm:$0xff]
      %v374 = vld [vmem:[%s271 + $0x224] sm:$0xff]
      %v375 = vld [vmem:[%s271 + $0x22c] sm:$0xf]
      %v376 = vld [vmem:[%s271 + $0x230] sm:$0xff]
      %v377 = vld [vmem:[%s271 + $0x238] sm:$0xff]
      %v378 = vld [vmem:[%s271 + $0x240] sm:$0xf]
      %v379 = vld [vmem:[%s271 + $0x244] sm:$0xff]
      %v380 = vld [vmem:[%s271 + $0x24c] sm:$0xff]
      %v381 = vld [vmem:[%s271 + $0x254] sm:$0xf]
      %v382 = vld [vmem:[%s271 + $0x258] sm:$0xff]
      %v383 = vld [vmem:[%s271 + $0x260] sm:$0xff]
      %v384 = vld [vmem:[%s271 + $0x268] sm:$0xf]
      %v385 = vld [vmem:[%s271 + $0x26c] sm:$0xff]
      %v386 = vld [vmem:[%s271 + $0x274] sm:$0xff]
      %v387 = vld [vmem:[%s271 + $0x27c] sm:$0xf]
      %v388 = vld [vmem:[%s271 + $0x280] sm:$0xff]
      %v389 = vld [vmem:[%s271 + $0x288] sm:$0xff]
      %v390 = vld [vmem:[%s271 + $0x290] sm:$0xf]
      %v391 = vld [vmem:[%s271 + $0x294] sm:$0xff]
      %v392 = vld [vmem:[%s271 + $0x29c] sm:$0xff]
      %v393 = vld [vmem:[%s271 + $0x2a4] sm:$0xf]
      %v394 = vld [vmem:[%s271 + $0x2a8] sm:$0xff]
      %v395 = vld [vmem:[%s271 + $0x2b0] sm:$0xff]
      %v396 = vld [vmem:[%s271 + $0x2b8] sm:$0xf]
      %v397 = vld [vmem:[%s271 + $0x2bc] sm:$0xff]
      %v398 = vld [vmem:[%s271 + $0x2c4] sm:$0xff]
      %v399 = vld [vmem:[%s271 + $0x2cc] sm:$0xf]
      %v400 = vld [vmem:[%s271 + $0x2d0] sm:$0xff]
      %v401 = vld [vmem:[%s271 + $0x2d8] sm:$0xff]
      %v402 = vld [vmem:[%s271 + $0x2e0] sm:$0xf]
      %v403 = vld [vmem:[%s271 + $0x2e4] sm:$0xff]
      %v404 = vld [vmem:[%s271 + $0x2ec] sm:$0xff]
      %v405 = vld [vmem:[%s271 + $0x2f4] sm:$0xf]
      %v406 = vld [vmem:[%s271 + $0x2f8] sm:$0xff]
      %v407 = vld [vmem:[%s271 + $0x300] sm:$0xff]
      %v408 = vld [vmem:[%s271 + $0x308] sm:$0xf]
      %v409 = vld [vmem:[%s271 + $0x30c] sm:$0xff]
      %v410 = vld [vmem:[%s271 + $0x314] sm:$0xff]
      %v411 = vld [vmem:[%s271 + $0x31c] sm:$0xf]
      %v412 = vld [vmem:[%s271 + $0x320] sm:$0xff]
      %v413 = vld [vmem:[%s271 + $0x328] sm:$0xff]
      %v414 = vld [vmem:[%s271 + $0x330] sm:$0xf]
      %v415 = vld [vmem:[%s271 + $0x334] sm:$0xff]
      %v416 = vld [vmem:[%s271 + $0x33c] sm:$0xff]
      %v417 = vld [vmem:[%s271 + $0x344] sm:$0xf]
      %v418 = vld [vmem:[%s271 + $0x348] sm:$0xff]
      %v419 = vld [vmem:[%s271 + $0x350] sm:$0xff]
      %v420 = vld [vmem:[%s271 + $0x358] sm:$0xf]
      %v421 = vld [vmem:[%s271 + $0x35c] sm:$0xff]
      %v422 = vld [vmem:[%s271 + $0x364] sm:$0xff]
      %v423 = vld [vmem:[%s271 + $0x36c] sm:$0xf]
      %v424 = vld [vmem:[%s271 + $0x370] sm:$0xff]
      %v425 = vld [vmem:[%s271 + $0x378] sm:$0xff]
      %v426 = vld [vmem:[%s271 + $0x380] sm:$0xf]
      %v427 = vld [vmem:[%s271 + $0x384] sm:$0xff]
      %v428 = vld [vmem:[%s271 + $0x38c] sm:$0xff]
      %v429 = vld [vmem:[%s271 + $0x394] sm:$0xf]
      %v430 = vld [vmem:[%s271 + $0x398] sm:$0xff]
      %v431 = vld [vmem:[%s271 + $0x3a0] sm:$0xff]
      %v432 = vld [vmem:[%s271 + $0x3a8] sm:$0xf]
      %v433 = vld [vmem:[%s271 + $0x3ac] sm:$0xff]
      %v434 = vld [vmem:[%s271 + $0x3b4] sm:$0xff]
      %v435 = vld [vmem:[%s271 + $0x3bc] sm:$0xf]
      %v436 = vld [vmem:[%s271 + $0x3c0] sm:$0xff]
      %v437 = vld [vmem:[%s271 + $0x3c8] sm:$0xff]
      %v438 = vld [vmem:[%s271 + $0x3d0] sm:$0xf]
      %v439 = vld [vmem:[%s271 + $0x3d4] sm:$0xff]
      %v440 = vld [vmem:[%s271 + $0x3dc] sm:$0xff]
      %v441 = vld [vmem:[%s271 + $0x3e4] sm:$0xf]
      %v442 = vld [vmem:[%s271 + $0x3e8] sm:$0xff]
      %v443 = vld [vmem:[%s271 + $0x3f0] sm:$0xff]
      %v444 = vld [vmem:[%s271 + $0x3f8] sm:$0xf]
      %v445 = vld [vmem:[%s271 + $0x3fc] sm:$0xff]
      %v446 = vld [vmem:[%s271 + $0x404] sm:$0xff]
      %v447 = vld [vmem:[%s271 + $0x40c] sm:$0xf]
      %v448 = vld [vmem:[%s271 + $0x410] sm:$0xff]
      %v449 = vld [vmem:[%s271 + $0x418] sm:$0xff]
      %v450 = vld [vmem:[%s271 + $0x420] sm:$0xf]
      %v451 = vld [vmem:[%s271 + $0x424] sm:$0xff]
      %v452 = vld [vmem:[%s271 + $0x42c] sm:$0xff]
      %v453 = vld [vmem:[%s271 + $0x434] sm:$0xf]
      %v454 = vld [vmem:[%s271 + $0x438] sm:$0xff]
      %v455 = vld [vmem:[%s271 + $0x440] sm:$0xff]
      %v456 = vld [vmem:[%s271 + $0x448] sm:$0xf]
      %v457 = vld [vmem:[%s271 + $0x44c] sm:$0xff]
      %v458 = vld [vmem:[%s271 + $0x454] sm:$0xff]
      %v459 = vld [vmem:[%s271 + $0x45c] sm:$0xf]
      %v460 = vld [vmem:[%s271 + $0x460] sm:$0xff]
      %v461 = vld [vmem:[%s271 + $0x468] sm:$0xff]
      %v462 = vld [vmem:[%s271 + $0x470] sm:$0xf]
      %v463 = vld [vmem:[%s271 + $0x474] sm:$0xff]
      %v464 = vld [vmem:[%s271 + $0x47c] sm:$0xff]
      %v465 = vld [vmem:[%s271 + $0x484] sm:$0xf]
      %v466 = vld [vmem:[%s271 + $0x488] sm:$0xff]
      %v467 = vld [vmem:[%s271 + $0x490] sm:$0xff]
      %v468 = vld [vmem:[%s271 + $0x498] sm:$0xf]
      %v469 = vld [vmem:[%s271 + $0x49c] sm:$0xff]
      %v470 = vld [vmem:[%s271 + $0x4a4] sm:$0xff]
      %v471 = vld [vmem:[%s271 + $0x4ac] sm:$0xf]
      %v472 = vld [vmem:[%s271 + $0x4b0] sm:$0xff]
      %v473 = vld [vmem:[%s271 + $0x4b8] sm:$0xff]
      %v474 = vld [vmem:[%s271 + $0x4c0] sm:$0xf]
      %v475 = vld [vmem:[%s271 + $0x4c4] sm:$0xff]
      %v476 = vld [vmem:[%s271 + $0x4cc] sm:$0xff]
      %v477 = vld [vmem:[%s271 + $0x4d4] sm:$0xf]
      %v478 = vld [vmem:[%s271 + $0x4d8] sm:$0xff]
      %v479 = vld [vmem:[%s271 + $0x4e0] sm:$0xff]
      %v480 = vld [vmem:[%s271 + $0x4e8] sm:$0xf]
      %v481 = vld [vmem:[%s271 + $0x4ec] sm:$0xff]
      %v482 = vld [vmem:[%s271 + $0x4f4] sm:$0xff]
      %v483 = vld [vmem:[%s271 + $0x4fc] sm:$0xf]
      %v484 = vld [vmem:[%s271 + $0x500] sm:$0xff]
      %v485 = vld [vmem:[%s271 + $0x508] sm:$0xff]
      %v486 = vld [vmem:[%s271 + $0x510] sm:$0xf]
      %v487 = vld [vmem:[%s271 + $0x514] sm:$0xff]
      %v488 = vld [vmem:[%s271 + $0x51c] sm:$0xff]
      %v489 = vld [vmem:[%s271 + $0x524] sm:$0xf]
      %v490 = vld [vmem:[%s271 + $0x528] sm:$0xff]
      %v491 = vld [vmem:[%s271 + $0x530] sm:$0xff]
      %v492 = vld [vmem:[%s271 + $0x538] sm:$0xf]
      %v493 = vld [vmem:[%s271 + $0x53c] sm:$0xff]
      %v494 = vld [vmem:[%s271 + $0x544] sm:$0xff]
      %v495 = vld [vmem:[%s271 + $0x54c] sm:$0xf]
      %v496 = vld [vmem:[%s271 + $0x550] sm:$0xff]
      %v497 = vld [vmem:[%s271 + $0x558] sm:$0xff]
      %v498 = vld [vmem:[%s271 + $0x560] sm:$0xf]
      %v499 = vld [vmem:[%s271 + $0x564] sm:$0xff]
      %v500 = vld [vmem:[%s271 + $0x56c] sm:$0xff]
      %v501 = vld [vmem:[%s271 + $0x574] sm:$0xf]
      %v502 = vld [vmem:[%s271 + $0x578] sm:$0xff]
      %v503 = vld [vmem:[%s271 + $0x580] sm:$0xff]
      %v504 = vld [vmem:[%s271 + $0x588] sm:$0xf]
      %v505 = vld [vmem:[%s271 + $0x58c] sm:$0x33]
      %v506 = vld [vmem:[%s271 + $0x594] sm:$0x33]
      %v507 = vld [vmem:[%s271 + $0x59c] sm:$0x3]
      %v508 = vld [vmem:[%s278] sm:$0xf]
      %v509 = vld [vmem:[%s278 + $0x4] sm:$0xf]
      %v510 = vld [vmem:[%s278 + $0x8] sm:$0xf]
      %v511 = vld [vmem:[%s278 + $0xc] sm:$0xf]
      %v512 = vld [vmem:[%s278 + $0x10] sm:$0xf]
      %v513 = vld [vmem:[%s278 + $0x14] sm:$0xf]
      %v514 = vld [vmem:[%s278 + $0x18] sm:$0xf]
      %v515 = vld [vmem:[%s278 + $0x1c] sm:$0xf]
      %v516 = vld [vmem:[%s278 + $0x20] sm:$0xf]
      %v517 = vld [vmem:[%s278 + $0x24] sm:$0xf]
      %v518 = vld [vmem:[%s278 + $0x28] sm:$0xf]
      %v519 = vld [vmem:[%s278 + $0x2c] sm:$0xf]
      %v520 = vld [vmem:[%s278 + $0x30] sm:$0xf]
      %v521 = vld [vmem:[%s278 + $0x34] sm:$0xf]
      %v522 = vld [vmem:[%s278 + $0x38] sm:$0xf]
      %v523 = vld [vmem:[%s278 + $0x3c] sm:$0xf]
      %v524 = vld [vmem:[%s278 + $0x40] sm:$0xf]
      %v525 = vld [vmem:[%s278 + $0x44] sm:$0xf]
      %v526 = vld [vmem:[%s278 + $0x48] sm:$0xf]
      %v527 = vld [vmem:[%s278 + $0x4c] sm:$0xf]
      %v528 = vld [vmem:[%s278 + $0x50] sm:$0xf]
      %v529 = vld [vmem:[%s278 + $0x54] sm:$0xf]
      %v530 = vld [vmem:[%s278 + $0x58] sm:$0xf]
      %v531 = vld [vmem:[%s278 + $0x5c] sm:$0xf]
      %v532 = vld [vmem:[%s278 + $0x60] sm:$0xf]
      %v533 = vld [vmem:[%s278 + $0x64] sm:$0xf]
      %v534 = vld [vmem:[%s278 + $0x68] sm:$0xf]
      %v535 = vld [vmem:[%s278 + $0x6c] sm:$0xf]
      %v536 = vld [vmem:[%s278 + $0x70] sm:$0xf]
      %v537 = vld [vmem:[%s278 + $0x74] sm:$0xf]
      %v538 = vld [vmem:[%s278 + $0x78] sm:$0xf]
      %v539 = vld [vmem:[%s278 + $0x7c] sm:$0xf]
      %v540 = vld [vmem:[%s278 + $0x80] sm:$0xf]
      %v541 = vld [vmem:[%s278 + $0x84] sm:$0xf]
      %v542 = vld [vmem:[%s278 + $0x88] sm:$0xf]
      %v543 = vld [vmem:[%s278 + $0x8c] sm:$0xf]
      %v544 = vld [vmem:[%s278 + $0x90] sm:$0xf]
      %v545 = vld [vmem:[%s278 + $0x94] sm:$0xf]
      %v546 = vld [vmem:[%s278 + $0x98] sm:$0xf]
      %v547 = vld [vmem:[%s278 + $0x9c] sm:$0xf]
      %v548 = vld [vmem:[%s278 + $0xa0] sm:$0xf]
      %v549 = vld [vmem:[%s278 + $0xa4] sm:$0xf]
      %v550 = vld [vmem:[%s278 + $0xa8] sm:$0xf]
      %v551 = vld [vmem:[%s278 + $0xac] sm:$0xf]
      %v552 = vld [vmem:[%s278 + $0xb0] sm:$0xf]
      %v553 = vld [vmem:[%s278 + $0xb4] sm:$0xf]
      %v554 = vld [vmem:[%s278 + $0xb8] sm:$0xf]
      %v555 = vld [vmem:[%s278 + $0xbc] sm:$0xf]
      %v556 = vld [vmem:[%s278 + $0xc0] sm:$0xf]
      %v557 = vld [vmem:[%s278 + $0xc4] sm:$0xf]
      %v558 = vld [vmem:[%s278 + $0xc8] sm:$0xf]
      %v559 = vld [vmem:[%s278 + $0xcc] sm:$0xf]
      %v560 = vld [vmem:[%s278 + $0xd0] sm:$0xf]
      %v561 = vld [vmem:[%s278 + $0xd4] sm:$0xf]
      %v562 = vld [vmem:[%s278 + $0xd8] sm:$0xf]
      %v563 = vld [vmem:[%s278 + $0xdc] sm:$0xf]
      %v564 = vld [vmem:[%s278 + $0xe0] sm:$0xf]
      %v565 = vld [vmem:[%s278 + $0xe4] sm:$0xf]
      %v566 = vld [vmem:[%s278 + $0xe8] sm:$0xf]
      %v567 = vld [vmem:[%s278 + $0xec] sm:$0xf]
      %v568 = vld [vmem:[%s278 + $0xf0] sm:$0xf]
      %v569 = vld [vmem:[%s278 + $0xf4] sm:$0xf]
      %v570 = vld [vmem:[%s278 + $0xf8] sm:$0xf]
      %v571 = vld [vmem:[%s278 + $0xfc] sm:$0xf]
      %v572 = vld [vmem:[%s278 + $0x100] sm:$0xf]
      %v573 = vld [vmem:[%s278 + $0x104] sm:$0xf]
      %v574 = vld [vmem:[%s278 + $0x108] sm:$0xf]
      %v575 = vld [vmem:[%s278 + $0x10c] sm:$0xf]
      %v576 = vld [vmem:[%s278 + $0x110] sm:$0xf]
      %v577 = vld [vmem:[%s278 + $0x114] sm:$0xf]
      %v578 = vld [vmem:[%s278 + $0x118] sm:$0xf]
      %v579 = vld [vmem:[%s278 + $0x11c] sm:$0x3]
      %v796 = vunpack.c.l.b16 %v292
      %v797 = vunpack.c.h.b16 %v292
      %v798 = vunpack.c.l.b16 %v293
      %v799 = vunpack.c.h.b16 %v293
      %v800 = vunpack.c.l.b16 %v294
      %v801 = vunpack.c.l.b16 %v295
      %v802 = vunpack.c.h.b16 %v295
      %v803 = vunpack.c.l.b16 %v296
      %v804 = vunpack.c.h.b16 %v296
      %v805 = vunpack.c.l.b16 %v297
      %v806 = vunpack.c.l.b16 %v298
      %v807 = vunpack.c.h.b16 %v298
      %v808 = vunpack.c.l.b16 %v299
      %v809 = vunpack.c.h.b16 %v299
      %v810 = vunpack.c.l.b16 %v300
      %v811 = vunpack.c.l.b16 %v301
      %v812 = vunpack.c.h.b16 %v301
      %v813 = vunpack.c.l.b16 %v302
      %v814 = vunpack.c.h.b16 %v302
      %v815 = vunpack.c.l.b16 %v303
      %v816 = vunpack.c.l.b16 %v304
      %v817 = vunpack.c.h.b16 %v304
      %v818 = vunpack.c.l.b16 %v305
      %v819 = vunpack.c.h.b16 %v305
      %v820 = vunpack.c.l.b16 %v306
      %v821 = vunpack.c.l.b16 %v307
      %v822 = vunpack.c.h.b16 %v307
      %v823 = vunpack.c.l.b16 %v308
      %v824 = vunpack.c.h.b16 %v308
      %v825 = vunpack.c.l.b16 %v309
      %v826 = vunpack.c.l.b16 %v310
      %v827 = vunpack.c.h.b16 %v310
      %v828 = vunpack.c.l.b16 %v311
      %v829 = vunpack.c.h.b16 %v311
      %v830 = vunpack.c.l.b16 %v312
      %v831 = vunpack.c.l.b16 %v313
      %v832 = vunpack.c.h.b16 %v313
      %v833 = vunpack.c.l.b16 %v314
      %v834 = vunpack.c.h.b16 %v314
      %v835 = vunpack.c.l.b16 %v315
      %v836 = vunpack.c.l.b16 %v316
      %v837 = vunpack.c.h.b16 %v316
      %v838 = vunpack.c.l.b16 %v317
      %v839 = vunpack.c.h.b16 %v317
      %v840 = vunpack.c.l.b16 %v318
      %v841 = vunpack.c.l.b16 %v319
      %v842 = vunpack.c.h.b16 %v319
      %v843 = vunpack.c.l.b16 %v320
      %v844 = vunpack.c.h.b16 %v320
      %v845 = vunpack.c.l.b16 %v321
      %v846 = vunpack.c.l.b16 %v322
      %v847 = vunpack.c.h.b16 %v322
      %v848 = vunpack.c.l.b16 %v323
      %v849 = vunpack.c.h.b16 %v323
      %v850 = vunpack.c.l.b16 %v324
      %v851 = vunpack.c.l.b16 %v325
      %v852 = vunpack.c.h.b16 %v325
      %v853 = vunpack.c.l.b16 %v326
      %v854 = vunpack.c.h.b16 %v326
      %v855 = vunpack.c.l.b16 %v327
      %v856 = vunpack.c.l.b16 %v328
      %v857 = vunpack.c.h.b16 %v328
      %v858 = vunpack.c.l.b16 %v329
      %v859 = vunpack.c.h.b16 %v329
      %v860 = vunpack.c.l.b16 %v330
      %v861 = vunpack.c.l.b16 %v331
      %v862 = vunpack.c.h.b16 %v331
      %v863 = vunpack.c.l.b16 %v332
      %v864 = vunpack.c.h.b16 %v332
      %v865 = vunpack.c.l.b16 %v333
      %v866 = vunpack.c.l.b16 %v334
      %v867 = vunpack.c.h.b16 %v334
      %v868 = vunpack.c.l.b16 %v335
      %v869 = vunpack.c.h.b16 %v335
      %v870 = vunpack.c.l.b16 %v336
      %v871 = vunpack.c.l.b16 %v337
      %v872 = vunpack.c.h.b16 %v337
      %v873 = vunpack.c.l.b16 %v338
      %v874 = vunpack.c.h.b16 %v338
      %v875 = vunpack.c.l.b16 %v339
      %v876 = vunpack.c.l.b16 %v340
      %v877 = vunpack.c.h.b16 %v340
      %v878 = vunpack.c.l.b16 %v341
      %v879 = vunpack.c.h.b16 %v341
      %v880 = vunpack.c.l.b16 %v342
      %v881 = vunpack.c.l.b16 %v343
      %v882 = vunpack.c.h.b16 %v343
      %v883 = vunpack.c.l.b16 %v344
      %v884 = vunpack.c.h.b16 %v344
      %v885 = vunpack.c.l.b16 %v345
      %v886 = vunpack.c.l.b16 %v346
      %v887 = vunpack.c.h.b16 %v346
      %v888 = vunpack.c.l.b16 %v347
      %v889 = vunpack.c.h.b16 %v347
      %v890 = vunpack.c.l.b16 %v348
      %v891 = vunpack.c.l.b16 %v349
      %v892 = vunpack.c.h.b16 %v349
      %v893 = vunpack.c.l.b16 %v350
      %v894 = vunpack.c.h.b16 %v350
      %v895 = vunpack.c.l.b16 %v351
      %v896 = vunpack.c.l.b16 %v352
      %v897 = vunpack.c.h.b16 %v352
      %v898 = vunpack.c.l.b16 %v353
      %v899 = vunpack.c.h.b16 %v353
      %v900 = vunpack.c.l.b16 %v354
      %v901 = vunpack.c.l.b16 %v355
      %v902 = vunpack.c.h.b16 %v355
      %v903 = vunpack.c.l.b16 %v356
      %v904 = vunpack.c.h.b16 %v356
      %v905 = vunpack.c.l.b16 %v357
      %v906 = vunpack.c.l.b16 %v358
      %v907 = vunpack.c.h.b16 %v358
      %v908 = vunpack.c.l.b16 %v359
      %v909 = vunpack.c.h.b16 %v359
      %v910 = vunpack.c.l.b16 %v360
      %v911 = vunpack.c.l.b16 %v361
      %v912 = vunpack.c.h.b16 %v361
      %v913 = vunpack.c.l.b16 %v362
      %v914 = vunpack.c.h.b16 %v362
      %v915 = vunpack.c.l.b16 %v363
      %v916 = vunpack.c.l.b16 %v364
      %v917 = vunpack.c.h.b16 %v364
      %v918 = vunpack.c.l.b16 %v365
      %v919 = vunpack.c.h.b16 %v365
      %v920 = vunpack.c.l.b16 %v366
      %v921 = vunpack.c.l.b16 %v367
      %v922 = vunpack.c.h.b16 %v367
      %v923 = vunpack.c.l.b16 %v368
      %v924 = vunpack.c.h.b16 %v368
      %v925 = vunpack.c.l.b16 %v369
      %v926 = vunpack.c.l.b16 %v370
      %v927 = vunpack.c.h.b16 %v370
      %v928 = vunpack.c.l.b16 %v371
      %v929 = vunpack.c.h.b16 %v371
      %v930 = vunpack.c.l.b16 %v372
      %v931 = vunpack.c.l.b16 %v373
      %v932 = vunpack.c.h.b16 %v373
      %v933 = vunpack.c.l.b16 %v374
      %v934 = vunpack.c.h.b16 %v374
      %v935 = vunpack.c.l.b16 %v375
      %v936 = vunpack.c.l.b16 %v376
      %v937 = vunpack.c.h.b16 %v376
      %v938 = vunpack.c.l.b16 %v377
      %v939 = vunpack.c.h.b16 %v377
      %v940 = vunpack.c.l.b16 %v378
      %v941 = vunpack.c.l.b16 %v379
      %v942 = vunpack.c.h.b16 %v379
      %v943 = vunpack.c.l.b16 %v380
      %v944 = vunpack.c.h.b16 %v380
      %v945 = vunpack.c.l.b16 %v381
      %v946 = vunpack.c.l.b16 %v382
      %v947 = vunpack.c.h.b16 %v382
      %v948 = vunpack.c.l.b16 %v383
      %v949 = vunpack.c.h.b16 %v383
      %v950 = vunpack.c.l.b16 %v384
      %v951 = vunpack.c.l.b16 %v385
      %v952 = vunpack.c.h.b16 %v385
      %v953 = vunpack.c.l.b16 %v386
      %v954 = vunpack.c.h.b16 %v386
      %v955 = vunpack.c.l.b16 %v387
      %v956 = vunpack.c.l.b16 %v388
      %v957 = vunpack.c.h.b16 %v388
      %v958 = vunpack.c.l.b16 %v389
      %v959 = vunpack.c.h.b16 %v389
      %v960 = vunpack.c.l.b16 %v390
      %v961 = vunpack.c.l.b16 %v391
      %v962 = vunpack.c.h.b16 %v391
      %v963 = vunpack.c.l.b16 %v392
      %v964 = vunpack.c.h.b16 %v392
      %v965 = vunpack.c.l.b16 %v393
      %v966 = vunpack.c.l.b16 %v394
      %v967 = vunpack.c.h.b16 %v394
      %v968 = vunpack.c.l.b16 %v395
      %v969 = vunpack.c.h.b16 %v395
      %v970 = vunpack.c.l.b16 %v396
      %v971 = vunpack.c.l.b16 %v397
      %v972 = vunpack.c.h.b16 %v397
      %v973 = vunpack.c.l.b16 %v398
      %v974 = vunpack.c.h.b16 %v398
      %v975 = vunpack.c.l.b16 %v399
      %v976 = vunpack.c.l.b16 %v400
      %v977 = vunpack.c.h.b16 %v400
      %v978 = vunpack.c.l.b16 %v401
      %v979 = vunpack.c.h.b16 %v401
      %v980 = vunpack.c.l.b16 %v402
      %v981 = vunpack.c.l.b16 %v403
      %v982 = vunpack.c.h.b16 %v403
      %v983 = vunpack.c.l.b16 %v404
      %v984 = vunpack.c.h.b16 %v404
      %v985 = vunpack.c.l.b16 %v405
      %v986 = vunpack.c.l.b16 %v406
      %v987 = vunpack.c.h.b16 %v406
      %v988 = vunpack.c.l.b16 %v407
      %v989 = vunpack.c.h.b16 %v407
      %v990 = vunpack.c.l.b16 %v408
      %v991 = vunpack.c.l.b16 %v409
      %v992 = vunpack.c.h.b16 %v409
      %v993 = vunpack.c.l.b16 %v410
      %v994 = vunpack.c.h.b16 %v410
      %v995 = vunpack.c.l.b16 %v411
      %v996 = vunpack.c.l.b16 %v412
      %v997 = vunpack.c.h.b16 %v412
      %v998 = vunpack.c.l.b16 %v413
      %v999 = vunpack.c.h.b16 %v413
      %v1000 = vunpack.c.l.b16 %v414
      %v1001 = vunpack.c.l.b16 %v415
      %v1002 = vunpack.c.h.b16 %v415
      %v1003 = vunpack.c.l.b16 %v416
      %v1004 = vunpack.c.h.b16 %v416
      %v1005 = vunpack.c.l.b16 %v417
      %v1006 = vunpack.c.l.b16 %v418
      %v1007 = vunpack.c.h.b16 %v418
      %v1008 = vunpack.c.l.b16 %v419
      %v1009 = vunpack.c.h.b16 %v419
      %v1010 = vunpack.c.l.b16 %v420
      %v1011 = vunpack.c.l.b16 %v421
      %v1012 = vunpack.c.h.b16 %v421
      %v1013 = vunpack.c.l.b16 %v422
      %v1014 = vunpack.c.h.b16 %v422
      %v1015 = vunpack.c.l.b16 %v423
      %v1016 = vunpack.c.l.b16 %v424
      %v1017 = vunpack.c.h.b16 %v424
      %v1018 = vunpack.c.l.b16 %v425
      %v1019 = vunpack.c.h.b16 %v425
      %v1020 = vunpack.c.l.b16 %v426
      %v1021 = vunpack.c.l.b16 %v427
      %v1022 = vunpack.c.h.b16 %v427
      %v1023 = vunpack.c.l.b16 %v428
      %v1024 = vunpack.c.h.b16 %v428
      %v1025 = vunpack.c.l.b16 %v429
      %v1026 = vunpack.c.l.b16 %v430
      %v1027 = vunpack.c.h.b16 %v430
      %v1028 = vunpack.c.l.b16 %v431
      %v1029 = vunpack.c.h.b16 %v431
      %v1030 = vunpack.c.l.b16 %v432
      %v1031 = vunpack.c.l.b16 %v433
      %v1032 = vunpack.c.h.b16 %v433
      %v1033 = vunpack.c.l.b16 %v434
      %v1034 = vunpack.c.h.b16 %v434
      %v1035 = vunpack.c.l.b16 %v435
      %v1036 = vunpack.c.l.b16 %v436
      %v1037 = vunpack.c.h.b16 %v436
      %v1038 = vunpack.c.l.b16 %v437
      %v1039 = vunpack.c.h.b16 %v437
      %v1040 = vunpack.c.l.b16 %v438
      %v1041 = vunpack.c.l.b16 %v439
      %v1042 = vunpack.c.h.b16 %v439
      %v1043 = vunpack.c.l.b16 %v440
      %v1044 = vunpack.c.h.b16 %v440
      %v1045 = vunpack.c.l.b16 %v441
      %v1046 = vunpack.c.l.b16 %v442
      %v1047 = vunpack.c.h.b16 %v442
      %v1048 = vunpack.c.l.b16 %v443
      %v1049 = vunpack.c.h.b16 %v443
      %v1050 = vunpack.c.l.b16 %v444
      %v1051 = vunpack.c.l.b16 %v445
      %v1052 = vunpack.c.h.b16 %v445
      %v1053 = vunpack.c.l.b16 %v446
      %v1054 = vunpack.c.h.b16 %v446
      %v1055 = vunpack.c.l.b16 %v447
      %v1056 = vunpack.c.l.b16 %v448
      %v1057 = vunpack.c.h.b16 %v448
      %v1058 = vunpack.c.l.b16 %v449
      %v1059 = vunpack.c.h.b16 %v449
      %v1060 = vunpack.c.l.b16 %v450
      %v1061 = vunpack.c.l.b16 %v451
      %v1062 = vunpack.c.h.b16 %v451
      %v1063 = vunpack.c.l.b16 %v452
      %v1064 = vunpack.c.h.b16 %v452
      %v1065 = vunpack.c.l.b16 %v453
      %v1066 = vunpack.c.l.b16 %v454
      %v1067 = vunpack.c.h.b16 %v454
      %v1068 = vunpack.c.l.b16 %v455
      %v1069 = vunpack.c.h.b16 %v455
      %v1070 = vunpack.c.l.b16 %v456
      %v1071 = vunpack.c.l.b16 %v457
      %v1072 = vunpack.c.h.b16 %v457
      %v1073 = vunpack.c.l.b16 %v458
      %v1074 = vunpack.c.h.b16 %v458
      %v1075 = vunpack.c.l.b16 %v459
      %v1076 = vunpack.c.l.b16 %v460
      %v1077 = vunpack.c.h.b16 %v460
      %v1078 = vunpack.c.l.b16 %v461
      %v1079 = vunpack.c.h.b16 %v461
      %v1080 = vunpack.c.l.b16 %v462
      %v1081 = vunpack.c.l.b16 %v463
      %v1082 = vunpack.c.h.b16 %v463
      %v1083 = vunpack.c.l.b16 %v464
      %v1084 = vunpack.c.h.b16 %v464
      %v1085 = vunpack.c.l.b16 %v465
      %v1086 = vunpack.c.l.b16 %v466
      %v1087 = vunpack.c.h.b16 %v466
      %v1088 = vunpack.c.l.b16 %v467
      %v1089 = vunpack.c.h.b16 %v467
      %v1090 = vunpack.c.l.b16 %v468
      %v1091 = vunpack.c.l.b16 %v469
      %v1092 = vunpack.c.h.b16 %v469
      %v1093 = vunpack.c.l.b16 %v470
      %v1094 = vunpack.c.h.b16 %v470
      %v1095 = vunpack.c.l.b16 %v471
      %v1096 = vunpack.c.l.b16 %v472
      %v1097 = vunpack.c.h.b16 %v472
      %v1098 = vunpack.c.l.b16 %v473
      %v1099 = vunpack.c.h.b16 %v473
      %v1100 = vunpack.c.l.b16 %v474
      %v1101 = vunpack.c.l.b16 %v475
      %v1102 = vunpack.c.h.b16 %v475
      %v1103 = vunpack.c.l.b16 %v476
      %v1104 = vunpack.c.h.b16 %v476
      %v1105 = vunpack.c.l.b16 %v477
      %v1106 = vunpack.c.l.b16 %v478
      %v1107 = vunpack.c.h.b16 %v478
      %v1108 = vunpack.c.l.b16 %v479
      %v1109 = vunpack.c.h.b16 %v479
      %v1110 = vunpack.c.l.b16 %v480
      %v1111 = vunpack.c.l.b16 %v481
      %v1112 = vunpack.c.h.b16 %v481
      %v1113 = vunpack.c.l.b16 %v482
      %v1114 = vunpack.c.h.b16 %v482
      %v1115 = vunpack.c.l.b16 %v483
      %v1116 = vunpack.c.l.b16 %v484
      %v1117 = vunpack.c.h.b16 %v484
      %v1118 = vunpack.c.l.b16 %v485
      %v1119 = vunpack.c.h.b16 %v485
      %v1120 = vunpack.c.l.b16 %v486
      %v1121 = vunpack.c.l.b16 %v487
      %v1122 = vunpack.c.h.b16 %v487
      %v1123 = vunpack.c.l.b16 %v488
      %v1124 = vunpack.c.h.b16 %v488
      %v1125 = vunpack.c.l.b16 %v489
      %v1126 = vunpack.c.l.b16 %v490
      %v1127 = vunpack.c.h.b16 %v490
      %v1128 = vunpack.c.l.b16 %v491
      %v1129 = vunpack.c.h.b16 %v491
      %v1130 = vunpack.c.l.b16 %v492
      %v1131 = vunpack.c.l.b16 %v493
      %v1132 = vunpack.c.h.b16 %v493
      %v1133 = vunpack.c.l.b16 %v494
      %v1134 = vunpack.c.h.b16 %v494
      %v1135 = vunpack.c.l.b16 %v495
      %v1136 = vunpack.c.l.b16 %v496
      %v1137 = vunpack.c.h.b16 %v496
      %v1138 = vunpack.c.l.b16 %v497
      %v1139 = vunpack.c.h.b16 %v497
      %v1140 = vunpack.c.l.b16 %v498
      %v1141 = vunpack.c.l.b16 %v499
      %v1142 = vunpack.c.h.b16 %v499
      %v1143 = vunpack.c.l.b16 %v500
      %v1144 = vunpack.c.h.b16 %v500
      %v1145 = vunpack.c.l.b16 %v501
      %v1146 = vunpack.c.l.b16 %v502
      %v1147 = vunpack.c.h.b16 %v502
      %v1148 = vunpack.c.l.b16 %v503
      %v1149 = vunpack.c.h.b16 %v503
      %v1150 = vunpack.c.l.b16 %v504
      %v1151 = vunpack.c.l.b16 %v505
      %v1152 = vunpack.c.h.b16 %v505
      %v1153 = vunpack.c.l.b16 %v506
      %v1154 = vunpack.c.h.b16 %v506
      %v1155 = vunpack.c.l.b16 %v507
      %v1156 = vpack.c.b16 %v801, %v796
      %v1157 = vpack.c.b16 %v802, %v797
      %v1158 = vpack.c.b16 %v803, %v798
      %v1159 = vpack.c.b16 %v804, %v799
      %v1160 = vpack.c.b16 %v805, %v800
      %v1161 = vpack.c.b16 %v811, %v806
      %v1162 = vpack.c.b16 %v812, %v807
      %v1163 = vpack.c.b16 %v813, %v808
      %v1164 = vpack.c.b16 %v814, %v809
      %v1165 = vpack.c.b16 %v815, %v810
      %v1166 = vpack.c.b16 %v821, %v816
      %v1167 = vpack.c.b16 %v822, %v817
      %v1168 = vpack.c.b16 %v823, %v818
      %v1169 = vpack.c.b16 %v824, %v819
      %v1170 = vpack.c.b16 %v825, %v820
      %v1171 = vpack.c.b16 %v831, %v826
      %v1172 = vpack.c.b16 %v832, %v827
      %v1173 = vpack.c.b16 %v833, %v828
      %v1174 = vpack.c.b16 %v834, %v829
      %v1175 = vpack.c.b16 %v835, %v830
      %v1176 = vpack.c.b16 %v841, %v836
      %v1177 = vpack.c.b16 %v842, %v837
      %v1178 = vpack.c.b16 %v843, %v838
      %v1179 = vpack.c.b16 %v844, %v839
      %v1180 = vpack.c.b16 %v845, %v840
      %v1181 = vpack.c.b16 %v851, %v846
      %v1182 = vpack.c.b16 %v852, %v847
      %v1183 = vpack.c.b16 %v853, %v848
      %v1184 = vpack.c.b16 %v854, %v849
      %v1185 = vpack.c.b16 %v855, %v850
      %v1186 = vpack.c.b16 %v861, %v856
      %v1187 = vpack.c.b16 %v862, %v857
      %v1188 = vpack.c.b16 %v863, %v858
      %v1189 = vpack.c.b16 %v864, %v859
      %v1190 = vpack.c.b16 %v865, %v860
      %v1191 = vpack.c.b16 %v871, %v866
      %v1192 = vpack.c.b16 %v872, %v867
      %v1193 = vpack.c.b16 %v873, %v868
      %v1194 = vpack.c.b16 %v874, %v869
      %v1195 = vpack.c.b16 %v875, %v870
      %v1196 = vpack.c.b16 %v881, %v876
      %v1197 = vpack.c.b16 %v882, %v877
      %v1198 = vpack.c.b16 %v883, %v878
      %v1199 = vpack.c.b16 %v884, %v879
      %v1200 = vpack.c.b16 %v885, %v880
      %v1201 = vpack.c.b16 %v891, %v886
      %v1202 = vpack.c.b16 %v892, %v887
      %v1203 = vpack.c.b16 %v893, %v888
      %v1204 = vpack.c.b16 %v894, %v889
      %v1205 = vpack.c.b16 %v895, %v890
      %v1206 = vpack.c.b16 %v901, %v896
      %v1207 = vpack.c.b16 %v902, %v897
      %v1208 = vpack.c.b16 %v903, %v898
      %v1209 = vpack.c.b16 %v904, %v899
      %v1210 = vpack.c.b16 %v905, %v900
      %v1211 = vpack.c.b16 %v911, %v906
      %v1212 = vpack.c.b16 %v912, %v907
      %v1213 = vpack.c.b16 %v913, %v908
      %v1214 = vpack.c.b16 %v914, %v909
      %v1215 = vpack.c.b16 %v915, %v910
      %v1216 = vpack.c.b16 %v921, %v916
      %v1217 = vpack.c.b16 %v922, %v917
      %v1218 = vpack.c.b16 %v923, %v918
      %v1219 = vpack.c.b16 %v924, %v919
      %v1220 = vpack.c.b16 %v925, %v920
      %v1221 = vpack.c.b16 %v931, %v926
      %v1222 = vpack.c.b16 %v932, %v927
      %v1223 = vpack.c.b16 %v933, %v928
      %v1224 = vpack.c.b16 %v934, %v929
      %v1225 = vpack.c.b16 %v935, %v930
      %v1226 = vpack.c.b16 %v941, %v936
      %v1227 = vpack.c.b16 %v942, %v937
      %v1228 = vpack.c.b16 %v943, %v938
      %v1229 = vpack.c.b16 %v944, %v939
      %v1230 = vpack.c.b16 %v945, %v940
      %v1231 = vpack.c.b16 %v951, %v946
      %v1232 = vpack.c.b16 %v952, %v947
      %v1233 = vpack.c.b16 %v953, %v948
      %v1234 = vpack.c.b16 %v954, %v949
      %v1235 = vpack.c.b16 %v955, %v950
      %v1236 = vpack.c.b16 %v961, %v956
      %v1237 = vpack.c.b16 %v962, %v957
      %v1238 = vpack.c.b16 %v963, %v958
      %v1239 = vpack.c.b16 %v964, %v959
      %v1240 = vpack.c.b16 %v965, %v960
      %v1241 = vpack.c.b16 %v971, %v966
      %v1242 = vpack.c.b16 %v972, %v967
      %v1243 = vpack.c.b16 %v973, %v968
      %v1244 = vpack.c.b16 %v974, %v969
      %v1245 = vpack.c.b16 %v975, %v970
      %v1246 = vpack.c.b16 %v981, %v976
      %v1247 = vpack.c.b16 %v982, %v977
      %v1248 = vpack.c.b16 %v983, %v978
      %v1249 = vpack.c.b16 %v984, %v979
      %v1250 = vpack.c.b16 %v985, %v980
      %v1251 = vpack.c.b16 %v991, %v986
      %v1252 = vpack.c.b16 %v992, %v987
      %v1253 = vpack.c.b16 %v993, %v988
      %v1254 = vpack.c.b16 %v994, %v989
      %v1255 = vpack.c.b16 %v995, %v990
      %v1256 = vpack.c.b16 %v1001, %v996
      %v1257 = vpack.c.b16 %v1002, %v997
      %v1258 = vpack.c.b16 %v1003, %v998
      %v1259 = vpack.c.b16 %v1004, %v999
      %v1260 = vpack.c.b16 %v1005, %v1000
      %v1261 = vpack.c.b16 %v1011, %v1006
      %v1262 = vpack.c.b16 %v1012, %v1007
      %v1263 = vpack.c.b16 %v1013, %v1008
      %v1264 = vpack.c.b16 %v1014, %v1009
      %v1265 = vpack.c.b16 %v1015, %v1010
      %v1266 = vpack.c.b16 %v1021, %v1016
      %v1267 = vpack.c.b16 %v1022, %v1017
      %v1268 = vpack.c.b16 %v1023, %v1018
      %v1269 = vpack.c.b16 %v1024, %v1019
      %v1270 = vpack.c.b16 %v1025, %v1020
      %v1271 = vpack.c.b16 %v1031, %v1026
      %v1272 = vpack.c.b16 %v1032, %v1027
      %v1273 = vpack.c.b16 %v1033, %v1028
      %v1274 = vpack.c.b16 %v1034, %v1029
      %v1275 = vpack.c.b16 %v1035, %v1030
      %v1276 = vpack.c.b16 %v1041, %v1036
      %v1277 = vpack.c.b16 %v1042, %v1037
      %v1278 = vpack.c.b16 %v1043, %v1038
      %v1279 = vpack.c.b16 %v1044, %v1039
      %v1280 = vpack.c.b16 %v1045, %v1040
      %v1281 = vpack.c.b16 %v1051, %v1046
      %v1282 = vpack.c.b16 %v1052, %v1047
      %v1283 = vpack.c.b16 %v1053, %v1048
      %v1284 = vpack.c.b16 %v1054, %v1049
      %v1285 = vpack.c.b16 %v1055, %v1050
      %v1286 = vpack.c.b16 %v1061, %v1056
      %v1287 = vpack.c.b16 %v1062, %v1057
      %v1288 = vpack.c.b16 %v1063, %v1058
      %v1289 = vpack.c.b16 %v1064, %v1059
      %v1290 = vpack.c.b16 %v1065, %v1060
      %v1291 = vpack.c.b16 %v1071, %v1066
      %v1292 = vpack.c.b16 %v1072, %v1067
      %v1293 = vpack.c.b16 %v1073, %v1068
      %v1294 = vpack.c.b16 %v1074, %v1069
      %v1295 = vpack.c.b16 %v1075, %v1070
      %v1296 = vpack.c.b16 %v1081, %v1076
      %v1297 = vpack.c.b16 %v1082, %v1077
      %v1298 = vpack.c.b16 %v1083, %v1078
      %v1299 = vpack.c.b16 %v1084, %v1079
      %v1300 = vpack.c.b16 %v1085, %v1080
      %v1301 = vpack.c.b16 %v1091, %v1086
      %v1302 = vpack.c.b16 %v1092, %v1087
      %v1303 = vpack.c.b16 %v1093, %v1088
      %v1304 = vpack.c.b16 %v1094, %v1089
      %v1305 = vpack.c.b16 %v1095, %v1090
      %v1306 = vpack.c.b16 %v1101, %v1096
      %v1307 = vpack.c.b16 %v1102, %v1097
      %v1308 = vpack.c.b16 %v1103, %v1098
      %v1309 = vpack.c.b16 %v1104, %v1099
      %v1310 = vpack.c.b16 %v1105, %v1100
      %v1311 = vpack.c.b16 %v1111, %v1106
      %v1312 = vpack.c.b16 %v1112, %v1107
      %v1313 = vpack.c.b16 %v1113, %v1108
      %v1314 = vpack.c.b16 %v1114, %v1109
      %v1315 = vpack.c.b16 %v1115, %v1110
      %v1316 = vpack.c.b16 %v1121, %v1116
      %v1317 = vpack.c.b16 %v1122, %v1117
      %v1318 = vpack.c.b16 %v1123, %v1118
      %v1319 = vpack.c.b16 %v1124, %v1119
      %v1320 = vpack.c.b16 %v1125, %v1120
      %v1321 = vpack.c.b16 %v1131, %v1126
      %v1322 = vpack.c.b16 %v1132, %v1127
      %v1323 = vpack.c.b16 %v1133, %v1128
      %v1324 = vpack.c.b16 %v1134, %v1129
      %v1325 = vpack.c.b16 %v1135, %v1130
      %v1326 = vpack.c.b16 %v1141, %v1136
      %v1327 = vpack.c.b16 %v1142, %v1137
      %v1328 = vpack.c.b16 %v1143, %v1138
      %v1329 = vpack.c.b16 %v1144, %v1139
      %v1330 = vpack.c.b16 %v1145, %v1140
      %v1331 = vpack.c.b16 %v1151, %v1146
      %v1332 = vpack.c.b16 %v1152, %v1147
      %v1333 = vpack.c.b16 %v1153, %v1148
      %v1334 = vpack.c.b16 %v1154, %v1149
      %v1335 = vpack.c.b16 %v1155, %v1150
      %v1552 = vunpack.c.l.b16 %v508
      %v1553 = vunpack.c.l.b16 %v509
      %v1554 = vunpack.c.l.b16 %v510
      %v1555 = vunpack.c.l.b16 %v511
      %v1556 = vunpack.c.l.b16 %v512
      %v1557 = vunpack.c.l.b16 %v513
      %v1558 = vunpack.c.l.b16 %v514
      %v1559 = vunpack.c.l.b16 %v515
      %v1560 = vunpack.c.l.b16 %v516
      %v1561 = vunpack.c.l.b16 %v517
      %v1562 = vunpack.c.l.b16 %v518
      %v1563 = vunpack.c.l.b16 %v519
      %v1564 = vunpack.c.l.b16 %v520
      %v1565 = vunpack.c.l.b16 %v521
      %v1566 = vunpack.c.l.b16 %v522
      %v1567 = vunpack.c.l.b16 %v523
      %v1568 = vunpack.c.l.b16 %v524
      %v1569 = vunpack.c.l.b16 %v525
      %v1570 = vunpack.c.l.b16 %v526
      %v1571 = vunpack.c.l.b16 %v527
      %v1572 = vunpack.c.l.b16 %v528
      %v1573 = vunpack.c.l.b16 %v529
      %v1574 = vunpack.c.l.b16 %v530
      %v1575 = vunpack.c.l.b16 %v531
      %v1576 = vunpack.c.l.b16 %v532
      %v1577 = vunpack.c.l.b16 %v533
      %v1578 = vunpack.c.l.b16 %v534
      %v1579 = vunpack.c.l.b16 %v535
      %v1580 = vunpack.c.l.b16 %v536
      %v1581 = vunpack.c.l.b16 %v537
      %v1582 = vunpack.c.l.b16 %v538
      %v1583 = vunpack.c.l.b16 %v539
      %v1584 = vunpack.c.l.b16 %v540
      %v1585 = vunpack.c.l.b16 %v541
      %v1586 = vunpack.c.l.b16 %v542
      %v1587 = vunpack.c.l.b16 %v543
      %v1588 = vunpack.c.l.b16 %v544
      %v1589 = vunpack.c.l.b16 %v545
      %v1590 = vunpack.c.l.b16 %v546
      %v1591 = vunpack.c.l.b16 %v547
      %v1592 = vunpack.c.l.b16 %v548
      %v1593 = vunpack.c.l.b16 %v549
      %v1594 = vunpack.c.l.b16 %v550
      %v1595 = vunpack.c.l.b16 %v551
      %v1596 = vunpack.c.l.b16 %v552
      %v1597 = vunpack.c.l.b16 %v553
      %v1598 = vunpack.c.l.b16 %v554
      %v1599 = vunpack.c.l.b16 %v555
      %v1600 = vunpack.c.l.b16 %v556
      %v1601 = vunpack.c.l.b16 %v557
      %v1602 = vunpack.c.l.b16 %v558
      %v1603 = vunpack.c.l.b16 %v559
      %v1604 = vunpack.c.l.b16 %v560
      %v1605 = vunpack.c.l.b16 %v561
      %v1606 = vunpack.c.l.b16 %v562
      %v1607 = vunpack.c.l.b16 %v563
      %v1608 = vunpack.c.l.b16 %v564
      %v1609 = vunpack.c.l.b16 %v565
      %v1610 = vunpack.c.l.b16 %v566
      %v1611 = vunpack.c.l.b16 %v567
      %v1612 = vunpack.c.l.b16 %v568
      %v1613 = vunpack.c.l.b16 %v569
      %v1614 = vunpack.c.l.b16 %v570
      %v1615 = vunpack.c.l.b16 %v571
      %v1616 = vunpack.c.l.b16 %v572
      %v1617 = vunpack.c.l.b16 %v573
      %v1618 = vunpack.c.l.b16 %v574
      %v1619 = vunpack.c.l.b16 %v575
      %v1620 = vunpack.c.l.b16 %v576
      %v1621 = vunpack.c.l.b16 %v577
      %v1622 = vunpack.c.l.b16 %v578
      %v1623 = vunpack.c.l.b16 %v579
      %v1624 = vpack.c.b16 %v1553, %v1552
      %v1625 = vpack.c.b16 %v1555, %v1554
      %v1626 = vpack.c.b16 %v1557, %v1556
      %v1627 = vpack.c.b16 %v1559, %v1558
      %v1628 = vpack.c.b16 %v1561, %v1560
      %v1629 = vpack.c.b16 %v1563, %v1562
      %v1630 = vpack.c.b16 %v1565, %v1564
      %v1631 = vpack.c.b16 %v1567, %v1566
      %v1632 = vpack.c.b16 %v1569, %v1568
      %v1633 = vpack.c.b16 %v1571, %v1570
      %v1634 = vpack.c.b16 %v1573, %v1572
      %v1635 = vpack.c.b16 %v1575, %v1574
      %v1636 = vpack.c.b16 %v1577, %v1576
      %v1637 = vpack.c.b16 %v1579, %v1578
      %v1638 = vpack.c.b16 %v1581, %v1580
      %v1639 = vpack.c.b16 %v1583, %v1582
      %v1640 = vpack.c.b16 %v1585, %v1584
      %v1641 = vpack.c.b16 %v1587, %v1586
      %v1642 = vpack.c.b16 %v1589, %v1588
      %v1643 = vpack.c.b16 %v1591, %v1590
      %v1644 = vpack.c.b16 %v1593, %v1592
      %v1645 = vpack.c.b16 %v1595, %v1594
      %v1646 = vpack.c.b16 %v1597, %v1596
      %v1647 = vpack.c.b16 %v1599, %v1598
      %v1648 = vpack.c.b16 %v1601, %v1600
      %v1649 = vpack.c.b16 %v1603, %v1602
      %v1650 = vpack.c.b16 %v1605, %v1604
      %v1651 = vpack.c.b16 %v1607, %v1606
      %v1652 = vpack.c.b16 %v1609, %v1608
      %v1653 = vpack.c.b16 %v1611, %v1610
      %v1654 = vpack.c.b16 %v1613, %v1612
      %v1655 = vpack.c.b16 %v1615, %v1614
      %v1656 = vpack.c.b16 %v1617, %v1616
      %v1657 = vpack.c.b16 %v1619, %v1618
      %v1658 = vpack.c.b16 %v1621, %v1620
      %v1659 = vpack.c.b16 %v1623, %v1622
      %vm1695 = vcmask 490496
      %v1697 = vsel %vm1695, %v1160, 0
      %v1700 = vsel %vm1695, %v1165, 0
      %v1703 = vsel %vm1695, %v1170, 0
      %v1706 = vsel %vm1695, %v1175, 0
      %v1709 = vsel %vm1695, %v1180, 0
      %v1712 = vsel %vm1695, %v1185, 0
      %v1715 = vsel %vm1695, %v1190, 0
      %v1718 = vsel %vm1695, %v1195, 0
      %v1721 = vsel %vm1695, %v1200, 0
      %v1724 = vsel %vm1695, %v1205, 0
      %v1727 = vsel %vm1695, %v1210, 0
      %v1730 = vsel %vm1695, %v1215, 0
      %v1733 = vsel %vm1695, %v1220, 0
      %v1736 = vsel %vm1695, %v1225, 0
      %v1739 = vsel %vm1695, %v1230, 0
      %v1742 = vsel %vm1695, %v1235, 0
      %v1745 = vsel %vm1695, %v1240, 0
      %v1748 = vsel %vm1695, %v1245, 0
      %v1751 = vsel %vm1695, %v1250, 0
      %v1754 = vsel %vm1695, %v1255, 0
      %v1757 = vsel %vm1695, %v1260, 0
      %v1760 = vsel %vm1695, %v1265, 0
      %v1763 = vsel %vm1695, %v1270, 0
      %v1766 = vsel %vm1695, %v1275, 0
      %v1769 = vsel %vm1695, %v1280, 0
      %v1772 = vsel %vm1695, %v1285, 0
      %v1775 = vsel %vm1695, %v1290, 0
      %v1778 = vsel %vm1695, %v1295, 0
      %v1781 = vsel %vm1695, %v1300, 0
      %v1784 = vsel %vm1695, %v1305, 0
      %v1787 = vsel %vm1695, %v1310, 0
      %v1790 = vsel %vm1695, %v1315, 0
      %v1793 = vsel %vm1695, %v1320, 0
      %v1796 = vsel %vm1695, %v1325, 0
      %v1799 = vsel %vm1695, %v1330, 0
      %v1802 = vsel %vm1695, %v1335, 0
      %vm1804 = vcmask 1045504
      %v1806 = vsel %vm1804, %v1659, 0
      %1808 = vmatprep.subr.bf16.mxu0 0
      %1809 = vmatpush1.bf16.msra.mxu0 %v1624
      %1810 = vmatprep.subr.bf16.mxu0 0
      %1811 = vmatpush1.bf16.msra.mxu0 %v1625
      %1812 = vmatprep.subr.bf16.mxu0 0
      %1813 = vmatpush1.bf16.msra.mxu0 %v1626
      %1814 = vmatprep.subr.bf16.mxu0 0
      %1815 = vmatpush1.bf16.msra.mxu0 %v1627
      %1816 = vmatprep.subr.bf16.mxu0 0
      %1817 = vmatpush1.bf16.msra.mxu0 %v1628
      %1818 = vmatprep.subr.bf16.mxu0 0
      %1819 = vmatpush1.bf16.msra.mxu0 %v1629
      %1820 = vmatprep.subr.bf16.mxu0 0
      %1821 = vmatpush1.bf16.msra.mxu0 %v1630
      %1822 = vmatprep.subr.bf16.mxu0 0
      %1823 = vmatpush1.bf16.msra.mxu0 %v1631
      %1824 = vmatprep.subr.bf16.mxu0 0
      %1825 = vmatpush1.bf16.msra.mxu0 %v1632
      %1826 = vmatprep.subr.bf16.mxu0 0
      %1827 = vmatpush1.bf16.msra.mxu0 %v1633
      %1828 = vmatprep.subr.bf16.mxu0 0
      %1829 = vmatpush1.bf16.msra.mxu0 %v1634
      %1830 = vmatprep.subr.bf16.mxu0 0
      %1831 = vmatpush1.bf16.msra.mxu0 %v1635
      %1832 = vmatprep.subr.bf16.mxu0 0
      %1833 = vmatpush1.bf16.msra.mxu0 %v1636
      %1834 = vmatprep.subr.bf16.mxu0 0
      %1835 = vmatpush1.bf16.msra.mxu0 %v1637
      %1836 = vmatprep.subr.bf16.mxu0 0
      %1837 = vmatpush1.bf16.msra.mxu0 %v1638
      %1838 = vmatprep.subr.bf16.mxu0 0
      %1839 = vmatpush1.bf16.msra.mxu0 %v1639
      %1840 = vmatprep.mubr.bf16.mxu0 %v1157
      %1841 = vmatmul.mubr.bf16.gmra.mrb[0].mxu0 %v1156
      %v1842 = vpop.f32.mrb[0].mxu0
      %v1843 = vadd.f32 0.0, %v1842
      %v1844 = vpop.f32.mrb[0].mxu0
      %v1845 = vpop.f32.mrb[0].mxu0
      %v1846 = vadd.f32 0.0, %v1845
      %v1847 = vpop.f32.mrb[0].mxu0
      %1848 = vmatprep.mubr.bf16.mxu0 %v1162
      %1849 = vmatmul.mubr.bf16.gmra.mrb[0].mxu0 %v1161
      %v1850 = vpop.f32.mrb[0].mxu0
      %v1851 = vadd.f32 0.0, %v1850
      %v1852 = vpop.f32.mrb[0].mxu0
      %v1853 = vpop.f32.mrb[0].mxu0
      %v1854 = vadd.f32 0.0, %v1853
      %v1855 = vpop.f32.mrb[0].mxu0
      %1856 = vmatprep.mubr.bf16.mxu0 %v1167
      %1857 = vmatmul.mubr.bf16.gmra.mrb[0].mxu0 %v1166
      %v1858 = vpop.f32.mrb[0].mxu0
      %v1859 = vadd.f32 0.0, %v1858
      %v1860 = vpop.f32.mrb[0].mxu0
      %v1861 = vpop.f32.mrb[0].mxu0
      %v1862 = vadd.f32 0.0, %v1861
      %v1863 = vpop.f32.mrb[0].mxu0
      %1864 = vmatprep.mubr.bf16.mxu0 %v1172
      %1865 = vmatmul.mubr.bf16.gmra.mrb[0].mxu0 %v1171
      %v1866 = vpop.f32.mrb[0].mxu0
      %v1867 = vadd.f32 0.0, %v1866
      %v1868 = vpop.f32.mrb[0].mxu0
      %v1869 = vpop.f32.mrb[0].mxu0
      %v1870 = vadd.f32 0.0, %v1869
      %v1871 = vpop.f32.mrb[0].mxu0
      %1872 = vmatprep.mubr.bf16.mxu0 %v1177
      %1873 = vmatmul.mubr.bf16.gmra.mrb[0].mxu0 %v1176
      %v1874 = vpop.f32.mrb[0].mxu0
      %v1875 = vadd.f32 0.0, %v1874
      %v1876 = vpop.f32.mrb[0].mxu0
      %v1877 = vpop.f32.mrb[0].mxu0
      %v1878 = vadd.f32 0.0, %v1877
      %v1879 = vpop.f32.mrb[0].mxu0
      %1880 = vmatprep.mubr.bf16.mxu0 %v1182
      %1881 = vmatmul.mubr.bf16.gmra.mrb[0].mxu0 %v1181
      %v1882 = vpop.f32.mrb[0].mxu0
      %v1883 = vadd.f32 0.0, %v1882
      %v1884 = vpop.f32.mrb[0].mxu0
      %v1885 = vpop.f32.mrb[0].mxu0
      %v1886 = vadd.f32 0.0, %v1885
      %v1887 = vpop.f32.mrb[0].mxu0
      %1888 = vmatprep.mubr.bf16.mxu0 %v1187
      %1889 = vmatmul.mubr.bf16.gmra.mrb[0].mxu0 %v1186
      %v1890 = vpop.f32.mrb[0].mxu0
      %v1891 = vadd.f32 0.0, %v1890
      %v1892 = vpop.f32.mrb[0].mxu0
      %v1893 = vpop.f32.mrb[0].mxu0
      %v1894 = vadd.f32 0.0, %v1893
      %v1895 = vpop.f32.mrb[0].mxu0
      %1896 = vmatprep.mubr.bf16.mxu0 %v1192
      %1897 = vmatmul.mubr.bf16.gmra.mrb[0].mxu0 %v1191
      %v1898 = vpop.f32.mrb[0].mxu0
      %v1899 = vadd.f32 0.0, %v1898
      %v1900 = vpop.f32.mrb[0].mxu0
      %v1901 = vpop.f32.mrb[0].mxu0
      %v1902 = vadd.f32 0.0, %v1901
      %v1903 = vpop.f32.mrb[0].mxu0
      %1904 = vmatprep.mubr.bf16.mxu0 %v1197
      %1905 = vmatmul.mubr.bf16.gmra.mrb[0].mxu0 %v1196
      %v1906 = vpop.f32.mrb[0].mxu0
      %v1907 = vadd.f32 0.0, %v1906
      %v1908 = vpop.f32.mrb[0].mxu0
      %v1909 = vpop.f32.mrb[0].mxu0
      %v1910 = vadd.f32 0.0, %v1909
      %v1911 = vpop.f32.mrb[0].mxu0
      %1912 = vmatprep.mubr.bf16.mxu0 %v1202
      %1913 = vmatmul.mubr.bf16.gmra.mrb[0].mxu0 %v1201
      %v1914 = vpop.f32.mrb[0].mxu0
      %v1915 = vadd.f32 0.0, %v1914
      %v1916 = vpop.f32.mrb[0].mxu0
      %v1917 = vpop.f32.mrb[0].mxu0
      %v1918 = vadd.f32 0.0, %v1917
      %v1919 = vpop.f32.mrb[0].mxu0
      %1920 = vmatprep.mubr.bf16.mxu0 %v1207
      %1921 = vmatmul.mubr.bf16.gmra.mrb[0].mxu0 %v1206
      %v1922 = vpop.f32.mrb[0].mxu0
      %v1923 = vadd.f32 0.0, %v1922
      %v1924 = vpop.f32.mrb[0].mxu0
      %v1925 = vpop.f32.mrb[0].mxu0
      %v1926 = vadd.f32 0.0, %v1925
      %v1927 = vpop.f32.mrb[0].mxu0
      %1928 = vmatprep.mubr.bf16.mxu0 %v1212
      %1929 = vmatmul.mubr.bf16.gmra.mrb[0].mxu0 %v1211
      %v1930 = vpop.f32.mrb[0].mxu0
      %v1931 = vadd.f32 0.0, %v1930
      %v1932 = vpop.f32.mrb[0].mxu0
      %v1933 = vpop.f32.mrb[0].mxu0
      %v1934 = vadd.f32 0.0, %v1933
      %v1935 = vpop.f32.mrb[0].mxu0
      %1936 = vmatprep.mubr.bf16.mxu0 %v1217
      %1937 = vmatmul.mubr.bf16.gmra.mrb[0].mxu0 %v1216
      %v1938 = vpop.f32.mrb[0].mxu0
      %v1939 = vadd.f32 0.0, %v1938
      %v1940 = vpop.f32.mrb[0].mxu0
      %v1941 = vpop.f32.mrb[0].mxu0
      %v1942 = vadd.f32 0.0, %v1941
      %v1943 = vpop.f32.mrb[0].mxu0
      %1944 = vmatprep.mubr.bf16.mxu0 %v1222
      %1945 = vmatmul.mubr.bf16.gmra.mrb[0].mxu0 %v1221
      %v1946 = vpop.f32.mrb[0].mxu0
      %v1947 = vadd.f32 0.0, %v1946
      %v1948 = vpop.f32.mrb[0].mxu0
      %v1949 = vpop.f32.mrb[0].mxu0
      %v1950 = vadd.f32 0.0, %v1949
      %v1951 = vpop.f32.mrb[0].mxu0
      %1952 = vmatprep.mubr.bf16.mxu0 %v1227
      %1953 = vmatmul.mubr.bf16.gmra.mrb[0].mxu0 %v1226
      %v1954 = vpop.f32.mrb[0].mxu0
      %v1955 = vadd.f32 0.0, %v1954
      %v1956 = vpop.f32.mrb[0].mxu0
      %v1957 = vpop.f32.mrb[0].mxu0
      %v1958 = vadd.f32 0.0, %v1957
      %v1959 = vpop.f32.mrb[0].mxu0
      %1960 = vmatprep.mubr.bf16.mxu0 %v1232
      %1961 = vmatmul.mubr.bf16.gmra.mrb[0].mxu0 %v1231
      %v1962 = vpop.f32.mrb[0].mxu0
      %v1963 = vadd.f32 0.0, %v1962
      %v1964 = vpop.f32.mrb[0].mxu0
      %v1965 = vpop.f32.mrb[0].mxu0
      %v1966 = vadd.f32 0.0, %v1965
      %v1967 = vpop.f32.mrb[0].mxu0
      %1968 = vmatprep.mubr.bf16.mxu0 %v1237
      %1969 = vmatmul.mubr.bf16.gmra.mrb[0].mxu0 %v1236
      %v1970 = vpop.f32.mrb[0].mxu0
      %v1971 = vadd.f32 0.0, %v1970
      %v1972 = vpop.f32.mrb[0].mxu0
      %v1973 = vpop.f32.mrb[0].mxu0
      %v1974 = vadd.f32 0.0, %v1973
      %v1975 = vpop.f32.mrb[0].mxu0
      %1976 = vmatprep.mubr.bf16.mxu0 %v1242
      %1977 = vmatmul.mubr.bf16.gmra.mrb[0].mxu0 %v1241
      %v1978 = vpop.f32.mrb[0].mxu0
      %v1979 = vadd.f32 0.0, %v1978
      %v1980 = vpop.f32.mrb[0].mxu0
      %v1981 = vpop.f32.mrb[0].mxu0
      %v1982 = vadd.f32 0.0, %v1981
      %v1983 = vpop.f32.mrb[0].mxu0
      %1984 = vmatprep.mubr.bf16.mxu0 %v1247
      %1985 = vmatmul.mubr.bf16.gmra.mrb[0].mxu0 %v1246
      %v1986 = vpop.f32.mrb[0].mxu0
      %v1987 = vadd.f32 0.0, %v1986
      %v1988 = vpop.f32.mrb[0].mxu0
      %v1989 = vpop.f32.mrb[0].mxu0
      %v1990 = vadd.f32 0.0, %v1989
      %v1991 = vpop.f32.mrb[0].mxu0
      %1992 = vmatprep.mubr.bf16.mxu0 %v1252
      %1993 = vmatmul.mubr.bf16.gmra.mrb[0].mxu0 %v1251
      %v1994 = vpop.f32.mrb[0].mxu0
      %v1995 = vadd.f32 0.0, %v1994
      %v1996 = vpop.f32.mrb[0].mxu0
      %v1997 = vpop.f32.mrb[0].mxu0
      %v1998 = vadd.f32 0.0, %v1997
      %v1999 = vpop.f32.mrb[0].mxu0
      %2000 = vmatprep.mubr.bf16.mxu0 %v1257
      %2001 = vmatmul.mubr.bf16.gmra.mrb[0].mxu0 %v1256
      %v2002 = vpop.f32.mrb[0].mxu0
      %v2003 = vadd.f32 0.0, %v2002
      %v2004 = vpop.f32.mrb[0].mxu0
      %v2005 = vpop.f32.mrb[0].mxu0
      %v2006 = vadd.f32 0.0, %v2005
      %v2007 = vpop.f32.mrb[0].mxu0
      %2008 = vmatprep.mubr.bf16.mxu0 %v1262
      %2009 = vmatmul.mubr.bf16.gmra.mrb[0].mxu0 %v1261
      %v2010 = vpop.f32.mrb[0].mxu0
      %v2011 = vadd.f32 0.0, %v2010
      %v2012 = vpop.f32.mrb[0].mxu0
      %v2013 = vpop.f32.mrb[0].mxu0
      %v2014 = vadd.f32 0.0, %v2013
      %v2015 = vpop.f32.mrb[0].mxu0
      %2016 = vmatprep.mubr.bf16.mxu0 %v1267
      %2017 = vmatmul.mubr.bf16.gmra.mrb[0].mxu0 %v1266
      %v2018 = vpop.f32.mrb[0].mxu0
      %v2019 = vadd.f32 0.0, %v2018
      %v2020 = vpop.f32.mrb[0].mxu0
      %v2021 = vpop.f32.mrb[0].mxu0
      %v2022 = vadd.f32 0.0, %v2021
      %v2023 = vpop.f32.mrb[0].mxu0
      %2024 = vmatprep.mubr.bf16.mxu0 %v1272
      %2025 = vmatmul.mubr.bf16.gmra.mrb[0].mxu0 %v1271
      %v2026 = vpop.f32.mrb[0].mxu0
      %v2027 = vadd.f32 0.0, %v2026
      %v2028 = vpop.f32.mrb[0].mxu0
      %v2029 = vpop.f32.mrb[0].mxu0
      %v2030 = vadd.f32 0.0, %v2029
      %v2031 = vpop.f32.mrb[0].mxu0
      %2032 = vmatprep.mubr.bf16.mxu0 %v1277
      %2033 = vmatmul.mubr.bf16.gmra.mrb[0].mxu0 %v1276
      %v2034 = vpop.f32.mrb[0].mxu0
      %v2035 = vadd.f32 0.0, %v2034
      %v2036 = vpop.f32.mrb[0].mxu0
      %v2037 = vpop.f32.mrb[0].mxu0
      %v2038 = vadd.f32 0.0, %v2037
      %v2039 = vpop.f32.mrb[0].mxu0
      %2040 = vmatprep.mubr.bf16.mxu0 %v1282
      %2041 = vmatmul.mubr.bf16.gmra.mrb[0].mxu0 %v1281
      %v2042 = vpop.f32.mrb[0].mxu0
      %v2043 = vadd.f32 0.0, %v2042
      %v2044 = vpop.f32.mrb[0].mxu0
      %v2045 = vpop.f32.mrb[0].mxu0
      %v2046 = vadd.f32 0.0, %v2045
      %v2047 = vpop.f32.mrb[0].mxu0
      %2048 = vmatprep.mubr.bf16.mxu0 %v1287
      %2049 = vmatmul.mubr.bf16.gmra.mrb[0].mxu0 %v1286
      %v2050 = vpop.f32.mrb[0].mxu0
      %v2051 = vadd.f32 0.0, %v2050
      %v2052 = vpop.f32.mrb[0].mxu0
      %v2053 = vpop.f32.mrb[0].mxu0
      %v2054 = vadd.f32 0.0, %v2053
      %v2055 = vpop.f32.mrb[0].mxu0
      %2056 = vmatprep.mubr.bf16.mxu0 %v1292
      %2057 = vmatmul.mubr.bf16.gmra.mrb[0].mxu0 %v1291
      %v2058 = vpop.f32.mrb[0].mxu0
      %v2059 = vadd.f32 0.0, %v2058
      %v2060 = vpop.f32.mrb[0].mxu0
      %v2061 = vpop.f32.mrb[0].mxu0
      %v2062 = vadd.f32 0.0, %v2061
      %v2063 = vpop.f32.mrb[0].mxu0
      %2064 = vmatprep.mubr.bf16.mxu0 %v1297
      %2065 = vmatmul.mubr.bf16.gmra.mrb[0].mxu0 %v1296
      %v2066 = vpop.f32.mrb[0].mxu0
      %v2067 = vadd.f32 0.0, %v2066
      %v2068 = vpop.f32.mrb[0].mxu0
      %v2069 = vpop.f32.mrb[0].mxu0
      %v2070 = vadd.f32 0.0, %v2069
      %v2071 = vpop.f32.mrb[0].mxu0
      %2072 = vmatprep.mubr.bf16.mxu0 %v1302
      %2073 = vmatmul.mubr.bf16.gmra.mrb[0].mxu0 %v1301
      %v2074 = vpop.f32.mrb[0].mxu0
      %v2075 = vadd.f32 0.0, %v2074
      %v2076 = vpop.f32.mrb[0].mxu0
      %v2077 = vpop.f32.mrb[0].mxu0
      %v2078 = vadd.f32 0.0, %v2077
      %v2079 = vpop.f32.mrb[0].mxu0
      %2080 = vmatprep.mubr.bf16.mxu0 %v1307
      %2081 = vmatmul.mubr.bf16.gmra.mrb[0].mxu0 %v1306
      %v2082 = vpop.f32.mrb[0].mxu0
      %v2083 = vadd.f32 0.0, %v2082
      %v2084 = vpop.f32.mrb[0].mxu0
      %v2085 = vpop.f32.mrb[0].mxu0
      %v2086 = vadd.f32 0.0, %v2085
      %v2087 = vpop.f32.mrb[0].mxu0
      %2088 = vmatprep.mubr.bf16.mxu0 %v1312
      %2089 = vmatmul.mubr.bf16.gmra.mrb[0].mxu0 %v1311
      %v2090 = vpop.f32.mrb[0].mxu0
      %v2091 = vadd.f32 0.0, %v2090
      %v2092 = vpop.f32.mrb[0].mxu0
      %v2093 = vpop.f32.mrb[0].mxu0
      %v2094 = vadd.f32 0.0, %v2093
      %v2095 = vpop.f32.mrb[0].mxu0
      %2096 = vmatprep.mubr.bf16.mxu0 %v1317
      %2097 = vmatmul.mubr.bf16.gmra.mrb[0].mxu0 %v1316
      %v2098 = vpop.f32.mrb[0].mxu0
      %v2099 = vadd.f32 0.0, %v2098
      %v2100 = vpop.f32.mrb[0].mxu0
      %v2101 = vpop.f32.mrb[0].mxu0
      %v2102 = vadd.f32 0.0, %v2101
      %v2103 = vpop.f32.mrb[0].mxu0
      %2104 = vmatprep.mubr.bf16.mxu0 %v1322
      %2105 = vmatmul.mubr.bf16.gmra.mrb[0].mxu0 %v1321
      %v2106 = vpop.f32.mrb[0].mxu0
      %v2107 = vadd.f32 0.0, %v2106
      %v2108 = vpop.f32.mrb[0].mxu0
      %v2109 = vpop.f32.mrb[0].mxu0
      %v2110 = vadd.f32 0.0, %v2109
      %v2111 = vpop.f32.mrb[0].mxu0
      %2112 = vmatprep.mubr.bf16.mxu0 %v1327
      %2113 = vmatmul.mubr.bf16.gmra.mrb[0].mxu0 %v1326
      %v2114 = vpop.f32.mrb[0].mxu0
      %v2115 = vadd.f32 0.0, %v2114
      %v2116 = vpop.f32.mrb[0].mxu0
      %v2117 = vpop.f32.mrb[0].mxu0
      %v2118 = vadd.f32 0.0, %v2117
      %v2119 = vpop.f32.mrb[0].mxu0
      %2120 = vmatprep.mubr.bf16.mxu0 %v1332
      %2121 = vmatmul.mubr.bf16.gmra.mrb[0].mxu0 %v1331
      %v2122 = vpop.f32.mrb[0].mxu0
      %v2123 = vadd.f32 0.0, %v2122
      %v2124 = vpop.f32.mrb[0].mxu0
      %v2125 = vpop.f32.mrb[0].mxu0
      %v2126 = vadd.f32 0.0, %v2125
      %v2127 = vpop.f32.mrb[0].mxu0
      %2128 = vdwg.mxu0
      %2129 = vmatprep.subr.bf16.mxu0 0
      %2130 = vmatpush1.bf16.msra.mxu0 %v1640
      %2131 = vmatprep.subr.bf16.mxu0 0
      %2132 = vmatpush1.bf16.msra.mxu0 %v1641
      %2133 = vmatprep.subr.bf16.mxu0 0
      %2134 = vmatpush1.bf16.msra.mxu0 %v1642
      %2135 = vmatprep.subr.bf16.mxu0 0
      %2136 = vmatpush1.bf16.msra.mxu0 %v1643
      %2137 = vmatprep.subr.bf16.mxu0 0
      %2138 = vmatpush1.bf16.msra.mxu0 %v1644
      %2139 = vmatprep.subr.bf16.mxu0 0
      %2140 = vmatpush1.bf16.msra.mxu0 %v1645
      %2141 = vmatprep.subr.bf16.mxu0 0
      %2142 = vmatpush1.bf16.msra.mxu0 %v1646
      %2143 = vmatprep.subr.bf16.mxu0 0
      %2144 = vmatpush1.bf16.msra.mxu0 %v1647
      %2145 = vmatprep.subr.bf16.mxu0 0
      %2146 = vmatpush1.bf16.msra.mxu0 %v1648
      %2147 = vmatprep.subr.bf16.mxu0 0
      %2148 = vmatpush1.bf16.msra.mxu0 %v1649
      %2149 = vmatprep.subr.bf16.mxu0 0
      %2150 = vmatpush1.bf16.msra.mxu0 %v1650
      %2151 = vmatprep.subr.bf16.mxu0 0
      %2152 = vmatpush1.bf16.msra.mxu0 %v1651
      %2153 = vmatprep.subr.bf16.mxu0 0
      %2154 = vmatpush1.bf16.msra.mxu0 %v1652
      %2155 = vmatprep.subr.bf16.mxu0 0
      %2156 = vmatpush1.bf16.msra.mxu0 %v1653
      %2157 = vmatprep.subr.bf16.mxu0 0
      %2158 = vmatpush1.bf16.msra.mxu0 %v1654
      %2159 = vmatprep.subr.bf16.mxu0 0
      %2160 = vmatpush1.bf16.msra.mxu0 %v1655
      %2161 = vmatprep.mubr.bf16.mxu0 %v1159
      %2162 = vmatmul.mubr.bf16.gmra.mrb[0].mxu0 %v1158
      %v2163 = vpop.f32.mrb[0].mxu0
      %v2164 = vadd.f32 %v1843, %v2163
      %v2165 = vpop.f32.mrb[0].mxu0
      %v2166 = vpop.f32.mrb[0].mxu0
      %v2167 = vadd.f32 %v1846, %v2166
      %v2168 = vpop.f32.mrb[0].mxu0
      %2169 = vmatprep.mubr.bf16.mxu0 %v1164
      %2170 = vmatmul.mubr.bf16.gmra.mrb[0].mxu0 %v1163
      %v2171 = vpop.f32.mrb[0].mxu0
      %v2172 = vadd.f32 %v1851, %v2171
      %v2173 = vpop.f32.mrb[0].mxu0
      %v2174 = vpop.f32.mrb[0].mxu0
      %v2175 = vadd.f32 %v1854, %v2174
      %v2176 = vpop.f32.mrb[0].mxu0
      %2177 = vmatprep.mubr.bf16.mxu0 %v1169
      %2178 = vmatmul.mubr.bf16.gmra.mrb[0].mxu0 %v1168
      %v2179 = vpop.f32.mrb[0].mxu0
      %v2180 = vadd.f32 %v1859, %v2179
      %v2181 = vpop.f32.mrb[0].mxu0
      %v2182 = vpop.f32.mrb[0].mxu0
      %v2183 = vadd.f32 %v1862, %v2182
      %v2184 = vpop.f32.mrb[0].mxu0
      %2185 = vmatprep.mubr.bf16.mxu0 %v1174
      %2186 = vmatmul.mubr.bf16.gmra.mrb[0].mxu0 %v1173
      %v2187 = vpop.f32.mrb[0].mxu0
      %v2188 = vadd.f32 %v1867, %v2187
      %v2189 = vpop.f32.mrb[0].mxu0
      %v2190 = vpop.f32.mrb[0].mxu0
      %v2191 = vadd.f32 %v1870, %v2190
      %v2192 = vpop.f32.mrb[0].mxu0
      %2193 = vmatprep.mubr.bf16.mxu0 %v1179
      %2194 = vmatmul.mubr.bf16.gmra.mrb[0].mxu0 %v1178
      %v2195 = vpop.f32.mrb[0].mxu0
      %v2196 = vadd.f32 %v1875, %v2195
      %v2197 = vpop.f32.mrb[0].mxu0
      %v2198 = vpop.f32.mrb[0].mxu0
      %v2199 = vadd.f32 %v1878, %v2198
      %v2200 = vpop.f32.mrb[0].mxu0
      %2201 = vmatprep.mubr.bf16.mxu0 %v1184
      %2202 = vmatmul.mubr.bf16.gmra.mrb[0].mxu0 %v1183
      %v2203 = vpop.f32.mrb[0].mxu0
      %v2204 = vadd.f32 %v1883, %v2203
      %v2205 = vpop.f32.mrb[0].mxu0
      %v2206 = vpop.f32.mrb[0].mxu0
      %v2207 = vadd.f32 %v1886, %v2206
      %v2208 = vpop.f32.mrb[0].mxu0
      %2209 = vmatprep.mubr.bf16.mxu0 %v1189
      %2210 = vmatmul.mubr.bf16.gmra.mrb[0].mxu0 %v1188
      %v2211 = vpop.f32.mrb[0].mxu0
      %v2212 = vadd.f32 %v1891, %v2211
      %v2213 = vpop.f32.mrb[0].mxu0
      %v2214 = vpop.f32.mrb[0].mxu0
      %v2215 = vadd.f32 %v1894, %v2214
      %v2216 = vpop.f32.mrb[0].mxu0
      %2217 = vmatprep.mubr.bf16.mxu0 %v1194
      %2218 = vmatmul.mubr.bf16.gmra.mrb[0].mxu0 %v1193
      %v2219 = vpop.f32.mrb[0].mxu0
      %v2220 = vadd.f32 %v1899, %v2219
      %v2221 = vpop.f32.mrb[0].mxu0
      %v2222 = vpop.f32.mrb[0].mxu0
      %v2223 = vadd.f32 %v1902, %v2222
      %v2224 = vpop.f32.mrb[0].mxu0
      %2225 = vmatprep.mubr.bf16.mxu0 %v1199
      %2226 = vmatmul.mubr.bf16.gmra.mrb[0].mxu0 %v1198
      %v2227 = vpop.f32.mrb[0].mxu0
      %v2228 = vadd.f32 %v1907, %v2227
      %v2229 = vpop.f32.mrb[0].mxu0
      %v2230 = vpop.f32.mrb[0].mxu0
      %v2231 = vadd.f32 %v1910, %v2230
      %v2232 = vpop.f32.mrb[0].mxu0
      %2233 = vmatprep.mubr.bf16.mxu0 %v1204
      %2234 = vmatmul.mubr.bf16.gmra.mrb[0].mxu0 %v1203
      %v2235 = vpop.f32.mrb[0].mxu0
      %v2236 = vadd.f32 %v1915, %v2235
      %v2237 = vpop.f32.mrb[0].mxu0
      %v2238 = vpop.f32.mrb[0].mxu0
      %v2239 = vadd.f32 %v1918, %v2238
      %v2240 = vpop.f32.mrb[0].mxu0
      %2241 = vmatprep.mubr.bf16.mxu0 %v1209
      %2242 = vmatmul.mubr.bf16.gmra.mrb[0].mxu0 %v1208
      %v2243 = vpop.f32.mrb[0].mxu0
      %v2244 = vadd.f32 %v1923, %v2243
      %v2245 = vpop.f32.mrb[0].mxu0
      %v2246 = vpop.f32.mrb[0].mxu0
      %v2247 = vadd.f32 %v1926, %v2246
      %v2248 = vpop.f32.mrb[0].mxu0
      %2249 = vmatprep.mubr.bf16.mxu0 %v1214
      %2250 = vmatmul.mubr.bf16.gmra.mrb[0].mxu0 %v1213
      %v2251 = vpop.f32.mrb[0].mxu0
      %v2252 = vadd.f32 %v1931, %v2251
      %v2253 = vpop.f32.mrb[0].mxu0
      %v2254 = vpop.f32.mrb[0].mxu0
      %v2255 = vadd.f32 %v1934, %v2254
      %v2256 = vpop.f32.mrb[0].mxu0
      %2257 = vmatprep.mubr.bf16.mxu0 %v1219
      %2258 = vmatmul.mubr.bf16.gmra.mrb[0].mxu0 %v1218
      %v2259 = vpop.f32.mrb[0].mxu0
      %v2260 = vadd.f32 %v1939, %v2259
      %v2261 = vpop.f32.mrb[0].mxu0
      %v2262 = vpop.f32.mrb[0].mxu0
      %v2263 = vadd.f32 %v1942, %v2262
      %v2264 = vpop.f32.mrb[0].mxu0
      %2265 = vmatprep.mubr.bf16.mxu0 %v1224
      %2266 = vmatmul.mubr.bf16.gmra.mrb[0].mxu0 %v1223
      %v2267 = vpop.f32.mrb[0].mxu0
      %v2268 = vadd.f32 %v1947, %v2267
      %v2269 = vpop.f32.mrb[0].mxu0
      %v2270 = vpop.f32.mrb[0].mxu0
      %v2271 = vadd.f32 %v1950, %v2270
      %v2272 = vpop.f32.mrb[0].mxu0
      %2273 = vmatprep.mubr.bf16.mxu0 %v1229
      %2274 = vmatmul.mubr.bf16.gmra.mrb[0].mxu0 %v1228
      %v2275 = vpop.f32.mrb[0].mxu0
      %v2276 = vadd.f32 %v1955, %v2275
      %v2277 = vpop.f32.mrb[0].mxu0
      %v2278 = vpop.f32.mrb[0].mxu0
      %v2279 = vadd.f32 %v1958, %v2278
      %v2280 = vpop.f32.mrb[0].mxu0
      %2281 = vmatprep.mubr.bf16.mxu0 %v1234
      %2282 = vmatmul.mubr.bf16.gmra.mrb[0].mxu0 %v1233
      %v2283 = vpop.f32.mrb[0].mxu0
      %v2284 = vadd.f32 %v1963, %v2283
      %v2285 = vpop.f32.mrb[0].mxu0
      %v2286 = vpop.f32.mrb[0].mxu0
      %v2287 = vadd.f32 %v1966, %v2286
      %v2288 = vpop.f32.mrb[0].mxu0
      %2289 = vmatprep.mubr.bf16.mxu0 %v1239
      %2290 = vmatmul.mubr.bf16.gmra.mrb[0].mxu0 %v1238
      %v2291 = vpop.f32.mrb[0].mxu0
      %v2292 = vadd.f32 %v1971, %v2291
      %v2293 = vpop.f32.mrb[0].mxu0
      %v2294 = vpop.f32.mrb[0].mxu0
      %v2295 = vadd.f32 %v1974, %v2294
      %v2296 = vpop.f32.mrb[0].mxu0
      %2297 = vmatprep.mubr.bf16.mxu0 %v1244
      %2298 = vmatmul.mubr.bf16.gmra.mrb[0].mxu0 %v1243
      %v2299 = vpop.f32.mrb[0].mxu0
      %v2300 = vadd.f32 %v1979, %v2299
      %v2301 = vpop.f32.mrb[0].mxu0
      %v2302 = vpop.f32.mrb[0].mxu0
      %v2303 = vadd.f32 %v1982, %v2302
      %v2304 = vpop.f32.mrb[0].mxu0
      %2305 = vmatprep.mubr.bf16.mxu0 %v1249
      %2306 = vmatmul.mubr.bf16.gmra.mrb[0].mxu0 %v1248
      %v2307 = vpop.f32.mrb[0].mxu0
      %v2308 = vadd.f32 %v1987, %v2307
      %v2309 = vpop.f32.mrb[0].mxu0
      %v2310 = vpop.f32.mrb[0].mxu0
      %v2311 = vadd.f32 %v1990, %v2310
      %v2312 = vpop.f32.mrb[0].mxu0
      %2313 = vmatprep.mubr.bf16.mxu0 %v1254
      %2314 = vmatmul.mubr.bf16.gmra.mrb[0].mxu0 %v1253
      %v2315 = vpop.f32.mrb[0].mxu0
      %v2316 = vadd.f32 %v1995, %v2315
      %v2317 = vpop.f32.mrb[0].mxu0
      %v2318 = vpop.f32.mrb[0].mxu0
      %v2319 = vadd.f32 %v1998, %v2318
      %v2320 = vpop.f32.mrb[0].mxu0
      %2321 = vmatprep.mubr.bf16.mxu0 %v1259
      %2322 = vmatmul.mubr.bf16.gmra.mrb[0].mxu0 %v1258
      %v2323 = vpop.f32.mrb[0].mxu0
      %v2324 = vadd.f32 %v2003, %v2323
      %v2325 = vpop.f32.mrb[0].mxu0
      %v2326 = vpop.f32.mrb[0].mxu0
      %v2327 = vadd.f32 %v2006, %v2326
      %v2328 = vpop.f32.mrb[0].mxu0
      %2329 = vmatprep.mubr.bf16.mxu0 %v1264
      %2330 = vmatmul.mubr.bf16.gmra.mrb[0].mxu0 %v1263
      %v2331 = vpop.f32.mrb[0].mxu0
      %v2332 = vadd.f32 %v2011, %v2331
      %v2333 = vpop.f32.mrb[0].mxu0
      %v2334 = vpop.f32.mrb[0].mxu0
      %v2335 = vadd.f32 %v2014, %v2334
      %v2336 = vpop.f32.mrb[0].mxu0
      %2337 = vmatprep.mubr.bf16.mxu0 %v1269
      %2338 = vmatmul.mubr.bf16.gmra.mrb[0].mxu0 %v1268
      %v2339 = vpop.f32.mrb[0].mxu0
      %v2340 = vadd.f32 %v2019, %v2339
      %v2341 = vpop.f32.mrb[0].mxu0
      %v2342 = vpop.f32.mrb[0].mxu0
      %v2343 = vadd.f32 %v2022, %v2342
      %v2344 = vpop.f32.mrb[0].mxu0
      %2345 = vmatprep.mubr.bf16.mxu0 %v1274
      %2346 = vmatmul.mubr.bf16.gmra.mrb[0].mxu0 %v1273
      %v2347 = vpop.f32.mrb[0].mxu0
      %v2348 = vadd.f32 %v2027, %v2347
      %v2349 = vpop.f32.mrb[0].mxu0
      %v2350 = vpop.f32.mrb[0].mxu0
      %v2351 = vadd.f32 %v2030, %v2350
      %v2352 = vpop.f32.mrb[0].mxu0
      %2353 = vmatprep.mubr.bf16.mxu0 %v1279
      %2354 = vmatmul.mubr.bf16.gmra.mrb[0].mxu0 %v1278
      %v2355 = vpop.f32.mrb[0].mxu0
      %v2356 = vadd.f32 %v2035, %v2355
      %v2357 = vpop.f32.mrb[0].mxu0
      %v2358 = vpop.f32.mrb[0].mxu0
      %v2359 = vadd.f32 %v2038, %v2358
      %v2360 = vpop.f32.mrb[0].mxu0
      %2361 = vmatprep.mubr.bf16.mxu0 %v1284
      %2362 = vmatmul.mubr.bf16.gmra.mrb[0].mxu0 %v1283
      %v2363 = vpop.f32.mrb[0].mxu0
      %v2364 = vadd.f32 %v2043, %v2363
      %v2365 = vpop.f32.mrb[0].mxu0
      %v2366 = vpop.f32.mrb[0].mxu0
      %v2367 = vadd.f32 %v2046, %v2366
      %v2368 = vpop.f32.mrb[0].mxu0
      %2369 = vmatprep.mubr.bf16.mxu0 %v1289
      %2370 = vmatmul.mubr.bf16.gmra.mrb[0].mxu0 %v1288
      %v2371 = vpop.f32.mrb[0].mxu0
      %v2372 = vadd.f32 %v2051, %v2371
      %v2373 = vpop.f32.mrb[0].mxu0
      %v2374 = vpop.f32.mrb[0].mxu0
      %v2375 = vadd.f32 %v2054, %v2374
      %v2376 = vpop.f32.mrb[0].mxu0
      %2377 = vmatprep.mubr.bf16.mxu0 %v1294
      %2378 = vmatmul.mubr.bf16.gmra.mrb[0].mxu0 %v1293
      %v2379 = vpop.f32.mrb[0].mxu0
      %v2380 = vadd.f32 %v2059, %v2379
      %v2381 = vpop.f32.mrb[0].mxu0
      %v2382 = vpop.f32.mrb[0].mxu0
      %v2383 = vadd.f32 %v2062, %v2382
      %v2384 = vpop.f32.mrb[0].mxu0
      %2385 = vmatprep.mubr.bf16.mxu0 %v1299
      %2386 = vmatmul.mubr.bf16.gmra.mrb[0].mxu0 %v1298
      %v2387 = vpop.f32.mrb[0].mxu0
      %v2388 = vadd.f32 %v2067, %v2387
      %v2389 = vpop.f32.mrb[0].mxu0
      %v2390 = vpop.f32.mrb[0].mxu0
      %v2391 = vadd.f32 %v2070, %v2390
      %v2392 = vpop.f32.mrb[0].mxu0
      %2393 = vmatprep.mubr.bf16.mxu0 %v1304
      %2394 = vmatmul.mubr.bf16.gmra.mrb[0].mxu0 %v1303
      %v2395 = vpop.f32.mrb[0].mxu0
      %v2396 = vadd.f32 %v2075, %v2395
      %v2397 = vpop.f32.mrb[0].mxu0
      %v2398 = vpop.f32.mrb[0].mxu0
      %v2399 = vadd.f32 %v2078, %v2398
      %v2400 = vpop.f32.mrb[0].mxu0
      %2401 = vmatprep.mubr.bf16.mxu0 %v1309
      %2402 = vmatmul.mubr.bf16.gmra.mrb[0].mxu0 %v1308
      %v2403 = vpop.f32.mrb[0].mxu0
      %v2404 = vadd.f32 %v2083, %v2403
      %v2405 = vpop.f32.mrb[0].mxu0
      %v2406 = vpop.f32.mrb[0].mxu0
      %v2407 = vadd.f32 %v2086, %v2406
      %v2408 = vpop.f32.mrb[0].mxu0
      %2409 = vmatprep.mubr.bf16.mxu0 %v1314
      %2410 = vmatmul.mubr.bf16.gmra.mrb[0].mxu0 %v1313
      %v2411 = vpop.f32.mrb[0].mxu0
      %v2412 = vadd.f32 %v2091, %v2411
      %v2413 = vpop.f32.mrb[0].mxu0
      %v2414 = vpop.f32.mrb[0].mxu0
      %v2415 = vadd.f32 %v2094, %v2414
      %v2416 = vpop.f32.mrb[0].mxu0
      %2417 = vmatprep.mubr.bf16.mxu0 %v1319
      %2418 = vmatmul.mubr.bf16.gmra.mrb[0].mxu0 %v1318
      %v2419 = vpop.f32.mrb[0].mxu0
      %v2420 = vadd.f32 %v2099, %v2419
      %v2421 = vpop.f32.mrb[0].mxu0
      %v2422 = vpop.f32.mrb[0].mxu0
      %v2423 = vadd.f32 %v2102, %v2422
      %v2424 = vpop.f32.mrb[0].mxu0
      %2425 = vmatprep.mubr.bf16.mxu0 %v1324
      %2426 = vmatmul.mubr.bf16.gmra.mrb[0].mxu0 %v1323
      %v2427 = vpop.f32.mrb[0].mxu0
      %v2428 = vadd.f32 %v2107, %v2427
      %v2429 = vpop.f32.mrb[0].mxu0
      %v2430 = vpop.f32.mrb[0].mxu0
      %v2431 = vadd.f32 %v2110, %v2430
      %v2432 = vpop.f32.mrb[0].mxu0
      %2433 = vmatprep.mubr.bf16.mxu0 %v1329
      %2434 = vmatmul.mubr.bf16.gmra.mrb[0].mxu0 %v1328
      %v2435 = vpop.f32.mrb[0].mxu0
      %v2436 = vadd.f32 %v2115, %v2435
      %v2437 = vpop.f32.mrb[0].mxu0
      %v2438 = vpop.f32.mrb[0].mxu0
      %v2439 = vadd.f32 %v2118, %v2438
      %v2440 = vpop.f32.mrb[0].mxu0
      %2441 = vmatprep.mubr.bf16.mxu0 %v1334
      %2442 = vmatmul.mubr.bf16.gmra.mrb[0].mxu0 %v1333
      %v2443 = vpop.f32.mrb[0].mxu0
      %v2444 = vadd.f32 %v2123, %v2443
      %v2445 = vpop.f32.mrb[0].mxu0
      %v2446 = vpop.f32.mrb[0].mxu0
      %v2447 = vadd.f32 %v2126, %v2446
      %v2448 = vpop.f32.mrb[0].mxu0
      %2449 = vdwg.mxu0
      %2450 = vmatprep.subr.bf16.mxu0 0
      %2451 = vmatpush1.bf16.msra.mxu0 %v1656
      %2452 = vmatprep.subr.bf16.mxu0 0
      %2453 = vmatpush1.bf16.msra.mxu0 %v1657
      %2454 = vmatprep.subr.bf16.mxu0 0
      %2455 = vmatpush1.bf16.msra.mxu0 %v1658
      %2456 = vmatprep.subr.bf16.mxu0 0
      %2457 = vmatpush1.bf16.msra.mxu0 %v1806
      %2458 = vmatprep.subr.bf16.mxu0 0
      %2459 = vmatpush1.bf16.msra.mxu0 0
      %2460 = vmatprep.subr.bf16.mxu0 0
      %2461 = vmatpush1.bf16.msra.mxu0 0
      %2462 = vmatprep.subr.bf16.mxu0 0
      %2463 = vmatpush1.bf16.msra.mxu0 0
      %2464 = vmatprep.subr.bf16.mxu0 0
      %2465 = vmatpush1.bf16.msra.mxu0 0
      %2466 = vmatprep.subr.bf16.mxu0 0
      %2467 = vmatpush1.bf16.msra.mxu0 0
      %2468 = vmatprep.subr.bf16.mxu0 0
      %2469 = vmatpush1.bf16.msra.mxu0 0
      %2470 = vmatprep.subr.bf16.mxu0 0
      %2471 = vmatpush1.bf16.msra.mxu0 0
      %2472 = vmatprep.subr.bf16.mxu0 0
      %2473 = vmatpush1.bf16.msra.mxu0 0
      %2474 = vmatprep.subr.bf16.mxu0 0
      %2475 = vmatpush1.bf16.msra.mxu0 0
      %2476 = vmatprep.subr.bf16.mxu0 0
      %2477 = vmatpush1.bf16.msra.mxu0 0
      %2478 = vmatprep.subr.bf16.mxu0 0
      %2479 = vmatpush1.bf16.msra.mxu0 0
      %2480 = vmatprep.subr.bf16.mxu0 0
      %2481 = vmatpush1.bf16.msra.mxu0 0
      %2482 = vmatprep.mubr.bf16.mxu0 0
      %2483 = vmatmul.mubr.bf16.gmra.mrb[0].mxu0 %v1697
      %v2484 = vpop.f32.mrb[0].mxu0
      %v2485 = vadd.f32 %v2164, %v2484
      %v2486 = vpop.f32.mrb[0].mxu0
      %v2487 = vpop.f32.mrb[0].mxu0
      %v2488 = vadd.f32 %v2167, %v2487
      %v2489 = vpop.f32.mrb[0].mxu0
      %2490 = vmatprep.mubr.bf16.mxu0 0
      %2491 = vmatmul.mubr.bf16.gmra.mrb[0].mxu0 %v1700
      %v2492 = vpop.f32.mrb[0].mxu0
      %v2493 = vadd.f32 %v2172, %v2492
      %v2494 = vpop.f32.mrb[0].mxu0
      %v2495 = vpop.f32.mrb[0].mxu0
      %v2496 = vadd.f32 %v2175, %v2495
      %v2497 = vpop.f32.mrb[0].mxu0
      %2498 = vmatprep.mubr.bf16.mxu0 0
      %2499 = vmatmul.mubr.bf16.gmra.mrb[0].mxu0 %v1703
      %v2500 = vpop.f32.mrb[0].mxu0
      %v2501 = vadd.f32 %v2180, %v2500
      %v2502 = vpop.f32.mrb[0].mxu0
      %v2503 = vpop.f32.mrb[0].mxu0
      %v2504 = vadd.f32 %v2183, %v2503
      %v2505 = vpop.f32.mrb[0].mxu0
      %2506 = vmatprep.mubr.bf16.mxu0 0
      %2507 = vmatmul.mubr.bf16.gmra.mrb[0].mxu0 %v1706
      %v2508 = vpop.f32.mrb[0].mxu0
      %v2509 = vadd.f32 %v2188, %v2508
      %v2510 = vpop.f32.mrb[0].mxu0
      %v2511 = vpop.f32.mrb[0].mxu0
      %v2512 = vadd.f32 %v2191, %v2511
      %v2513 = vpop.f32.mrb[0].mxu0
      %2514 = vmatprep.mubr.bf16.mxu0 0
      %2515 = vmatmul.mubr.bf16.gmra.mrb[0].mxu0 %v1709
      %v2516 = vpop.f32.mrb[0].mxu0
      %v2517 = vadd.f32 %v2196, %v2516
      %v2518 = vpop.f32.mrb[0].mxu0
      %v2519 = vpop.f32.mrb[0].mxu0
      %v2520 = vadd.f32 %v2199, %v2519
      %v2521 = vpop.f32.mrb[0].mxu0
      %2522 = vmatprep.mubr.bf16.mxu0 0
      %2523 = vmatmul.mubr.bf16.gmra.mrb[0].mxu0 %v1712
      %v2524 = vpop.f32.mrb[0].mxu0
      %v2525 = vadd.f32 %v2204, %v2524
      %v2526 = vpop.f32.mrb[0].mxu0
      %v2527 = vpop.f32.mrb[0].mxu0
      %v2528 = vadd.f32 %v2207, %v2527
      %v2529 = vpop.f32.mrb[0].mxu0
      %2530 = vmatprep.mubr.bf16.mxu0 0
      %2531 = vmatmul.mubr.bf16.gmra.mrb[0].mxu0 %v1715
      %v2532 = vpop.f32.mrb[0].mxu0
      %v2533 = vadd.f32 %v2212, %v2532
      %v2534 = vpop.f32.mrb[0].mxu0
      %v2535 = vpop.f32.mrb[0].mxu0
      %v2536 = vadd.f32 %v2215, %v2535
      %v2537 = vpop.f32.mrb[0].mxu0
      %2538 = vmatprep.mubr.bf16.mxu0 0
      %2539 = vmatmul.mubr.bf16.gmra.mrb[0].mxu0 %v1718
      %v2540 = vpop.f32.mrb[0].mxu0
      %v2541 = vadd.f32 %v2220, %v2540
      %v2542 = vpop.f32.mrb[0].mxu0
      %v2543 = vpop.f32.mrb[0].mxu0
      %v2544 = vadd.f32 %v2223, %v2543
      %v2545 = vpop.f32.mrb[0].mxu0
      %2546 = vmatprep.mubr.bf16.mxu0 0
      %2547 = vmatmul.mubr.bf16.gmra.mrb[0].mxu0 %v1721
      %v2548 = vpop.f32.mrb[0].mxu0
      %v2549 = vadd.f32 %v2228, %v2548
      %v2550 = vpop.f32.mrb[0].mxu0
      %v2551 = vpop.f32.mrb[0].mxu0
      %v2552 = vadd.f32 %v2231, %v2551
      %v2553 = vpop.f32.mrb[0].mxu0
      %2554 = vmatprep.mubr.bf16.mxu0 0
      %2555 = vmatmul.mubr.bf16.gmra.mrb[0].mxu0 %v1724
      %v2556 = vpop.f32.mrb[0].mxu0
      %v2557 = vadd.f32 %v2236, %v2556
      %v2558 = vpop.f32.mrb[0].mxu0
      %v2559 = vpop.f32.mrb[0].mxu0
      %v2560 = vadd.f32 %v2239, %v2559
      %v2561 = vpop.f32.mrb[0].mxu0
      %2562 = vmatprep.mubr.bf16.mxu0 0
      %2563 = vmatmul.mubr.bf16.gmra.mrb[0].mxu0 %v1727
      %v2564 = vpop.f32.mrb[0].mxu0
      %v2565 = vadd.f32 %v2244, %v2564
      %v2566 = vpop.f32.mrb[0].mxu0
      %v2567 = vpop.f32.mrb[0].mxu0
      %v2568 = vadd.f32 %v2247, %v2567
      %v2569 = vpop.f32.mrb[0].mxu0
      %2570 = vmatprep.mubr.bf16.mxu0 0
      %2571 = vmatmul.mubr.bf16.gmra.mrb[0].mxu0 %v1730
      %v2572 = vpop.f32.mrb[0].mxu0
      %v2573 = vadd.f32 %v2252, %v2572
      %v2574 = vpop.f32.mrb[0].mxu0
      %v2575 = vpop.f32.mrb[0].mxu0
      %v2576 = vadd.f32 %v2255, %v2575
      %v2577 = vpop.f32.mrb[0].mxu0
      %2578 = vmatprep.mubr.bf16.mxu0 0
      %2579 = vmatmul.mubr.bf16.gmra.mrb[0].mxu0 %v1733
      %v2580 = vpop.f32.mrb[0].mxu0
      %v2581 = vadd.f32 %v2260, %v2580
      %v2582 = vpop.f32.mrb[0].mxu0
      %v2583 = vpop.f32.mrb[0].mxu0
      %v2584 = vadd.f32 %v2263, %v2583
      %v2585 = vpop.f32.mrb[0].mxu0
      %2586 = vmatprep.mubr.bf16.mxu0 0
      %2587 = vmatmul.mubr.bf16.gmra.mrb[0].mxu0 %v1736
      %v2588 = vpop.f32.mrb[0].mxu0
      %v2589 = vadd.f32 %v2268, %v2588
      %v2590 = vpop.f32.mrb[0].mxu0
      %v2591 = vpop.f32.mrb[0].mxu0
      %v2592 = vadd.f32 %v2271, %v2591
      %v2593 = vpop.f32.mrb[0].mxu0
      %2594 = vmatprep.mubr.bf16.mxu0 0
      %2595 = vmatmul.mubr.bf16.gmra.mrb[0].mxu0 %v1739
      %v2596 = vpop.f32.mrb[0].mxu0
      %v2597 = vadd.f32 %v2276, %v2596
      %v2598 = vpop.f32.mrb[0].mxu0
      %v2599 = vpop.f32.mrb[0].mxu0
      %v2600 = vadd.f32 %v2279, %v2599
      %v2601 = vpop.f32.mrb[0].mxu0
      %2602 = vmatprep.mubr.bf16.mxu0 0
      %2603 = vmatmul.mubr.bf16.gmra.mrb[0].mxu0 %v1742
      %v2604 = vpop.f32.mrb[0].mxu0
      %v2605 = vadd.f32 %v2284, %v2604
      %v2606 = vpop.f32.mrb[0].mxu0
      %v2607 = vpop.f32.mrb[0].mxu0
      %v2608 = vadd.f32 %v2287, %v2607
      %v2609 = vpop.f32.mrb[0].mxu0
      %2610 = vmatprep.mubr.bf16.mxu0 0
      %2611 = vmatmul.mubr.bf16.gmra.mrb[0].mxu0 %v1745
      %v2612 = vpop.f32.mrb[0].mxu0
      %v2613 = vadd.f32 %v2292, %v2612
      %v2614 = vpop.f32.mrb[0].mxu0
      %v2615 = vpop.f32.mrb[0].mxu0
      %v2616 = vadd.f32 %v2295, %v2615
      %v2617 = vpop.f32.mrb[0].mxu0
      %2618 = vmatprep.mubr.bf16.mxu0 0
      %2619 = vmatmul.mubr.bf16.gmra.mrb[0].mxu0 %v1748
      %v2620 = vpop.f32.mrb[0].mxu0
      %v2621 = vadd.f32 %v2300, %v2620
      %v2622 = vpop.f32.mrb[0].mxu0
      %v2623 = vpop.f32.mrb[0].mxu0
      %v2624 = vadd.f32 %v2303, %v2623
      %v2625 = vpop.f32.mrb[0].mxu0
      %2626 = vmatprep.mubr.bf16.mxu0 0
      %2627 = vmatmul.mubr.bf16.gmra.mrb[0].mxu0 %v1751
      %v2628 = vpop.f32.mrb[0].mxu0
      %v2629 = vadd.f32 %v2308, %v2628
      %v2630 = vpop.f32.mrb[0].mxu0
      %v2631 = vpop.f32.mrb[0].mxu0
      %v2632 = vadd.f32 %v2311, %v2631
      %v2633 = vpop.f32.mrb[0].mxu0
      %2634 = vmatprep.mubr.bf16.mxu0 0
      %2635 = vmatmul.mubr.bf16.gmra.mrb[0].mxu0 %v1754
      %v2636 = vpop.f32.mrb[0].mxu0
      %v2637 = vadd.f32 %v2316, %v2636
      %v2638 = vpop.f32.mrb[0].mxu0
      %v2639 = vpop.f32.mrb[0].mxu0
      %v2640 = vadd.f32 %v2319, %v2639
      %v2641 = vpop.f32.mrb[0].mxu0
      %2642 = vmatprep.mubr.bf16.mxu0 0
      %2643 = vmatmul.mubr.bf16.gmra.mrb[0].mxu0 %v1757
      %v2644 = vpop.f32.mrb[0].mxu0
      %v2645 = vadd.f32 %v2324, %v2644
      %v2646 = vpop.f32.mrb[0].mxu0
      %v2647 = vpop.f32.mrb[0].mxu0
      %v2648 = vadd.f32 %v2327, %v2647
      %v2649 = vpop.f32.mrb[0].mxu0
      %2650 = vmatprep.mubr.bf16.mxu0 0
      %2651 = vmatmul.mubr.bf16.gmra.mrb[0].mxu0 %v1760
      %v2652 = vpop.f32.mrb[0].mxu0
      %v2653 = vadd.f32 %v2332, %v2652
      %v2654 = vpop.f32.mrb[0].mxu0
      %v2655 = vpop.f32.mrb[0].mxu0
      %v2656 = vadd.f32 %v2335, %v2655
      %v2657 = vpop.f32.mrb[0].mxu0
      %2658 = vmatprep.mubr.bf16.mxu0 0
      %2659 = vmatmul.mubr.bf16.gmra.mrb[0].mxu0 %v1763
      %v2660 = vpop.f32.mrb[0].mxu0
      %v2661 = vadd.f32 %v2340, %v2660
      %v2662 = vpop.f32.mrb[0].mxu0
      %v2663 = vpop.f32.mrb[0].mxu0
      %v2664 = vadd.f32 %v2343, %v2663
      %v2665 = vpop.f32.mrb[0].mxu0
      %2666 = vmatprep.mubr.bf16.mxu0 0
      %2667 = vmatmul.mubr.bf16.gmra.mrb[0].mxu0 %v1766
      %v2668 = vpop.f32.mrb[0].mxu0
      %v2669 = vadd.f32 %v2348, %v2668
      %v2670 = vpop.f32.mrb[0].mxu0
      %v2671 = vpop.f32.mrb[0].mxu0
      %v2672 = vadd.f32 %v2351, %v2671
      %v2673 = vpop.f32.mrb[0].mxu0
      %2674 = vmatprep.mubr.bf16.mxu0 0
      %2675 = vmatmul.mubr.bf16.gmra.mrb[0].mxu0 %v1769
      %v2676 = vpop.f32.mrb[0].mxu0
      %v2677 = vadd.f32 %v2356, %v2676
      %v2678 = vpop.f32.mrb[0].mxu0
      %v2679 = vpop.f32.mrb[0].mxu0
      %v2680 = vadd.f32 %v2359, %v2679
      %v2681 = vpop.f32.mrb[0].mxu0
      %2682 = vmatprep.mubr.bf16.mxu0 0
      %2683 = vmatmul.mubr.bf16.gmra.mrb[0].mxu0 %v1772
      %v2684 = vpop.f32.mrb[0].mxu0
      %v2685 = vadd.f32 %v2364, %v2684
      %v2686 = vpop.f32.mrb[0].mxu0
      %v2687 = vpop.f32.mrb[0].mxu0
      %v2688 = vadd.f32 %v2367, %v2687
      %v2689 = vpop.f32.mrb[0].mxu0
      %2690 = vmatprep.mubr.bf16.mxu0 0
      %2691 = vmatmul.mubr.bf16.gmra.mrb[0].mxu0 %v1775
      %v2692 = vpop.f32.mrb[0].mxu0
      %v2693 = vadd.f32 %v2372, %v2692
      %v2694 = vpop.f32.mrb[0].mxu0
      %v2695 = vpop.f32.mrb[0].mxu0
      %v2696 = vadd.f32 %v2375, %v2695
      %v2697 = vpop.f32.mrb[0].mxu0
      %2698 = vmatprep.mubr.bf16.mxu0 0
      %2699 = vmatmul.mubr.bf16.gmra.mrb[0].mxu0 %v1778
      %v2700 = vpop.f32.mrb[0].mxu0
      %v2701 = vadd.f32 %v2380, %v2700
      %v2702 = vpop.f32.mrb[0].mxu0
      %v2703 = vpop.f32.mrb[0].mxu0
      %v2704 = vadd.f32 %v2383, %v2703
      %v2705 = vpop.f32.mrb[0].mxu0
      %2706 = vmatprep.mubr.bf16.mxu0 0
      %2707 = vmatmul.mubr.bf16.gmra.mrb[0].mxu0 %v1781
      %v2708 = vpop.f32.mrb[0].mxu0
      %v2709 = vadd.f32 %v2388, %v2708
      %v2710 = vpop.f32.mrb[0].mxu0
      %v2711 = vpop.f32.mrb[0].mxu0
      %v2712 = vadd.f32 %v2391, %v2711
      %v2713 = vpop.f32.mrb[0].mxu0
      %2714 = vmatprep.mubr.bf16.mxu0 0
      %2715 = vmatmul.mubr.bf16.gmra.mrb[0].mxu0 %v1784
      %v2716 = vpop.f32.mrb[0].mxu0
      %v2717 = vadd.f32 %v2396, %v2716
      %v2718 = vpop.f32.mrb[0].mxu0
      %v2719 = vpop.f32.mrb[0].mxu0
      %v2720 = vadd.f32 %v2399, %v2719
      %v2721 = vpop.f32.mrb[0].mxu0
      %2722 = vmatprep.mubr.bf16.mxu0 0
      %2723 = vmatmul.mubr.bf16.gmra.mrb[0].mxu0 %v1787
      %v2724 = vpop.f32.mrb[0].mxu0
      %v2725 = vadd.f32 %v2404, %v2724
      %v2726 = vpop.f32.mrb[0].mxu0
      %v2727 = vpop.f32.mrb[0].mxu0
      %v2728 = vadd.f32 %v2407, %v2727
      %v2729 = vpop.f32.mrb[0].mxu0
      %2730 = vmatprep.mubr.bf16.mxu0 0
      %2731 = vmatmul.mubr.bf16.gmra.mrb[0].mxu0 %v1790
      %v2732 = vpop.f32.mrb[0].mxu0
      %v2733 = vadd.f32 %v2412, %v2732
      %v2734 = vpop.f32.mrb[0].mxu0
      %v2735 = vpop.f32.mrb[0].mxu0
      %v2736 = vadd.f32 %v2415, %v2735
      %v2737 = vpop.f32.mrb[0].mxu0
      %2738 = vmatprep.mubr.bf16.mxu0 0
      %2739 = vmatmul.mubr.bf16.gmra.mrb[0].mxu0 %v1793
      %v2740 = vpop.f32.mrb[0].mxu0
      %v2741 = vadd.f32 %v2420, %v2740
      %v2742 = vpop.f32.mrb[0].mxu0
      %v2743 = vpop.f32.mrb[0].mxu0
      %v2744 = vadd.f32 %v2423, %v2743
      %v2745 = vpop.f32.mrb[0].mxu0
      %2746 = vmatprep.mubr.bf16.mxu0 0
      %2747 = vmatmul.mubr.bf16.gmra.mrb[0].mxu0 %v1796
      %v2748 = vpop.f32.mrb[0].mxu0
      %v2749 = vadd.f32 %v2428, %v2748
      %v2750 = vpop.f32.mrb[0].mxu0
      %v2751 = vpop.f32.mrb[0].mxu0
      %v2752 = vadd.f32 %v2431, %v2751
      %v2753 = vpop.f32.mrb[0].mxu0
      %2754 = vmatprep.mubr.bf16.mxu0 0
      %2755 = vmatmul.mubr.bf16.gmra.mrb[0].mxu0 %v1799
      %v2756 = vpop.f32.mrb[0].mxu0
      %v2757 = vadd.f32 %v2436, %v2756
      %v2758 = vpop.f32.mrb[0].mxu0
      %v2759 = vpop.f32.mrb[0].mxu0
      %v2760 = vadd.f32 %v2439, %v2759
      %v2761 = vpop.f32.mrb[0].mxu0
      %2762 = vmatprep.mubr.bf16.mxu0 0
      %2763 = vmatmul.mubr.bf16.gmra.mrb[0].mxu0 %v1802
      %v2764 = vpop.f32.mrb[0].mxu0
      %v2765 = vadd.f32 %v2444, %v2764
      %v2766 = vpop.f32.mrb[0].mxu0
      %v2767 = vpop.f32.mrb[0].mxu0
      %v2768 = vadd.f32 %v2447, %v2767
      %v2769 = vpop.f32.mrb[0].mxu0
      %2770 = vdwg.mxu0
      %2772 = vset.pattern.permute.xlu0 0
      %2773 = vperm.xlu0 %2772, %v2485
      %v2774 = vpop.permute.xlu0 %2773
      %2777 = vset.pattern.permute.xlu0 0
      %2778 = vperm.xlu0 %2777, %v2488
      %v2779 = vpop.permute.xlu0 %2778
      %2782 = vset.pattern.permute.xlu0 0
      %2783 = vperm.xlu0 %2782, %v2493
      %v2784 = vpop.permute.xlu0 %2783
      %2787 = vset.pattern.permute.xlu0 0
      %2788 = vperm.xlu0 %2787, %v2496
      %v2789 = vpop.permute.xlu0 %2788
      %2792 = vset.pattern.permute.xlu0 0
      %2793 = vperm.xlu0 %2792, %v2501
      %v2794 = vpop.permute.xlu0 %2793
      %2797 = vset.pattern.permute.xlu0 0
      %2798 = vperm.xlu0 %2797, %v2504
      %v2799 = vpop.permute.xlu0 %2798
      %2802 = vset.pattern.permute.xlu0 0
      %2803 = vperm.xlu0 %2802, %v2509
      %v2804 = vpop.permute.xlu0 %2803
      %2807 = vset.pattern.permute.xlu0 0
      %2808 = vperm.xlu0 %2807, %v2512
      %v2809 = vpop.permute.xlu0 %2808
      %2812 = vset.pattern.permute.xlu0 0
      %2813 = vperm.xlu0 %2812, %v2517
      %v2814 = vpop.permute.xlu0 %2813
      %2817 = vset.pattern.permute.xlu0 0
      %2818 = vperm.xlu0 %2817, %v2520
      %v2819 = vpop.permute.xlu0 %2818
      %2822 = vset.pattern.permute.xlu0 0
      %2823 = vperm.xlu0 %2822, %v2525
      %v2824 = vpop.permute.xlu0 %2823
      %2827 = vset.pattern.permute.xlu0 0
      %2828 = vperm.xlu0 %2827, %v2528
      %v2829 = vpop.permute.xlu0 %2828
      %2832 = vset.pattern.permute.xlu0 0
      %2833 = vperm.xlu0 %2832, %v2533
      %v2834 = vpop.permute.xlu0 %2833
      %2837 = vset.pattern.permute.xlu0 0
      %2838 = vperm.xlu0 %2837, %v2536
      %v2839 = vpop.permute.xlu0 %2838
      %2842 = vset.pattern.permute.xlu0 0
      %2843 = vperm.xlu0 %2842, %v2541
      %v2844 = vpop.permute.xlu0 %2843
      %2847 = vset.pattern.permute.xlu0 0
      %2848 = vperm.xlu0 %2847, %v2544
      %v2849 = vpop.permute.xlu0 %2848
      %2852 = vset.pattern.permute.xlu0 0
      %2853 = vperm.xlu0 %2852, %v2549
      %v2854 = vpop.permute.xlu0 %2853
      %2857 = vset.pattern.permute.xlu0 0
      %2858 = vperm.xlu0 %2857, %v2552
      %v2859 = vpop.permute.xlu0 %2858
      %2862 = vset.pattern.permute.xlu0 0
      %2863 = vperm.xlu0 %2862, %v2557
      %v2864 = vpop.permute.xlu0 %2863
      %2867 = vset.pattern.permute.xlu0 0
      %2868 = vperm.xlu0 %2867, %v2560
      %v2869 = vpop.permute.xlu0 %2868
      %2872 = vset.pattern.permute.xlu0 0
      %2873 = vperm.xlu0 %2872, %v2565
      %v2874 = vpop.permute.xlu0 %2873
      %2877 = vset.pattern.permute.xlu0 0
      %2878 = vperm.xlu0 %2877, %v2568
      %v2879 = vpop.permute.xlu0 %2878
      %2882 = vset.pattern.permute.xlu0 0
      %2883 = vperm.xlu0 %2882, %v2573
      %v2884 = vpop.permute.xlu0 %2883
      %2887 = vset.pattern.permute.xlu0 0
      %2888 = vperm.xlu0 %2887, %v2576
      %v2889 = vpop.permute.xlu0 %2888
      %2892 = vset.pattern.permute.xlu0 0
      %2893 = vperm.xlu0 %2892, %v2581
      %v2894 = vpop.permute.xlu0 %2893
      %2897 = vset.pattern.permute.xlu0 0
      %2898 = vperm.xlu0 %2897, %v2584
      %v2899 = vpop.permute.xlu0 %2898
      %2902 = vset.pattern.permute.xlu0 0
      %2903 = vperm.xlu0 %2902, %v2589
      %v2904 = vpop.permute.xlu0 %2903
      %2907 = vset.pattern.permute.xlu0 0
      %2908 = vperm.xlu0 %2907, %v2592
      %v2909 = vpop.permute.xlu0 %2908
      %2912 = vset.pattern.permute.xlu0 0
      %2913 = vperm.xlu0 %2912, %v2597
      %v2914 = vpop.permute.xlu0 %2913
      %2917 = vset.pattern.permute.xlu0 0
      %2918 = vperm.xlu0 %2917, %v2600
      %v2919 = vpop.permute.xlu0 %2918
      %2922 = vset.pattern.permute.xlu0 0
      %2923 = vperm.xlu0 %2922, %v2605
      %v2924 = vpop.permute.xlu0 %2923
      %2927 = vset.pattern.permute.xlu0 0
      %2928 = vperm.xlu0 %2927, %v2608
      %v2929 = vpop.permute.xlu0 %2928
      %2932 = vset.pattern.permute.xlu0 0
      %2933 = vperm.xlu0 %2932, %v2613
      %v2934 = vpop.permute.xlu0 %2933
      %2937 = vset.pattern.permute.xlu0 0
      %2938 = vperm.xlu0 %2937, %v2616
      %v2939 = vpop.permute.xlu0 %2938
      %2942 = vset.pattern.permute.xlu0 0
      %2943 = vperm.xlu0 %2942, %v2621
      %v2944 = vpop.permute.xlu0 %2943
      %2947 = vset.pattern.permute.xlu0 0
      %2948 = vperm.xlu0 %2947, %v2624
      %v2949 = vpop.permute.xlu0 %2948
      %2952 = vset.pattern.permute.xlu0 0
      %2953 = vperm.xlu0 %2952, %v2629
      %v2954 = vpop.permute.xlu0 %2953
      %2957 = vset.pattern.permute.xlu0 0
      %2958 = vperm.xlu0 %2957, %v2632
      %v2959 = vpop.permute.xlu0 %2958
      %2962 = vset.pattern.permute.xlu0 0
      %2963 = vperm.xlu0 %2962, %v2637
      %v2964 = vpop.permute.xlu0 %2963
      %2967 = vset.pattern.permute.xlu0 0
      %2968 = vperm.xlu0 %2967, %v2640
      %v2969 = vpop.permute.xlu0 %2968
      %2972 = vset.pattern.permute.xlu0 0
      %2973 = vperm.xlu0 %2972, %v2645
      %v2974 = vpop.permute.xlu0 %2973
      %2977 = vset.pattern.permute.xlu0 0
      %2978 = vperm.xlu0 %2977, %v2648
      %v2979 = vpop.permute.xlu0 %2978
      %2982 = vset.pattern.permute.xlu0 0
      %2983 = vperm.xlu0 %2982, %v2653
      %v2984 = vpop.permute.xlu0 %2983
      %2987 = vset.pattern.permute.xlu0 0
      %2988 = vperm.xlu0 %2987, %v2656
      %v2989 = vpop.permute.xlu0 %2988
      %2992 = vset.pattern.permute.xlu0 0
      %2993 = vperm.xlu0 %2992, %v2661
      %v2994 = vpop.permute.xlu0 %2993
      %2997 = vset.pattern.permute.xlu0 0
      %2998 = vperm.xlu0 %2997, %v2664
      %v2999 = vpop.permute.xlu0 %2998
      %3002 = vset.pattern.permute.xlu0 0
      %3003 = vperm.xlu0 %3002, %v2669
      %v3004 = vpop.permute.xlu0 %3003
      %3007 = vset.pattern.permute.xlu0 0
      %3008 = vperm.xlu0 %3007, %v2672
      %v3009 = vpop.permute.xlu0 %3008
      %3012 = vset.pattern.permute.xlu0 0
      %3013 = vperm.xlu0 %3012, %v2677
      %v3014 = vpop.permute.xlu0 %3013
      %3017 = vset.pattern.permute.xlu0 0
      %3018 = vperm.xlu0 %3017, %v2680
      %v3019 = vpop.permute.xlu0 %3018
      %3022 = vset.pattern.permute.xlu0 0
      %3023 = vperm.xlu0 %3022, %v2685
      %v3024 = vpop.permute.xlu0 %3023
      %3027 = vset.pattern.permute.xlu0 0
      %3028 = vperm.xlu0 %3027, %v2688
      %v3029 = vpop.permute.xlu0 %3028
      %3032 = vset.pattern.permute.xlu0 0
      %3033 = vperm.xlu0 %3032, %v2693
      %v3034 = vpop.permute.xlu0 %3033
      %3037 = vset.pattern.permute.xlu0 0
      %3038 = vperm.xlu0 %3037, %v2696
      %v3039 = vpop.permute.xlu0 %3038
      %3042 = vset.pattern.permute.xlu0 0
      %3043 = vperm.xlu0 %3042, %v2701
      %v3044 = vpop.permute.xlu0 %3043
      %3047 = vset.pattern.permute.xlu0 0
      %3048 = vperm.xlu0 %3047, %v2704
      %v3049 = vpop.permute.xlu0 %3048
      %3052 = vset.pattern.permute.xlu0 0
      %3053 = vperm.xlu0 %3052, %v2709
      %v3054 = vpop.permute.xlu0 %3053
      %3057 = vset.pattern.permute.xlu0 0
      %3058 = vperm.xlu0 %3057, %v2712
      %v3059 = vpop.permute.xlu0 %3058
      %3062 = vset.pattern.permute.xlu0 0
      %3063 = vperm.xlu0 %3062, %v2717
      %v3064 = vpop.permute.xlu0 %3063
      %3067 = vset.pattern.permute.xlu0 0
      %3068 = vperm.xlu0 %3067, %v2720
      %v3069 = vpop.permute.xlu0 %3068
      %3072 = vset.pattern.permute.xlu0 0
      %3073 = vperm.xlu0 %3072, %v2725
      %v3074 = vpop.permute.xlu0 %3073
      %3077 = vset.pattern.permute.xlu0 0
      %3078 = vperm.xlu0 %3077, %v2728
      %v3079 = vpop.permute.xlu0 %3078
      %3082 = vset.pattern.permute.xlu0 0
      %3083 = vperm.xlu0 %3082, %v2733
      %v3084 = vpop.permute.xlu0 %3083
      %3087 = vset.pattern.permute.xlu0 0
      %3088 = vperm.xlu0 %3087, %v2736
      %v3089 = vpop.permute.xlu0 %3088
      %3092 = vset.pattern.permute.xlu0 0
      %3093 = vperm.xlu0 %3092, %v2741
      %v3094 = vpop.permute.xlu0 %3093
      %3097 = vset.pattern.permute.xlu0 0
      %3098 = vperm.xlu0 %3097, %v2744
      %v3099 = vpop.permute.xlu0 %3098
      %3102 = vset.pattern.permute.xlu0 0
      %3103 = vperm.xlu0 %3102, %v2749
      %v3104 = vpop.permute.xlu0 %3103
      %3107 = vset.pattern.permute.xlu0 0
      %3108 = vperm.xlu0 %3107, %v2752
      %v3109 = vpop.permute.xlu0 %3108
      %3112 = vset.pattern.permute.xlu0 0
      %3113 = vperm.xlu0 %3112, %v2757
      %v3114 = vpop.permute.xlu0 %3113
      %3117 = vset.pattern.permute.xlu0 0
      %3118 = vperm.xlu0 %3117, %v2760
      %v3119 = vpop.permute.xlu0 %3118
      %3122 = vset.pattern.permute.xlu0 0
      %3123 = vperm.xlu0 %3122, %v2765
      %v3124 = vpop.permute.xlu0 %3123
      %3127 = vset.pattern.permute.xlu0 0
      %3128 = vperm.xlu0 %3127, %v2768
      %v3129 = vpop.permute.xlu0 %3128
      %v3132 = vlaneseq
      %v3133 = vshrl.u32 %v3132, 7
      %v3134 = vsub.s32 0, %v3133
      %v3135 = vrot.slane %v288, %v3134
      %v3137 = vmul.f32 %v2774, %v3135
      %v3138 = vmul.f32 %v2779, %v3135
      %v3139 = vmul.f32 %v2784, %v3135
      %v3140 = vmul.f32 %v2789, %v3135
      %v3141 = vmul.f32 %v2794, %v3135
      %v3142 = vmul.f32 %v2799, %v3135
      %v3143 = vmul.f32 %v2804, %v3135
      %v3144 = vmul.f32 %v2809, %v3135
      %v3145 = vmul.f32 %v2814, %v3135
      %v3146 = vmul.f32 %v2819, %v3135
      %v3147 = vmul.f32 %v2824, %v3135
      %v3148 = vmul.f32 %v2829, %v3135
      %v3149 = vmul.f32 %v2834, %v3135
      %v3150 = vmul.f32 %v2839, %v3135
      %v3151 = vmul.f32 %v2844, %v3135
      %v3152 = vmul.f32 %v2849, %v3135
      %v3153 = vmul.f32 %v2854, %v3135
      %v3154 = vmul.f32 %v2859, %v3135
      %v3155 = vmul.f32 %v2864, %v3135
      %v3156 = vmul.f32 %v2869, %v3135
      %v3157 = vmul.f32 %v2874, %v3135
      %v3158 = vmul.f32 %v2879, %v3135
      %v3159 = vmul.f32 %v2884, %v3135
      %v3160 = vmul.f32 %v2889, %v3135
      %v3161 = vmul.f32 %v2894, %v3135
      %v3162 = vmul.f32 %v2899, %v3135
      %v3163 = vmul.f32 %v2904, %v3135
      %v3164 = vmul.f32 %v2909, %v3135
      %v3165 = vmul.f32 %v2914, %v3135
      %v3166 = vmul.f32 %v2919, %v3135
      %v3167 = vmul.f32 %v2924, %v3135
      %v3168 = vmul.f32 %v2929, %v3135
      %v3169 = vmul.f32 %v2934, %v3135
      %v3170 = vmul.f32 %v2939, %v3135
      %v3171 = vmul.f32 %v2944, %v3135
      %v3172 = vmul.f32 %v2949, %v3135
      %v3173 = vmul.f32 %v2954, %v3135
      %v3174 = vmul.f32 %v2959, %v3135
      %v3175 = vmul.f32 %v2964, %v3135
      %v3176 = vmul.f32 %v2969, %v3135
      %v3177 = vmul.f32 %v2974, %v3135
      %v3178 = vmul.f32 %v2979, %v3135
      %v3179 = vmul.f32 %v2984, %v3135
      %v3180 = vmul.f32 %v2989, %v3135
      %v3181 = vmul.f32 %v2994, %v3135
      %v3182 = vmul.f32 %v2999, %v3135
      %v3183 = vmul.f32 %v3004, %v3135
      %v3184 = vmul.f32 %v3009, %v3135
      %v3185 = vmul.f32 %v3014, %v3135
      %v3186 = vmul.f32 %v3019, %v3135
      %v3187 = vmul.f32 %v3024, %v3135
      %v3188 = vmul.f32 %v3029, %v3135
      %v3189 = vmul.f32 %v3034, %v3135
      %v3190 = vmul.f32 %v3039, %v3135
      %v3191 = vmul.f32 %v3044, %v3135
      %v3192 = vmul.f32 %v3049, %v3135
      %v3193 = vmul.f32 %v3054, %v3135
      %v3194 = vmul.f32 %v3059, %v3135
      %v3195 = vmul.f32 %v3064, %v3135
      %v3196 = vmul.f32 %v3069, %v3135
      %v3197 = vmul.f32 %v3074, %v3135
      %v3198 = vmul.f32 %v3079, %v3135
      %v3199 = vmul.f32 %v3084, %v3135
      %v3200 = vmul.f32 %v3089, %v3135
      %v3201 = vmul.f32 %v3094, %v3135
      %v3202 = vmul.f32 %v3099, %v3135
      %v3203 = vmul.f32 %v3104, %v3135
      %v3204 = vmul.f32 %v3109, %v3135
      %v3205 = vmul.f32 %v3114, %v3135
      %v3206 = vmul.f32 %v3119, %v3135
      %v3207 = vmul.f32 %v3124, %v3135
      %v3208 = vmul.f32 %v3129, %v3135
      %v3210 = vlaneseq
      %v3211 = vshrl.u32 %v3210, 7
      %v3212 = vsub.s32 0, %v3211
      %v3213 = vrot.slane %v289, %v3212
      %v3215 = vadd.f32 %v3137, %v3213
      %v3216 = vadd.f32 %v3138, %v3213
      %v3217 = vadd.f32 %v3139, %v3213
      %v3218 = vadd.f32 %v3140, %v3213
      %v3219 = vadd.f32 %v3141, %v3213
      %v3220 = vadd.f32 %v3142, %v3213
      %v3221 = vadd.f32 %v3143, %v3213
      %v3222 = vadd.f32 %v3144, %v3213
      %v3223 = vadd.f32 %v3145, %v3213
      %v3224 = vadd.f32 %v3146, %v3213
      %v3225 = vadd.f32 %v3147, %v3213
      %v3226 = vadd.f32 %v3148, %v3213
      %v3227 = vadd.f32 %v3149, %v3213
      %v3228 = vadd.f32 %v3150, %v3213
      %v3229 = vadd.f32 %v3151, %v3213
      %v3230 = vadd.f32 %v3152, %v3213
      %v3231 = vadd.f32 %v3153, %v3213
      %v3232 = vadd.f32 %v3154, %v3213
      %v3233 = vadd.f32 %v3155, %v3213
      %v3234 = vadd.f32 %v3156, %v3213
      %v3235 = vadd.f32 %v3157, %v3213
      %v3236 = vadd.f32 %v3158, %v3213
      %v3237 = vadd.f32 %v3159, %v3213
      %v3238 = vadd.f32 %v3160, %v3213
      %v3239 = vadd.f32 %v3161, %v3213
      %v3240 = vadd.f32 %v3162, %v3213
      %v3241 = vadd.f32 %v3163, %v3213
      %v3242 = vadd.f32 %v3164, %v3213
      %v3243 = vadd.f32 %v3165, %v3213
      %v3244 = vadd.f32 %v3166, %v3213
      %v3245 = vadd.f32 %v3167, %v3213
      %v3246 = vadd.f32 %v3168, %v3213
      %v3247 = vadd.f32 %v3169, %v3213
      %v3248 = vadd.f32 %v3170, %v3213
      %v3249 = vadd.f32 %v3171, %v3213
      %v3250 = vadd.f32 %v3172, %v3213
      %v3251 = vadd.f32 %v3173, %v3213
      %v3252 = vadd.f32 %v3174, %v3213
      %v3253 = vadd.f32 %v3175, %v3213
      %v3254 = vadd.f32 %v3176, %v3213
      %v3255 = vadd.f32 %v3177, %v3213
      %v3256 = vadd.f32 %v3178, %v3213
      %v3257 = vadd.f32 %v3179, %v3213
      %v3258 = vadd.f32 %v3180, %v3213
      %v3259 = vadd.f32 %v3181, %v3213
      %v3260 = vadd.f32 %v3182, %v3213
      %v3261 = vadd.f32 %v3183, %v3213
      %v3262 = vadd.f32 %v3184, %v3213
      %v3263 = vadd.f32 %v3185, %v3213
      %v3264 = vadd.f32 %v3186, %v3213
      %v3265 = vadd.f32 %v3187, %v3213
      %v3266 = vadd.f32 %v3188, %v3213
      %v3267 = vadd.f32 %v3189, %v3213
      %v3268 = vadd.f32 %v3190, %v3213
      %v3269 = vadd.f32 %v3191, %v3213
      %v3270 = vadd.f32 %v3192, %v3213
      %v3271 = vadd.f32 %v3193, %v3213
      %v3272 = vadd.f32 %v3194, %v3213
      %v3273 = vadd.f32 %v3195, %v3213
      %v3274 = vadd.f32 %v3196, %v3213
      %v3275 = vadd.f32 %v3197, %v3213
      %v3276 = vadd.f32 %v3198, %v3213
      %v3277 = vadd.f32 %v3199, %v3213
      %v3278 = vadd.f32 %v3200, %v3213
      %v3279 = vadd.f32 %v3201, %v3213
      %v3280 = vadd.f32 %v3202, %v3213
      %v3281 = vadd.f32 %v3203, %v3213
      %v3282 = vadd.f32 %v3204, %v3213
      %v3283 = vadd.f32 %v3205, %v3213
      %v3284 = vadd.f32 %v3206, %v3213
      %v3285 = vadd.f32 %v3207, %v3213
      %v3286 = vadd.f32 %v3208, %v3213
      %v3287 = vmax.f32 %v3215, 0.0
      %v3288 = vmax.f32 %v3216, 0.0
      %v3289 = vmax.f32 %v3217, 0.0
      %v3290 = vmax.f32 %v3218, 0.0
      %v3291 = vmax.f32 %v3219, 0.0
      %v3292 = vmax.f32 %v3220, 0.0
      %v3293 = vmax.f32 %v3221, 0.0
      %v3294 = vmax.f32 %v3222, 0.0
      %v3295 = vmax.f32 %v3223, 0.0
      %v3296 = vmax.f32 %v3224, 0.0
      %v3297 = vmax.f32 %v3225, 0.0
      %v3298 = vmax.f32 %v3226, 0.0
      %v3299 = vmax.f32 %v3227, 0.0
      %v3300 = vmax.f32 %v3228, 0.0
      %v3301 = vmax.f32 %v3229, 0.0
      %v3302 = vmax.f32 %v3230, 0.0
      %v3303 = vmax.f32 %v3231, 0.0
      %v3304 = vmax.f32 %v3232, 0.0
      %v3305 = vmax.f32 %v3233, 0.0
      %v3306 = vmax.f32 %v3234, 0.0
      %v3307 = vmax.f32 %v3235, 0.0
      %v3308 = vmax.f32 %v3236, 0.0
      %v3309 = vmax.f32 %v3237, 0.0
      %v3310 = vmax.f32 %v3238, 0.0
      %v3311 = vmax.f32 %v3239, 0.0
      %v3312 = vmax.f32 %v3240, 0.0
      %v3313 = vmax.f32 %v3241, 0.0
      %v3314 = vmax.f32 %v3242, 0.0
      %v3315 = vmax.f32 %v3243, 0.0
      %v3316 = vmax.f32 %v3244, 0.0
      %v3317 = vmax.f32 %v3245, 0.0
      %v3318 = vmax.f32 %v3246, 0.0
      %v3319 = vmax.f32 %v3247, 0.0
      %v3320 = vmax.f32 %v3248, 0.0
      %v3321 = vmax.f32 %v3249, 0.0
      %v3322 = vmax.f32 %v3250, 0.0
      %v3323 = vmax.f32 %v3251, 0.0
      %v3324 = vmax.f32 %v3252, 0.0
      %v3325 = vmax.f32 %v3253, 0.0
      %v3326 = vmax.f32 %v3254, 0.0
      %v3327 = vmax.f32 %v3255, 0.0
      %v3328 = vmax.f32 %v3256, 0.0
      %v3329 = vmax.f32 %v3257, 0.0
      %v3330 = vmax.f32 %v3258, 0.0
      %v3331 = vmax.f32 %v3259, 0.0
      %v3332 = vmax.f32 %v3260, 0.0
      %v3333 = vmax.f32 %v3261, 0.0
      %v3334 = vmax.f32 %v3262, 0.0
      %v3335 = vmax.f32 %v3263, 0.0
      %v3336 = vmax.f32 %v3264, 0.0
      %v3337 = vmax.f32 %v3265, 0.0
      %v3338 = vmax.f32 %v3266, 0.0
      %v3339 = vmax.f32 %v3267, 0.0
      %v3340 = vmax.f32 %v3268, 0.0
      %v3341 = vmax.f32 %v3269, 0.0
      %v3342 = vmax.f32 %v3270, 0.0
      %v3343 = vmax.f32 %v3271, 0.0
      %v3344 = vmax.f32 %v3272, 0.0
      %v3345 = vmax.f32 %v3273, 0.0
      %v3346 = vmax.f32 %v3274, 0.0
      %v3347 = vmax.f32 %v3275, 0.0
      %v3348 = vmax.f32 %v3276, 0.0
      %v3349 = vmax.f32 %v3277, 0.0
      %v3350 = vmax.f32 %v3278, 0.0
      %v3351 = vmax.f32 %v3279, 0.0
      %v3352 = vmax.f32 %v3280, 0.0
      %v3353 = vmax.f32 %v3281, 0.0
      %v3354 = vmax.f32 %v3282, 0.0
      %v3355 = vmax.f32 %v3283, 0.0
      %v3356 = vmax.f32 %v3284, 0.0
      %v3357 = vmax.f32 %v3285, 0.0
      %v3358 = vmax.f32 %v3286, 0.0
      %vm3359 = vcmask 64512
      %v3361 = vsel %vm3359, %v3287, 0
      %v3364 = vsel %vm3359, %v3288, 0
      %v3367 = vsel %vm3359, %v3289, 0
      %v3370 = vsel %vm3359, %v3290, 0
      %v3373 = vsel %vm3359, %v3291, 0
      %v3376 = vsel %vm3359, %v3292, 0
      %v3379 = vsel %vm3359, %v3293, 0
      %v3382 = vsel %vm3359, %v3294, 0
      %v3385 = vsel %vm3359, %v3295, 0
      %v3388 = vsel %vm3359, %v3296, 0
      %v3391 = vsel %vm3359, %v3297, 0
      %v3394 = vsel %vm3359, %v3298, 0
      %v3397 = vsel %vm3359, %v3299, 0
      %v3400 = vsel %vm3359, %v3300, 0
      %v3403 = vsel %vm3359, %v3301, 0
      %v3406 = vsel %vm3359, %v3302, 0
      %v3409 = vsel %vm3359, %v3303, 0
      %v3412 = vsel %vm3359, %v3304, 0
      %v3415 = vsel %vm3359, %v3305, 0
      %v3418 = vsel %vm3359, %v3306, 0
      %v3421 = vsel %vm3359, %v3307, 0
      %v3424 = vsel %vm3359, %v3308, 0
      %v3427 = vsel %vm3359, %v3309, 0
      %v3430 = vsel %vm3359, %v3310, 0
      %v3433 = vsel %vm3359, %v3311, 0
      %v3436 = vsel %vm3359, %v3312, 0
      %v3439 = vsel %vm3359, %v3313, 0
      %v3442 = vsel %vm3359, %v3314, 0
      %v3445 = vsel %vm3359, %v3315, 0
      %v3448 = vsel %vm3359, %v3316, 0
      %v3451 = vsel %vm3359, %v3317, 0
      %v3454 = vsel %vm3359, %v3318, 0
      %v3457 = vsel %vm3359, %v3319, 0
      %v3460 = vsel %vm3359, %v3320, 0
      %v3463 = vsel %vm3359, %v3321, 0
      %v3466 = vsel %vm3359, %v3322, 0
      %v3469 = vsel %vm3359, %v3323, 0
      %v3472 = vsel %vm3359, %v3324, 0
      %v3475 = vsel %vm3359, %v3325, 0
      %v3478 = vsel %vm3359, %v3326, 0
      %v3481 = vsel %vm3359, %v3327, 0
      %v3484 = vsel %vm3359, %v3328, 0
      %v3487 = vsel %vm3359, %v3329, 0
      %v3490 = vsel %vm3359, %v3330, 0
      %v3493 = vsel %vm3359, %v3331, 0
      %v3496 = vsel %vm3359, %v3332, 0
      %v3499 = vsel %vm3359, %v3333, 0
      %v3502 = vsel %vm3359, %v3334, 0
      %v3505 = vsel %vm3359, %v3335, 0
      %v3508 = vsel %vm3359, %v3336, 0
      %v3511 = vsel %vm3359, %v3337, 0
      %v3514 = vsel %vm3359, %v3338, 0
      %v3517 = vsel %vm3359, %v3339, 0
      %v3520 = vsel %vm3359, %v3340, 0
      %v3523 = vsel %vm3359, %v3341, 0
      %v3526 = vsel %vm3359, %v3342, 0
      %v3529 = vsel %vm3359, %v3343, 0
      %v3532 = vsel %vm3359, %v3344, 0
      %v3535 = vsel %vm3359, %v3345, 0
      %v3538 = vsel %vm3359, %v3346, 0
      %v3541 = vsel %vm3359, %v3347, 0
      %v3544 = vsel %vm3359, %v3348, 0
      %v3547 = vsel %vm3359, %v3349, 0
      %v3550 = vsel %vm3359, %v3350, 0
      %v3553 = vsel %vm3359, %v3351, 0
      %v3556 = vsel %vm3359, %v3352, 0
      %v3559 = vsel %vm3359, %v3353, 0
      %v3562 = vsel %vm3359, %v3354, 0
      %v3565 = vsel %vm3359, %v3355, 0
      %v3568 = vsel %vm3359, %v3356, 0
      %v3571 = vsel %vm3359, %v3357, 0
      %v3574 = vsel %vm3359, %v3358, 0
      %3576 = vmatprep.subr.mxu0 0.0
      %3577 = vmatpush1.msra.mxu0 %v290
      %3578 = vmatprep.subr.mxu0 0.0
      %3579 = vmatpush1.msra.mxu0 0.0
      %3580 = vmatprep.subr.mxu0 0.0
      %3581 = vmatpush1.msra.mxu0 0.0
      %3582 = vmatprep.subr.mxu0 0.0
      %3583 = vmatpush1.msra.mxu0 0.0
      %3584 = vmatprep.subr.mxu0 0.0
      %3585 = vmatpush1.msra.mxu0 0.0
      %3586 = vmatprep.subr.mxu0 0.0
      %3587 = vmatpush1.msra.mxu0 0.0
      %3588 = vmatprep.subr.mxu0 0.0
      %3589 = vmatpush1.msra.mxu0 0.0
      %3590 = vmatprep.subr.mxu0 0.0
      %3591 = vmatpush1.msra.mxu0 0.0
      %3592 = vmatprep.subr.mxu0 0.0
      %3593 = vmatpush1.msra.mxu0 0.0
      %3594 = vmatprep.subr.mxu0 0.0
      %3595 = vmatpush1.msra.mxu0 0.0
      %3596 = vmatprep.subr.mxu0 0.0
      %3597 = vmatpush1.msra.mxu0 0.0
      %3598 = vmatprep.subr.mxu0 0.0
      %3599 = vmatpush1.msra.mxu0 0.0
      %3600 = vmatprep.subr.mxu0 0.0
      %3601 = vmatpush1.msra.mxu0 0.0
      %3602 = vmatprep.subr.mxu0 0.0
      %3603 = vmatpush1.msra.mxu0 0.0
      %3604 = vmatprep.subr.mxu0 0.0
      %3605 = vmatpush1.msra.mxu0 0.0
      %3606 = vmatprep.subr.mxu0 0.0
      %3607 = vmatpush1.msra.mxu0 0.0
      %3608 = vmatprep.subr.mxu0 0.0
      %3609 = vmatpush1.msra.mxu0 0.0
      %3610 = vmatprep.subr.mxu0 0.0
      %3611 = vmatpush1.msra.mxu0 0.0
      %3612 = vmatprep.subr.mxu0 0.0
      %3613 = vmatpush1.msra.mxu0 0.0
      %3614 = vmatprep.subr.mxu0 0.0
      %3615 = vmatpush1.msra.mxu0 0.0
      %3616 = vmatprep.subr.mxu0 0.0
      %3617 = vmatpush1.msra.mxu0 0.0
      %3618 = vmatprep.subr.mxu0 0.0
      %3619 = vmatpush1.msra.mxu0 0.0
      %3620 = vmatprep.subr.mxu0 0.0
      %3621 = vmatpush1.msra.mxu0 0.0
      %3622 = vmatprep.subr.mxu0 0.0
      %3623 = vmatpush1.msra.mxu0 0.0
      %3624 = vmatprep.subr.mxu0 0.0
      %3625 = vmatpush1.msra.mxu0 0.0
      %3626 = vmatprep.subr.mxu0 0.0
      %3627 = vmatpush1.msra.mxu0 0.0
      %3628 = vmatprep.subr.mxu0 0.0
      %3629 = vmatpush1.msra.mxu0 0.0
      %3630 = vmatprep.subr.mxu0 0.0
      %3631 = vmatpush1.msra.mxu0 0.0
      %3632 = vmatprep.subr.mxu0 0.0
      %3633 = vmatpush1.msra.mxu0 0.0
      %3634 = vmatprep.subr.mxu0 0.0
      %3635 = vmatpush1.msra.mxu0 0.0
      %3636 = vmatprep.subr.mxu0 0.0
      %3637 = vmatpush1.msra.mxu0 0.0
      %3638 = vmatprep.subr.mxu0 0.0
      %3639 = vmatpush1.msra.mxu0 0.0
      %3640 = vmatprep.mubr.f32.mxu0 0.0
      %3641 = vmatmul.mubr.f32.gmra.mrb[0].mxu0 %v3361
      %v3642 = vpop.f32.mrb[0].mxu0
      %v3643 = vadd.f32 0.0, %v3642
      %v3644 = vpop.f32.mrb[0].mxu0
      %3645 = vmatprep.mubr.f32.mxu0 0.0
      %3646 = vmatmul.mubr.f32.gmra.mrb[0].mxu0 %v3364
      %v3647 = vpop.f32.mrb[0].mxu0
      %v3648 = vadd.f32 0.0, %v3647
      %v3649 = vpop.f32.mrb[0].mxu0
      %3650 = vmatprep.mubr.f32.mxu0 0.0
      %3651 = vmatmul.mubr.f32.gmra.mrb[0].mxu0 %v3367
      %v3652 = vpop.f32.mrb[0].mxu0
      %v3653 = vadd.f32 0.0, %v3652
      %v3654 = vpop.f32.mrb[0].mxu0
      %3655 = vmatprep.mubr.f32.mxu0 0.0
      %3656 = vmatmul.mubr.f32.gmra.mrb[0].mxu0 %v3370
      %v3657 = vpop.f32.mrb[0].mxu0
      %v3658 = vadd.f32 0.0, %v3657
      %v3659 = vpop.f32.mrb[0].mxu0
      %3660 = vmatprep.mubr.f32.mxu0 0.0
      %3661 = vmatmul.mubr.f32.gmra.mrb[0].mxu0 %v3373
      %v3662 = vpop.f32.mrb[0].mxu0
      %v3663 = vadd.f32 0.0, %v3662
      %v3664 = vpop.f32.mrb[0].mxu0
      %3665 = vmatprep.mubr.f32.mxu0 0.0
      %3666 = vmatmul.mubr.f32.gmra.mrb[0].mxu0 %v3376
      %v3667 = vpop.f32.mrb[0].mxu0
      %v3668 = vadd.f32 0.0, %v3667
      %v3669 = vpop.f32.mrb[0].mxu0
      %3670 = vmatprep.mubr.f32.mxu0 0.0
      %3671 = vmatmul.mubr.f32.gmra.mrb[0].mxu0 %v3379
      %v3672 = vpop.f32.mrb[0].mxu0
      %v3673 = vadd.f32 0.0, %v3672
      %v3674 = vpop.f32.mrb[0].mxu0
      %3675 = vmatprep.mubr.f32.mxu0 0.0
      %3676 = vmatmul.mubr.f32.gmra.mrb[0].mxu0 %v3382
      %v3677 = vpop.f32.mrb[0].mxu0
      %v3678 = vadd.f32 0.0, %v3677
      %v3679 = vpop.f32.mrb[0].mxu0
      %3680 = vmatprep.mubr.f32.mxu0 0.0
      %3681 = vmatmul.mubr.f32.gmra.mrb[0].mxu0 %v3385
      %v3682 = vpop.f32.mrb[0].mxu0
      %v3683 = vadd.f32 0.0, %v3682
      %v3684 = vpop.f32.mrb[0].mxu0
      %3685 = vmatprep.mubr.f32.mxu0 0.0
      %3686 = vmatmul.mubr.f32.gmra.mrb[0].mxu0 %v3388
      %v3687 = vpop.f32.mrb[0].mxu0
      %v3688 = vadd.f32 0.0, %v3687
      %v3689 = vpop.f32.mrb[0].mxu0
      %3690 = vmatprep.mubr.f32.mxu0 0.0
      %3691 = vmatmul.mubr.f32.gmra.mrb[0].mxu0 %v3391
      %v3692 = vpop.f32.mrb[0].mxu0
      %v3693 = vadd.f32 0.0, %v3692
      %v3694 = vpop.f32.mrb[0].mxu0
      %3695 = vmatprep.mubr.f32.mxu0 0.0
      %3696 = vmatmul.mubr.f32.gmra.mrb[0].mxu0 %v3394
      %v3697 = vpop.f32.mrb[0].mxu0
      %v3698 = vadd.f32 0.0, %v3697
      %v3699 = vpop.f32.mrb[0].mxu0
      %3700 = vmatprep.mubr.f32.mxu0 0.0
      %3701 = vmatmul.mubr.f32.gmra.mrb[0].mxu0 %v3397
      %v3702 = vpop.f32.mrb[0].mxu0
      %v3703 = vadd.f32 0.0, %v3702
      %v3704 = vpop.f32.mrb[0].mxu0
      %3705 = vmatprep.mubr.f32.mxu0 0.0
      %3706 = vmatmul.mubr.f32.gmra.mrb[0].mxu0 %v3400
      %v3707 = vpop.f32.mrb[0].mxu0
      %v3708 = vadd.f32 0.0, %v3707
      %v3709 = vpop.f32.mrb[0].mxu0
      %3710 = vmatprep.mubr.f32.mxu0 0.0
      %3711 = vmatmul.mubr.f32.gmra.mrb[0].mxu0 %v3403
      %v3712 = vpop.f32.mrb[0].mxu0
      %v3713 = vadd.f32 0.0, %v3712
      %v3714 = vpop.f32.mrb[0].mxu0
      %3715 = vmatprep.mubr.f32.mxu0 0.0
      %3716 = vmatmul.mubr.f32.gmra.mrb[0].mxu0 %v3406
      %v3717 = vpop.f32.mrb[0].mxu0
      %v3718 = vadd.f32 0.0, %v3717
      %v3719 = vpop.f32.mrb[0].mxu0
      %3720 = vmatprep.mubr.f32.mxu0 0.0
      %3721 = vmatmul.mubr.f32.gmra.mrb[0].mxu0 %v3409
      %v3722 = vpop.f32.mrb[0].mxu0
      %v3723 = vadd.f32 0.0, %v3722
      %v3724 = vpop.f32.mrb[0].mxu0
      %3725 = vmatprep.mubr.f32.mxu0 0.0
      %3726 = vmatmul.mubr.f32.gmra.mrb[0].mxu0 %v3412
      %v3727 = vpop.f32.mrb[0].mxu0
      %v3728 = vadd.f32 0.0, %v3727
      %v3729 = vpop.f32.mrb[0].mxu0
      %3730 = vmatprep.mubr.f32.mxu0 0.0
      %3731 = vmatmul.mubr.f32.gmra.mrb[0].mxu0 %v3415
      %v3732 = vpop.f32.mrb[0].mxu0
      %v3733 = vadd.f32 0.0, %v3732
      %v3734 = vpop.f32.mrb[0].mxu0
      %3735 = vmatprep.mubr.f32.mxu0 0.0
      %3736 = vmatmul.mubr.f32.gmra.mrb[0].mxu0 %v3418
      %v3737 = vpop.f32.mrb[0].mxu0
      %v3738 = vadd.f32 0.0, %v3737
      %v3739 = vpop.f32.mrb[0].mxu0
      %3740 = vmatprep.mubr.f32.mxu0 0.0
      %3741 = vmatmul.mubr.f32.gmra.mrb[0].mxu0 %v3421
      %v3742 = vpop.f32.mrb[0].mxu0
      %v3743 = vadd.f32 0.0, %v3742
      %v3744 = vpop.f32.mrb[0].mxu0
      %3745 = vmatprep.mubr.f32.mxu0 0.0
      %3746 = vmatmul.mubr.f32.gmra.mrb[0].mxu0 %v3424
      %v3747 = vpop.f32.mrb[0].mxu0
      %v3748 = vadd.f32 0.0, %v3747
      %v3749 = vpop.f32.mrb[0].mxu0
      %3750 = vmatprep.mubr.f32.mxu0 0.0
      %3751 = vmatmul.mubr.f32.gmra.mrb[0].mxu0 %v3427
      %v3752 = vpop.f32.mrb[0].mxu0
      %v3753 = vadd.f32 0.0, %v3752
      %v3754 = vpop.f32.mrb[0].mxu0
      %3755 = vmatprep.mubr.f32.mxu0 0.0
      %3756 = vmatmul.mubr.f32.gmra.mrb[0].mxu0 %v3430
      %v3757 = vpop.f32.mrb[0].mxu0
      %v3758 = vadd.f32 0.0, %v3757
      %v3759 = vpop.f32.mrb[0].mxu0
      %3760 = vmatprep.mubr.f32.mxu0 0.0
      %3761 = vmatmul.mubr.f32.gmra.mrb[0].mxu0 %v3433
      %v3762 = vpop.f32.mrb[0].mxu0
      %v3763 = vadd.f32 0.0, %v3762
      %v3764 = vpop.f32.mrb[0].mxu0
      %3765 = vmatprep.mubr.f32.mxu0 0.0
      %3766 = vmatmul.mubr.f32.gmra.mrb[0].mxu0 %v3436
      %v3767 = vpop.f32.mrb[0].mxu0
      %v3768 = vadd.f32 0.0, %v3767
      %v3769 = vpop.f32.mrb[0].mxu0
      %3770 = vmatprep.mubr.f32.mxu0 0.0
      %3771 = vmatmul.mubr.f32.gmra.mrb[0].mxu0 %v3439
      %v3772 = vpop.f32.mrb[0].mxu0
      %v3773 = vadd.f32 0.0, %v3772
      %v3774 = vpop.f32.mrb[0].mxu0
      %3775 = vmatprep.mubr.f32.mxu0 0.0
      %3776 = vmatmul.mubr.f32.gmra.mrb[0].mxu0 %v3442
      %v3777 = vpop.f32.mrb[0].mxu0
      %v3778 = vadd.f32 0.0, %v3777
      %v3779 = vpop.f32.mrb[0].mxu0
      %3780 = vmatprep.mubr.f32.mxu0 0.0
      %3781 = vmatmul.mubr.f32.gmra.mrb[0].mxu0 %v3445
      %v3782 = vpop.f32.mrb[0].mxu0
      %v3783 = vadd.f32 0.0, %v3782
      %v3784 = vpop.f32.mrb[0].mxu0
      %3785 = vmatprep.mubr.f32.mxu0 0.0
      %3786 = vmatmul.mubr.f32.gmra.mrb[0].mxu0 %v3448
      %v3787 = vpop.f32.mrb[0].mxu0
      %v3788 = vadd.f32 0.0, %v3787
      %v3789 = vpop.f32.mrb[0].mxu0
      %3790 = vmatprep.mubr.f32.mxu0 0.0
      %3791 = vmatmul.mubr.f32.gmra.mrb[0].mxu0 %v3451
      %v3792 = vpop.f32.mrb[0].mxu0
      %v3793 = vadd.f32 0.0, %v3792
      %v3794 = vpop.f32.mrb[0].mxu0
      %3795 = vmatprep.mubr.f32.mxu0 0.0
      %3796 = vmatmul.mubr.f32.gmra.mrb[0].mxu0 %v3454
      %v3797 = vpop.f32.mrb[0].mxu0
      %v3798 = vadd.f32 0.0, %v3797
      %v3799 = vpop.f32.mrb[0].mxu0
      %3800 = vmatprep.mubr.f32.mxu0 0.0
      %3801 = vmatmul.mubr.f32.gmra.mrb[0].mxu0 %v3457
      %v3802 = vpop.f32.mrb[0].mxu0
      %v3803 = vadd.f32 0.0, %v3802
      %v3804 = vpop.f32.mrb[0].mxu0
      %3805 = vmatprep.mubr.f32.mxu0 0.0
      %3806 = vmatmul.mubr.f32.gmra.mrb[0].mxu0 %v3460
      %v3807 = vpop.f32.mrb[0].mxu0
      %v3808 = vadd.f32 0.0, %v3807
      %v3809 = vpop.f32.mrb[0].mxu0
      %3810 = vmatprep.mubr.f32.mxu0 0.0
      %3811 = vmatmul.mubr.f32.gmra.mrb[0].mxu0 %v3463
      %v3812 = vpop.f32.mrb[0].mxu0
      %v3813 = vadd.f32 0.0, %v3812
      %v3814 = vpop.f32.mrb[0].mxu0
      %3815 = vmatprep.mubr.f32.mxu0 0.0
      %3816 = vmatmul.mubr.f32.gmra.mrb[0].mxu0 %v3466
      %v3817 = vpop.f32.mrb[0].mxu0
      %v3818 = vadd.f32 0.0, %v3817
      %v3819 = vpop.f32.mrb[0].mxu0
      %3820 = vmatprep.mubr.f32.mxu0 0.0
      %3821 = vmatmul.mubr.f32.gmra.mrb[0].mxu0 %v3469
      %v3822 = vpop.f32.mrb[0].mxu0
      %v3823 = vadd.f32 0.0, %v3822
      %v3824 = vpop.f32.mrb[0].mxu0
      %3825 = vmatprep.mubr.f32.mxu0 0.0
      %3826 = vmatmul.mubr.f32.gmra.mrb[0].mxu0 %v3472
      %v3827 = vpop.f32.mrb[0].mxu0
      %v3828 = vadd.f32 0.0, %v3827
      %v3829 = vpop.f32.mrb[0].mxu0
      %3830 = vmatprep.mubr.f32.mxu0 0.0
      %3831 = vmatmul.mubr.f32.gmra.mrb[0].mxu0 %v3475
      %v3832 = vpop.f32.mrb[0].mxu0
      %v3833 = vadd.f32 0.0, %v3832
      %v3834 = vpop.f32.mrb[0].mxu0
      %3835 = vmatprep.mubr.f32.mxu0 0.0
      %3836 = vmatmul.mubr.f32.gmra.mrb[0].mxu0 %v3478
      %v3837 = vpop.f32.mrb[0].mxu0
      %v3838 = vadd.f32 0.0, %v3837
      %v3839 = vpop.f32.mrb[0].mxu0
      %3840 = vmatprep.mubr.f32.mxu0 0.0
      %3841 = vmatmul.mubr.f32.gmra.mrb[0].mxu0 %v3481
      %v3842 = vpop.f32.mrb[0].mxu0
      %v3843 = vadd.f32 0.0, %v3842
      %v3844 = vpop.f32.mrb[0].mxu0
      %3845 = vmatprep.mubr.f32.mxu0 0.0
      %3846 = vmatmul.mubr.f32.gmra.mrb[0].mxu0 %v3484
      %v3847 = vpop.f32.mrb[0].mxu0
      %v3848 = vadd.f32 0.0, %v3847
      %v3849 = vpop.f32.mrb[0].mxu0
      %3850 = vmatprep.mubr.f32.mxu0 0.0
      %3851 = vmatmul.mubr.f32.gmra.mrb[0].mxu0 %v3487
      %v3852 = vpop.f32.mrb[0].mxu0
      %v3853 = vadd.f32 0.0, %v3852
      %v3854 = vpop.f32.mrb[0].mxu0
      %3855 = vmatprep.mubr.f32.mxu0 0.0
      %3856 = vmatmul.mubr.f32.gmra.mrb[0].mxu0 %v3490
      %v3857 = vpop.f32.mrb[0].mxu0
      %v3858 = vadd.f32 0.0, %v3857
      %v3859 = vpop.f32.mrb[0].mxu0
      %3860 = vmatprep.mubr.f32.mxu0 0.0
      %3861 = vmatmul.mubr.f32.gmra.mrb[0].mxu0 %v3493
      %v3862 = vpop.f32.mrb[0].mxu0
      %v3863 = vadd.f32 0.0, %v3862
      %v3864 = vpop.f32.mrb[0].mxu0
      %3865 = vmatprep.mubr.f32.mxu0 0.0
      %3866 = vmatmul.mubr.f32.gmra.mrb[0].mxu0 %v3496
      %v3867 = vpop.f32.mrb[0].mxu0
      %v3868 = vadd.f32 0.0, %v3867
      %v3869 = vpop.f32.mrb[0].mxu0
      %3870 = vmatprep.mubr.f32.mxu0 0.0
      %3871 = vmatmul.mubr.f32.gmra.mrb[0].mxu0 %v3499
      %v3872 = vpop.f32.mrb[0].mxu0
      %v3873 = vadd.f32 0.0, %v3872
      %v3874 = vpop.f32.mrb[0].mxu0
      %3875 = vmatprep.mubr.f32.mxu0 0.0
      %3876 = vmatmul.mubr.f32.gmra.mrb[0].mxu0 %v3502
      %v3877 = vpop.f32.mrb[0].mxu0
      %v3878 = vadd.f32 0.0, %v3877
      %v3879 = vpop.f32.mrb[0].mxu0
      %3880 = vmatprep.mubr.f32.mxu0 0.0
      %3881 = vmatmul.mubr.f32.gmra.mrb[0].mxu0 %v3505
      %v3882 = vpop.f32.mrb[0].mxu0
      %v3883 = vadd.f32 0.0, %v3882
      %v3884 = vpop.f32.mrb[0].mxu0
      %3885 = vmatprep.mubr.f32.mxu0 0.0
      %3886 = vmatmul.mubr.f32.gmra.mrb[0].mxu0 %v3508
      %v3887 = vpop.f32.mrb[0].mxu0
      %v3888 = vadd.f32 0.0, %v3887
      %v3889 = vpop.f32.mrb[0].mxu0
      %3890 = vmatprep.mubr.f32.mxu0 0.0
      %3891 = vmatmul.mubr.f32.gmra.mrb[0].mxu0 %v3511
      %v3892 = vpop.f32.mrb[0].mxu0
      %v3893 = vadd.f32 0.0, %v3892
      %v3894 = vpop.f32.mrb[0].mxu0
      %3895 = vmatprep.mubr.f32.mxu0 0.0
      %3896 = vmatmul.mubr.f32.gmra.mrb[0].mxu0 %v3514
      %v3897 = vpop.f32.mrb[0].mxu0
      %v3898 = vadd.f32 0.0, %v3897
      %v3899 = vpop.f32.mrb[0].mxu0
      %3900 = vmatprep.mubr.f32.mxu0 0.0
      %3901 = vmatmul.mubr.f32.gmra.mrb[0].mxu0 %v3517
      %v3902 = vpop.f32.mrb[0].mxu0
      %v3903 = vadd.f32 0.0, %v3902
      %v3904 = vpop.f32.mrb[0].mxu0
      %3905 = vmatprep.mubr.f32.mxu0 0.0
      %3906 = vmatmul.mubr.f32.gmra.mrb[0].mxu0 %v3520
      %v3907 = vpop.f32.mrb[0].mxu0
      %v3908 = vadd.f32 0.0, %v3907
      %v3909 = vpop.f32.mrb[0].mxu0
      %3910 = vmatprep.mubr.f32.mxu0 0.0
      %3911 = vmatmul.mubr.f32.gmra.mrb[0].mxu0 %v3523
      %v3912 = vpop.f32.mrb[0].mxu0
      %v3913 = vadd.f32 0.0, %v3912
      %v3914 = vpop.f32.mrb[0].mxu0
      %3915 = vmatprep.mubr.f32.mxu0 0.0
      %3916 = vmatmul.mubr.f32.gmra.mrb[0].mxu0 %v3526
      %v3917 = vpop.f32.mrb[0].mxu0
      %v3918 = vadd.f32 0.0, %v3917
      %v3919 = vpop.f32.mrb[0].mxu0
      %3920 = vmatprep.mubr.f32.mxu0 0.0
      %3921 = vmatmul.mubr.f32.gmra.mrb[0].mxu0 %v3529
      %v3922 = vpop.f32.mrb[0].mxu0
      %v3923 = vadd.f32 0.0, %v3922
      %v3924 = vpop.f32.mrb[0].mxu0
      %3925 = vmatprep.mubr.f32.mxu0 0.0
      %3926 = vmatmul.mubr.f32.gmra.mrb[0].mxu0 %v3532
      %v3927 = vpop.f32.mrb[0].mxu0
      %v3928 = vadd.f32 0.0, %v3927
      %v3929 = vpop.f32.mrb[0].mxu0
      %3930 = vmatprep.mubr.f32.mxu0 0.0
      %3931 = vmatmul.mubr.f32.gmra.mrb[0].mxu0 %v3535
      %v3932 = vpop.f32.mrb[0].mxu0
      %v3933 = vadd.f32 0.0, %v3932
      %v3934 = vpop.f32.mrb[0].mxu0
      %3935 = vmatprep.mubr.f32.mxu0 0.0
      %3936 = vmatmul.mubr.f32.gmra.mrb[0].mxu0 %v3538
      %v3937 = vpop.f32.mrb[0].mxu0
      %v3938 = vadd.f32 0.0, %v3937
      %v3939 = vpop.f32.mrb[0].mxu0
      %3940 = vmatprep.mubr.f32.mxu0 0.0
      %3941 = vmatmul.mubr.f32.gmra.mrb[0].mxu0 %v3541
      %v3942 = vpop.f32.mrb[0].mxu0
      %v3943 = vadd.f32 0.0, %v3942
      %v3944 = vpop.f32.mrb[0].mxu0
      %3945 = vmatprep.mubr.f32.mxu0 0.0
      %3946 = vmatmul.mubr.f32.gmra.mrb[0].mxu0 %v3544
      %v3947 = vpop.f32.mrb[0].mxu0
      %v3948 = vadd.f32 0.0, %v3947
      %v3949 = vpop.f32.mrb[0].mxu0
      %3950 = vmatprep.mubr.f32.mxu0 0.0
      %3951 = vmatmul.mubr.f32.gmra.mrb[0].mxu0 %v3547
      %v3952 = vpop.f32.mrb[0].mxu0
      %v3953 = vadd.f32 0.0, %v3952
      %v3954 = vpop.f32.mrb[0].mxu0
      %3955 = vmatprep.mubr.f32.mxu0 0.0
      %3956 = vmatmul.mubr.f32.gmra.mrb[0].mxu0 %v3550
      %v3957 = vpop.f32.mrb[0].mxu0
      %v3958 = vadd.f32 0.0, %v3957
      %v3959 = vpop.f32.mrb[0].mxu0
      %3960 = vmatprep.mubr.f32.mxu0 0.0
      %3961 = vmatmul.mubr.f32.gmra.mrb[0].mxu0 %v3553
      %v3962 = vpop.f32.mrb[0].mxu0
      %v3963 = vadd.f32 0.0, %v3962
      %v3964 = vpop.f32.mrb[0].mxu0
      %3965 = vmatprep.mubr.f32.mxu0 0.0
      %3966 = vmatmul.mubr.f32.gmra.mrb[0].mxu0 %v3556
      %v3967 = vpop.f32.mrb[0].mxu0
      %v3968 = vadd.f32 0.0, %v3967
      %v3969 = vpop.f32.mrb[0].mxu0
      %3970 = vmatprep.mubr.f32.mxu0 0.0
      %3971 = vmatmul.mubr.f32.gmra.mrb[0].mxu0 %v3559
      %v3972 = vpop.f32.mrb[0].mxu0
      %v3973 = vadd.f32 0.0, %v3972
      %v3974 = vpop.f32.mrb[0].mxu0
      %3975 = vmatprep.mubr.f32.mxu0 0.0
      %3976 = vmatmul.mubr.f32.gmra.mrb[0].mxu0 %v3562
      %v3977 = vpop.f32.mrb[0].mxu0
      %v3978 = vadd.f32 0.0, %v3977
      %v3979 = vpop.f32.mrb[0].mxu0
      %3980 = vmatprep.mubr.f32.mxu0 0.0
      %3981 = vmatmul.mubr.f32.gmra.mrb[0].mxu0 %v3565
      %v3982 = vpop.f32.mrb[0].mxu0
      %v3983 = vadd.f32 0.0, %v3982
      %v3984 = vpop.f32.mrb[0].mxu0
      %3985 = vmatprep.mubr.f32.mxu0 0.0
      %3986 = vmatmul.mubr.f32.gmra.mrb[0].mxu0 %v3568
      %v3987 = vpop.f32.mrb[0].mxu0
      %v3988 = vadd.f32 0.0, %v3987
      %v3989 = vpop.f32.mrb[0].mxu0
      %3990 = vmatprep.mubr.f32.mxu0 0.0
      %3991 = vmatmul.mubr.f32.gmra.mrb[0].mxu0 %v3571
      %v3992 = vpop.f32.mrb[0].mxu0
      %v3993 = vadd.f32 0.0, %v3992
      %v3994 = vpop.f32.mrb[0].mxu0
      %3995 = vmatprep.mubr.f32.mxu0 0.0
      %3996 = vmatmul.mubr.f32.gmra.mrb[0].mxu0 %v3574
      %v3997 = vpop.f32.mrb[0].mxu0
      %v3998 = vadd.f32 0.0, %v3997
      %v3999 = vpop.f32.mrb[0].mxu0
      %4000 = vdwg.mxu0
      %v4001 = vpack.c.bf16 %v3648, %v3643
      %v4002 = vpack.c.bf16 %v3658, %v3653
      %v4003 = vpack.c.bf16 %v3668, %v3663
      %v4004 = vpack.c.bf16 %v3678, %v3673
      %v4005 = vpack.c.bf16 %v3688, %v3683
      %v4006 = vpack.c.bf16 %v3698, %v3693
      %v4007 = vpack.c.bf16 %v3708, %v3703
      %v4008 = vpack.c.bf16 %v3718, %v3713
      %v4009 = vpack.c.bf16 %v3728, %v3723
      %v4010 = vpack.c.bf16 %v3738, %v3733
      %v4011 = vpack.c.bf16 %v3748, %v3743
      %v4012 = vpack.c.bf16 %v3758, %v3753
      %v4013 = vpack.c.bf16 %v3768, %v3763
      %v4014 = vpack.c.bf16 %v3778, %v3773
      %v4015 = vpack.c.bf16 %v3788, %v3783
      %v4016 = vpack.c.bf16 %v3798, %v3793
      %v4017 = vpack.c.bf16 %v3808, %v3803
      %v4018 = vpack.c.bf16 %v3818, %v3813
      %v4019 = vpack.c.bf16 %v3828, %v3823
      %v4020 = vpack.c.bf16 %v3838, %v3833
      %v4021 = vpack.c.bf16 %v3848, %v3843
      %v4022 = vpack.c.bf16 %v3858, %v3853
      %v4023 = vpack.c.bf16 %v3868, %v3863
      %v4024 = vpack.c.bf16 %v3878, %v3873
      %v4025 = vpack.c.bf16 %v3888, %v3883
      %v4026 = vpack.c.bf16 %v3898, %v3893
      %v4027 = vpack.c.bf16 %v3908, %v3903
      %v4028 = vpack.c.bf16 %v3918, %v3913
      %v4029 = vpack.c.bf16 %v3928, %v3923
      %v4030 = vpack.c.bf16 %v3938, %v3933
      %v4031 = vpack.c.bf16 %v3948, %v3943
      %v4032 = vpack.c.bf16 %v3958, %v3953
      %v4033 = vpack.c.bf16 %v3968, %v3963
      %v4034 = vpack.c.bf16 %v3978, %v3973
      %v4035 = vpack.c.bf16 %v3988, %v3983
      %v4036 = vpack.c.bf16 %v3998, %v3993
      %v4038 = vlaneseq
      %v4039 = vshrl.u32 %v4038, 7
      %v4040 = vsub.s32 0, %v4039
      %v4041 = vrot.slane %v291, %v4040
      %v4044 = vsel %vm1804, %v4036, 0
      %4046 = vmatprep.subr.bf16.mxu0 0
      %4047 = vmatpush1.bf16.msra.mxu0 %v4001
      %4048 = vmatprep.subr.bf16.mxu0 0
      %4049 = vmatpush1.bf16.msra.mxu0 %v4002
      %4050 = vmatprep.subr.bf16.mxu0 0
      %4051 = vmatpush1.bf16.msra.mxu0 %v4003
      %4052 = vmatprep.subr.bf16.mxu0 0
      %4053 = vmatpush1.bf16.msra.mxu0 %v4004
      %4054 = vmatprep.subr.bf16.mxu0 0
      %4055 = vmatpush1.bf16.msra.mxu0 %v4005
      %4056 = vmatprep.subr.bf16.mxu0 0
      %4057 = vmatpush1.bf16.msra.mxu0 %v4006
      %4058 = vmatprep.subr.bf16.mxu0 0
      %4059 = vmatpush1.bf16.msra.mxu0 %v4007
      %4060 = vmatprep.subr.bf16.mxu0 0
      %4061 = vmatpush1.bf16.msra.mxu0 %v4008
      %4062 = vmatprep.subr.bf16.mxu0 0
      %4063 = vmatpush1.bf16.msra.mxu0 %v4009
      %4064 = vmatprep.subr.bf16.mxu0 0
      %4065 = vmatpush1.bf16.msra.mxu0 %v4010
      %4066 = vmatprep.subr.bf16.mxu0 0
      %4067 = vmatpush1.bf16.msra.mxu0 %v4011
      %4068 = vmatprep.subr.bf16.mxu0 0
      %4069 = vmatpush1.bf16.msra.mxu0 %v4012
      %4070 = vmatprep.subr.bf16.mxu0 0
      %4071 = vmatpush1.bf16.msra.mxu0 %v4013
      %4072 = vmatprep.subr.bf16.mxu0 0
      %4073 = vmatpush1.bf16.msra.mxu0 %v4014
      %4074 = vmatprep.subr.bf16.mxu0 0
      %4075 = vmatpush1.bf16.msra.mxu0 %v4015
      %4076 = vmatprep.subr.bf16.mxu0 0
      %4077 = vmatpush1.bf16.msra.mxu0 %v4016
      %4078 = vmatprep.mubr.bf16.mxu0 %v1157
      %4079 = vmatmul.mubr.bf16.gmra.mrb[0].mxu0 %v1156
      %v4080 = vpop.f32.mrb[0].mxu0
      %v4081 = vadd.f32 %v4041, %v4080
      %v4082 = vpop.f32.mrb[0].mxu0
      %v4083 = vpop.f32.mrb[0].mxu0
      %v4084 = vadd.f32 %v4041, %v4083
      %v4085 = vpop.f32.mrb[0].mxu0
      %4086 = vmatprep.mubr.bf16.mxu0 %v1162
      %4087 = vmatmul.mubr.bf16.gmra.mrb[0].mxu0 %v1161
      %v4088 = vpop.f32.mrb[0].mxu0
      %v4089 = vadd.f32 %v4041, %v4088
      %v4090 = vpop.f32.mrb[0].mxu0
      %v4091 = vpop.f32.mrb[0].mxu0
      %v4092 = vadd.f32 %v4041, %v4091
      %v4093 = vpop.f32.mrb[0].mxu0
      %4094 = vmatprep.mubr.bf16.mxu0 %v1167
      %4095 = vmatmul.mubr.bf16.gmra.mrb[0].mxu0 %v1166
      %v4096 = vpop.f32.mrb[0].mxu0
      %v4097 = vadd.f32 %v4041, %v4096
      %v4098 = vpop.f32.mrb[0].mxu0
      %v4099 = vpop.f32.mrb[0].mxu0
      %v4100 = vadd.f32 %v4041, %v4099
      %v4101 = vpop.f32.mrb[0].mxu0
      %4102 = vmatprep.mubr.bf16.mxu0 %v1172
      %4103 = vmatmul.mubr.bf16.gmra.mrb[0].mxu0 %v1171
      %v4104 = vpop.f32.mrb[0].mxu0
      %v4105 = vadd.f32 %v4041, %v4104
      %v4106 = vpop.f32.mrb[0].mxu0
      %v4107 = vpop.f32.mrb[0].mxu0
      %v4108 = vadd.f32 %v4041, %v4107
      %v4109 = vpop.f32.mrb[0].mxu0
      %4110 = vmatprep.mubr.bf16.mxu0 %v1177
      %4111 = vmatmul.mubr.bf16.gmra.mrb[0].mxu0 %v1176
      %v4112 = vpop.f32.mrb[0].mxu0
      %v4113 = vadd.f32 %v4041, %v4112
      %v4114 = vpop.f32.mrb[0].mxu0
      %v4115 = vpop.f32.mrb[0].mxu0
      %v4116 = vadd.f32 %v4041, %v4115
      %v4117 = vpop.f32.mrb[0].mxu0
      %4118 = vmatprep.mubr.bf16.mxu0 %v1182
      %4119 = vmatmul.mubr.bf16.gmra.mrb[0].mxu0 %v1181
      %v4120 = vpop.f32.mrb[0].mxu0
      %v4121 = vadd.f32 %v4041, %v4120
      %v4122 = vpop.f32.mrb[0].mxu0
      %v4123 = vpop.f32.mrb[0].mxu0
      %v4124 = vadd.f32 %v4041, %v4123
      %v4125 = vpop.f32.mrb[0].mxu0
      %4126 = vmatprep.mubr.bf16.mxu0 %v1187
      %4127 = vmatmul.mubr.bf16.gmra.mrb[0].mxu0 %v1186
      %v4128 = vpop.f32.mrb[0].mxu0
      %v4129 = vadd.f32 %v4041, %v4128
      %v4130 = vpop.f32.mrb[0].mxu0
      %v4131 = vpop.f32.mrb[0].mxu0
      %v4132 = vadd.f32 %v4041, %v4131
      %v4133 = vpop.f32.mrb[0].mxu0
      %4134 = vmatprep.mubr.bf16.mxu0 %v1192
      %4135 = vmatmul.mubr.bf16.gmra.mrb[0].mxu0 %v1191
      %v4136 = vpop.f32.mrb[0].mxu0
      %v4137 = vadd.f32 %v4041, %v4136
      %v4138 = vpop.f32.mrb[0].mxu0
      %v4139 = vpop.f32.mrb[0].mxu0
      %v4140 = vadd.f32 %v4041, %v4139
      %v4141 = vpop.f32.mrb[0].mxu0
      %4142 = vmatprep.mubr.bf16.mxu0 %v1197
      %4143 = vmatmul.mubr.bf16.gmra.mrb[0].mxu0 %v1196
      %v4144 = vpop.f32.mrb[0].mxu0
      %v4145 = vadd.f32 %v4041, %v4144
      %v4146 = vpop.f32.mrb[0].mxu0
      %v4147 = vpop.f32.mrb[0].mxu0
      %v4148 = vadd.f32 %v4041, %v4147
      %v4149 = vpop.f32.mrb[0].mxu0
      %4150 = vmatprep.mubr.bf16.mxu0 %v1202
      %4151 = vmatmul.mubr.bf16.gmra.mrb[0].mxu0 %v1201
      %v4152 = vpop.f32.mrb[0].mxu0
      %v4153 = vadd.f32 %v4041, %v4152
      %v4154 = vpop.f32.mrb[0].mxu0
      %v4155 = vpop.f32.mrb[0].mxu0
      %v4156 = vadd.f32 %v4041, %v4155
      %v4157 = vpop.f32.mrb[0].mxu0
      %4158 = vmatprep.mubr.bf16.mxu0 %v1207
      %4159 = vmatmul.mubr.bf16.gmra.mrb[0].mxu0 %v1206
      %v4160 = vpop.f32.mrb[0].mxu0
      %v4161 = vadd.f32 %v4041, %v4160
      %v4162 = vpop.f32.mrb[0].mxu0
      %v4163 = vpop.f32.mrb[0].mxu0
      %v4164 = vadd.f32 %v4041, %v4163
      %v4165 = vpop.f32.mrb[0].mxu0
      %4166 = vmatprep.mubr.bf16.mxu0 %v1212
      %4167 = vmatmul.mubr.bf16.gmra.mrb[0].mxu0 %v1211
      %v4168 = vpop.f32.mrb[0].mxu0
      %v4169 = vadd.f32 %v4041, %v4168
      %v4170 = vpop.f32.mrb[0].mxu0
      %v4171 = vpop.f32.mrb[0].mxu0
      %v4172 = vadd.f32 %v4041, %v4171
      %v4173 = vpop.f32.mrb[0].mxu0
      %4174 = vmatprep.mubr.bf16.mxu0 %v1217
      %4175 = vmatmul.mubr.bf16.gmra.mrb[0].mxu0 %v1216
      %v4176 = vpop.f32.mrb[0].mxu0
      %v4177 = vadd.f32 %v4041, %v4176
      %v4178 = vpop.f32.mrb[0].mxu0
      %v4179 = vpop.f32.mrb[0].mxu0
      %v4180 = vadd.f32 %v4041, %v4179
      %v4181 = vpop.f32.mrb[0].mxu0
      %4182 = vmatprep.mubr.bf16.mxu0 %v1222
      %4183 = vmatmul.mubr.bf16.gmra.mrb[0].mxu0 %v1221
      %v4184 = vpop.f32.mrb[0].mxu0
      %v4185 = vadd.f32 %v4041, %v4184
      %v4186 = vpop.f32.mrb[0].mxu0
      %v4187 = vpop.f32.mrb[0].mxu0
      %v4188 = vadd.f32 %v4041, %v4187
      %v4189 = vpop.f32.mrb[0].mxu0
      %4190 = vmatprep.mubr.bf16.mxu0 %v1227
      %4191 = vmatmul.mubr.bf16.gmra.mrb[0].mxu0 %v1226
      %v4192 = vpop.f32.mrb[0].mxu0
      %v4193 = vadd.f32 %v4041, %v4192
      %v4194 = vpop.f32.mrb[0].mxu0
      %v4195 = vpop.f32.mrb[0].mxu0
      %v4196 = vadd.f32 %v4041, %v4195
      %v4197 = vpop.f32.mrb[0].mxu0
      %4198 = vmatprep.mubr.bf16.mxu0 %v1232
      %4199 = vmatmul.mubr.bf16.gmra.mrb[0].mxu0 %v1231
      %v4200 = vpop.f32.mrb[0].mxu0
      %v4201 = vadd.f32 %v4041, %v4200
      %v4202 = vpop.f32.mrb[0].mxu0
      %v4203 = vpop.f32.mrb[0].mxu0
      %v4204 = vadd.f32 %v4041, %v4203
      %v4205 = vpop.f32.mrb[0].mxu0
      %4206 = vmatprep.mubr.bf16.mxu0 %v1237
      %4207 = vmatmul.mubr.bf16.gmra.mrb[0].mxu0 %v1236
      %v4208 = vpop.f32.mrb[0].mxu0
      %v4209 = vadd.f32 %v4041, %v4208
      %v4210 = vpop.f32.mrb[0].mxu0
      %v4211 = vpop.f32.mrb[0].mxu0
      %v4212 = vadd.f32 %v4041, %v4211
      %v4213 = vpop.f32.mrb[0].mxu0
      %4214 = vmatprep.mubr.bf16.mxu0 %v1242
      %4215 = vmatmul.mubr.bf16.gmra.mrb[0].mxu0 %v1241
      %v4216 = vpop.f32.mrb[0].mxu0
      %v4217 = vadd.f32 %v4041, %v4216
      %v4218 = vpop.f32.mrb[0].mxu0
      %v4219 = vpop.f32.mrb[0].mxu0
      %v4220 = vadd.f32 %v4041, %v4219
      %v4221 = vpop.f32.mrb[0].mxu0
      %4222 = vmatprep.mubr.bf16.mxu0 %v1247
      %4223 = vmatmul.mubr.bf16.gmra.mrb[0].mxu0 %v1246
      %v4224 = vpop.f32.mrb[0].mxu0
      %v4225 = vadd.f32 %v4041, %v4224
      %v4226 = vpop.f32.mrb[0].mxu0
      %v4227 = vpop.f32.mrb[0].mxu0
      %v4228 = vadd.f32 %v4041, %v4227
      %v4229 = vpop.f32.mrb[0].mxu0
      %4230 = vmatprep.mubr.bf16.mxu0 %v1252
      %4231 = vmatmul.mubr.bf16.gmra.mrb[0].mxu0 %v1251
      %v4232 = vpop.f32.mrb[0].mxu0
      %v4233 = vadd.f32 %v4041, %v4232
      %v4234 = vpop.f32.mrb[0].mxu0
      %v4235 = vpop.f32.mrb[0].mxu0
      %v4236 = vadd.f32 %v4041, %v4235
      %v4237 = vpop.f32.mrb[0].mxu0
      %4238 = vmatprep.mubr.bf16.mxu0 %v1257
      %4239 = vmatmul.mubr.bf16.gmra.mrb[0].mxu0 %v1256
      %v4240 = vpop.f32.mrb[0].mxu0
      %v4241 = vadd.f32 %v4041, %v4240
      %v4242 = vpop.f32.mrb[0].mxu0
      %v4243 = vpop.f32.mrb[0].mxu0
      %v4244 = vadd.f32 %v4041, %v4243
      %v4245 = vpop.f32.mrb[0].mxu0
      %4246 = vmatprep.mubr.bf16.mxu0 %v1262
      %4247 = vmatmul.mubr.bf16.gmra.mrb[0].mxu0 %v1261
      %v4248 = vpop.f32.mrb[0].mxu0
      %v4249 = vadd.f32 %v4041, %v4248
      %v4250 = vpop.f32.mrb[0].mxu0
      %v4251 = vpop.f32.mrb[0].mxu0
      %v4252 = vadd.f32 %v4041, %v4251
      %v4253 = vpop.f32.mrb[0].mxu0
      %4254 = vmatprep.mubr.bf16.mxu0 %v1267
      %4255 = vmatmul.mubr.bf16.gmra.mrb[0].mxu0 %v1266
      %v4256 = vpop.f32.mrb[0].mxu0
      %v4257 = vadd.f32 %v4041, %v4256
      %v4258 = vpop.f32.mrb[0].mxu0
      %v4259 = vpop.f32.mrb[0].mxu0
      %v4260 = vadd.f32 %v4041, %v4259
      %v4261 = vpop.f32.mrb[0].mxu0
      %4262 = vmatprep.mubr.bf16.mxu0 %v1272
      %4263 = vmatmul.mubr.bf16.gmra.mrb[0].mxu0 %v1271
      %v4264 = vpop.f32.mrb[0].mxu0
      %v4265 = vadd.f32 %v4041, %v4264
      %v4266 = vpop.f32.mrb[0].mxu0
      %v4267 = vpop.f32.mrb[0].mxu0
      %v4268 = vadd.f32 %v4041, %v4267
      %v4269 = vpop.f32.mrb[0].mxu0
      %4270 = vmatprep.mubr.bf16.mxu0 %v1277
      %4271 = vmatmul.mubr.bf16.gmra.mrb[0].mxu0 %v1276
      %v4272 = vpop.f32.mrb[0].mxu0
      %v4273 = vadd.f32 %v4041, %v4272
      %v4274 = vpop.f32.mrb[0].mxu0
      %v4275 = vpop.f32.mrb[0].mxu0
      %v4276 = vadd.f32 %v4041, %v4275
      %v4277 = vpop.f32.mrb[0].mxu0
      %4278 = vmatprep.mubr.bf16.mxu0 %v1282
      %4279 = vmatmul.mubr.bf16.gmra.mrb[0].mxu0 %v1281
      %v4280 = vpop.f32.mrb[0].mxu0
      %v4281 = vadd.f32 %v4041, %v4280
      %v4282 = vpop.f32.mrb[0].mxu0
      %v4283 = vpop.f32.mrb[0].mxu0
      %v4284 = vadd.f32 %v4041, %v4283
      %v4285 = vpop.f32.mrb[0].mxu0
      %4286 = vmatprep.mubr.bf16.mxu0 %v1287
      %4287 = vmatmul.mubr.bf16.gmra.mrb[0].mxu0 %v1286
      %v4288 = vpop.f32.mrb[0].mxu0
      %v4289 = vadd.f32 %v4041, %v4288
      %v4290 = vpop.f32.mrb[0].mxu0
      %v4291 = vpop.f32.mrb[0].mxu0
      %v4292 = vadd.f32 %v4041, %v4291
      %v4293 = vpop.f32.mrb[0].mxu0
      %4294 = vmatprep.mubr.bf16.mxu0 %v1292
      %4295 = vmatmul.mubr.bf16.gmra.mrb[0].mxu0 %v1291
      %v4296 = vpop.f32.mrb[0].mxu0
      %v4297 = vadd.f32 %v4041, %v4296
      %v4298 = vpop.f32.mrb[0].mxu0
      %v4299 = vpop.f32.mrb[0].mxu0
      %v4300 = vadd.f32 %v4041, %v4299
      %v4301 = vpop.f32.mrb[0].mxu0
      %4302 = vmatprep.mubr.bf16.mxu0 %v1297
      %4303 = vmatmul.mubr.bf16.gmra.mrb[0].mxu0 %v1296
      %v4304 = vpop.f32.mrb[0].mxu0
      %v4305 = vadd.f32 %v4041, %v4304
      %v4306 = vpop.f32.mrb[0].mxu0
      %v4307 = vpop.f32.mrb[0].mxu0
      %v4308 = vadd.f32 %v4041, %v4307
      %v4309 = vpop.f32.mrb[0].mxu0
      %4310 = vmatprep.mubr.bf16.mxu0 %v1302
      %4311 = vmatmul.mubr.bf16.gmra.mrb[0].mxu0 %v1301
      %v4312 = vpop.f32.mrb[0].mxu0
      %v4313 = vadd.f32 %v4041, %v4312
      %v4314 = vpop.f32.mrb[0].mxu0
      %v4315 = vpop.f32.mrb[0].mxu0
      %v4316 = vadd.f32 %v4041, %v4315
      %v4317 = vpop.f32.mrb[0].mxu0
      %4318 = vmatprep.mubr.bf16.mxu0 %v1307
      %4319 = vmatmul.mubr.bf16.gmra.mrb[0].mxu0 %v1306
      %v4320 = vpop.f32.mrb[0].mxu0
      %v4321 = vadd.f32 %v4041, %v4320
      %v4322 = vpop.f32.mrb[0].mxu0
      %v4323 = vpop.f32.mrb[0].mxu0
      %v4324 = vadd.f32 %v4041, %v4323
      %v4325 = vpop.f32.mrb[0].mxu0
      %4326 = vmatprep.mubr.bf16.mxu0 %v1312
      %4327 = vmatmul.mubr.bf16.gmra.mrb[0].mxu0 %v1311
      %v4328 = vpop.f32.mrb[0].mxu0
      %v4329 = vadd.f32 %v4041, %v4328
      %v4330 = vpop.f32.mrb[0].mxu0
      %v4331 = vpop.f32.mrb[0].mxu0
      %v4332 = vadd.f32 %v4041, %v4331
      %v4333 = vpop.f32.mrb[0].mxu0
      %4334 = vmatprep.mubr.bf16.mxu0 %v1317
      %4335 = vmatmul.mubr.bf16.gmra.mrb[0].mxu0 %v1316
      %v4336 = vpop.f32.mrb[0].mxu0
      %v4337 = vadd.f32 %v4041, %v4336
      %v4338 = vpop.f32.mrb[0].mxu0
      %v4339 = vpop.f32.mrb[0].mxu0
      %v4340 = vadd.f32 %v4041, %v4339
      %v4341 = vpop.f32.mrb[0].mxu0
      %4342 = vmatprep.mubr.bf16.mxu0 %v1322
      %4343 = vmatmul.mubr.bf16.gmra.mrb[0].mxu0 %v1321
      %v4344 = vpop.f32.mrb[0].mxu0
      %v4345 = vadd.f32 %v4041, %v4344
      %v4346 = vpop.f32.mrb[0].mxu0
      %v4347 = vpop.f32.mrb[0].mxu0
      %v4348 = vadd.f32 %v4041, %v4347
      %v4349 = vpop.f32.mrb[0].mxu0
      %4350 = vmatprep.mubr.bf16.mxu0 %v1327
      %4351 = vmatmul.mubr.bf16.gmra.mrb[0].mxu0 %v1326
      %v4352 = vpop.f32.mrb[0].mxu0
      %v4353 = vadd.f32 %v4041, %v4352
      %v4354 = vpop.f32.mrb[0].mxu0
      %v4355 = vpop.f32.mrb[0].mxu0
      %v4356 = vadd.f32 %v4041, %v4355
      %v4357 = vpop.f32.mrb[0].mxu0
      %4358 = vmatprep.mubr.bf16.mxu0 %v1332
      %4359 = vmatmul.mubr.bf16.gmra.mrb[0].mxu0 %v1331
      %v4360 = vpop.f32.mrb[0].mxu0
      %v4361 = vadd.f32 %v4041, %v4360
      %v4362 = vpop.f32.mrb[0].mxu0
      %v4363 = vpop.f32.mrb[0].mxu0
      %v4364 = vadd.f32 %v4041, %v4363
      %v4365 = vpop.f32.mrb[0].mxu0
      %4366 = vdwg.mxu0
      %4367 = vmatprep.subr.bf16.mxu0 0
      %4368 = vmatpush1.bf16.msra.mxu0 %v4017
      %4369 = vmatprep.subr.bf16.mxu0 0
      %4370 = vmatpush1.bf16.msra.mxu0 %v4018
      %4371 = vmatprep.subr.bf16.mxu0 0
      %4372 = vmatpush1.bf16.msra.mxu0 %v4019
      %4373 = vmatprep.subr.bf16.mxu0 0
      %4374 = vmatpush1.bf16.msra.mxu0 %v4020
      %4375 = vmatprep.subr.bf16.mxu0 0
      %4376 = vmatpush1.bf16.msra.mxu0 %v4021
      %4377 = vmatprep.subr.bf16.mxu0 0
      %4378 = vmatpush1.bf16.msra.mxu0 %v4022
      %4379 = vmatprep.subr.bf16.mxu0 0
      %4380 = vmatpush1.bf16.msra.mxu0 %v4023
      %4381 = vmatprep.subr.bf16.mxu0 0
      %4382 = vmatpush1.bf16.msra.mxu0 %v4024
      %4383 = vmatprep.subr.bf16.mxu0 0
      %4384 = vmatpush1.bf16.msra.mxu0 %v4025
      %4385 = vmatprep.subr.bf16.mxu0 0
      %4386 = vmatpush1.bf16.msra.mxu0 %v4026
      %4387 = vmatprep.subr.bf16.mxu0 0
      %4388 = vmatpush1.bf16.msra.mxu0 %v4027
      %4389 = vmatprep.subr.bf16.mxu0 0
      %4390 = vmatpush1.bf16.msra.mxu0 %v4028
      %4391 = vmatprep.subr.bf16.mxu0 0
      %4392 = vmatpush1.bf16.msra.mxu0 %v4029
      %4393 = vmatprep.subr.bf16.mxu0 0
      %4394 = vmatpush1.bf16.msra.mxu0 %v4030
      %4395 = vmatprep.subr.bf16.mxu0 0
      %4396 = vmatpush1.bf16.msra.mxu0 %v4031
      %4397 = vmatprep.subr.bf16.mxu0 0
      %4398 = vmatpush1.bf16.msra.mxu0 %v4032
      %4399 = vmatprep.mubr.bf16.mxu0 %v1159
      %4400 = vmatmul.mubr.bf16.gmra.mrb[0].mxu0 %v1158
      %v4401 = vpop.f32.mrb[0].mxu0
      %v4402 = vadd.f32 %v4081, %v4401
      %v4403 = vpop.f32.mrb[0].mxu0
      %v4404 = vpop.f32.mrb[0].mxu0
      %v4405 = vadd.f32 %v4084, %v4404
      %v4406 = vpop.f32.mrb[0].mxu0
      %4407 = vmatprep.mubr.bf16.mxu0 %v1164
      %4408 = vmatmul.mubr.bf16.gmra.mrb[0].mxu0 %v1163
      %v4409 = vpop.f32.mrb[0].mxu0
      %v4410 = vadd.f32 %v4089, %v4409
      %v4411 = vpop.f32.mrb[0].mxu0
      %v4412 = vpop.f32.mrb[0].mxu0
      %v4413 = vadd.f32 %v4092, %v4412
      %v4414 = vpop.f32.mrb[0].mxu0
      %4415 = vmatprep.mubr.bf16.mxu0 %v1169
      %4416 = vmatmul.mubr.bf16.gmra.mrb[0].mxu0 %v1168
      %v4417 = vpop.f32.mrb[0].mxu0
      %v4418 = vadd.f32 %v4097, %v4417
      %v4419 = vpop.f32.mrb[0].mxu0
      %v4420 = vpop.f32.mrb[0].mxu0
      %v4421 = vadd.f32 %v4100, %v4420
      %v4422 = vpop.f32.mrb[0].mxu0
      %4423 = vmatprep.mubr.bf16.mxu0 %v1174
      %4424 = vmatmul.mubr.bf16.gmra.mrb[0].mxu0 %v1173
      %v4425 = vpop.f32.mrb[0].mxu0
      %v4426 = vadd.f32 %v4105, %v4425
      %v4427 = vpop.f32.mrb[0].mxu0
      %v4428 = vpop.f32.mrb[0].mxu0
      %v4429 = vadd.f32 %v4108, %v4428
      %v4430 = vpop.f32.mrb[0].mxu0
      %4431 = vmatprep.mubr.bf16.mxu0 %v1179
      %4432 = vmatmul.mubr.bf16.gmra.mrb[0].mxu0 %v1178
      %v4433 = vpop.f32.mrb[0].mxu0
      %v4434 = vadd.f32 %v4113, %v4433
      %v4435 = vpop.f32.mrb[0].mxu0
      %v4436 = vpop.f32.mrb[0].mxu0
      %v4437 = vadd.f32 %v4116, %v4436
      %v4438 = vpop.f32.mrb[0].mxu0
      %4439 = vmatprep.mubr.bf16.mxu0 %v1184
      %4440 = vmatmul.mubr.bf16.gmra.mrb[0].mxu0 %v1183
      %v4441 = vpop.f32.mrb[0].mxu0
      %v4442 = vadd.f32 %v4121, %v4441
      %v4443 = vpop.f32.mrb[0].mxu0
      %v4444 = vpop.f32.mrb[0].mxu0
      %v4445 = vadd.f32 %v4124, %v4444
      %v4446 = vpop.f32.mrb[0].mxu0
      %4447 = vmatprep.mubr.bf16.mxu0 %v1189
      %4448 = vmatmul.mubr.bf16.gmra.mrb[0].mxu0 %v1188
      %v4449 = vpop.f32.mrb[0].mxu0
      %v4450 = vadd.f32 %v4129, %v4449
      %v4451 = vpop.f32.mrb[0].mxu0
      %v4452 = vpop.f32.mrb[0].mxu0
      %v4453 = vadd.f32 %v4132, %v4452
      %v4454 = vpop.f32.mrb[0].mxu0
      %4455 = vmatprep.mubr.bf16.mxu0 %v1194
      %4456 = vmatmul.mubr.bf16.gmra.mrb[0].mxu0 %v1193
      %v4457 = vpop.f32.mrb[0].mxu0
      %v4458 = vadd.f32 %v4137, %v4457
      %v4459 = vpop.f32.mrb[0].mxu0
      %v4460 = vpop.f32.mrb[0].mxu0
      %v4461 = vadd.f32 %v4140, %v4460
      %v4462 = vpop.f32.mrb[0].mxu0
      %4463 = vmatprep.mubr.bf16.mxu0 %v1199
      %4464 = vmatmul.mubr.bf16.gmra.mrb[0].mxu0 %v1198
      %v4465 = vpop.f32.mrb[0].mxu0
      %v4466 = vadd.f32 %v4145, %v4465
      %v4467 = vpop.f32.mrb[0].mxu0
      %v4468 = vpop.f32.mrb[0].mxu0
      %v4469 = vadd.f32 %v4148, %v4468
      %v4470 = vpop.f32.mrb[0].mxu0
      %4471 = vmatprep.mubr.bf16.mxu0 %v1204
      %4472 = vmatmul.mubr.bf16.gmra.mrb[0].mxu0 %v1203
      %v4473 = vpop.f32.mrb[0].mxu0
      %v4474 = vadd.f32 %v4153, %v4473
      %v4475 = vpop.f32.mrb[0].mxu0
      %v4476 = vpop.f32.mrb[0].mxu0
      %v4477 = vadd.f32 %v4156, %v4476
      %v4478 = vpop.f32.mrb[0].mxu0
      %4479 = vmatprep.mubr.bf16.mxu0 %v1209
      %4480 = vmatmul.mubr.bf16.gmra.mrb[0].mxu0 %v1208
      %v4481 = vpop.f32.mrb[0].mxu0
      %v4482 = vadd.f32 %v4161, %v4481
      %v4483 = vpop.f32.mrb[0].mxu0
      %v4484 = vpop.f32.mrb[0].mxu0
      %v4485 = vadd.f32 %v4164, %v4484
      %v4486 = vpop.f32.mrb[0].mxu0
      %4487 = vmatprep.mubr.bf16.mxu0 %v1214
      %4488 = vmatmul.mubr.bf16.gmra.mrb[0].mxu0 %v1213
      %v4489 = vpop.f32.mrb[0].mxu0
      %v4490 = vadd.f32 %v4169, %v4489
      %v4491 = vpop.f32.mrb[0].mxu0
      %v4492 = vpop.f32.mrb[0].mxu0
      %v4493 = vadd.f32 %v4172, %v4492
      %v4494 = vpop.f32.mrb[0].mxu0
      %4495 = vmatprep.mubr.bf16.mxu0 %v1219
      %4496 = vmatmul.mubr.bf16.gmra.mrb[0].mxu0 %v1218
      %v4497 = vpop.f32.mrb[0].mxu0
      %v4498 = vadd.f32 %v4177, %v4497
      %v4499 = vpop.f32.mrb[0].mxu0
      %v4500 = vpop.f32.mrb[0].mxu0
      %v4501 = vadd.f32 %v4180, %v4500
      %v4502 = vpop.f32.mrb[0].mxu0
      %4503 = vmatprep.mubr.bf16.mxu0 %v1224
      %4504 = vmatmul.mubr.bf16.gmra.mrb[0].mxu0 %v1223
      %v4505 = vpop.f32.mrb[0].mxu0
      %v4506 = vadd.f32 %v4185, %v4505
      %v4507 = vpop.f32.mrb[0].mxu0
      %v4508 = vpop.f32.mrb[0].mxu0
      %v4509 = vadd.f32 %v4188, %v4508
      %v4510 = vpop.f32.mrb[0].mxu0
      %4511 = vmatprep.mubr.bf16.mxu0 %v1229
      %4512 = vmatmul.mubr.bf16.gmra.mrb[0].mxu0 %v1228
      %v4513 = vpop.f32.mrb[0].mxu0
      %v4514 = vadd.f32 %v4193, %v4513
      %v4515 = vpop.f32.mrb[0].mxu0
      %v4516 = vpop.f32.mrb[0].mxu0
      %v4517 = vadd.f32 %v4196, %v4516
      %v4518 = vpop.f32.mrb[0].mxu0
      %4519 = vmatprep.mubr.bf16.mxu0 %v1234
      %4520 = vmatmul.mubr.bf16.gmra.mrb[0].mxu0 %v1233
      %v4521 = vpop.f32.mrb[0].mxu0
      %v4522 = vadd.f32 %v4201, %v4521
      %v4523 = vpop.f32.mrb[0].mxu0
      %v4524 = vpop.f32.mrb[0].mxu0
      %v4525 = vadd.f32 %v4204, %v4524
      %v4526 = vpop.f32.mrb[0].mxu0
      %4527 = vmatprep.mubr.bf16.mxu0 %v1239
      %4528 = vmatmul.mubr.bf16.gmra.mrb[0].mxu0 %v1238
      %v4529 = vpop.f32.mrb[0].mxu0
      %v4530 = vadd.f32 %v4209, %v4529
      %v4531 = vpop.f32.mrb[0].mxu0
      %v4532 = vpop.f32.mrb[0].mxu0
      %v4533 = vadd.f32 %v4212, %v4532
      %v4534 = vpop.f32.mrb[0].mxu0
      %4535 = vmatprep.mubr.bf16.mxu0 %v1244
      %4536 = vmatmul.mubr.bf16.gmra.mrb[0].mxu0 %v1243
      %v4537 = vpop.f32.mrb[0].mxu0
      %v4538 = vadd.f32 %v4217, %v4537
      %v4539 = vpop.f32.mrb[0].mxu0
      %v4540 = vpop.f32.mrb[0].mxu0
      %v4541 = vadd.f32 %v4220, %v4540
      %v4542 = vpop.f32.mrb[0].mxu0
      %4543 = vmatprep.mubr.bf16.mxu0 %v1249
      %4544 = vmatmul.mubr.bf16.gmra.mrb[0].mxu0 %v1248
      %v4545 = vpop.f32.mrb[0].mxu0
      %v4546 = vadd.f32 %v4225, %v4545
      %v4547 = vpop.f32.mrb[0].mxu0
      %v4548 = vpop.f32.mrb[0].mxu0
      %v4549 = vadd.f32 %v4228, %v4548
      %v4550 = vpop.f32.mrb[0].mxu0
      %4551 = vmatprep.mubr.bf16.mxu0 %v1254
      %4552 = vmatmul.mubr.bf16.gmra.mrb[0].mxu0 %v1253
      %v4553 = vpop.f32.mrb[0].mxu0
      %v4554 = vadd.f32 %v4233, %v4553
      %v4555 = vpop.f32.mrb[0].mxu0
      %v4556 = vpop.f32.mrb[0].mxu0
      %v4557 = vadd.f32 %v4236, %v4556
      %v4558 = vpop.f32.mrb[0].mxu0
      %4559 = vmatprep.mubr.bf16.mxu0 %v1259
      %4560 = vmatmul.mubr.bf16.gmra.mrb[0].mxu0 %v1258
      %v4561 = vpop.f32.mrb[0].mxu0
      %v4562 = vadd.f32 %v4241, %v4561
      %v4563 = vpop.f32.mrb[0].mxu0
      %v4564 = vpop.f32.mrb[0].mxu0
      %v4565 = vadd.f32 %v4244, %v4564
      %v4566 = vpop.f32.mrb[0].mxu0
      %4567 = vmatprep.mubr.bf16.mxu0 %v1264
      %4568 = vmatmul.mubr.bf16.gmra.mrb[0].mxu0 %v1263
      %v4569 = vpop.f32.mrb[0].mxu0
      %v4570 = vadd.f32 %v4249, %v4569
      %v4571 = vpop.f32.mrb[0].mxu0
      %v4572 = vpop.f32.mrb[0].mxu0
      %v4573 = vadd.f32 %v4252, %v4572
      %v4574 = vpop.f32.mrb[0].mxu0
      %4575 = vmatprep.mubr.bf16.mxu0 %v1269
      %4576 = vmatmul.mubr.bf16.gmra.mrb[0].mxu0 %v1268
      %v4577 = vpop.f32.mrb[0].mxu0
      %v4578 = vadd.f32 %v4257, %v4577
      %v4579 = vpop.f32.mrb[0].mxu0
      %v4580 = vpop.f32.mrb[0].mxu0
      %v4581 = vadd.f32 %v4260, %v4580
      %v4582 = vpop.f32.mrb[0].mxu0
      %4583 = vmatprep.mubr.bf16.mxu0 %v1274
      %4584 = vmatmul.mubr.bf16.gmra.mrb[0].mxu0 %v1273
      %v4585 = vpop.f32.mrb[0].mxu0
      %v4586 = vadd.f32 %v4265, %v4585
      %v4587 = vpop.f32.mrb[0].mxu0
      %v4588 = vpop.f32.mrb[0].mxu0
      %v4589 = vadd.f32 %v4268, %v4588
      %v4590 = vpop.f32.mrb[0].mxu0
      %4591 = vmatprep.mubr.bf16.mxu0 %v1279
      %4592 = vmatmul.mubr.bf16.gmra.mrb[0].mxu0 %v1278
      %v4593 = vpop.f32.mrb[0].mxu0
      %v4594 = vadd.f32 %v4273, %v4593
      %v4595 = vpop.f32.mrb[0].mxu0
      %v4596 = vpop.f32.mrb[0].mxu0
      %v4597 = vadd.f32 %v4276, %v4596
      %v4598 = vpop.f32.mrb[0].mxu0
      %4599 = vmatprep.mubr.bf16.mxu0 %v1284
      %4600 = vmatmul.mubr.bf16.gmra.mrb[0].mxu0 %v1283
      %v4601 = vpop.f32.mrb[0].mxu0
      %v4602 = vadd.f32 %v4281, %v4601
      %v4603 = vpop.f32.mrb[0].mxu0
      %v4604 = vpop.f32.mrb[0].mxu0
      %v4605 = vadd.f32 %v4284, %v4604
      %v4606 = vpop.f32.mrb[0].mxu0
      %4607 = vmatprep.mubr.bf16.mxu0 %v1289
      %4608 = vmatmul.mubr.bf16.gmra.mrb[0].mxu0 %v1288
      %v4609 = vpop.f32.mrb[0].mxu0
      %v4610 = vadd.f32 %v4289, %v4609
      %v4611 = vpop.f32.mrb[0].mxu0
      %v4612 = vpop.f32.mrb[0].mxu0
      %v4613 = vadd.f32 %v4292, %v4612
      %v4614 = vpop.f32.mrb[0].mxu0
      %4615 = vmatprep.mubr.bf16.mxu0 %v1294
      %4616 = vmatmul.mubr.bf16.gmra.mrb[0].mxu0 %v1293
      %v4617 = vpop.f32.mrb[0].mxu0
      %v4618 = vadd.f32 %v4297, %v4617
      %v4619 = vpop.f32.mrb[0].mxu0
      %v4620 = vpop.f32.mrb[0].mxu0
      %v4621 = vadd.f32 %v4300, %v4620
      %v4622 = vpop.f32.mrb[0].mxu0
      %4623 = vmatprep.mubr.bf16.mxu0 %v1299
      %4624 = vmatmul.mubr.bf16.gmra.mrb[0].mxu0 %v1298
      %v4625 = vpop.f32.mrb[0].mxu0
      %v4626 = vadd.f32 %v4305, %v4625
      %v4627 = vpop.f32.mrb[0].mxu0
      %v4628 = vpop.f32.mrb[0].mxu0
      %v4629 = vadd.f32 %v4308, %v4628
      %v4630 = vpop.f32.mrb[0].mxu0
      %4631 = vmatprep.mubr.bf16.mxu0 %v1304
      %4632 = vmatmul.mubr.bf16.gmra.mrb[0].mxu0 %v1303
      %v4633 = vpop.f32.mrb[0].mxu0
      %v4634 = vadd.f32 %v4313, %v4633
      %v4635 = vpop.f32.mrb[0].mxu0
      %v4636 = vpop.f32.mrb[0].mxu0
      %v4637 = vadd.f32 %v4316, %v4636
      %v4638 = vpop.f32.mrb[0].mxu0
      %4639 = vmatprep.mubr.bf16.mxu0 %v1309
      %4640 = vmatmul.mubr.bf16.gmra.mrb[0].mxu0 %v1308
      %v4641 = vpop.f32.mrb[0].mxu0
      %v4642 = vadd.f32 %v4321, %v4641
      %v4643 = vpop.f32.mrb[0].mxu0
      %v4644 = vpop.f32.mrb[0].mxu0
      %v4645 = vadd.f32 %v4324, %v4644
      %v4646 = vpop.f32.mrb[0].mxu0
      %4647 = vmatprep.mubr.bf16.mxu0 %v1314
      %4648 = vmatmul.mubr.bf16.gmra.mrb[0].mxu0 %v1313
      %v4649 = vpop.f32.mrb[0].mxu0
      %v4650 = vadd.f32 %v4329, %v4649
      %v4651 = vpop.f32.mrb[0].mxu0
      %v4652 = vpop.f32.mrb[0].mxu0
      %v4653 = vadd.f32 %v4332, %v4652
      %v4654 = vpop.f32.mrb[0].mxu0
      %4655 = vmatprep.mubr.bf16.mxu0 %v1319
      %4656 = vmatmul.mubr.bf16.gmra.mrb[0].mxu0 %v1318
      %v4657 = vpop.f32.mrb[0].mxu0
      %v4658 = vadd.f32 %v4337, %v4657
      %v4659 = vpop.f32.mrb[0].mxu0
      %v4660 = vpop.f32.mrb[0].mxu0
      %v4661 = vadd.f32 %v4340, %v4660
      %v4662 = vpop.f32.mrb[0].mxu0
      %4663 = vmatprep.mubr.bf16.mxu0 %v1324
      %4664 = vmatmul.mubr.bf16.gmra.mrb[0].mxu0 %v1323
      %v4665 = vpop.f32.mrb[0].mxu0
      %v4666 = vadd.f32 %v4345, %v4665
      %v4667 = vpop.f32.mrb[0].mxu0
      %v4668 = vpop.f32.mrb[0].mxu0
      %v4669 = vadd.f32 %v4348, %v4668
      %v4670 = vpop.f32.mrb[0].mxu0
      %4671 = vmatprep.mubr.bf16.mxu0 %v1329
      %4672 = vmatmul.mubr.bf16.gmra.mrb[0].mxu0 %v1328
      %v4673 = vpop.f32.mrb[0].mxu0
      %v4674 = vadd.f32 %v4353, %v4673
      %v4675 = vpop.f32.mrb[0].mxu0
      %v4676 = vpop.f32.mrb[0].mxu0
      %v4677 = vadd.f32 %v4356, %v4676
      %v4678 = vpop.f32.mrb[0].mxu0
      %4679 = vmatprep.mubr.bf16.mxu0 %v1334
      %4680 = vmatmul.mubr.bf16.gmra.mrb[0].mxu0 %v1333
      %v4681 = vpop.f32.mrb[0].mxu0
      %v4682 = vadd.f32 %v4361, %v4681
      %v4683 = vpop.f32.mrb[0].mxu0
      %v4684 = vpop.f32.mrb[0].mxu0
      %v4685 = vadd.f32 %v4364, %v4684
      %v4686 = vpop.f32.mrb[0].mxu0
      %4687 = vdwg.mxu0
      %4688 = vmatprep.subr.bf16.mxu0 0
      %4689 = vmatpush1.bf16.msra.mxu0 %v4033
      %4690 = vmatprep.subr.bf16.mxu0 0
      %4691 = vmatpush1.bf16.msra.mxu0 %v4034
      %4692 = vmatprep.subr.bf16.mxu0 0
      %4693 = vmatpush1.bf16.msra.mxu0 %v4035
      %4694 = vmatprep.subr.bf16.mxu0 0
      %4695 = vmatpush1.bf16.msra.mxu0 %v4044
      %4696 = vmatprep.subr.bf16.mxu0 0
      %4697 = vmatpush1.bf16.msra.mxu0 0
      %4698 = vmatprep.subr.bf16.mxu0 0
      %4699 = vmatpush1.bf16.msra.mxu0 0
      %4700 = vmatprep.subr.bf16.mxu0 0
      %4701 = vmatpush1.bf16.msra.mxu0 0
      %4702 = vmatprep.subr.bf16.mxu0 0
      %4703 = vmatpush1.bf16.msra.mxu0 0
      %4704 = vmatprep.subr.bf16.mxu0 0
      %4705 = vmatpush1.bf16.msra.mxu0 0
      %4706 = vmatprep.subr.bf16.mxu0 0
      %4707 = vmatpush1.bf16.msra.mxu0 0
      %4708 = vmatprep.subr.bf16.mxu0 0
      %4709 = vmatpush1.bf16.msra.mxu0 0
      %4710 = vmatprep.subr.bf16.mxu0 0
      %4711 = vmatpush1.bf16.msra.mxu0 0
      %4712 = vmatprep.subr.bf16.mxu0 0
      %4713 = vmatpush1.bf16.msra.mxu0 0
      %4714 = vmatprep.subr.bf16.mxu0 0
      %4715 = vmatpush1.bf16.msra.mxu0 0
      %4716 = vmatprep.subr.bf16.mxu0 0
      %4717 = vmatpush1.bf16.msra.mxu0 0
      %4718 = vmatprep.subr.bf16.mxu0 0
      %4719 = vmatpush1.bf16.msra.mxu0 0
      %4720 = vmatprep.mubr.bf16.mxu0 0
      %4721 = vmatmul.mubr.bf16.gmra.mrb[0].mxu0 %v1697
      %v4722 = vpop.f32.mrb[0].mxu0
      %v4723 = vadd.f32 %v4402, %v4722
      %v4724 = vpop.f32.mrb[0].mxu0
      %v4725 = vpop.f32.mrb[0].mxu0
      %v4726 = vadd.f32 %v4405, %v4725
      %v4727 = vpop.f32.mrb[0].mxu0
      %4728 = vmatprep.mubr.bf16.mxu0 0
      %4729 = vmatmul.mubr.bf16.gmra.mrb[0].mxu0 %v1700
      %v4730 = vpop.f32.mrb[0].mxu0
      %v4731 = vadd.f32 %v4410, %v4730
      %v4732 = vpop.f32.mrb[0].mxu0
      %v4733 = vpop.f32.mrb[0].mxu0
      %v4734 = vadd.f32 %v4413, %v4733
      %v4735 = vpop.f32.mrb[0].mxu0
      %4736 = vmatprep.mubr.bf16.mxu0 0
      %4737 = vmatmul.mubr.bf16.gmra.mrb[0].mxu0 %v1703
      %v4738 = vpop.f32.mrb[0].mxu0
      %v4739 = vadd.f32 %v4418, %v4738
      %v4740 = vpop.f32.mrb[0].mxu0
      %v4741 = vpop.f32.mrb[0].mxu0
      %v4742 = vadd.f32 %v4421, %v4741
      %v4743 = vpop.f32.mrb[0].mxu0
      %4744 = vmatprep.mubr.bf16.mxu0 0
      %4745 = vmatmul.mubr.bf16.gmra.mrb[0].mxu0 %v1706
      %v4746 = vpop.f32.mrb[0].mxu0
      %v4747 = vadd.f32 %v4426, %v4746
      %v4748 = vpop.f32.mrb[0].mxu0
      %v4749 = vpop.f32.mrb[0].mxu0
      %v4750 = vadd.f32 %v4429, %v4749
      %v4751 = vpop.f32.mrb[0].mxu0
      %4752 = vmatprep.mubr.bf16.mxu0 0
      %4753 = vmatmul.mubr.bf16.gmra.mrb[0].mxu0 %v1709
      %v4754 = vpop.f32.mrb[0].mxu0
      %v4755 = vadd.f32 %v4434, %v4754
      %v4756 = vpop.f32.mrb[0].mxu0
      %v4757 = vpop.f32.mrb[0].mxu0
      %v4758 = vadd.f32 %v4437, %v4757
      %v4759 = vpop.f32.mrb[0].mxu0
      %4760 = vmatprep.mubr.bf16.mxu0 0
      %4761 = vmatmul.mubr.bf16.gmra.mrb[0].mxu0 %v1712
      %v4762 = vpop.f32.mrb[0].mxu0
      %v4763 = vadd.f32 %v4442, %v4762
      %v4764 = vpop.f32.mrb[0].mxu0
      %v4765 = vpop.f32.mrb[0].mxu0
      %v4766 = vadd.f32 %v4445, %v4765
      %v4767 = vpop.f32.mrb[0].mxu0
      %4768 = vmatprep.mubr.bf16.mxu0 0
      %4769 = vmatmul.mubr.bf16.gmra.mrb[0].mxu0 %v1715
      %v4770 = vpop.f32.mrb[0].mxu0
      %v4771 = vadd.f32 %v4450, %v4770
      %v4772 = vpop.f32.mrb[0].mxu0
      %v4773 = vpop.f32.mrb[0].mxu0
      %v4774 = vadd.f32 %v4453, %v4773
      %v4775 = vpop.f32.mrb[0].mxu0
      %4776 = vmatprep.mubr.bf16.mxu0 0
      %4777 = vmatmul.mubr.bf16.gmra.mrb[0].mxu0 %v1718
      %v4778 = vpop.f32.mrb[0].mxu0
      %v4779 = vadd.f32 %v4458, %v4778
      %v4780 = vpop.f32.mrb[0].mxu0
      %v4781 = vpop.f32.mrb[0].mxu0
      %v4782 = vadd.f32 %v4461, %v4781
      %v4783 = vpop.f32.mrb[0].mxu0
      %4784 = vmatprep.mubr.bf16.mxu0 0
      %4785 = vmatmul.mubr.bf16.gmra.mrb[0].mxu0 %v1721
      %v4786 = vpop.f32.mrb[0].mxu0
      %v4787 = vadd.f32 %v4466, %v4786
      %v4788 = vpop.f32.mrb[0].mxu0
      %v4789 = vpop.f32.mrb[0].mxu0
      %v4790 = vadd.f32 %v4469, %v4789
      %v4791 = vpop.f32.mrb[0].mxu0
      %4792 = vmatprep.mubr.bf16.mxu0 0
      %4793 = vmatmul.mubr.bf16.gmra.mrb[0].mxu0 %v1724
      %v4794 = vpop.f32.mrb[0].mxu0
      %v4795 = vadd.f32 %v4474, %v4794
      %v4796 = vpop.f32.mrb[0].mxu0
      %v4797 = vpop.f32.mrb[0].mxu0
      %v4798 = vadd.f32 %v4477, %v4797
      %v4799 = vpop.f32.mrb[0].mxu0
      %4800 = vmatprep.mubr.bf16.mxu0 0
      %4801 = vmatmul.mubr.bf16.gmra.mrb[0].mxu0 %v1727
      %v4802 = vpop.f32.mrb[0].mxu0
      %v4803 = vadd.f32 %v4482, %v4802
      %v4804 = vpop.f32.mrb[0].mxu0
      %v4805 = vpop.f32.mrb[0].mxu0
      %v4806 = vadd.f32 %v4485, %v4805
      %v4807 = vpop.f32.mrb[0].mxu0
      %4808 = vmatprep.mubr.bf16.mxu0 0
      %4809 = vmatmul.mubr.bf16.gmra.mrb[0].mxu0 %v1730
      %v4810 = vpop.f32.mrb[0].mxu0
      %v4811 = vadd.f32 %v4490, %v4810
      %v4812 = vpop.f32.mrb[0].mxu0
      %v4813 = vpop.f32.mrb[0].mxu0
      %v4814 = vadd.f32 %v4493, %v4813
      %v4815 = vpop.f32.mrb[0].mxu0
      %4816 = vmatprep.mubr.bf16.mxu0 0
      %4817 = vmatmul.mubr.bf16.gmra.mrb[0].mxu0 %v1733
      %v4818 = vpop.f32.mrb[0].mxu0
      %v4819 = vadd.f32 %v4498, %v4818
      %v4820 = vpop.f32.mrb[0].mxu0
      %v4821 = vpop.f32.mrb[0].mxu0
      %v4822 = vadd.f32 %v4501, %v4821
      %v4823 = vpop.f32.mrb[0].mxu0
      %4824 = vmatprep.mubr.bf16.mxu0 0
      %4825 = vmatmul.mubr.bf16.gmra.mrb[0].mxu0 %v1736
      %v4826 = vpop.f32.mrb[0].mxu0
      %v4827 = vadd.f32 %v4506, %v4826
      %v4828 = vpop.f32.mrb[0].mxu0
      %v4829 = vpop.f32.mrb[0].mxu0
      %v4830 = vadd.f32 %v4509, %v4829
      %v4831 = vpop.f32.mrb[0].mxu0
      %4832 = vmatprep.mubr.bf16.mxu0 0
      %4833 = vmatmul.mubr.bf16.gmra.mrb[0].mxu0 %v1739
      %v4834 = vpop.f32.mrb[0].mxu0
      %v4835 = vadd.f32 %v4514, %v4834
      %v4836 = vpop.f32.mrb[0].mxu0
      %v4837 = vpop.f32.mrb[0].mxu0
      %v4838 = vadd.f32 %v4517, %v4837
      %v4839 = vpop.f32.mrb[0].mxu0
      %4840 = vmatprep.mubr.bf16.mxu0 0
      %4841 = vmatmul.mubr.bf16.gmra.mrb[0].mxu0 %v1742
      %v4842 = vpop.f32.mrb[0].mxu0
      %v4843 = vadd.f32 %v4522, %v4842
      %v4844 = vpop.f32.mrb[0].mxu0
      %v4845 = vpop.f32.mrb[0].mxu0
      %v4846 = vadd.f32 %v4525, %v4845
      %v4847 = vpop.f32.mrb[0].mxu0
      %4848 = vmatprep.mubr.bf16.mxu0 0
      %4849 = vmatmul.mubr.bf16.gmra.mrb[0].mxu0 %v1745
      %v4850 = vpop.f32.mrb[0].mxu0
      %v4851 = vadd.f32 %v4530, %v4850
      %v4852 = vpop.f32.mrb[0].mxu0
      %v4853 = vpop.f32.mrb[0].mxu0
      %v4854 = vadd.f32 %v4533, %v4853
      %v4855 = vpop.f32.mrb[0].mxu0
      %4856 = vmatprep.mubr.bf16.mxu0 0
      %4857 = vmatmul.mubr.bf16.gmra.mrb[0].mxu0 %v1748
      %v4858 = vpop.f32.mrb[0].mxu0
      %v4859 = vadd.f32 %v4538, %v4858
      %v4860 = vpop.f32.mrb[0].mxu0
      %v4861 = vpop.f32.mrb[0].mxu0
      %v4862 = vadd.f32 %v4541, %v4861
      %v4863 = vpop.f32.mrb[0].mxu0
      %4864 = vmatprep.mubr.bf16.mxu0 0
      %4865 = vmatmul.mubr.bf16.gmra.mrb[0].mxu0 %v1751
      %v4866 = vpop.f32.mrb[0].mxu0
      %v4867 = vadd.f32 %v4546, %v4866
      %v4868 = vpop.f32.mrb[0].mxu0
      %v4869 = vpop.f32.mrb[0].mxu0
      %v4870 = vadd.f32 %v4549, %v4869
      %v4871 = vpop.f32.mrb[0].mxu0
      %4872 = vmatprep.mubr.bf16.mxu0 0
      %4873 = vmatmul.mubr.bf16.gmra.mrb[0].mxu0 %v1754
      %v4874 = vpop.f32.mrb[0].mxu0
      %v4875 = vadd.f32 %v4554, %v4874
      %v4876 = vpop.f32.mrb[0].mxu0
      %v4877 = vpop.f32.mrb[0].mxu0
      %v4878 = vadd.f32 %v4557, %v4877
      %v4879 = vpop.f32.mrb[0].mxu0
      %4880 = vmatprep.mubr.bf16.mxu0 0
      %4881 = vmatmul.mubr.bf16.gmra.mrb[0].mxu0 %v1757
      %v4882 = vpop.f32.mrb[0].mxu0
      %v4883 = vadd.f32 %v4562, %v4882
      %v4884 = vpop.f32.mrb[0].mxu0
      %v4885 = vpop.f32.mrb[0].mxu0
      %v4886 = vadd.f32 %v4565, %v4885
      %v4887 = vpop.f32.mrb[0].mxu0
      %4888 = vmatprep.mubr.bf16.mxu0 0
      %4889 = vmatmul.mubr.bf16.gmra.mrb[0].mxu0 %v1760
      %v4890 = vpop.f32.mrb[0].mxu0
      %v4891 = vadd.f32 %v4570, %v4890
      %v4892 = vpop.f32.mrb[0].mxu0
      %v4893 = vpop.f32.mrb[0].mxu0
      %v4894 = vadd.f32 %v4573, %v4893
      %v4895 = vpop.f32.mrb[0].mxu0
      %4896 = vmatprep.mubr.bf16.mxu0 0
      %4897 = vmatmul.mubr.bf16.gmra.mrb[0].mxu0 %v1763
      %v4898 = vpop.f32.mrb[0].mxu0
      %v4899 = vadd.f32 %v4578, %v4898
      %v4900 = vpop.f32.mrb[0].mxu0
      %v4901 = vpop.f32.mrb[0].mxu0
      %v4902 = vadd.f32 %v4581, %v4901
      %v4903 = vpop.f32.mrb[0].mxu0
      %4904 = vmatprep.mubr.bf16.mxu0 0
      %4905 = vmatmul.mubr.bf16.gmra.mrb[0].mxu0 %v1766
      %v4906 = vpop.f32.mrb[0].mxu0
      %v4907 = vadd.f32 %v4586, %v4906
      %v4908 = vpop.f32.mrb[0].mxu0
      %v4909 = vpop.f32.mrb[0].mxu0
      %v4910 = vadd.f32 %v4589, %v4909
      %v4911 = vpop.f32.mrb[0].mxu0
      %4912 = vmatprep.mubr.bf16.mxu0 0
      %4913 = vmatmul.mubr.bf16.gmra.mrb[0].mxu0 %v1769
      %v4914 = vpop.f32.mrb[0].mxu0
      %v4915 = vadd.f32 %v4594, %v4914
      %v4916 = vpop.f32.mrb[0].mxu0
      %v4917 = vpop.f32.mrb[0].mxu0
      %v4918 = vadd.f32 %v4597, %v4917
      %v4919 = vpop.f32.mrb[0].mxu0
      %4920 = vmatprep.mubr.bf16.mxu0 0
      %4921 = vmatmul.mubr.bf16.gmra.mrb[0].mxu0 %v1772
      %v4922 = vpop.f32.mrb[0].mxu0
      %v4923 = vadd.f32 %v4602, %v4922
      %v4924 = vpop.f32.mrb[0].mxu0
      %v4925 = vpop.f32.mrb[0].mxu0
      %v4926 = vadd.f32 %v4605, %v4925
      %v4927 = vpop.f32.mrb[0].mxu0
      %4928 = vmatprep.mubr.bf16.mxu0 0
      %4929 = vmatmul.mubr.bf16.gmra.mrb[0].mxu0 %v1775
      %v4930 = vpop.f32.mrb[0].mxu0
      %v4931 = vadd.f32 %v4610, %v4930
      %v4932 = vpop.f32.mrb[0].mxu0
      %v4933 = vpop.f32.mrb[0].mxu0
      %v4934 = vadd.f32 %v4613, %v4933
      %v4935 = vpop.f32.mrb[0].mxu0
      %4936 = vmatprep.mubr.bf16.mxu0 0
      %4937 = vmatmul.mubr.bf16.gmra.mrb[0].mxu0 %v1778
      %v4938 = vpop.f32.mrb[0].mxu0
      %v4939 = vadd.f32 %v4618, %v4938
      %v4940 = vpop.f32.mrb[0].mxu0
      %v4941 = vpop.f32.mrb[0].mxu0
      %v4942 = vadd.f32 %v4621, %v4941
      %v4943 = vpop.f32.mrb[0].mxu0
      %4944 = vmatprep.mubr.bf16.mxu0 0
      %4945 = vmatmul.mubr.bf16.gmra.mrb[0].mxu0 %v1781
      %v4946 = vpop.f32.mrb[0].mxu0
      %v4947 = vadd.f32 %v4626, %v4946
      %v4948 = vpop.f32.mrb[0].mxu0
      %v4949 = vpop.f32.mrb[0].mxu0
      %v4950 = vadd.f32 %v4629, %v4949
      %v4951 = vpop.f32.mrb[0].mxu0
      %4952 = vmatprep.mubr.bf16.mxu0 0
      %4953 = vmatmul.mubr.bf16.gmra.mrb[0].mxu0 %v1784
      %v4954 = vpop.f32.mrb[0].mxu0
      %v4955 = vadd.f32 %v4634, %v4954
      %v4956 = vpop.f32.mrb[0].mxu0
      %v4957 = vpop.f32.mrb[0].mxu0
      %v4958 = vadd.f32 %v4637, %v4957
      %v4959 = vpop.f32.mrb[0].mxu0
      %4960 = vmatprep.mubr.bf16.mxu0 0
      %4961 = vmatmul.mubr.bf16.gmra.mrb[0].mxu0 %v1787
      %v4962 = vpop.f32.mrb[0].mxu0
      %v4963 = vadd.f32 %v4642, %v4962
      %v4964 = vpop.f32.mrb[0].mxu0
      %v4965 = vpop.f32.mrb[0].mxu0
      %v4966 = vadd.f32 %v4645, %v4965
      %v4967 = vpop.f32.mrb[0].mxu0
      %4968 = vmatprep.mubr.bf16.mxu0 0
      %4969 = vmatmul.mubr.bf16.gmra.mrb[0].mxu0 %v1790
      %v4970 = vpop.f32.mrb[0].mxu0
      %v4971 = vadd.f32 %v4650, %v4970
      %v4972 = vpop.f32.mrb[0].mxu0
      %v4973 = vpop.f32.mrb[0].mxu0
      %v4974 = vadd.f32 %v4653, %v4973
      %v4975 = vpop.f32.mrb[0].mxu0
      %4976 = vmatprep.mubr.bf16.mxu0 0
      %4977 = vmatmul.mubr.bf16.gmra.mrb[0].mxu0 %v1793
      %v4978 = vpop.f32.mrb[0].mxu0
      %v4979 = vadd.f32 %v4658, %v4978
      %v4980 = vpop.f32.mrb[0].mxu0
      %v4981 = vpop.f32.mrb[0].mxu0
      %v4982 = vadd.f32 %v4661, %v4981
      %v4983 = vpop.f32.mrb[0].mxu0
      %4984 = vmatprep.mubr.bf16.mxu0 0
      %4985 = vmatmul.mubr.bf16.gmra.mrb[0].mxu0 %v1796
      %v4986 = vpop.f32.mrb[0].mxu0
      %v4987 = vadd.f32 %v4666, %v4986
      %v4988 = vpop.f32.mrb[0].mxu0
      %v4989 = vpop.f32.mrb[0].mxu0
      %v4990 = vadd.f32 %v4669, %v4989
      %v4991 = vpop.f32.mrb[0].mxu0
      %4992 = vmatprep.mubr.bf16.mxu0 0
      %4993 = vmatmul.mubr.bf16.gmra.mrb[0].mxu0 %v1799
      %v4994 = vpop.f32.mrb[0].mxu0
      %v4995 = vadd.f32 %v4674, %v4994
      %v4996 = vpop.f32.mrb[0].mxu0
      %v4997 = vpop.f32.mrb[0].mxu0
      %v4998 = vadd.f32 %v4677, %v4997
      %v4999 = vpop.f32.mrb[0].mxu0
      %5000 = vmatprep.mubr.bf16.mxu0 0
      %5001 = vmatmul.mubr.bf16.gmra.mrb[0].mxu0 %v1802
      %v5002 = vpop.f32.mrb[0].mxu0
      %v5003 = vadd.f32 %v4682, %v5002
      %v5004 = vpop.f32.mrb[0].mxu0
      %v5005 = vpop.f32.mrb[0].mxu0
      %v5006 = vadd.f32 %v4685, %v5005
      %v5007 = vpop.f32.mrb[0].mxu0
      %5008 = vdwg.mxu0
      %v5009 = vsub.f32 %v4723, %v4723
      %v5010 = vsub.f32 %v4726, %v4726
      %v5011 = vsub.f32 %v4731, %v4731
      %v5012 = vsub.f32 %v4734, %v4734
      %v5013 = vsub.f32 %v4739, %v4739
      %v5014 = vsub.f32 %v4742, %v4742
      %v5015 = vsub.f32 %v4747, %v4747
      %v5016 = vsub.f32 %v4750, %v4750
      %v5017 = vsub.f32 %v4755, %v4755
      %v5018 = vsub.f32 %v4758, %v4758
      %v5019 = vsub.f32 %v4763, %v4763
      %v5020 = vsub.f32 %v4766, %v4766
      %v5021 = vsub.f32 %v4771, %v4771
      %v5022 = vsub.f32 %v4774, %v4774
      %v5023 = vsub.f32 %v4779, %v4779
      %v5024 = vsub.f32 %v4782, %v4782
      %v5025 = vsub.f32 %v4787, %v4787
      %v5026 = vsub.f32 %v4790, %v4790
      %v5027 = vsub.f32 %v4795, %v4795
      %v5028 = vsub.f32 %v4798, %v4798
      %v5029 = vsub.f32 %v4803, %v4803
      %v5030 = vsub.f32 %v4806, %v4806
      %v5031 = vsub.f32 %v4811, %v4811
      %v5032 = vsub.f32 %v4814, %v4814
      %v5033 = vsub.f32 %v4819, %v4819
      %v5034 = vsub.f32 %v4822, %v4822
      %v5035 = vsub.f32 %v4827, %v4827
      %v5036 = vsub.f32 %v4830, %v4830
      %v5037 = vsub.f32 %v4835, %v4835
      %v5038 = vsub.f32 %v4838, %v4838
      %v5039 = vsub.f32 %v4843, %v4843
      %v5040 = vsub.f32 %v4846, %v4846
      %v5041 = vsub.f32 %v4851, %v4851
      %v5042 = vsub.f32 %v4854, %v4854
      %v5043 = vsub.f32 %v4859, %v4859
      %v5044 = vsub.f32 %v4862, %v4862
      %v5045 = vsub.f32 %v4867, %v4867
      %v5046 = vsub.f32 %v4870, %v4870
      %v5047 = vsub.f32 %v4875, %v4875
      %v5048 = vsub.f32 %v4878, %v4878
      %v5049 = vsub.f32 %v4883, %v4883
      %v5050 = vsub.f32 %v4886, %v4886
      %v5051 = vsub.f32 %v4891, %v4891
      %v5052 = vsub.f32 %v4894, %v4894
      %v5053 = vsub.f32 %v4899, %v4899
      %v5054 = vsub.f32 %v4902, %v4902
      %v5055 = vsub.f32 %v4907, %v4907
      %v5056 = vsub.f32 %v4910, %v4910
      %v5057 = vsub.f32 %v4915, %v4915
      %v5058 = vsub.f32 %v4918, %v4918
      %v5059 = vsub.f32 %v4923, %v4923
      %v5060 = vsub.f32 %v4926, %v4926
      %v5061 = vsub.f32 %v4931, %v4931
      %v5062 = vsub.f32 %v4934, %v4934
      %v5063 = vsub.f32 %v4939, %v4939
      %v5064 = vsub.f32 %v4942, %v4942
      %v5065 = vsub.f32 %v4947, %v4947
      %v5066 = vsub.f32 %v4950, %v4950
      %v5067 = vsub.f32 %v4955, %v4955
      %v5068 = vsub.f32 %v4958, %v4958
      %v5069 = vsub.f32 %v4963, %v4963
      %v5070 = vsub.f32 %v4966, %v4966
      %v5071 = vsub.f32 %v4971, %v4971
      %v5072 = vsub.f32 %v4974, %v4974
      %v5073 = vsub.f32 %v4979, %v4979
      %v5074 = vsub.f32 %v4982, %v4982
      %v5075 = vsub.f32 %v4987, %v4987
      %v5076 = vsub.f32 %v4990, %v4990
      %v5077 = vsub.f32 %v4995, %v4995
      %v5078 = vsub.f32 %v4998, %v4998
      %v5079 = vsub.f32 %v5003, %v5003
      %v5080 = vsub.f32 %v5006, %v5006
      %v5081 = vmul.f32 %v5009, 1.442695
      %v5082 = vpow.pop %v5081
      %v5083 = vmul.f32 %v5010, 1.442695
      %v5084 = vpow.pop %v5083
      %v5085 = vmul.f32 %v5011, 1.442695
      %v5086 = vpow.pop %v5085
      %v5087 = vmul.f32 %v5012, 1.442695
      %v5088 = vpow.pop %v5087
      %v5089 = vmul.f32 %v5013, 1.442695
      %v5090 = vpow.pop %v5089
      %v5091 = vmul.f32 %v5014, 1.442695
      %v5092 = vpow.pop %v5091
      %v5093 = vmul.f32 %v5015, 1.442695
      %v5094 = vpow.pop %v5093
      %v5095 = vmul.f32 %v5016, 1.442695
      %v5096 = vpow.pop %v5095
      %v5097 = vmul.f32 %v5017, 1.442695
      %v5098 = vpow.pop %v5097
      %v5099 = vmul.f32 %v5018, 1.442695
      %v5100 = vpow.pop %v5099
      %v5101 = vmul.f32 %v5019, 1.442695
      %v5102 = vpow.pop %v5101
      %v5103 = vmul.f32 %v5020, 1.442695
      %v5104 = vpow.pop %v5103
      %v5105 = vmul.f32 %v5021, 1.442695
      %v5106 = vpow.pop %v5105
      %v5107 = vmul.f32 %v5022, 1.442695
      %v5108 = vpow.pop %v5107
      %v5109 = vmul.f32 %v5023, 1.442695
      %v5110 = vpow.pop %v5109
      %v5111 = vmul.f32 %v5024, 1.442695
      %v5112 = vpow.pop %v5111
      %v5113 = vmul.f32 %v5025, 1.442695
      %v5114 = vpow.pop %v5113
      %v5115 = vmul.f32 %v5026, 1.442695
      %v5116 = vpow.pop %v5115
      %v5117 = vmul.f32 %v5027, 1.442695
      %v5118 = vpow.pop %v5117
      %v5119 = vmul.f32 %v5028, 1.442695
      %v5120 = vpow.pop %v5119
      %v5121 = vmul.f32 %v5029, 1.442695
      %v5122 = vpow.pop %v5121
      %v5123 = vmul.f32 %v5030, 1.442695
      %v5124 = vpow.pop %v5123
      %v5125 = vmul.f32 %v5031, 1.442695
      %v5126 = vpow.pop %v5125
      %v5127 = vmul.f32 %v5032, 1.442695
      %v5128 = vpow.pop %v5127
      %v5129 = vmul.f32 %v5033, 1.442695
      %v5130 = vpow.pop %v5129
      %v5131 = vmul.f32 %v5034, 1.442695
      %v5132 = vpow.pop %v5131
      %v5133 = vmul.f32 %v5035, 1.442695
      %v5134 = vpow.pop %v5133
      %v5135 = vmul.f32 %v5036, 1.442695
      %v5136 = vpow.pop %v5135
      %v5137 = vmul.f32 %v5037, 1.442695
      %v5138 = vpow.pop %v5137
      %v5139 = vmul.f32 %v5038, 1.442695
      %v5140 = vpow.pop %v5139
      %v5141 = vmul.f32 %v5039, 1.442695
      %v5142 = vpow.pop %v5141
      %v5143 = vmul.f32 %v5040, 1.442695
      %v5144 = vpow.pop %v5143
      %v5145 = vmul.f32 %v5041, 1.442695
      %v5146 = vpow.pop %v5145
      %v5147 = vmul.f32 %v5042, 1.442695
      %v5148 = vpow.pop %v5147
      %v5149 = vmul.f32 %v5043, 1.442695
      %v5150 = vpow.pop %v5149
      %v5151 = vmul.f32 %v5044, 1.442695
      %v5152 = vpow.pop %v5151
      %v5153 = vmul.f32 %v5045, 1.442695
      %v5154 = vpow.pop %v5153
      %v5155 = vmul.f32 %v5046, 1.442695
      %v5156 = vpow.pop %v5155
      %v5157 = vmul.f32 %v5047, 1.442695
      %v5158 = vpow.pop %v5157
      %v5159 = vmul.f32 %v5048, 1.442695
      %v5160 = vpow.pop %v5159
      %v5161 = vmul.f32 %v5049, 1.442695
      %v5162 = vpow.pop %v5161
      %v5163 = vmul.f32 %v5050, 1.442695
      %v5164 = vpow.pop %v5163
      %v5165 = vmul.f32 %v5051, 1.442695
      %v5166 = vpow.pop %v5165
      %v5167 = vmul.f32 %v5052, 1.442695
      %v5168 = vpow.pop %v5167
      %v5169 = vmul.f32 %v5053, 1.442695
      %v5170 = vpow.pop %v5169
      %v5171 = vmul.f32 %v5054, 1.442695
      %v5172 = vpow.pop %v5171
      %v5173 = vmul.f32 %v5055, 1.442695
      %v5174 = vpow.pop %v5173
      %v5175 = vmul.f32 %v5056, 1.442695
      %v5176 = vpow.pop %v5175
      %v5177 = vmul.f32 %v5057, 1.442695
      %v5178 = vpow.pop %v5177
      %v5179 = vmul.f32 %v5058, 1.442695
      %v5180 = vpow.pop %v5179
      %v5181 = vmul.f32 %v5059, 1.442695
      %v5182 = vpow.pop %v5181
      %v5183 = vmul.f32 %v5060, 1.442695
      %v5184 = vpow.pop %v5183
      %v5185 = vmul.f32 %v5061, 1.442695
      %v5186 = vpow.pop %v5185
      %v5187 = vmul.f32 %v5062, 1.442695
      %v5188 = vpow.pop %v5187
      %v5189 = vmul.f32 %v5063, 1.442695
      %v5190 = vpow.pop %v5189
      %v5191 = vmul.f32 %v5064, 1.442695
      %v5192 = vpow.pop %v5191
      %v5193 = vmul.f32 %v5065, 1.442695
      %v5194 = vpow.pop %v5193
      %v5195 = vmul.f32 %v5066, 1.442695
      %v5196 = vpow.pop %v5195
      %v5197 = vmul.f32 %v5067, 1.442695
      %v5198 = vpow.pop %v5197
      %v5199 = vmul.f32 %v5068, 1.442695
      %v5200 = vpow.pop %v5199
      %v5201 = vmul.f32 %v5069, 1.442695
      %v5202 = vpow.pop %v5201
      %v5203 = vmul.f32 %v5070, 1.442695
      %v5204 = vpow.pop %v5203
      %v5205 = vmul.f32 %v5071, 1.442695
      %v5206 = vpow.pop %v5205
      %v5207 = vmul.f32 %v5072, 1.442695
      %v5208 = vpow.pop %v5207
      %v5209 = vmul.f32 %v5073, 1.442695
      %v5210 = vpow.pop %v5209
      %v5211 = vmul.f32 %v5074, 1.442695
      %v5212 = vpow.pop %v5211
      %v5213 = vmul.f32 %v5075, 1.442695
      %v5214 = vpow.pop %v5213
      %v5215 = vmul.f32 %v5076, 1.442695
      %v5216 = vpow.pop %v5215
      %v5217 = vmul.f32 %v5077, 1.442695
      %v5218 = vpow.pop %v5217
      %v5219 = vmul.f32 %v5078, 1.442695
      %v5220 = vpow.pop %v5219
      %v5221 = vmul.f32 %v5079, 1.442695
      %v5222 = vpow.pop %v5221
      %v5223 = vmul.f32 %v5080, 1.442695
      %v5224 = vpow.pop %v5223
      %v5225 = vadd.f32 %v5082, 0.0
      %v5226 = vadd.f32 %v5084, 0.0
      %v5227 = vadd.f32 %v5086, 0.0
      %v5228 = vadd.f32 %v5088, 0.0
      %v5229 = vadd.f32 %v5090, 0.0
      %v5230 = vadd.f32 %v5092, 0.0
      %v5231 = vadd.f32 %v5094, 0.0
      %v5232 = vadd.f32 %v5096, 0.0
      %v5233 = vadd.f32 %v5098, 0.0
      %v5234 = vadd.f32 %v5100, 0.0
      %v5235 = vadd.f32 %v5102, 0.0
      %v5236 = vadd.f32 %v5104, 0.0
      %v5237 = vadd.f32 %v5106, 0.0
      %v5238 = vadd.f32 %v5108, 0.0
      %v5239 = vadd.f32 %v5110, 0.0
      %v5240 = vadd.f32 %v5112, 0.0
      %v5241 = vadd.f32 %v5114, 0.0
      %v5242 = vadd.f32 %v5116, 0.0
      %v5243 = vadd.f32 %v5118, 0.0
      %v5244 = vadd.f32 %v5120, 0.0
      %v5245 = vadd.f32 %v5122, 0.0
      %v5246 = vadd.f32 %v5124, 0.0
      %v5247 = vadd.f32 %v5126, 0.0
      %v5248 = vadd.f32 %v5128, 0.0
      %v5249 = vadd.f32 %v5130, 0.0
      %v5250 = vadd.f32 %v5132, 0.0
      %v5251 = vadd.f32 %v5134, 0.0
      %v5252 = vadd.f32 %v5136, 0.0
      %v5253 = vadd.f32 %v5138, 0.0
      %v5254 = vadd.f32 %v5140, 0.0
      %v5255 = vadd.f32 %v5142, 0.0
      %v5256 = vadd.f32 %v5144, 0.0
      %v5257 = vadd.f32 %v5146, 0.0
      %v5258 = vadd.f32 %v5148, 0.0
      %v5259 = vadd.f32 %v5150, 0.0
      %v5260 = vadd.f32 %v5152, 0.0
      %v5261 = vadd.f32 %v5154, 0.0
      %v5262 = vadd.f32 %v5156, 0.0
      %v5263 = vadd.f32 %v5158, 0.0
      %v5264 = vadd.f32 %v5160, 0.0
      %v5265 = vadd.f32 %v5162, 0.0
      %v5266 = vadd.f32 %v5164, 0.0
      %v5267 = vadd.f32 %v5166, 0.0
      %v5268 = vadd.f32 %v5168, 0.0
      %v5269 = vadd.f32 %v5170, 0.0
      %v5270 = vadd.f32 %v5172, 0.0
      %v5271 = vadd.f32 %v5174, 0.0
      %v5272 = vadd.f32 %v5176, 0.0
      %v5273 = vadd.f32 %v5178, 0.0
      %v5274 = vadd.f32 %v5180, 0.0
      %v5275 = vadd.f32 %v5182, 0.0
      %v5276 = vadd.f32 %v5184, 0.0
      %v5277 = vadd.f32 %v5186, 0.0
      %v5278 = vadd.f32 %v5188, 0.0
      %v5279 = vadd.f32 %v5190, 0.0
      %v5280 = vadd.f32 %v5192, 0.0
      %v5281 = vadd.f32 %v5194, 0.0
      %v5282 = vadd.f32 %v5196, 0.0
      %v5283 = vadd.f32 %v5198, 0.0
      %v5284 = vadd.f32 %v5200, 0.0
      %v5285 = vadd.f32 %v5202, 0.0
      %v5286 = vadd.f32 %v5204, 0.0
      %v5287 = vadd.f32 %v5206, 0.0
      %v5288 = vadd.f32 %v5208, 0.0
      %v5289 = vadd.f32 %v5210, 0.0
      %v5290 = vadd.f32 %v5212, 0.0
      %v5291 = vadd.f32 %v5214, 0.0
      %v5292 = vadd.f32 %v5216, 0.0
      %v5293 = vadd.f32 %v5218, 0.0
      %v5294 = vadd.f32 %v5220, 0.0
      %v5295 = vadd.f32 %v5222, 0.0
      %v5296 = vadd.f32 %v5224, 0.0
      %v5297 = vlog2.pop %v5225
      %v5298 = vmul.f32 %v5297, 0.6931472
      %v5299 = vlog2.pop %v5226
      %v5300 = vmul.f32 %v5299, 0.6931472
      %v5301 = vlog2.pop %v5227
      %v5302 = vmul.f32 %v5301, 0.6931472
      %v5303 = vlog2.pop %v5228
      %v5304 = vmul.f32 %v5303, 0.6931472
      %v5305 = vlog2.pop %v5229
      %v5306 = vmul.f32 %v5305, 0.6931472
      %v5307 = vlog2.pop %v5230
      %v5308 = vmul.f32 %v5307, 0.6931472
      %v5309 = vlog2.pop %v5231
      %v5310 = vmul.f32 %v5309, 0.6931472
      %v5311 = vlog2.pop %v5232
      %v5312 = vmul.f32 %v5311, 0.6931472
      %v5313 = vlog2.pop %v5233
      %v5314 = vmul.f32 %v5313, 0.6931472
      %v5315 = vlog2.pop %v5234
      %v5316 = vmul.f32 %v5315, 0.6931472
      %v5317 = vlog2.pop %v5235
      %v5318 = vmul.f32 %v5317, 0.6931472
      %v5319 = vlog2.pop %v5236
      %v5320 = vmul.f32 %v5319, 0.6931472
      %v5321 = vlog2.pop %v5237
      %v5322 = vmul.f32 %v5321, 0.6931472
      %v5323 = vlog2.pop %v5238
      %v5324 = vmul.f32 %v5323, 0.6931472
      %v5325 = vlog2.pop %v5239
      %v5326 = vmul.f32 %v5325, 0.6931472
      %v5327 = vlog2.pop %v5240
      %v5328 = vmul.f32 %v5327, 0.6931472
      %v5329 = vlog2.pop %v5241
      %v5330 = vmul.f32 %v5329, 0.6931472
      %v5331 = vlog2.pop %v5242
      %v5332 = vmul.f32 %v5331, 0.6931472
      %v5333 = vlog2.pop %v5243
      %v5334 = vmul.f32 %v5333, 0.6931472
      %v5335 = vlog2.pop %v5244
      %v5336 = vmul.f32 %v5335, 0.6931472
      %v5337 = vlog2.pop %v5245
      %v5338 = vmul.f32 %v5337, 0.6931472
      %v5339 = vlog2.pop %v5246
      %v5340 = vmul.f32 %v5339, 0.6931472
      %v5341 = vlog2.pop %v5247
      %v5342 = vmul.f32 %v5341, 0.6931472
      %v5343 = vlog2.pop %v5248
      %v5344 = vmul.f32 %v5343, 0.6931472
      %v5345 = vlog2.pop %v5249
      %v5346 = vmul.f32 %v5345, 0.6931472
      %v5347 = vlog2.pop %v5250
      %v5348 = vmul.f32 %v5347, 0.6931472
      %v5349 = vlog2.pop %v5251
      %v5350 = vmul.f32 %v5349, 0.6931472
      %v5351 = vlog2.pop %v5252
      %v5352 = vmul.f32 %v5351, 0.6931472
      %v5353 = vlog2.pop %v5253
      %v5354 = vmul.f32 %v5353, 0.6931472
      %v5355 = vlog2.pop %v5254
      %v5356 = vmul.f32 %v5355, 0.6931472
      %v5357 = vlog2.pop %v5255
      %v5358 = vmul.f32 %v5357, 0.6931472
      %v5359 = vlog2.pop %v5256
      %v5360 = vmul.f32 %v5359, 0.6931472
      %v5361 = vlog2.pop %v5257
      %v5362 = vmul.f32 %v5361, 0.6931472
      %v5363 = vlog2.pop %v5258
      %v5364 = vmul.f32 %v5363, 0.6931472
      %v5365 = vlog2.pop %v5259
      %v5366 = vmul.f32 %v5365, 0.6931472
      %v5367 = vlog2.pop %v5260
      %v5368 = vmul.f32 %v5367, 0.6931472
      %v5369 = vlog2.pop %v5261
      %v5370 = vmul.f32 %v5369, 0.6931472
      %v5371 = vlog2.pop %v5262
      %v5372 = vmul.f32 %v5371, 0.6931472
      %v5373 = vlog2.pop %v5263
      %v5374 = vmul.f32 %v5373, 0.6931472
      %v5375 = vlog2.pop %v5264
      %v5376 = vmul.f32 %v5375, 0.6931472
      %v5377 = vlog2.pop %v5265
      %v5378 = vmul.f32 %v5377, 0.6931472
      %v5379 = vlog2.pop %v5266
      %v5380 = vmul.f32 %v5379, 0.6931472
      %v5381 = vlog2.pop %v5267
      %v5382 = vmul.f32 %v5381, 0.6931472
      %v5383 = vlog2.pop %v5268
      %v5384 = vmul.f32 %v5383, 0.6931472
      %v5385 = vlog2.pop %v5269
      %v5386 = vmul.f32 %v5385, 0.6931472
      %v5387 = vlog2.pop %v5270
      %v5388 = vmul.f32 %v5387, 0.6931472
      %v5389 = vlog2.pop %v5271
      %v5390 = vmul.f32 %v5389, 0.6931472
      %v5391 = vlog2.pop %v5272
      %v5392 = vmul.f32 %v5391, 0.6931472
      %v5393 = vlog2.pop %v5273
      %v5394 = vmul.f32 %v5393, 0.6931472
      %v5395 = vlog2.pop %v5274
      %v5396 = vmul.f32 %v5395, 0.6931472
      %v5397 = vlog2.pop %v5275
      %v5398 = vmul.f32 %v5397, 0.6931472
      %v5399 = vlog2.pop %v5276
      %v5400 = vmul.f32 %v5399, 0.6931472
      %v5401 = vlog2.pop %v5277
      %v5402 = vmul.f32 %v5401, 0.6931472
      %v5403 = vlog2.pop %v5278
      %v5404 = vmul.f32 %v5403, 0.6931472
      %v5405 = vlog2.pop %v5279
      %v5406 = vmul.f32 %v5405, 0.6931472
      %v5407 = vlog2.pop %v5280
      %v5408 = vmul.f32 %v5407, 0.6931472
      %v5409 = vlog2.pop %v5281
      %v5410 = vmul.f32 %v5409, 0.6931472
      %v5411 = vlog2.pop %v5282
      %v5412 = vmul.f32 %v5411, 0.6931472
      %v5413 = vlog2.pop %v5283
      %v5414 = vmul.f32 %v5413, 0.6931472
      %v5415 = vlog2.pop %v5284
      %v5416 = vmul.f32 %v5415, 0.6931472
      %v5417 = vlog2.pop %v5285
      %v5418 = vmul.f32 %v5417, 0.6931472
      %v5419 = vlog2.pop %v5286
      %v5420 = vmul.f32 %v5419, 0.6931472
      %v5421 = vlog2.pop %v5287
      %v5422 = vmul.f32 %v5421, 0.6931472
      %v5423 = vlog2.pop %v5288
      %v5424 = vmul.f32 %v5423, 0.6931472
      %v5425 = vlog2.pop %v5289
      %v5426 = vmul.f32 %v5425, 0.6931472
      %v5427 = vlog2.pop %v5290
      %v5428 = vmul.f32 %v5427, 0.6931472
      %v5429 = vlog2.pop %v5291
      %v5430 = vmul.f32 %v5429, 0.6931472
      %v5431 = vlog2.pop %v5292
      %v5432 = vmul.f32 %v5431, 0.6931472
      %v5433 = vlog2.pop %v5293
      %v5434 = vmul.f32 %v5433, 0.6931472
      %v5435 = vlog2.pop %v5294
      %v5436 = vmul.f32 %v5435, 0.6931472
      %v5437 = vlog2.pop %v5295
      %v5438 = vmul.f32 %v5437, 0.6931472
      %v5439 = vlog2.pop %v5296
      %v5440 = vmul.f32 %v5439, 0.6931472
      %v5441 = vadd.f32 %v4723, %v5298
      %v5442 = vadd.f32 %v4726, %v5300
      %v5443 = vadd.f32 %v4731, %v5302
      %v5444 = vadd.f32 %v4734, %v5304
      %v5445 = vadd.f32 %v4739, %v5306
      %v5446 = vadd.f32 %v4742, %v5308
      %v5447 = vadd.f32 %v4747, %v5310
      %v5448 = vadd.f32 %v4750, %v5312
      %v5449 = vadd.f32 %v4755, %v5314
      %v5450 = vadd.f32 %v4758, %v5316
      %v5451 = vadd.f32 %v4763, %v5318
      %v5452 = vadd.f32 %v4766, %v5320
      %v5453 = vadd.f32 %v4771, %v5322
      %v5454 = vadd.f32 %v4774, %v5324
      %v5455 = vadd.f32 %v4779, %v5326
      %v5456 = vadd.f32 %v4782, %v5328
      %v5457 = vadd.f32 %v4787, %v5330
      %v5458 = vadd.f32 %v4790, %v5332
      %v5459 = vadd.f32 %v4795, %v5334
      %v5460 = vadd.f32 %v4798, %v5336
      %v5461 = vadd.f32 %v4803, %v5338
      %v5462 = vadd.f32 %v4806, %v5340
      %v5463 = vadd.f32 %v4811, %v5342
      %v5464 = vadd.f32 %v4814, %v5344
      %v5465 = vadd.f32 %v4819, %v5346
      %v5466 = vadd.f32 %v4822, %v5348
      %v5467 = vadd.f32 %v4827, %v5350
      %v5468 = vadd.f32 %v4830, %v5352
      %v5469 = vadd.f32 %v4835, %v5354
      %v5470 = vadd.f32 %v4838, %v5356
      %v5471 = vadd.f32 %v4843, %v5358
      %v5472 = vadd.f32 %v4846, %v5360
      %v5473 = vadd.f32 %v4851, %v5362
      %v5474 = vadd.f32 %v4854, %v5364
      %v5475 = vadd.f32 %v4859, %v5366
      %v5476 = vadd.f32 %v4862, %v5368
      %v5477 = vadd.f32 %v4867, %v5370
      %v5478 = vadd.f32 %v4870, %v5372
      %v5479 = vadd.f32 %v4875, %v5374
      %v5480 = vadd.f32 %v4878, %v5376
      %v5481 = vadd.f32 %v4883, %v5378
      %v5482 = vadd.f32 %v4886, %v5380
      %v5483 = vadd.f32 %v4891, %v5382
      %v5484 = vadd.f32 %v4894, %v5384
      %v5485 = vadd.f32 %v4899, %v5386
      %v5486 = vadd.f32 %v4902, %v5388
      %v5487 = vadd.f32 %v4907, %v5390
      %v5488 = vadd.f32 %v4910, %v5392
      %v5489 = vadd.f32 %v4915, %v5394
      %v5490 = vadd.f32 %v4918, %v5396
      %v5491 = vadd.f32 %v4923, %v5398
      %v5492 = vadd.f32 %v4926, %v5400
      %v5493 = vadd.f32 %v4931, %v5402
      %v5494 = vadd.f32 %v4934, %v5404
      %v5495 = vadd.f32 %v4939, %v5406
      %v5496 = vadd.f32 %v4942, %v5408
      %v5497 = vadd.f32 %v4947, %v5410
      %v5498 = vadd.f32 %v4950, %v5412
      %v5499 = vadd.f32 %v4955, %v5414
      %v5500 = vadd.f32 %v4958, %v5416
      %v5501 = vadd.f32 %v4963, %v5418
      %v5502 = vadd.f32 %v4966, %v5420
      %v5503 = vadd.f32 %v4971, %v5422
      %v5504 = vadd.f32 %v4974, %v5424
      %v5505 = vadd.f32 %v4979, %v5426
      %v5506 = vadd.f32 %v4982, %v5428
      %v5507 = vadd.f32 %v4987, %v5430
      %v5508 = vadd.f32 %v4990, %v5432
      %v5509 = vadd.f32 %v4995, %v5434
      %v5510 = vadd.f32 %v4998, %v5436
      %v5511 = vadd.f32 %v5003, %v5438
      %v5512 = vadd.f32 %v5006, %v5440
      %v5513 = vsub.f32 %v4723, %v5441
      %v5514 = vsub.f32 %v4726, %v5442
      %v5515 = vsub.f32 %v4731, %v5443
      %v5516 = vsub.f32 %v4734, %v5444
      %v5517 = vsub.f32 %v4739, %v5445
      %v5518 = vsub.f32 %v4742, %v5446
      %v5519 = vsub.f32 %v4747, %v5447
      %v5520 = vsub.f32 %v4750, %v5448
      %v5521 = vsub.f32 %v4755, %v5449
      %v5522 = vsub.f32 %v4758, %v5450
      %v5523 = vsub.f32 %v4763, %v5451
      %v5524 = vsub.f32 %v4766, %v5452
      %v5525 = vsub.f32 %v4771, %v5453
      %v5526 = vsub.f32 %v4774, %v5454
      %v5527 = vsub.f32 %v4779, %v5455
      %v5528 = vsub.f32 %v4782, %v5456
      %v5529 = vsub.f32 %v4787, %v5457
      %v5530 = vsub.f32 %v4790, %v5458
      %v5531 = vsub.f32 %v4795, %v5459
      %v5532 = vsub.f32 %v4798, %v5460
      %v5533 = vsub.f32 %v4803, %v5461
      %v5534 = vsub.f32 %v4806, %v5462
      %v5535 = vsub.f32 %v4811, %v5463
      %v5536 = vsub.f32 %v4814, %v5464
      %v5537 = vsub.f32 %v4819, %v5465
      %v5538 = vsub.f32 %v4822, %v5466
      %v5539 = vsub.f32 %v4827, %v5467
      %v5540 = vsub.f32 %v4830, %v5468
      %v5541 = vsub.f32 %v4835, %v5469
      %v5542 = vsub.f32 %v4838, %v5470
      %v5543 = vsub.f32 %v4843, %v5471
      %v5544 = vsub.f32 %v4846, %v5472
      %v5545 = vsub.f32 %v4851, %v5473
      %v5546 = vsub.f32 %v4854, %v5474
      %v5547 = vsub.f32 %v4859, %v5475
      %v5548 = vsub.f32 %v4862, %v5476
      %v5549 = vsub.f32 %v4867, %v5477
      %v5550 = vsub.f32 %v4870, %v5478
      %v5551 = vsub.f32 %v4875, %v5479
      %v5552 = vsub.f32 %v4878, %v5480
      %v5553 = vsub.f32 %v4883, %v5481
      %v5554 = vsub.f32 %v4886, %v5482
      %v5555 = vsub.f32 %v4891, %v5483
      %v5556 = vsub.f32 %v4894, %v5484
      %v5557 = vsub.f32 %v4899, %v5485
      %v5558 = vsub.f32 %v4902, %v5486
      %v5559 = vsub.f32 %v4907, %v5487
      %v5560 = vsub.f32 %v4910, %v5488
      %v5561 = vsub.f32 %v4915, %v5489
      %v5562 = vsub.f32 %v4918, %v5490
      %v5563 = vsub.f32 %v4923, %v5491
      %v5564 = vsub.f32 %v4926, %v5492
      %v5565 = vsub.f32 %v4931, %v5493
      %v5566 = vsub.f32 %v4934, %v5494
      %v5567 = vsub.f32 %v4939, %v5495
      %v5568 = vsub.f32 %v4942, %v5496
      %v5569 = vsub.f32 %v4947, %v5497
      %v5570 = vsub.f32 %v4950, %v5498
      %v5571 = vsub.f32 %v4955, %v5499
      %v5572 = vsub.f32 %v4958, %v5500
      %v5573 = vsub.f32 %v4963, %v5501
      %v5574 = vsub.f32 %v4966, %v5502
      %v5575 = vsub.f32 %v4971, %v5503
      %v5576 = vsub.f32 %v4974, %v5504
      %v5577 = vsub.f32 %v4979, %v5505
      %v5578 = vsub.f32 %v4982, %v5506
      %v5579 = vsub.f32 %v4987, %v5507
      %v5580 = vsub.f32 %v4990, %v5508
      %v5581 = vsub.f32 %v4995, %v5509
      %v5582 = vsub.f32 %v4998, %v5510
      %v5583 = vsub.f32 %v5003, %v5511
      %v5584 = vsub.f32 %v5006, %v5512
      %vm5585 = vcmask 7168
      %5586 = vst.msk [vmem:[%s285] sm:$0xff] %vm5585, %v5513
      %5587 = vst.msk [vmem:[%s285 + $0x8] sm:$0xff] %vm5585, %v5514
      %5588 = vst.msk [vmem:[%s285 + $0x10] sm:$0xff] %vm5585, %v5515
      %5589 = vst.msk [vmem:[%s285 + $0x18] sm:$0xff] %vm5585, %v5516
      %5590 = vst.msk [vmem:[%s285 + $0x20] sm:$0xff] %vm5585, %v5517
      %5591 = vst.msk [vmem:[%s285 + $0x28] sm:$0xff] %vm5585, %v5518
      %5592 = vst.msk [vmem:[%s285 + $0x30] sm:$0xff] %vm5585, %v5519
      %5593 = vst.msk [vmem:[%s285 + $0x38] sm:$0xff] %vm5585, %v5520
      %5594 = vst.msk [vmem:[%s285 + $0x40] sm:$0xff] %vm5585, %v5521
      %5595 = vst.msk [vmem:[%s285 + $0x48] sm:$0xff] %vm5585, %v5522
      %5596 = vst.msk [vmem:[%s285 + $0x50] sm:$0xff] %vm5585, %v5523
      %5597 = vst.msk [vmem:[%s285 + $0x58] sm:$0xff] %vm5585, %v5524
      %5598 = vst.msk [vmem:[%s285 + $0x60] sm:$0xff] %vm5585, %v5525
      %5599 = vst.msk [vmem:[%s285 + $0x68] sm:$0xff] %vm5585, %v5526
      %5600 = vst.msk [vmem:[%s285 + $0x70] sm:$0xff] %vm5585, %v5527
      %5601 = vst.msk [vmem:[%s285 + $0x78] sm:$0xff] %vm5585, %v5528
      %5602 = vst.msk [vmem:[%s285 + $0x80] sm:$0xff] %vm5585, %v5529
      %5603 = vst.msk [vmem:[%s285 + $0x88] sm:$0xff] %vm5585, %v5530
      %5604 = vst.msk [vmem:[%s285 + $0x90] sm:$0xff] %vm5585, %v5531
      %5605 = vst.msk [vmem:[%s285 + $0x98] sm:$0xff] %vm5585, %v5532
      %5606 = vst.msk [vmem:[%s285 + $0xa0] sm:$0xff] %vm5585, %v5533
      %5607 = vst.msk [vmem:[%s285 + $0xa8] sm:$0xff] %vm5585, %v5534
      %5608 = vst.msk [vmem:[%s285 + $0xb0] sm:$0xff] %vm5585, %v5535
      %5609 = vst.msk [vmem:[%s285 + $0xb8] sm:$0xff] %vm5585, %v5536
      %5610 = vst.msk [vmem:[%s285 + $0xc0] sm:$0xff] %vm5585, %v5537
      %5611 = vst.msk [vmem:[%s285 + $0xc8] sm:$0xff] %vm5585, %v5538
      %5612 = vst.msk [vmem:[%s285 + $0xd0] sm:$0xff] %vm5585, %v5539
      %5613 = vst.msk [vmem:[%s285 + $0xd8] sm:$0xff] %vm5585, %v5540
      %5614 = vst.msk [vmem:[%s285 + $0xe0] sm:$0xff] %vm5585, %v5541
      %5615 = vst.msk [vmem:[%s285 + $0xe8] sm:$0xff] %vm5585, %v5542
      %5616 = vst.msk [vmem:[%s285 + $0xf0] sm:$0xff] %vm5585, %v5543
      %5617 = vst.msk [vmem:[%s285 + $0xf8] sm:$0xff] %vm5585, %v5544
      %5618 = vst.msk [vmem:[%s285 + $0x100] sm:$0xff] %vm5585, %v5545
      %5619 = vst.msk [vmem:[%s285 + $0x108] sm:$0xff] %vm5585, %v5546
      %5620 = vst.msk [vmem:[%s285 + $0x110] sm:$0xff] %vm5585, %v5547
      %5621 = vst.msk [vmem:[%s285 + $0x118] sm:$0xff] %vm5585, %v5548
      %5622 = vst.msk [vmem:[%s285 + $0x120] sm:$0xff] %vm5585, %v5549
      %5623 = vst.msk [vmem:[%s285 + $0x128] sm:$0xff] %vm5585, %v5550
      %5624 = vst.msk [vmem:[%s285 + $0x130] sm:$0xff] %vm5585, %v5551
      %5625 = vst.msk [vmem:[%s285 + $0x138] sm:$0xff] %vm5585, %v5552
      %5626 = vst.msk [vmem:[%s285 + $0x140] sm:$0xff] %vm5585, %v5553
      %5627 = vst.msk [vmem:[%s285 + $0x148] sm:$0xff] %vm5585, %v5554
      %5628 = vst.msk [vmem:[%s285 + $0x150] sm:$0xff] %vm5585, %v5555
      %5629 = vst.msk [vmem:[%s285 + $0x158] sm:$0xff] %vm5585, %v5556
      %5630 = vst.msk [vmem:[%s285 + $0x160] sm:$0xff] %vm5585, %v5557
      %5631 = vst.msk [vmem:[%s285 + $0x168] sm:$0xff] %vm5585, %v5558
      %5632 = vst.msk [vmem:[%s285 + $0x170] sm:$0xff] %vm5585, %v5559
      %5633 = vst.msk [vmem:[%s285 + $0x178] sm:$0xff] %vm5585, %v5560
      %5634 = vst.msk [vmem:[%s285 + $0x180] sm:$0xff] %vm5585, %v5561
      %5635 = vst.msk [vmem:[%s285 + $0x188] sm:$0xff] %vm5585, %v5562
      %5636 = vst.msk [vmem:[%s285 + $0x190] sm:$0xff] %vm5585, %v5563
      %5637 = vst.msk [vmem:[%s285 + $0x198] sm:$0xff] %vm5585, %v5564
      %5638 = vst.msk [vmem:[%s285 + $0x1a0] sm:$0xff] %vm5585, %v5565
      %5639 = vst.msk [vmem:[%s285 + $0x1a8] sm:$0xff] %vm5585, %v5566
      %5640 = vst.msk [vmem:[%s285 + $0x1b0] sm:$0xff] %vm5585, %v5567
      %5641 = vst.msk [vmem:[%s285 + $0x1b8] sm:$0xff] %vm5585, %v5568
      %5642 = vst.msk [vmem:[%s285 + $0x1c0] sm:$0xff] %vm5585, %v5569
      %5643 = vst.msk [vmem:[%s285 + $0x1c8] sm:$0xff] %vm5585, %v5570
      %5644 = vst.msk [vmem:[%s285 + $0x1d0] sm:$0xff] %vm5585, %v5571
      %5645 = vst.msk [vmem:[%s285 + $0x1d8] sm:$0xff] %vm5585, %v5572
      %5646 = vst.msk [vmem:[%s285 + $0x1e0] sm:$0xff] %vm5585, %v5573
      %5647 = vst.msk [vmem:[%s285 + $0x1e8] sm:$0xff] %vm5585, %v5574
      %5648 = vst.msk [vmem:[%s285 + $0x1f0] sm:$0xff] %vm5585, %v5575
      %5649 = vst.msk [vmem:[%s285 + $0x1f8] sm:$0xff] %vm5585, %v5576
      %5650 = vst.msk [vmem:[%s285 + $0x200] sm:$0xff] %vm5585, %v5577
      %5651 = vst.msk [vmem:[%s285 + $0x208] sm:$0xff] %vm5585, %v5578
      %5652 = vst.msk [vmem:[%s285 + $0x210] sm:$0xff] %vm5585, %v5579
      %5653 = vst.msk [vmem:[%s285 + $0x218] sm:$0xff] %vm5585, %v5580
      %5654 = vst.msk [vmem:[%s285 + $0x220] sm:$0xff] %vm5585, %v5581
      %5655 = vst.msk [vmem:[%s285 + $0x228] sm:$0xff] %vm5585, %v5582
      %5656 = vst.msk [vmem:[%s285 + $0x230] sm:$0xff] %vm5585, %v5583
      %vm5657 = vcmask 3072
      %5658 = vst.msk [vmem:[%s285 + $0x238] sm:$0xf] %vm5657, %v5584
      %s5659 = scalar_lea.vmem %s271, 1440
      %v5660 = vld [vmem:[%s5659] sm:$0xff]
      %v5661 = vld [vmem:[%s5659 + $0x8] sm:$0xff]
      %v5662 = vld [vmem:[%s5659 + $0x10] sm:$0xf]
      %v5663 = vld [vmem:[%s5659 + $0x14] sm:$0xff]
      %v5664 = vld [vmem:[%s5659 + $0x1c] sm:$0xff]
      %v5665 = vld [vmem:[%s5659 + $0x24] sm:$0xf]
      %v5666 = vld [vmem:[%s5659 + $0x28] sm:$0xff]
      %v5667 = vld [vmem:[%s5659 + $0x30] sm:$0xff]
      %v5668 = vld [vmem:[%s5659 + $0x38] sm:$0xf]
      %v5669 = vld [vmem:[%s5659 + $0x3c] sm:$0xff]
      %v5670 = vld [vmem:[%s5659 + $0x44] sm:$0xff]
      %v5671 = vld [vmem:[%s5659 + $0x4c] sm:$0xf]
      %v5672 = vld [vmem:[%s5659 + $0x50] sm:$0xff]
      %v5673 = vld [vmem:[%s5659 + $0x58] sm:$0xff]
      %v5674 = vld [vmem:[%s5659 + $0x60] sm:$0xf]
      %v5675 = vld [vmem:[%s5659 + $0x64] sm:$0xff]
      %v5676 = vld [vmem:[%s5659 + $0x6c] sm:$0xff]
      %v5677 = vld [vmem:[%s5659 + $0x74] sm:$0xf]
      %v5678 = vld [vmem:[%s5659 + $0x78] sm:$0xff]
      %v5679 = vld [vmem:[%s5659 + $0x80] sm:$0xff]
      %v5680 = vld [vmem:[%s5659 + $0x88] sm:$0xf]
      %v5681 = vld [vmem:[%s5659 + $0x8c] sm:$0xff]
      %v5682 = vld [vmem:[%s5659 + $0x94] sm:$0xff]
      %v5683 = vld [vmem:[%s5659 + $0x9c] sm:$0xf]
      %v5684 = vld [vmem:[%s5659 + $0xa0] sm:$0xff]
      %v5685 = vld [vmem:[%s5659 + $0xa8] sm:$0xff]
      %v5686 = vld [vmem:[%s5659 + $0xb0] sm:$0xf]
      %v5687 = vld [vmem:[%s5659 + $0xb4] sm:$0xff]
      %v5688 = vld [vmem:[%s5659 + $0xbc] sm:$0xff]
      %v5689 = vld [vmem:[%s5659 + $0xc4] sm:$0xf]
      %v5690 = vld [vmem:[%s5659 + $0xc8] sm:$0xff]
      %v5691 = vld [vmem:[%s5659 + $0xd0] sm:$0xff]
      %v5692 = vld [vmem:[%s5659 + $0xd8] sm:$0xf]
      %v5693 = vld [vmem:[%s5659 + $0xdc] sm:$0xff]
      %v5694 = vld [vmem:[%s5659 + $0xe4] sm:$0xff]
      %v5695 = vld [vmem:[%s5659 + $0xec] sm:$0xf]
      %v5696 = vld [vmem:[%s5659 + $0xf0] sm:$0xff]
      %v5697 = vld [vmem:[%s5659 + $0xf8] sm:$0xff]
      %v5698 = vld [vmem:[%s5659 + $0x100] sm:$0xf]
      %v5699 = vld [vmem:[%s5659 + $0x104] sm:$0xff]
      %v5700 = vld [vmem:[%s5659 + $0x10c] sm:$0xff]
      %v5701 = vld [vmem:[%s5659 + $0x114] sm:$0xf]
      %v5702 = vld [vmem:[%s5659 + $0x118] sm:$0xff]
      %v5703 = vld [vmem:[%s5659 + $0x120] sm:$0xff]
      %v5704 = vld [vmem:[%s5659 + $0x128] sm:$0xf]
      %v5705 = vld [vmem:[%s5659 + $0x12c] sm:$0xff]
      %v5706 = vld [vmem:[%s5659 + $0x134] sm:$0xff]
      %v5707 = vld [vmem:[%s5659 + $0x13c] sm:$0xf]
      %v5708 = vld [vmem:[%s5659 + $0x140] sm:$0xff]
      %v5709 = vld [vmem:[%s5659 + $0x148] sm:$0xff]
      %v5710 = vld [vmem:[%s5659 + $0x150] sm:$0xf]
      %v5711 = vld [vmem:[%s5659 + $0x154] sm:$0xff]
      %v5712 = vld [vmem:[%s5659 + $0x15c] sm:$0xff]
      %v5713 = vld [vmem:[%s5659 + $0x164] sm:$0xf]
      %v5714 = vld [vmem:[%s5659 + $0x168] sm:$0xff]
      %v5715 = vld [vmem:[%s5659 + $0x170] sm:$0xff]
      %v5716 = vld [vmem:[%s5659 + $0x178] sm:$0xf]
      %v5717 = vld [vmem:[%s5659 + $0x17c] sm:$0xff]
      %v5718 = vld [vmem:[%s5659 + $0x184] sm:$0xff]
      %v5719 = vld [vmem:[%s5659 + $0x18c] sm:$0xf]
      %v5720 = vld [vmem:[%s5659 + $0x190] sm:$0xff]
      %v5721 = vld [vmem:[%s5659 + $0x198] sm:$0xff]
      %v5722 = vld [vmem:[%s5659 + $0x1a0] sm:$0xf]
      %v5723 = vld [vmem:[%s5659 + $0x1a4] sm:$0xff]
      %v5724 = vld [vmem:[%s5659 + $0x1ac] sm:$0xff]
      %v5725 = vld [vmem:[%s5659 + $0x1b4] sm:$0xf]
      %v5726 = vld [vmem:[%s5659 + $0x1b8] sm:$0xff]
      %v5727 = vld [vmem:[%s5659 + $0x1c0] sm:$0xff]
      %v5728 = vld [vmem:[%s5659 + $0x1c8] sm:$0xf]
      %v5729 = vld [vmem:[%s5659 + $0x1cc] sm:$0xff]
      %v5730 = vld [vmem:[%s5659 + $0x1d4] sm:$0xff]
      %v5731 = vld [vmem:[%s5659 + $0x1dc] sm:$0xf]
      %v5732 = vld [vmem:[%s5659 + $0x1e0] sm:$0xff]
      %v5733 = vld [vmem:[%s5659 + $0x1e8] sm:$0xff]
      %v5734 = vld [vmem:[%s5659 + $0x1f0] sm:$0xf]
      %v5735 = vld [vmem:[%s5659 + $0x1f4] sm:$0xff]
      %v5736 = vld [vmem:[%s5659 + $0x1fc] sm:$0xff]
      %v5737 = vld [vmem:[%s5659 + $0x204] sm:$0xf]
      %v5738 = vld [vmem:[%s5659 + $0x208] sm:$0xff]
      %v5739 = vld [vmem:[%s5659 + $0x210] sm:$0xff]
      %v5740 = vld [vmem:[%s5659 + $0x218] sm:$0xf]
      %v5741 = vld [vmem:[%s5659 + $0x21c] sm:$0xff]
      %v5742 = vld [vmem:[%s5659 + $0x224] sm:$0xff]
      %v5743 = vld [vmem:[%s5659 + $0x22c] sm:$0xf]
      %v5744 = vld [vmem:[%s5659 + $0x230] sm:$0xff]
      %v5745 = vld [vmem:[%s5659 + $0x238] sm:$0xff]
      %v5746 = vld [vmem:[%s5659 + $0x240] sm:$0xf]
      %v5747 = vld [vmem:[%s5659 + $0x244] sm:$0xff]
      %v5748 = vld [vmem:[%s5659 + $0x24c] sm:$0xff]
      %v5749 = vld [vmem:[%s5659 + $0x254] sm:$0xf]
      %v5750 = vld [vmem:[%s5659 + $0x258] sm:$0xff]
      %v5751 = vld [vmem:[%s5659 + $0x260] sm:$0xff]
      %v5752 = vld [vmem:[%s5659 + $0x268] sm:$0xf]
      %v5753 = vld [vmem:[%s5659 + $0x26c] sm:$0xff]
      %v5754 = vld [vmem:[%s5659 + $0x274] sm:$0xff]
      %v5755 = vld [vmem:[%s5659 + $0x27c] sm:$0xf]
      %v5756 = vld [vmem:[%s5659 + $0x280] sm:$0xff]
      %v5757 = vld [vmem:[%s5659 + $0x288] sm:$0xff]
      %v5758 = vld [vmem:[%s5659 + $0x290] sm:$0xf]
      %v5759 = vld [vmem:[%s5659 + $0x294] sm:$0xff]
      %v5760 = vld [vmem:[%s5659 + $0x29c] sm:$0xff]
      %v5761 = vld [vmem:[%s5659 + $0x2a4] sm:$0xf]
      %v5762 = vld [vmem:[%s5659 + $0x2a8] sm:$0xff]
      %v5763 = vld [vmem:[%s5659 + $0x2b0] sm:$0xff]
      %v5764 = vld [vmem:[%s5659 + $0x2b8] sm:$0xf]
      %v5765 = vld [vmem:[%s5659 + $0x2bc] sm:$0xff]
      %v5766 = vld [vmem:[%s5659 + $0x2c4] sm:$0xff]
      %v5767 = vld [vmem:[%s5659 + $0x2cc] sm:$0xf]
      %v5768 = vld [vmem:[%s5659 + $0x2d0] sm:$0xff]
      %v5769 = vld [vmem:[%s5659 + $0x2d8] sm:$0xff]
      %v5770 = vld [vmem:[%s5659 + $0x2e0] sm:$0xf]
      %v5771 = vld [vmem:[%s5659 + $0x2e4] sm:$0xff]
      %v5772 = vld [vmem:[%s5659 + $0x2ec] sm:$0xff]
      %v5773 = vld [vmem:[%s5659 + $0x2f4] sm:$0xf]
      %v5774 = vld [vmem:[%s5659 + $0x2f8] sm:$0xff]
      %v5775 = vld [vmem:[%s5659 + $0x300] sm:$0xff]
      %v5776 = vld [vmem:[%s5659 + $0x308] sm:$0xf]
      %v5777 = vld [vmem:[%s5659 + $0x30c] sm:$0xff]
      %v5778 = vld [vmem:[%s5659 + $0x314] sm:$0xff]
      %v5779 = vld [vmem:[%s5659 + $0x31c] sm:$0xf]
      %v5780 = vld [vmem:[%s5659 + $0x320] sm:$0xff]
      %v5781 = vld [vmem:[%s5659 + $0x328] sm:$0xff]
      %v5782 = vld [vmem:[%s5659 + $0x330] sm:$0xf]
      %v5783 = vld [vmem:[%s5659 + $0x334] sm:$0xff]
      %v5784 = vld [vmem:[%s5659 + $0x33c] sm:$0xff]
      %v5785 = vld [vmem:[%s5659 + $0x344] sm:$0xf]
      %v5786 = vld [vmem:[%s5659 + $0x348] sm:$0xff]
      %v5787 = vld [vmem:[%s5659 + $0x350] sm:$0xff]
      %v5788 = vld [vmem:[%s5659 + $0x358] sm:$0xf]
      %v5789 = vld [vmem:[%s5659 + $0x35c] sm:$0xff]
      %v5790 = vld [vmem:[%s5659 + $0x364] sm:$0xff]
      %v5791 = vld [vmem:[%s5659 + $0x36c] sm:$0xf]
      %v5792 = vld [vmem:[%s5659 + $0x370] sm:$0xff]
      %v5793 = vld [vmem:[%s5659 + $0x378] sm:$0xff]
      %v5794 = vld [vmem:[%s5659 + $0x380] sm:$0xf]
      %v5795 = vld [vmem:[%s5659 + $0x384] sm:$0xff]
      %v5796 = vld [vmem:[%s5659 + $0x38c] sm:$0xff]
      %v5797 = vld [vmem:[%s5659 + $0x394] sm:$0xf]
      %v5798 = vld [vmem:[%s5659 + $0x398] sm:$0xff]
      %v5799 = vld [vmem:[%s5659 + $0x3a0] sm:$0xff]
      %v5800 = vld [vmem:[%s5659 + $0x3a8] sm:$0xf]
      %v5801 = vld [vmem:[%s5659 + $0x3ac] sm:$0xff]
      %v5802 = vld [vmem:[%s5659 + $0x3b4] sm:$0xff]
      %v5803 = vld [vmem:[%s5659 + $0x3bc] sm:$0xf]
      %v5804 = vld [vmem:[%s5659 + $0x3c0] sm:$0xff]
      %v5805 = vld [vmem:[%s5659 + $0x3c8] sm:$0xff]
      %v5806 = vld [vmem:[%s5659 + $0x3d0] sm:$0xf]
      %v5807 = vld [vmem:[%s5659 + $0x3d4] sm:$0xff]
      %v5808 = vld [vmem:[%s5659 + $0x3dc] sm:$0xff]
      %v5809 = vld [vmem:[%s5659 + $0x3e4] sm:$0xf]
      %v5810 = vld [vmem:[%s5659 + $0x3e8] sm:$0xff]
      %v5811 = vld [vmem:[%s5659 + $0x3f0] sm:$0xff]
      %v5812 = vld [vmem:[%s5659 + $0x3f8] sm:$0xf]
      %v5813 = vld [vmem:[%s5659 + $0x3fc] sm:$0xff]
      %v5814 = vld [vmem:[%s5659 + $0x404] sm:$0xff]
      %v5815 = vld [vmem:[%s5659 + $0x40c] sm:$0xf]
      %v5816 = vld [vmem:[%s5659 + $0x410] sm:$0xff]
      %v5817 = vld [vmem:[%s5659 + $0x418] sm:$0xff]
      %v5818 = vld [vmem:[%s5659 + $0x420] sm:$0xf]
      %v5819 = vld [vmem:[%s5659 + $0x424] sm:$0xff]
      %v5820 = vld [vmem:[%s5659 + $0x42c] sm:$0xff]
      %v5821 = vld [vmem:[%s5659 + $0x434] sm:$0xf]
      %v5822 = vld [vmem:[%s5659 + $0x438] sm:$0xff]
      %v5823 = vld [vmem:[%s5659 + $0x440] sm:$0xff]
      %v5824 = vld [vmem:[%s5659 + $0x448] sm:$0xf]
      %v5825 = vld [vmem:[%s5659 + $0x44c] sm:$0xff]
      %v5826 = vld [vmem:[%s5659 + $0x454] sm:$0xff]
      %v5827 = vld [vmem:[%s5659 + $0x45c] sm:$0xf]
      %v5828 = vld [vmem:[%s5659 + $0x460] sm:$0xff]
      %v5829 = vld [vmem:[%s5659 + $0x468] sm:$0xff]
      %v5830 = vld [vmem:[%s5659 + $0x470] sm:$0xf]
      %v5831 = vld [vmem:[%s5659 + $0x474] sm:$0xff]
      %v5832 = vld [vmem:[%s5659 + $0x47c] sm:$0xff]
      %v5833 = vld [vmem:[%s5659 + $0x484] sm:$0xf]
      %v5834 = vld [vmem:[%s5659 + $0x488] sm:$0xff]
      %v5835 = vld [vmem:[%s5659 + $0x490] sm:$0xff]
      %v5836 = vld [vmem:[%s5659 + $0x498] sm:$0xf]
      %v5837 = vld [vmem:[%s5659 + $0x49c] sm:$0xff]
      %v5838 = vld [vmem:[%s5659 + $0x4a4] sm:$0xff]
      %v5839 = vld [vmem:[%s5659 + $0x4ac] sm:$0xf]
      %v5840 = vld [vmem:[%s5659 + $0x4b0] sm:$0xff]
      %v5841 = vld [vmem:[%s5659 + $0x4b8] sm:$0xff]
      %v5842 = vld [vmem:[%s5659 + $0x4c0] sm:$0xf]
      %v5843 = vld [vmem:[%s5659 + $0x4c4] sm:$0xff]
      %v5844 = vld [vmem:[%s5659 + $0x4cc] sm:$0xff]
      %v5845 = vld [vmem:[%s5659 + $0x4d4] sm:$0xf]
      %v5846 = vld [vmem:[%s5659 + $0x4d8] sm:$0xff]
      %v5847 = vld [vmem:[%s5659 + $0x4e0] sm:$0xff]
      %v5848 = vld [vmem:[%s5659 + $0x4e8] sm:$0xf]
      %v5849 = vld [vmem:[%s5659 + $0x4ec] sm:$0xff]
      %v5850 = vld [vmem:[%s5659 + $0x4f4] sm:$0xff]
      %v5851 = vld [vmem:[%s5659 + $0x4fc] sm:$0xf]
      %v5852 = vld [vmem:[%s5659 + $0x500] sm:$0xff]
      %v5853 = vld [vmem:[%s5659 + $0x508] sm:$0xff]
      %v5854 = vld [vmem:[%s5659 + $0x510] sm:$0xf]
      %v5855 = vld [vmem:[%s5659 + $0x514] sm:$0xff]
      %v5856 = vld [vmem:[%s5659 + $0x51c] sm:$0xff]
      %v5857 = vld [vmem:[%s5659 + $0x524] sm:$0xf]
      %v5858 = vld [vmem:[%s5659 + $0x528] sm:$0xff]
      %v5859 = vld [vmem:[%s5659 + $0x530] sm:$0xff]
      %v5860 = vld [vmem:[%s5659 + $0x538] sm:$0xf]
      %v5861 = vld [vmem:[%s5659 + $0x53c] sm:$0xff]
      %v5862 = vld [vmem:[%s5659 + $0x544] sm:$0xff]
      %v5863 = vld [vmem:[%s5659 + $0x54c] sm:$0xf]
      %v5864 = vld [vmem:[%s5659 + $0x550] sm:$0xff]
      %v5865 = vld [vmem:[%s5659 + $0x558] sm:$0xff]
      %v5866 = vld [vmem:[%s5659 + $0x560] sm:$0xf]
      %v5867 = vld [vmem:[%s5659 + $0x564] sm:$0xff]
      %v5868 = vld [vmem:[%s5659 + $0x56c] sm:$0xff]
      %v5869 = vld [vmem:[%s5659 + $0x574] sm:$0xf]
      %v5870 = vld [vmem:[%s5659 + $0x578] sm:$0xff]
      %v5871 = vld [vmem:[%s5659 + $0x580] sm:$0xff]
      %v5872 = vld [vmem:[%s5659 + $0x588] sm:$0xf]
      %v5873 = vld [vmem:[%s5659 + $0x58c] sm:$0x33]
      %v5874 = vld [vmem:[%s5659 + $0x594] sm:$0x33]
      %v5875 = vld [vmem:[%s5659 + $0x59c] sm:$0x3]
      %s5876 = scalar_lea.vmem %s278, 288
      %v5877 = vld [vmem:[%s5876] sm:$0xf]
      %v5878 = vld [vmem:[%s5876 + $0x4] sm:$0xf]
      %v5879 = vld [vmem:[%s5876 + $0x8] sm:$0xf]
      %v5880 = vld [vmem:[%s5876 + $0xc] sm:$0xf]
      %v5881 = vld [vmem:[%s5876 + $0x10] sm:$0xf]
      %v5882 = vld [vmem:[%s5876 + $0x14] sm:$0xf]
      %v5883 = vld [vmem:[%s5876 + $0x18] sm:$0xf]
      %v5884 = vld [vmem:[%s5876 + $0x1c] sm:$0xf]
      %v5885 = vld [vmem:[%s5876 + $0x20] sm:$0xf]
      %v5886 = vld [vmem:[%s5876 + $0x24] sm:$0xf]
      %v5887 = vld [vmem:[%s5876 + $0x28] sm:$0xf]
      %v5888 = vld [vmem:[%s5876 + $0x2c] sm:$0xf]
      %v5889 = vld [vmem:[%s5876 + $0x30] sm:$0xf]
      %v5890 = vld [vmem:[%s5876 + $0x34] sm:$0xf]
      %v5891 = vld [vmem:[%s5876 + $0x38] sm:$0xf]
      %v5892 = vld [vmem:[%s5876 + $0x3c] sm:$0xf]
      %v5893 = vld [vmem:[%s5876 + $0x40] sm:$0xf]
      %v5894 = vld [vmem:[%s5876 + $0x44] sm:$0xf]
      %v5895 = vld [vmem:[%s5876 + $0x48] sm:$0xf]
      %v5896 = vld [vmem:[%s5876 + $0x4c] sm:$0xf]
      %v5897 = vld [vmem:[%s5876 + $0x50] sm:$0xf]
      %v5898 = vld [vmem:[%s5876 + $0x54] sm:$0xf]
      %v5899 = vld [vmem:[%s5876 + $0x58] sm:$0xf]
      %v5900 = vld [vmem:[%s5876 + $0x5c] sm:$0xf]
      %v5901 = vld [vmem:[%s5876 + $0x60] sm:$0xf]
      %v5902 = vld [vmem:[%s5876 + $0x64] sm:$0xf]
      %v5903 = vld [vmem:[%s5876 + $0x68] sm:$0xf]
      %v5904 = vld [vmem:[%s5876 + $0x6c] sm:$0xf]
      %v5905 = vld [vmem:[%s5876 + $0x70] sm:$0xf]
      %v5906 = vld [vmem:[%s5876 + $0x74] sm:$0xf]
      %v5907 = vld [vmem:[%s5876 + $0x78] sm:$0xf]
      %v5908 = vld [vmem:[%s5876 + $0x7c] sm:$0xf]
      %v5909 = vld [vmem:[%s5876 + $0x80] sm:$0xf]
      %v5910 = vld [vmem:[%s5876 + $0x84] sm:$0xf]
      %v5911 = vld [vmem:[%s5876 + $0x88] sm:$0xf]
      %v5912 = vld [vmem:[%s5876 + $0x8c] sm:$0xf]
      %v5913 = vld [vmem:[%s5876 + $0x90] sm:$0xf]
      %v5914 = vld [vmem:[%s5876 + $0x94] sm:$0xf]
      %v5915 = vld [vmem:[%s5876 + $0x98] sm:$0xf]
      %v5916 = vld [vmem:[%s5876 + $0x9c] sm:$0xf]
      %v5917 = vld [vmem:[%s5876 + $0xa0] sm:$0xf]
      %v5918 = vld [vmem:[%s5876 + $0xa4] sm:$0xf]
      %v5919 = vld [vmem:[%s5876 + $0xa8] sm:$0xf]
      %v5920 = vld [vmem:[%s5876 + $0xac] sm:$0xf]
      %v5921 = vld [vmem:[%s5876 + $0xb0] sm:$0xf]
      %v5922 = vld [vmem:[%s5876 + $0xb4] sm:$0xf]
      %v5923 = vld [vmem:[%s5876 + $0xb8] sm:$0xf]
      %v5924 = vld [vmem:[%s5876 + $0xbc] sm:$0xf]
      %v5925 = vld [vmem:[%s5876 + $0xc0] sm:$0xf]
      %v5926 = vld [vmem:[%s5876 + $0xc4] sm:$0xf]
      %v5927 = vld [vmem:[%s5876 + $0xc8] sm:$0xf]
      %v5928 = vld [vmem:[%s5876 + $0xcc] sm:$0xf]
      %v5929 = vld [vmem:[%s5876 + $0xd0] sm:$0xf]
      %v5930 = vld [vmem:[%s5876 + $0xd4] sm:$0xf]
      %v5931 = vld [vmem:[%s5876 + $0xd8] sm:$0xf]
      %v5932 = vld [vmem:[%s5876 + $0xdc] sm:$0xf]
      %v5933 = vld [vmem:[%s5876 + $0xe0] sm:$0xf]
      %v5934 = vld [vmem:[%s5876 + $0xe4] sm:$0xf]
      %v5935 = vld [vmem:[%s5876 + $0xe8] sm:$0xf]
      %v5936 = vld [vmem:[%s5876 + $0xec] sm:$0xf]
      %v5937 = vld [vmem:[%s5876 + $0xf0] sm:$0xf]
      %v5938 = vld [vmem:[%s5876 + $0xf4] sm:$0xf]
      %v5939 = vld [vmem:[%s5876 + $0xf8] sm:$0xf]
      %v5940 = vld [vmem:[%s5876 + $0xfc] sm:$0xf]
      %v5941 = vld [vmem:[%s5876 + $0x100] sm:$0xf]
      %v5942 = vld [vmem:[%s5876 + $0x104] sm:$0xf]
      %v5943 = vld [vmem:[%s5876 + $0x108] sm:$0xf]
      %v5944 = vld [vmem:[%s5876 + $0x10c] sm:$0xf]
      %v5945 = vld [vmem:[%s5876 + $0x110] sm:$0xf]
      %v5946 = vld [vmem:[%s5876 + $0x114] sm:$0xf]
      %v5947 = vld [vmem:[%s5876 + $0x118] sm:$0xf]
      %v5948 = vld [vmem:[%s5876 + $0x11c] sm:$0x3]
      %v6165 = vunpack.c.l.b16 %v5660
      %v6166 = vunpack.c.h.b16 %v5660
      %v6167 = vunpack.c.l.b16 %v5661
      %v6168 = vunpack.c.h.b16 %v5661
      %v6169 = vunpack.c.l.b16 %v5662
      %v6170 = vunpack.c.l.b16 %v5663
      %v6171 = vunpack.c.h.b16 %v5663
      %v6172 = vunpack.c.l.b16 %v5664
      %v6173 = vunpack.c.h.b16 %v5664
      %v6174 = vunpack.c.l.b16 %v5665
      %v6175 = vunpack.c.l.b16 %v5666
      %v6176 = vunpack.c.h.b16 %v5666
      %v6177 = vunpack.c.l.b16 %v5667
      %v6178 = vunpack.c.h.b16 %v5667
      %v6179 = vunpack.c.l.b16 %v5668
      %v6180 = vunpack.c.l.b16 %v5669
      %v6181 = vunpack.c.h.b16 %v5669
      %v6182 = vunpack.c.l.b16 %v5670
      %v6183 = vunpack.c.h.b16 %v5670
      %v6184 = vunpack.c.l.b16 %v5671
      %v6185 = vunpack.c.l.b16 %v5672
      %v6186 = vunpack.c.h.b16 %v5672
      %v6187 = vunpack.c.l.b16 %v5673
      %v6188 = vunpack.c.h.b16 %v5673
      %v6189 = vunpack.c.l.b16 %v5674
      %v6190 = vunpack.c.l.b16 %v5675
      %v6191 = vunpack.c.h.b16 %v5675
      %v6192 = vunpack.c.l.b16 %v5676
      %v6193 = vunpack.c.h.b16 %v5676
      %v6194 = vunpack.c.l.b16 %v5677
      %v6195 = vunpack.c.l.b16 %v5678
      %v6196 = vunpack.c.h.b16 %v5678
      %v6197 = vunpack.c.l.b16 %v5679
      %v6198 = vunpack.c.h.b16 %v5679
      %v6199 = vunpack.c.l.b16 %v5680
      %v6200 = vunpack.c.l.b16 %v5681
      %v6201 = vunpack.c.h.b16 %v5681
      %v6202 = vunpack.c.l.b16 %v5682
      %v6203 = vunpack.c.h.b16 %v5682
      %v6204 = vunpack.c.l.b16 %v5683
      %v6205 = vunpack.c.l.b16 %v5684
      %v6206 = vunpack.c.h.b16 %v5684
      %v6207 = vunpack.c.l.b16 %v5685
      %v6208 = vunpack.c.h.b16 %v5685
      %v6209 = vunpack.c.l.b16 %v5686
      %v6210 = vunpack.c.l.b16 %v5687
      %v6211 = vunpack.c.h.b16 %v5687
      %v6212 = vunpack.c.l.b16 %v5688
      %v6213 = vunpack.c.h.b16 %v5688
      %v6214 = vunpack.c.l.b16 %v5689
      %v6215 = vunpack.c.l.b16 %v5690
      %v6216 = vunpack.c.h.b16 %v5690
      %v6217 = vunpack.c.l.b16 %v5691
      %v6218 = vunpack.c.h.b16 %v5691
      %v6219 = vunpack.c.l.b16 %v5692
      %v6220 = vunpack.c.l.b16 %v5693
      %v6221 = vunpack.c.h.b16 %v5693
      %v6222 = vunpack.c.l.b16 %v5694
      %v6223 = vunpack.c.h.b16 %v5694
      %v6224 = vunpack.c.l.b16 %v5695
      %v6225 = vunpack.c.l.b16 %v5696
      %v6226 = vunpack.c.h.b16 %v5696
      %v6227 = vunpack.c.l.b16 %v5697
      %v6228 = vunpack.c.h.b16 %v5697
      %v6229 = vunpack.c.l.b16 %v5698
      %v6230 = vunpack.c.l.b16 %v5699
      %v6231 = vunpack.c.h.b16 %v5699
      %v6232 = vunpack.c.l.b16 %v5700
      %v6233 = vunpack.c.h.b16 %v5700
      %v6234 = vunpack.c.l.b16 %v5701
      %v6235 = vunpack.c.l.b16 %v5702
      %v6236 = vunpack.c.h.b16 %v5702
      %v6237 = vunpack.c.l.b16 %v5703
      %v6238 = vunpack.c.h.b16 %v5703
      %v6239 = vunpack.c.l.b16 %v5704
      %v6240 = vunpack.c.l.b16 %v5705
      %v6241 = vunpack.c.h.b16 %v5705
      %v6242 = vunpack.c.l.b16 %v5706
      %v6243 = vunpack.c.h.b16 %v5706
      %v6244 = vunpack.c.l.b16 %v5707
      %v6245 = vunpack.c.l.b16 %v5708
      %v6246 = vunpack.c.h.b16 %v5708
      %v6247 = vunpack.c.l.b16 %v5709
      %v6248 = vunpack.c.h.b16 %v5709
      %v6249 = vunpack.c.l.b16 %v5710
      %v6250 = vunpack.c.l.b16 %v5711
      %v6251 = vunpack.c.h.b16 %v5711
      %v6252 = vunpack.c.l.b16 %v5712
      %v6253 = vunpack.c.h.b16 %v5712
      %v6254 = vunpack.c.l.b16 %v5713
      %v6255 = vunpack.c.l.b16 %v5714
      %v6256 = vunpack.c.h.b16 %v5714
      %v6257 = vunpack.c.l.b16 %v5715
      %v6258 = vunpack.c.h.b16 %v5715
      %v6259 = vunpack.c.l.b16 %v5716
      %v6260 = vunpack.c.l.b16 %v5717
      %v6261 = vunpack.c.h.b16 %v5717
      %v6262 = vunpack.c.l.b16 %v5718
      %v6263 = vunpack.c.h.b16 %v5718
      %v6264 = vunpack.c.l.b16 %v5719
      %v6265 = vunpack.c.l.b16 %v5720
      %v6266 = vunpack.c.h.b16 %v5720
      %v6267 = vunpack.c.l.b16 %v5721
      %v6268 = vunpack.c.h.b16 %v5721
      %v6269 = vunpack.c.l.b16 %v5722
      %v6270 = vunpack.c.l.b16 %v5723
      %v6271 = vunpack.c.h.b16 %v5723
      %v6272 = vunpack.c.l.b16 %v5724
      %v6273 = vunpack.c.h.b16 %v5724
      %v6274 = vunpack.c.l.b16 %v5725
      %v6275 = vunpack.c.l.b16 %v5726
      %v6276 = vunpack.c.h.b16 %v5726
      %v6277 = vunpack.c.l.b16 %v5727
      %v6278 = vunpack.c.h.b16 %v5727
      %v6279 = vunpack.c.l.b16 %v5728
      %v6280 = vunpack.c.l.b16 %v5729
      %v6281 = vunpack.c.h.b16 %v5729
      %v6282 = vunpack.c.l.b16 %v5730
      %v6283 = vunpack.c.h.b16 %v5730
      %v6284 = vunpack.c.l.b16 %v5731
      %v6285 = vunpack.c.l.b16 %v5732
      %v6286 = vunpack.c.h.b16 %v5732
      %v6287 = vunpack.c.l.b16 %v5733
      %v6288 = vunpack.c.h.b16 %v5733
      %v6289 = vunpack.c.l.b16 %v5734
      %v6290 = vunpack.c.l.b16 %v5735
      %v6291 = vunpack.c.h.b16 %v5735
      %v6292 = vunpack.c.l.b16 %v5736
      %v6293 = vunpack.c.h.b16 %v5736
      %v6294 = vunpack.c.l.b16 %v5737
      %v6295 = vunpack.c.l.b16 %v5738
      %v6296 = vunpack.c.h.b16 %v5738
      %v6297 = vunpack.c.l.b16 %v5739
      %v6298 = vunpack.c.h.b16 %v5739
      %v6299 = vunpack.c.l.b16 %v5740
      %v6300 = vunpack.c.l.b16 %v5741
      %v6301 = vunpack.c.h.b16 %v5741
      %v6302 = vunpack.c.l.b16 %v5742
      %v6303 = vunpack.c.h.b16 %v5742
      %v6304 = vunpack.c.l.b16 %v5743
      %v6305 = vunpack.c.l.b16 %v5744
      %v6306 = vunpack.c.h.b16 %v5744
      %v6307 = vunpack.c.l.b16 %v5745
      %v6308 = vunpack.c.h.b16 %v5745
      %v6309 = vunpack.c.l.b16 %v5746
      %v6310 = vunpack.c.l.b16 %v5747
      %v6311 = vunpack.c.h.b16 %v5747
      %v6312 = vunpack.c.l.b16 %v5748
      %v6313 = vunpack.c.h.b16 %v5748
      %v6314 = vunpack.c.l.b16 %v5749
      %v6315 = vunpack.c.l.b16 %v5750
      %v6316 = vunpack.c.h.b16 %v5750
      %v6317 = vunpack.c.l.b16 %v5751
      %v6318 = vunpack.c.h.b16 %v5751
      %v6319 = vunpack.c.l.b16 %v5752
      %v6320 = vunpack.c.l.b16 %v5753
      %v6321 = vunpack.c.h.b16 %v5753
      %v6322 = vunpack.c.l.b16 %v5754
      %v6323 = vunpack.c.h.b16 %v5754
      %v6324 = vunpack.c.l.b16 %v5755
      %v6325 = vunpack.c.l.b16 %v5756
      %v6326 = vunpack.c.h.b16 %v5756
      %v6327 = vunpack.c.l.b16 %v5757
      %v6328 = vunpack.c.h.b16 %v5757
      %v6329 = vunpack.c.l.b16 %v5758
      %v6330 = vunpack.c.l.b16 %v5759
      %v6331 = vunpack.c.h.b16 %v5759
      %v6332 = vunpack.c.l.b16 %v5760
      %v6333 = vunpack.c.h.b16 %v5760
      %v6334 = vunpack.c.l.b16 %v5761
      %v6335 = vunpack.c.l.b16 %v5762
      %v6336 = vunpack.c.h.b16 %v5762
      %v6337 = vunpack.c.l.b16 %v5763
      %v6338 = vunpack.c.h.b16 %v5763
      %v6339 = vunpack.c.l.b16 %v5764
      %v6340 = vunpack.c.l.b16 %v5765
      %v6341 = vunpack.c.h.b16 %v5765
      %v6342 = vunpack.c.l.b16 %v5766
      %v6343 = vunpack.c.h.b16 %v5766
      %v6344 = vunpack.c.l.b16 %v5767
      %v6345 = vunpack.c.l.b16 %v5768
      %v6346 = vunpack.c.h.b16 %v5768
      %v6347 = vunpack.c.l.b16 %v5769
      %v6348 = vunpack.c.h.b16 %v5769
      %v6349 = vunpack.c.l.b16 %v5770
      %v6350 = vunpack.c.l.b16 %v5771
      %v6351 = vunpack.c.h.b16 %v5771
      %v6352 = vunpack.c.l.b16 %v5772
      %v6353 = vunpack.c.h.b16 %v5772
      %v6354 = vunpack.c.l.b16 %v5773
      %v6355 = vunpack.c.l.b16 %v5774
      %v6356 = vunpack.c.h.b16 %v5774
      %v6357 = vunpack.c.l.b16 %v5775
      %v6358 = vunpack.c.h.b16 %v5775
      %v6359 = vunpack.c.l.b16 %v5776
      %v6360 = vunpack.c.l.b16 %v5777
      %v6361 = vunpack.c.h.b16 %v5777
      %v6362 = vunpack.c.l.b16 %v5778
      %v6363 = vunpack.c.h.b16 %v5778
      %v6364 = vunpack.c.l.b16 %v5779
      %v6365 = vunpack.c.l.b16 %v5780
      %v6366 = vunpack.c.h.b16 %v5780
      %v6367 = vunpack.c.l.b16 %v5781
      %v6368 = vunpack.c.h.b16 %v5781
      %v6369 = vunpack.c.l.b16 %v5782
      %v6370 = vunpack.c.l.b16 %v5783
      %v6371 = vunpack.c.h.b16 %v5783
      %v6372 = vunpack.c.l.b16 %v5784
      %v6373 = vunpack.c.h.b16 %v5784
      %v6374 = vunpack.c.l.b16 %v5785
      %v6375 = vunpack.c.l.b16 %v5786
      %v6376 = vunpack.c.h.b16 %v5786
      %v6377 = vunpack.c.l.b16 %v5787
      %v6378 = vunpack.c.h.b16 %v5787
      %v6379 = vunpack.c.l.b16 %v5788
      %v6380 = vunpack.c.l.b16 %v5789
      %v6381 = vunpack.c.h.b16 %v5789
      %v6382 = vunpack.c.l.b16 %v5790
      %v6383 = vunpack.c.h.b16 %v5790
      %v6384 = vunpack.c.l.b16 %v5791
      %v6385 = vunpack.c.l.b16 %v5792
      %v6386 = vunpack.c.h.b16 %v5792
      %v6387 = vunpack.c.l.b16 %v5793
      %v6388 = vunpack.c.h.b16 %v5793
      %v6389 = vunpack.c.l.b16 %v5794
      %v6390 = vunpack.c.l.b16 %v5795
      %v6391 = vunpack.c.h.b16 %v5795
      %v6392 = vunpack.c.l.b16 %v5796
      %v6393 = vunpack.c.h.b16 %v5796
      %v6394 = vunpack.c.l.b16 %v5797
      %v6395 = vunpack.c.l.b16 %v5798
      %v6396 = vunpack.c.h.b16 %v5798
      %v6397 = vunpack.c.l.b16 %v5799
      %v6398 = vunpack.c.h.b16 %v5799
      %v6399 = vunpack.c.l.b16 %v5800
      %v6400 = vunpack.c.l.b16 %v5801
      %v6401 = vunpack.c.h.b16 %v5801
      %v6402 = vunpack.c.l.b16 %v5802
      %v6403 = vunpack.c.h.b16 %v5802
      %v6404 = vunpack.c.l.b16 %v5803
      %v6405 = vunpack.c.l.b16 %v5804
      %v6406 = vunpack.c.h.b16 %v5804
      %v6407 = vunpack.c.l.b16 %v5805
      %v6408 = vunpack.c.h.b16 %v5805
      %v6409 = vunpack.c.l.b16 %v5806
      %v6410 = vunpack.c.l.b16 %v5807
      %v6411 = vunpack.c.h.b16 %v5807
      %v6412 = vunpack.c.l.b16 %v5808
      %v6413 = vunpack.c.h.b16 %v5808
      %v6414 = vunpack.c.l.b16 %v5809
      %v6415 = vunpack.c.l.b16 %v5810
      %v6416 = vunpack.c.h.b16 %v5810
      %v6417 = vunpack.c.l.b16 %v5811
      %v6418 = vunpack.c.h.b16 %v5811
      %v6419 = vunpack.c.l.b16 %v5812
      %v6420 = vunpack.c.l.b16 %v5813
      %v6421 = vunpack.c.h.b16 %v5813
      %v6422 = vunpack.c.l.b16 %v5814
      %v6423 = vunpack.c.h.b16 %v5814
      %v6424 = vunpack.c.l.b16 %v5815
      %v6425 = vunpack.c.l.b16 %v5816
      %v6426 = vunpack.c.h.b16 %v5816
      %v6427 = vunpack.c.l.b16 %v5817
      %v6428 = vunpack.c.h.b16 %v5817
      %v6429 = vunpack.c.l.b16 %v5818
      %v6430 = vunpack.c.l.b16 %v5819
      %v6431 = vunpack.c.h.b16 %v5819
      %v6432 = vunpack.c.l.b16 %v5820
      %v6433 = vunpack.c.h.b16 %v5820
      %v6434 = vunpack.c.l.b16 %v5821
      %v6435 = vunpack.c.l.b16 %v5822
      %v6436 = vunpack.c.h.b16 %v5822
      %v6437 = vunpack.c.l.b16 %v5823
      %v6438 = vunpack.c.h.b16 %v5823
      %v6439 = vunpack.c.l.b16 %v5824
      %v6440 = vunpack.c.l.b16 %v5825
      %v6441 = vunpack.c.h.b16 %v5825
      %v6442 = vunpack.c.l.b16 %v5826
      %v6443 = vunpack.c.h.b16 %v5826
      %v6444 = vunpack.c.l.b16 %v5827
      %v6445 = vunpack.c.l.b16 %v5828
      %v6446 = vunpack.c.h.b16 %v5828
      %v6447 = vunpack.c.l.b16 %v5829
      %v6448 = vunpack.c.h.b16 %v5829
      %v6449 = vunpack.c.l.b16 %v5830
      %v6450 = vunpack.c.l.b16 %v5831
      %v6451 = vunpack.c.h.b16 %v5831
      %v6452 = vunpack.c.l.b16 %v5832
      %v6453 = vunpack.c.h.b16 %v5832
      %v6454 = vunpack.c.l.b16 %v5833
      %v6455 = vunpack.c.l.b16 %v5834
      %v6456 = vunpack.c.h.b16 %v5834
      %v6457 = vunpack.c.l.b16 %v5835
      %v6458 = vunpack.c.h.b16 %v5835
      %v6459 = vunpack.c.l.b16 %v5836
      %v6460 = vunpack.c.l.b16 %v5837
      %v6461 = vunpack.c.h.b16 %v5837
      %v6462 = vunpack.c.l.b16 %v5838
      %v6463 = vunpack.c.h.b16 %v5838
      %v6464 = vunpack.c.l.b16 %v5839
      %v6465 = vunpack.c.l.b16 %v5840
      %v6466 = vunpack.c.h.b16 %v5840
      %v6467 = vunpack.c.l.b16 %v5841
      %v6468 = vunpack.c.h.b16 %v5841
      %v6469 = vunpack.c.l.b16 %v5842
      %v6470 = vunpack.c.l.b16 %v5843
      %v6471 = vunpack.c.h.b16 %v5843
      %v6472 = vunpack.c.l.b16 %v5844
      %v6473 = vunpack.c.h.b16 %v5844
      %v6474 = vunpack.c.l.b16 %v5845
      %v6475 = vunpack.c.l.b16 %v5846
      %v6476 = vunpack.c.h.b16 %v5846
      %v6477 = vunpack.c.l.b16 %v5847
      %v6478 = vunpack.c.h.b16 %v5847
      %v6479 = vunpack.c.l.b16 %v5848
      %v6480 = vunpack.c.l.b16 %v5849
      %v6481 = vunpack.c.h.b16 %v5849
      %v6482 = vunpack.c.l.b16 %v5850
      %v6483 = vunpack.c.h.b16 %v5850
      %v6484 = vunpack.c.l.b16 %v5851
      %v6485 = vunpack.c.l.b16 %v5852
      %v6486 = vunpack.c.h.b16 %v5852
      %v6487 = vunpack.c.l.b16 %v5853
      %v6488 = vunpack.c.h.b16 %v5853
      %v6489 = vunpack.c.l.b16 %v5854
      %v6490 = vunpack.c.l.b16 %v5855
      %v6491 = vunpack.c.h.b16 %v5855
      %v6492 = vunpack.c.l.b16 %v5856
      %v6493 = vunpack.c.h.b16 %v5856
      %v6494 = vunpack.c.l.b16 %v5857
      %v6495 = vunpack.c.l.b16 %v5858
      %v6496 = vunpack.c.h.b16 %v5858
      %v6497 = vunpack.c.l.b16 %v5859
      %v6498 = vunpack.c.h.b16 %v5859
      %v6499 = vunpack.c.l.b16 %v5860
      %v6500 = vunpack.c.l.b16 %v5861
      %v6501 = vunpack.c.h.b16 %v5861
      %v6502 = vunpack.c.l.b16 %v5862
      %v6503 = vunpack.c.h.b16 %v5862
      %v6504 = vunpack.c.l.b16 %v5863
      %v6505 = vunpack.c.l.b16 %v5864
      %v6506 = vunpack.c.h.b16 %v5864
      %v6507 = vunpack.c.l.b16 %v5865
      %v6508 = vunpack.c.h.b16 %v5865
      %v6509 = vunpack.c.l.b16 %v5866
      %v6510 = vunpack.c.l.b16 %v5867
      %v6511 = vunpack.c.h.b16 %v5867
      %v6512 = vunpack.c.l.b16 %v5868
      %v6513 = vunpack.c.h.b16 %v5868
      %v6514 = vunpack.c.l.b16 %v5869
      %v6515 = vunpack.c.l.b16 %v5870
      %v6516 = vunpack.c.h.b16 %v5870
      %v6517 = vunpack.c.l.b16 %v5871
      %v6518 = vunpack.c.h.b16 %v5871
      %v6519 = vunpack.c.l.b16 %v5872
      %v6520 = vunpack.c.l.b16 %v5873
      %v6521 = vunpack.c.h.b16 %v5873
      %v6522 = vunpack.c.l.b16 %v5874
      %v6523 = vunpack.c.h.b16 %v5874
      %v6524 = vunpack.c.l.b16 %v5875
      %v6525 = vpack.c.b16 %v6170, %v6165
      %v6526 = vpack.c.b16 %v6171, %v6166
      %v6527 = vpack.c.b16 %v6172, %v6167
      %v6528 = vpack.c.b16 %v6173, %v6168
      %v6529 = vpack.c.b16 %v6174, %v6169
      %v6530 = vpack.c.b16 %v6180, %v6175
      %v6531 = vpack.c.b16 %v6181, %v6176
      %v6532 = vpack.c.b16 %v6182, %v6177
      %v6533 = vpack.c.b16 %v6183, %v6178
      %v6534 = vpack.c.b16 %v6184, %v6179
      %v6535 = vpack.c.b16 %v6190, %v6185
      %v6536 = vpack.c.b16 %v6191, %v6186
      %v6537 = vpack.c.b16 %v6192, %v6187
      %v6538 = vpack.c.b16 %v6193, %v6188
      %v6539 = vpack.c.b16 %v6194, %v6189
      %v6540 = vpack.c.b16 %v6200, %v6195
      %v6541 = vpack.c.b16 %v6201, %v6196
      %v6542 = vpack.c.b16 %v6202, %v6197
      %v6543 = vpack.c.b16 %v6203, %v6198
      %v6544 = vpack.c.b16 %v6204, %v6199
      %v6545 = vpack.c.b16 %v6210, %v6205
      %v6546 = vpack.c.b16 %v6211, %v6206
      %v6547 = vpack.c.b16 %v6212, %v6207
      %v6548 = vpack.c.b16 %v6213, %v6208
      %v6549 = vpack.c.b16 %v6214, %v6209
      %v6550 = vpack.c.b16 %v6220, %v6215
      %v6551 = vpack.c.b16 %v6221, %v6216
      %v6552 = vpack.c.b16 %v6222, %v6217
      %v6553 = vpack.c.b16 %v6223, %v6218
      %v6554 = vpack.c.b16 %v6224, %v6219
      %v6555 = vpack.c.b16 %v6230, %v6225
      %v6556 = vpack.c.b16 %v6231, %v6226
      %v6557 = vpack.c.b16 %v6232, %v6227
      %v6558 = vpack.c.b16 %v6233, %v6228
      %v6559 = vpack.c.b16 %v6234, %v6229
      %v6560 = vpack.c.b16 %v6240, %v6235
      %v6561 = vpack.c.b16 %v6241, %v6236
      %v6562 = vpack.c.b16 %v6242, %v6237
      %v6563 = vpack.c.b16 %v6243, %v6238
      %v6564 = vpack.c.b16 %v6244, %v6239
      %v6565 = vpack.c.b16 %v6250, %v6245
      %v6566 = vpack.c.b16 %v6251, %v6246
      %v6567 = vpack.c.b16 %v6252, %v6247
      %v6568 = vpack.c.b16 %v6253, %v6248
      %v6569 = vpack.c.b16 %v6254, %v6249
      %v6570 = vpack.c.b16 %v6260, %v6255
      %v6571 = vpack.c.b16 %v6261, %v6256
      %v6572 = vpack.c.b16 %v6262, %v6257
      %v6573 = vpack.c.b16 %v6263, %v6258
      %v6574 = vpack.c.b16 %v6264, %v6259
      %v6575 = vpack.c.b16 %v6270, %v6265
      %v6576 = vpack.c.b16 %v6271, %v6266
      %v6577 = vpack.c.b16 %v6272, %v6267
      %v6578 = vpack.c.b16 %v6273, %v6268
      %v6579 = vpack.c.b16 %v6274, %v6269
      %v6580 = vpack.c.b16 %v6280, %v6275
      %v6581 = vpack.c.b16 %v6281, %v6276
      %v6582 = vpack.c.b16 %v6282, %v6277
      %v6583 = vpack.c.b16 %v6283, %v6278
      %v6584 = vpack.c.b16 %v6284, %v6279
      %v6585 = vpack.c.b16 %v6290, %v6285
      %v6586 = vpack.c.b16 %v6291, %v6286
      %v6587 = vpack.c.b16 %v6292, %v6287
      %v6588 = vpack.c.b16 %v6293, %v6288
      %v6589 = vpack.c.b16 %v6294, %v6289
      %v6590 = vpack.c.b16 %v6300, %v6295
      %v6591 = vpack.c.b16 %v6301, %v6296
      %v6592 = vpack.c.b16 %v6302, %v6297
      %v6593 = vpack.c.b16 %v6303, %v6298
      %v6594 = vpack.c.b16 %v6304, %v6299
      %v6595 = vpack.c.b16 %v6310, %v6305
      %v6596 = vpack.c.b16 %v6311, %v6306
      %v6597 = vpack.c.b16 %v6312, %v6307
      %v6598 = vpack.c.b16 %v6313, %v6308
      %v6599 = vpack.c.b16 %v6314, %v6309
      %v6600 = vpack.c.b16 %v6320, %v6315
      %v6601 = vpack.c.b16 %v6321, %v6316
      %v6602 = vpack.c.b16 %v6322, %v6317
      %v6603 = vpack.c.b16 %v6323, %v6318
      %v6604 = vpack.c.b16 %v6324, %v6319
      %v6605 = vpack.c.b16 %v6330, %v6325
      %v6606 = vpack.c.b16 %v6331, %v6326
      %v6607 = vpack.c.b16 %v6332, %v6327
      %v6608 = vpack.c.b16 %v6333, %v6328
      %v6609 = vpack.c.b16 %v6334, %v6329
      %v6610 = vpack.c.b16 %v6340, %v6335
      %v6611 = vpack.c.b16 %v6341, %v6336
      %v6612 = vpack.c.b16 %v6342, %v6337
      %v6613 = vpack.c.b16 %v6343, %v6338
      %v6614 = vpack.c.b16 %v6344, %v6339
      %v6615 = vpack.c.b16 %v6350, %v6345
      %v6616 = vpack.c.b16 %v6351, %v6346
      %v6617 = vpack.c.b16 %v6352, %v6347
      %v6618 = vpack.c.b16 %v6353, %v6348
      %v6619 = vpack.c.b16 %v6354, %v6349
      %v6620 = vpack.c.b16 %v6360, %v6355
      %v6621 = vpack.c.b16 %v6361, %v6356
      %v6622 = vpack.c.b16 %v6362, %v6357
      %v6623 = vpack.c.b16 %v6363, %v6358
      %v6624 = vpack.c.b16 %v6364, %v6359
      %v6625 = vpack.c.b16 %v6370, %v6365
      %v6626 = vpack.c.b16 %v6371, %v6366
      %v6627 = vpack.c.b16 %v6372, %v6367
      %v6628 = vpack.c.b16 %v6373, %v6368
      %v6629 = vpack.c.b16 %v6374, %v6369
      %v6630 = vpack.c.b16 %v6380, %v6375
      %v6631 = vpack.c.b16 %v6381, %v6376
      %v6632 = vpack.c.b16 %v6382, %v6377
      %v6633 = vpack.c.b16 %v6383, %v6378
      %v6634 = vpack.c.b16 %v6384, %v6379
      %v6635 = vpack.c.b16 %v6390, %v6385
      %v6636 = vpack.c.b16 %v6391, %v6386
      %v6637 = vpack.c.b16 %v6392, %v6387
      %v6638 = vpack.c.b16 %v6393, %v6388
      %v6639 = vpack.c.b16 %v6394, %v6389
      %v6640 = vpack.c.b16 %v6400, %v6395
      %v6641 = vpack.c.b16 %v6401, %v6396
      %v6642 = vpack.c.b16 %v6402, %v6397
      %v6643 = vpack.c.b16 %v6403, %v6398
      %v6644 = vpack.c.b16 %v6404, %v6399
      %v6645 = vpack.c.b16 %v6410, %v6405
      %v6646 = vpack.c.b16 %v6411, %v6406
      %v6647 = vpack.c.b16 %v6412, %v6407
      %v6648 = vpack.c.b16 %v6413, %v6408
      %v6649 = vpack.c.b16 %v6414, %v6409
      %v6650 = vpack.c.b16 %v6420, %v6415
      %v6651 = vpack.c.b16 %v6421, %v6416
      %v6652 = vpack.c.b16 %v6422, %v6417
      %v6653 = vpack.c.b16 %v6423, %v6418
      %v6654 = vpack.c.b16 %v6424, %v6419
      %v6655 = vpack.c.b16 %v6430, %v6425
      %v6656 = vpack.c.b16 %v6431, %v6426
      %v6657 = vpack.c.b16 %v6432, %v6427
      %v6658 = vpack.c.b16 %v6433, %v6428
      %v6659 = vpack.c.b16 %v6434, %v6429
      %v6660 = vpack.c.b16 %v6440, %v6435
      %v6661 = vpack.c.b16 %v6441, %v6436
      %v6662 = vpack.c.b16 %v6442, %v6437
      %v6663 = vpack.c.b16 %v6443, %v6438
      %v6664 = vpack.c.b16 %v6444, %v6439
      %v6665 = vpack.c.b16 %v6450, %v6445
      %v6666 = vpack.c.b16 %v6451, %v6446
      %v6667 = vpack.c.b16 %v6452, %v6447
      %v6668 = vpack.c.b16 %v6453, %v6448
      %v6669 = vpack.c.b16 %v6454, %v6449
      %v6670 = vpack.c.b16 %v6460, %v6455
      %v6671 = vpack.c.b16 %v6461, %v6456
      %v6672 = vpack.c.b16 %v6462, %v6457
      %v6673 = vpack.c.b16 %v6463, %v6458
      %v6674 = vpack.c.b16 %v6464, %v6459
      %v6675 = vpack.c.b16 %v6470, %v6465
      %v6676 = vpack.c.b16 %v6471, %v6466
      %v6677 = vpack.c.b16 %v6472, %v6467
      %v6678 = vpack.c.b16 %v6473, %v6468
      %v6679 = vpack.c.b16 %v6474, %v6469
      %v6680 = vpack.c.b16 %v6480, %v6475
      %v6681 = vpack.c.b16 %v6481, %v6476
      %v6682 = vpack.c.b16 %v6482, %v6477
      %v6683 = vpack.c.b16 %v6483, %v6478
      %v6684 = vpack.c.b16 %v6484, %v6479
      %v6685 = vpack.c.b16 %v6490, %v6485
      %v6686 = vpack.c.b16 %v6491, %v6486
      %v6687 = vpack.c.b16 %v6492, %v6487
      %v6688 = vpack.c.b16 %v6493, %v6488
      %v6689 = vpack.c.b16 %v6494, %v6489
      %v6690 = vpack.c.b16 %v6500, %v6495
      %v6691 = vpack.c.b16 %v6501, %v6496
      %v6692 = vpack.c.b16 %v6502, %v6497
      %v6693 = vpack.c.b16 %v6503, %v6498
      %v6694 = vpack.c.b16 %v6504, %v6499
      %v6695 = vpack.c.b16 %v6510, %v6505
      %v6696 = vpack.c.b16 %v6511, %v6506
      %v6697 = vpack.c.b16 %v6512, %v6507
      %v6698 = vpack.c.b16 %v6513, %v6508
      %v6699 = vpack.c.b16 %v6514, %v6509
      %v6700 = vpack.c.b16 %v6520, %v6515
      %v6701 = vpack.c.b16 %v6521, %v6516
      %v6702 = vpack.c.b16 %v6522, %v6517
      %v6703 = vpack.c.b16 %v6523, %v6518
      %v6704 = vpack.c.b16 %v6524, %v6519
      %v6921 = vunpack.c.l.b16 %v5877
      %v6922 = vunpack.c.l.b16 %v5878
      %v6923 = vunpack.c.l.b16 %v5879
      %v6924 = vunpack.c.l.b16 %v5880
      %v6925 = vunpack.c.l.b16 %v5881
      %v6926 = vunpack.c.l.b16 %v5882
      %v6927 = vunpack.c.l.b16 %v5883
      %v6928 = vunpack.c.l.b16 %v5884
      %v6929 = vunpack.c.l.b16 %v5885
      %v6930 = vunpack.c.l.b16 %v5886
      %v6931 = vunpack.c.l.b16 %v5887
      %v6932 = vunpack.c.l.b16 %v5888
      %v6933 = vunpack.c.l.b16 %v5889
      %v6934 = vunpack.c.l.b16 %v5890
      %v6935 = vunpack.c.l.b16 %v5891
      %v6936 = vunpack.c.l.b16 %v5892
      %v6937 = vunpack.c.l.b16 %v5893
      %v6938 = vunpack.c.l.b16 %v5894
      %v6939 = vunpack.c.l.b16 %v5895
      %v6940 = vunpack.c.l.b16 %v5896
      %v6941 = vunpack.c.l.b16 %v5897
      %v6942 = vunpack.c.l.b16 %v5898
      %v6943 = vunpack.c.l.b16 %v5899
      %v6944 = vunpack.c.l.b16 %v5900
      %v6945 = vunpack.c.l.b16 %v5901
      %v6946 = vunpack.c.l.b16 %v5902
      %v6947 = vunpack.c.l.b16 %v5903
      %v6948 = vunpack.c.l.b16 %v5904
      %v6949 = vunpack.c.l.b16 %v5905
      %v6950 = vunpack.c.l.b16 %v5906
      %v6951 = vunpack.c.l.b16 %v5907
      %v6952 = vunpack.c.l.b16 %v5908
      %v6953 = vunpack.c.l.b16 %v5909
      %v6954 = vunpack.c.l.b16 %v5910
      %v6955 = vunpack.c.l.b16 %v5911
      %v6956 = vunpack.c.l.b16 %v5912
      %v6957 = vunpack.c.l.b16 %v5913
      %v6958 = vunpack.c.l.b16 %v5914
      %v6959 = vunpack.c.l.b16 %v5915
      %v6960 = vunpack.c.l.b16 %v5916
      %v6961 = vunpack.c.l.b16 %v5917
      %v6962 = vunpack.c.l.b16 %v5918
      %v6963 = vunpack.c.l.b16 %v5919
      %v6964 = vunpack.c.l.b16 %v5920
      %v6965 = vunpack.c.l.b16 %v5921
      %v6966 = vunpack.c.l.b16 %v5922
      %v6967 = vunpack.c.l.b16 %v5923
      %v6968 = vunpack.c.l.b16 %v5924
      %v6969 = vunpack.c.l.b16 %v5925
      %v6970 = vunpack.c.l.b16 %v5926
      %v6971 = vunpack.c.l.b16 %v5927
      %v6972 = vunpack.c.l.b16 %v5928
      %v6973 = vunpack.c.l.b16 %v5929
      %v6974 = vunpack.c.l.b16 %v5930
      %v6975 = vunpack.c.l.b16 %v5931
      %v6976 = vunpack.c.l.b16 %v5932
      %v6977 = vunpack.c.l.b16 %v5933
      %v6978 = vunpack.c.l.b16 %v5934
      %v6979 = vunpack.c.l.b16 %v5935
      %v6980 = vunpack.c.l.b16 %v5936
      %v6981 = vunpack.c.l.b16 %v5937
      %v6982 = vunpack.c.l.b16 %v5938
      %v6983 = vunpack.c.l.b16 %v5939
      %v6984 = vunpack.c.l.b16 %v5940
      %v6985 = vunpack.c.l.b16 %v5941
      %v6986 = vunpack.c.l.b16 %v5942
      %v6987 = vunpack.c.l.b16 %v5943
      %v6988 = vunpack.c.l.b16 %v5944
      %v6989 = vunpack.c.l.b16 %v5945
      %v6990 = vunpack.c.l.b16 %v5946
      %v6991 = vunpack.c.l.b16 %v5947
      %v6992 = vunpack.c.l.b16 %v5948
      %v6993 = vpack.c.b16 %v6922, %v6921
      %v6994 = vpack.c.b16 %v6924, %v6923
      %v6995 = vpack.c.b16 %v6926, %v6925
      %v6996 = vpack.c.b16 %v6928, %v6927
      %v6997 = vpack.c.b16 %v6930, %v6929
      %v6998 = vpack.c.b16 %v6932, %v6931
      %v6999 = vpack.c.b16 %v6934, %v6933
      %v7000 = vpack.c.b16 %v6936, %v6935
      %v7001 = vpack.c.b16 %v6938, %v6937
      %v7002 = vpack.c.b16 %v6940, %v6939
      %v7003 = vpack.c.b16 %v6942, %v6941
      %v7004 = vpack.c.b16 %v6944, %v6943
      %v7005 = vpack.c.b16 %v6946, %v6945
      %v7006 = vpack.c.b16 %v6948, %v6947
      %v7007 = vpack.c.b16 %v6950, %v6949
      %v7008 = vpack.c.b16 %v6952, %v6951
      %v7009 = vpack.c.b16 %v6954, %v6953
      %v7010 = vpack.c.b16 %v6956, %v6955
      %v7011 = vpack.c.b16 %v6958, %v6957
      %v7012 = vpack.c.b16 %v6960, %v6959
      %v7013 = vpack.c.b16 %v6962, %v6961
      %v7014 = vpack.c.b16 %v6964, %v6963
      %v7015 = vpack.c.b16 %v6966, %v6965
      %v7016 = vpack.c.b16 %v6968, %v6967
      %v7017 = vpack.c.b16 %v6970, %v6969
      %v7018 = vpack.c.b16 %v6972, %v6971
      %v7019 = vpack.c.b16 %v6974, %v6973
      %v7020 = vpack.c.b16 %v6976, %v6975
      %v7021 = vpack.c.b16 %v6978, %v6977
      %v7022 = vpack.c.b16 %v6980, %v6979
      %v7023 = vpack.c.b16 %v6982, %v6981
      %v7024 = vpack.c.b16 %v6984, %v6983
      %v7025 = vpack.c.b16 %v6986, %v6985
      %v7026 = vpack.c.b16 %v6988, %v6987
      %v7027 = vpack.c.b16 %v6990, %v6989
      %v7028 = vpack.c.b16 %v6992, %v6991
      %v7065 = vsel %vm1695, %v6529, 0
      %v7068 = vsel %vm1695, %v6534, 0
      %v7071 = vsel %vm1695, %v6539, 0
      %v7074 = vsel %vm1695, %v6544, 0
      %v7077 = vsel %vm1695, %v6549, 0
      %v7080 = vsel %vm1695, %v6554, 0
      %v7083 = vsel %vm1695, %v6559, 0
      %v7086 = vsel %vm1695, %v6564, 0
      %v7089 = vsel %vm1695, %v6569, 0
      %v7092 = vsel %vm1695, %v6574, 0
      %v7095 = vsel %vm1695, %v6579, 0
      %v7098 = vsel %vm1695, %v6584, 0
      %v7101 = vsel %vm1695, %v6589, 0
      %v7104 = vsel %vm1695, %v6594, 0
      %v7107 = vsel %vm1695, %v6599, 0
      %v7110 = vsel %vm1695, %v6604, 0
      %v7113 = vsel %vm1695, %v6609, 0
      %v7116 = vsel %vm1695, %v6614, 0
      %v7119 = vsel %vm1695, %v6619, 0
      %v7122 = vsel %vm1695, %v6624, 0
      %v7125 = vsel %vm1695, %v6629, 0
      %v7128 = vsel %vm1695, %v6634, 0
      %v7131 = vsel %vm1695, %v6639, 0
      %v7134 = vsel %vm1695, %v6644, 0
      %v7137 = vsel %vm1695, %v6649, 0
      %v7140 = vsel %vm1695, %v6654, 0
      %v7143 = vsel %vm1695, %v6659, 0
      %v7146 = vsel %vm1695, %v6664, 0
      %v7149 = vsel %vm1695, %v6669, 0
      %v7152 = vsel %vm1695, %v6674, 0
      %v7155 = vsel %vm1695, %v6679, 0
      %v7158 = vsel %vm1695, %v6684, 0
      %v7161 = vsel %vm1695, %v6689, 0
      %v7164 = vsel %vm1695, %v6694, 0
      %v7167 = vsel %vm1695, %v6699, 0
      %v7170 = vsel %vm1695, %v6704, 0
      %v7173 = vsel %vm1804, %v7028, 0
      %7175 = vmatprep.subr.bf16.mxu0 0
      %7176 = vmatpush1.bf16.msra.mxu0 %v6993
      %7177 = vmatprep.subr.bf16.mxu0 0
      %7178 = vmatpush1.bf16.msra.mxu0 %v6994
      %7179 = vmatprep.subr.bf16.mxu0 0
      %7180 = vmatpush1.bf16.msra.mxu0 %v6995
      %7181 = vmatprep.subr.bf16.mxu0 0
      %7182 = vmatpush1.bf16.msra.mxu0 %v6996
      %7183 = vmatprep.subr.bf16.mxu0 0
      %7184 = vmatpush1.bf16.msra.mxu0 %v6997
      %7185 = vmatprep.subr.bf16.mxu0 0
      %7186 = vmatpush1.bf16.msra.mxu0 %v6998
      %7187 = vmatprep.subr.bf16.mxu0 0
      %7188 = vmatpush1.bf16.msra.mxu0 %v6999
      %7189 = vmatprep.subr.bf16.mxu0 0
      %7190 = vmatpush1.bf16.msra.mxu0 %v7000
      %7191 = vmatprep.subr.bf16.mxu0 0
      %7192 = vmatpush1.bf16.msra.mxu0 %v7001
      %7193 = vmatprep.subr.bf16.mxu0 0
      %7194 = vmatpush1.bf16.msra.mxu0 %v7002
      %7195 = vmatprep.subr.bf16.mxu0 0
      %7196 = vmatpush1.bf16.msra.mxu0 %v7003
      %7197 = vmatprep.subr.bf16.mxu0 0
      %7198 = vmatpush1.bf16.msra.mxu0 %v7004
      %7199 = vmatprep.subr.bf16.mxu0 0
      %7200 = vmatpush1.bf16.msra.mxu0 %v7005
      %7201 = vmatprep.subr.bf16.mxu0 0
      %7202 = vmatpush1.bf16.msra.mxu0 %v7006
      %7203 = vmatprep.subr.bf16.mxu0 0
      %7204 = vmatpush1.bf16.msra.mxu0 %v7007
      %7205 = vmatprep.subr.bf16.mxu0 0
      %7206 = vmatpush1.bf16.msra.mxu0 %v7008
      %7207 = vmatprep.mubr.bf16.mxu0 %v6526
      %7208 = vmatmul.mubr.bf16.gmra.mrb[0].mxu0 %v6525
      %v7209 = vpop.f32.mrb[0].mxu0
      %v7210 = vadd.f32 0.0, %v7209
      %v7211 = vpop.f32.mrb[0].mxu0
      %v7212 = vpop.f32.mrb[0].mxu0
      %v7213 = vadd.f32 0.0, %v7212
      %v7214 = vpop.f32.mrb[0].mxu0
      %7215 = vmatprep.mubr.bf16.mxu0 %v6531
      %7216 = vmatmul.mubr.bf16.gmra.mrb[0].mxu0 %v6530
      %v7217 = vpop.f32.mrb[0].mxu0
      %v7218 = vadd.f32 0.0, %v7217
      %v7219 = vpop.f32.mrb[0].mxu0
      %v7220 = vpop.f32.mrb[0].mxu0
      %v7221 = vadd.f32 0.0, %v7220
      %v7222 = vpop.f32.mrb[0].mxu0
      %7223 = vmatprep.mubr.bf16.mxu0 %v6536
      %7224 = vmatmul.mubr.bf16.gmra.mrb[0].mxu0 %v6535
      %v7225 = vpop.f32.mrb[0].mxu0
      %v7226 = vadd.f32 0.0, %v7225
      %v7227 = vpop.f32.mrb[0].mxu0
      %v7228 = vpop.f32.mrb[0].mxu0
      %v7229 = vadd.f32 0.0, %v7228
      %v7230 = vpop.f32.mrb[0].mxu0
      %7231 = vmatprep.mubr.bf16.mxu0 %v6541
      %7232 = vmatmul.mubr.bf16.gmra.mrb[0].mxu0 %v6540
      %v7233 = vpop.f32.mrb[0].mxu0
      %v7234 = vadd.f32 0.0, %v7233
      %v7235 = vpop.f32.mrb[0].mxu0
      %v7236 = vpop.f32.mrb[0].mxu0
      %v7237 = vadd.f32 0.0, %v7236
      %v7238 = vpop.f32.mrb[0].mxu0
      %7239 = vmatprep.mubr.bf16.mxu0 %v6546
      %7240 = vmatmul.mubr.bf16.gmra.mrb[0].mxu0 %v6545
      %v7241 = vpop.f32.mrb[0].mxu0
      %v7242 = vadd.f32 0.0, %v7241
      %v7243 = vpop.f32.mrb[0].mxu0
      %v7244 = vpop.f32.mrb[0].mxu0
      %v7245 = vadd.f32 0.0, %v7244
      %v7246 = vpop.f32.mrb[0].mxu0
      %7247 = vmatprep.mubr.bf16.mxu0 %v6551
      %7248 = vmatmul.mubr.bf16.gmra.mrb[0].mxu0 %v6550
      %v7249 = vpop.f32.mrb[0].mxu0
      %v7250 = vadd.f32 0.0, %v7249
      %v7251 = vpop.f32.mrb[0].mxu0
      %v7252 = vpop.f32.mrb[0].mxu0
      %v7253 = vadd.f32 0.0, %v7252
      %v7254 = vpop.f32.mrb[0].mxu0
      %7255 = vmatprep.mubr.bf16.mxu0 %v6556
      %7256 = vmatmul.mubr.bf16.gmra.mrb[0].mxu0 %v6555
      %v7257 = vpop.f32.mrb[0].mxu0
      %v7258 = vadd.f32 0.0, %v7257
      %v7259 = vpop.f32.mrb[0].mxu0
      %v7260 = vpop.f32.mrb[0].mxu0
      %v7261 = vadd.f32 0.0, %v7260
      %v7262 = vpop.f32.mrb[0].mxu0
      %7263 = vmatprep.mubr.bf16.mxu0 %v6561
      %7264 = vmatmul.mubr.bf16.gmra.mrb[0].mxu0 %v6560
      %v7265 = vpop.f32.mrb[0].mxu0
      %v7266 = vadd.f32 0.0, %v7265
      %v7267 = vpop.f32.mrb[0].mxu0
      %v7268 = vpop.f32.mrb[0].mxu0
      %v7269 = vadd.f32 0.0, %v7268
      %v7270 = vpop.f32.mrb[0].mxu0
      %7271 = vmatprep.mubr.bf16.mxu0 %v6566
      %7272 = vmatmul.mubr.bf16.gmra.mrb[0].mxu0 %v6565
      %v7273 = vpop.f32.mrb[0].mxu0
      %v7274 = vadd.f32 0.0, %v7273
      %v7275 = vpop.f32.mrb[0].mxu0
      %v7276 = vpop.f32.mrb[0].mxu0
      %v7277 = vadd.f32 0.0, %v7276
      %v7278 = vpop.f32.mrb[0].mxu0
      %7279 = vmatprep.mubr.bf16.mxu0 %v6571
      %7280 = vmatmul.mubr.bf16.gmra.mrb[0].mxu0 %v6570
      %v7281 = vpop.f32.mrb[0].mxu0
      %v7282 = vadd.f32 0.0, %v7281
      %v7283 = vpop.f32.mrb[0].mxu0
      %v7284 = vpop.f32.mrb[0].mxu0
      %v7285 = vadd.f32 0.0, %v7284
      %v7286 = vpop.f32.mrb[0].mxu0
      %7287 = vmatprep.mubr.bf16.mxu0 %v6576
      %7288 = vmatmul.mubr.bf16.gmra.mrb[0].mxu0 %v6575
      %v7289 = vpop.f32.mrb[0].mxu0
      %v7290 = vadd.f32 0.0, %v7289
      %v7291 = vpop.f32.mrb[0].mxu0
      %v7292 = vpop.f32.mrb[0].mxu0
      %v7293 = vadd.f32 0.0, %v7292
      %v7294 = vpop.f32.mrb[0].mxu0
      %7295 = vmatprep.mubr.bf16.mxu0 %v6581
      %7296 = vmatmul.mubr.bf16.gmra.mrb[0].mxu0 %v6580
      %v7297 = vpop.f32.mrb[0].mxu0
      %v7298 = vadd.f32 0.0, %v7297
      %v7299 = vpop.f32.mrb[0].mxu0
      %v7300 = vpop.f32.mrb[0].mxu0
      %v7301 = vadd.f32 0.0, %v7300
      %v7302 = vpop.f32.mrb[0].mxu0
      %7303 = vmatprep.mubr.bf16.mxu0 %v6586
      %7304 = vmatmul.mubr.bf16.gmra.mrb[0].mxu0 %v6585
      %v7305 = vpop.f32.mrb[0].mxu0
      %v7306 = vadd.f32 0.0, %v7305
      %v7307 = vpop.f32.mrb[0].mxu0
      %v7308 = vpop.f32.mrb[0].mxu0
      %v7309 = vadd.f32 0.0, %v7308
      %v7310 = vpop.f32.mrb[0].mxu0
      %7311 = vmatprep.mubr.bf16.mxu0 %v6591
      %7312 = vmatmul.mubr.bf16.gmra.mrb[0].mxu0 %v6590
      %v7313 = vpop.f32.mrb[0].mxu0
      %v7314 = vadd.f32 0.0, %v7313
      %v7315 = vpop.f32.mrb[0].mxu0
      %v7316 = vpop.f32.mrb[0].mxu0
      %v7317 = vadd.f32 0.0, %v7316
      %v7318 = vpop.f32.mrb[0].mxu0
      %7319 = vmatprep.mubr.bf16.mxu0 %v6596
      %7320 = vmatmul.mubr.bf16.gmra.mrb[0].mxu0 %v6595
      %v7321 = vpop.f32.mrb[0].mxu0
      %v7322 = vadd.f32 0.0, %v7321
      %v7323 = vpop.f32.mrb[0].mxu0
      %v7324 = vpop.f32.mrb[0].mxu0
      %v7325 = vadd.f32 0.0, %v7324
      %v7326 = vpop.f32.mrb[0].mxu0
      %7327 = vmatprep.mubr.bf16.mxu0 %v6601
      %7328 = vmatmul.mubr.bf16.gmra.mrb[0].mxu0 %v6600
      %v7329 = vpop.f32.mrb[0].mxu0
      %v7330 = vadd.f32 0.0, %v7329
      %v7331 = vpop.f32.mrb[0].mxu0
      %v7332 = vpop.f32.mrb[0].mxu0
      %v7333 = vadd.f32 0.0, %v7332
      %v7334 = vpop.f32.mrb[0].mxu0
      %7335 = vmatprep.mubr.bf16.mxu0 %v6606
      %7336 = vmatmul.mubr.bf16.gmra.mrb[0].mxu0 %v6605
      %v7337 = vpop.f32.mrb[0].mxu0
      %v7338 = vadd.f32 0.0, %v7337
      %v7339 = vpop.f32.mrb[0].mxu0
      %v7340 = vpop.f32.mrb[0].mxu0
      %v7341 = vadd.f32 0.0, %v7340
      %v7342 = vpop.f32.mrb[0].mxu0
      %7343 = vmatprep.mubr.bf16.mxu0 %v6611
      %7344 = vmatmul.mubr.bf16.gmra.mrb[0].mxu0 %v6610
      %v7345 = vpop.f32.mrb[0].mxu0
      %v7346 = vadd.f32 0.0, %v7345
      %v7347 = vpop.f32.mrb[0].mxu0
      %v7348 = vpop.f32.mrb[0].mxu0
      %v7349 = vadd.f32 0.0, %v7348
      %v7350 = vpop.f32.mrb[0].mxu0
      %7351 = vmatprep.mubr.bf16.mxu0 %v6616
      %7352 = vmatmul.mubr.bf16.gmra.mrb[0].mxu0 %v6615
      %v7353 = vpop.f32.mrb[0].mxu0
      %v7354 = vadd.f32 0.0, %v7353
      %v7355 = vpop.f32.mrb[0].mxu0
      %v7356 = vpop.f32.mrb[0].mxu0
      %v7357 = vadd.f32 0.0, %v7356
      %v7358 = vpop.f32.mrb[0].mxu0
      %7359 = vmatprep.mubr.bf16.mxu0 %v6621
      %7360 = vmatmul.mubr.bf16.gmra.mrb[0].mxu0 %v6620
      %v7361 = vpop.f32.mrb[0].mxu0
      %v7362 = vadd.f32 0.0, %v7361
      %v7363 = vpop.f32.mrb[0].mxu0
      %v7364 = vpop.f32.mrb[0].mxu0
      %v7365 = vadd.f32 0.0, %v7364
      %v7366 = vpop.f32.mrb[0].mxu0
      %7367 = vmatprep.mubr.bf16.mxu0 %v6626
      %7368 = vmatmul.mubr.bf16.gmra.mrb[0].mxu0 %v6625
      %v7369 = vpop.f32.mrb[0].mxu0
      %v7370 = vadd.f32 0.0, %v7369
      %v7371 = vpop.f32.mrb[0].mxu0
      %v7372 = vpop.f32.mrb[0].mxu0
      %v7373 = vadd.f32 0.0, %v7372
      %v7374 = vpop.f32.mrb[0].mxu0
      %7375 = vmatprep.mubr.bf16.mxu0 %v6631
      %7376 = vmatmul.mubr.bf16.gmra.mrb[0].mxu0 %v6630
      %v7377 = vpop.f32.mrb[0].mxu0
      %v7378 = vadd.f32 0.0, %v7377
      %v7379 = vpop.f32.mrb[0].mxu0
      %v7380 = vpop.f32.mrb[0].mxu0
      %v7381 = vadd.f32 0.0, %v7380
      %v7382 = vpop.f32.mrb[0].mxu0
      %7383 = vmatprep.mubr.bf16.mxu0 %v6636
      %7384 = vmatmul.mubr.bf16.gmra.mrb[0].mxu0 %v6635
      %v7385 = vpop.f32.mrb[0].mxu0
      %v7386 = vadd.f32 0.0, %v7385
      %v7387 = vpop.f32.mrb[0].mxu0
      %v7388 = vpop.f32.mrb[0].mxu0
      %v7389 = vadd.f32 0.0, %v7388
      %v7390 = vpop.f32.mrb[0].mxu0
      %7391 = vmatprep.mubr.bf16.mxu0 %v6641
      %7392 = vmatmul.mubr.bf16.gmra.mrb[0].mxu0 %v6640
      %v7393 = vpop.f32.mrb[0].mxu0
      %v7394 = vadd.f32 0.0, %v7393
      %v7395 = vpop.f32.mrb[0].mxu0
      %v7396 = vpop.f32.mrb[0].mxu0
      %v7397 = vadd.f32 0.0, %v7396
      %v7398 = vpop.f32.mrb[0].mxu0
      %7399 = vmatprep.mubr.bf16.mxu0 %v6646
      %7400 = vmatmul.mubr.bf16.gmra.mrb[0].mxu0 %v6645
      %v7401 = vpop.f32.mrb[0].mxu0
      %v7402 = vadd.f32 0.0, %v7401
      %v7403 = vpop.f32.mrb[0].mxu0
      %v7404 = vpop.f32.mrb[0].mxu0
      %v7405 = vadd.f32 0.0, %v7404
      %v7406 = vpop.f32.mrb[0].mxu0
      %7407 = vmatprep.mubr.bf16.mxu0 %v6651
      %7408 = vmatmul.mubr.bf16.gmra.mrb[0].mxu0 %v6650
      %v7409 = vpop.f32.mrb[0].mxu0
      %v7410 = vadd.f32 0.0, %v7409
      %v7411 = vpop.f32.mrb[0].mxu0
      %v7412 = vpop.f32.mrb[0].mxu0
      %v7413 = vadd.f32 0.0, %v7412
      %v7414 = vpop.f32.mrb[0].mxu0
      %7415 = vmatprep.mubr.bf16.mxu0 %v6656
      %7416 = vmatmul.mubr.bf16.gmra.mrb[0].mxu0 %v6655
      %v7417 = vpop.f32.mrb[0].mxu0
      %v7418 = vadd.f32 0.0, %v7417
      %v7419 = vpop.f32.mrb[0].mxu0
      %v7420 = vpop.f32.mrb[0].mxu0
      %v7421 = vadd.f32 0.0, %v7420
      %v7422 = vpop.f32.mrb[0].mxu0
      %7423 = vmatprep.mubr.bf16.mxu0 %v6661
      %7424 = vmatmul.mubr.bf16.gmra.mrb[0].mxu0 %v6660
      %v7425 = vpop.f32.mrb[0].mxu0
      %v7426 = vadd.f32 0.0, %v7425
      %v7427 = vpop.f32.mrb[0].mxu0
      %v7428 = vpop.f32.mrb[0].mxu0
      %v7429 = vadd.f32 0.0, %v7428
      %v7430 = vpop.f32.mrb[0].mxu0
      %7431 = vmatprep.mubr.bf16.mxu0 %v6666
      %7432 = vmatmul.mubr.bf16.gmra.mrb[0].mxu0 %v6665
      %v7433 = vpop.f32.mrb[0].mxu0
      %v7434 = vadd.f32 0.0, %v7433
      %v7435 = vpop.f32.mrb[0].mxu0
      %v7436 = vpop.f32.mrb[0].mxu0
      %v7437 = vadd.f32 0.0, %v7436
      %v7438 = vpop.f32.mrb[0].mxu0
      %7439 = vmatprep.mubr.bf16.mxu0 %v6671
      %7440 = vmatmul.mubr.bf16.gmra.mrb[0].mxu0 %v6670
      %v7441 = vpop.f32.mrb[0].mxu0
      %v7442 = vadd.f32 0.0, %v7441
      %v7443 = vpop.f32.mrb[0].mxu0
      %v7444 = vpop.f32.mrb[0].mxu0
      %v7445 = vadd.f32 0.0, %v7444
      %v7446 = vpop.f32.mrb[0].mxu0
      %7447 = vmatprep.mubr.bf16.mxu0 %v6676
      %7448 = vmatmul.mubr.bf16.gmra.mrb[0].mxu0 %v6675
      %v7449 = vpop.f32.mrb[0].mxu0
      %v7450 = vadd.f32 0.0, %v7449
      %v7451 = vpop.f32.mrb[0].mxu0
      %v7452 = vpop.f32.mrb[0].mxu0
      %v7453 = vadd.f32 0.0, %v7452
      %v7454 = vpop.f32.mrb[0].mxu0
      %7455 = vmatprep.mubr.bf16.mxu0 %v6681
      %7456 = vmatmul.mubr.bf16.gmra.mrb[0].mxu0 %v6680
      %v7457 = vpop.f32.mrb[0].mxu0
      %v7458 = vadd.f32 0.0, %v7457
      %v7459 = vpop.f32.mrb[0].mxu0
      %v7460 = vpop.f32.mrb[0].mxu0
      %v7461 = vadd.f32 0.0, %v7460
      %v7462 = vpop.f32.mrb[0].mxu0
      %7463 = vmatprep.mubr.bf16.mxu0 %v6686
      %7464 = vmatmul.mubr.bf16.gmra.mrb[0].mxu0 %v6685
      %v7465 = vpop.f32.mrb[0].mxu0
      %v7466 = vadd.f32 0.0, %v7465
      %v7467 = vpop.f32.mrb[0].mxu0
      %v7468 = vpop.f32.mrb[0].mxu0
      %v7469 = vadd.f32 0.0, %v7468
      %v7470 = vpop.f32.mrb[0].mxu0
      %7471 = vmatprep.mubr.bf16.mxu0 %v6691
      %7472 = vmatmul.mubr.bf16.gmra.mrb[0].mxu0 %v6690
      %v7473 = vpop.f32.mrb[0].mxu0
      %v7474 = vadd.f32 0.0, %v7473
      %v7475 = vpop.f32.mrb[0].mxu0
      %v7476 = vpop.f32.mrb[0].mxu0
      %v7477 = vadd.f32 0.0, %v7476
      %v7478 = vpop.f32.mrb[0].mxu0
      %7479 = vmatprep.mubr.bf16.mxu0 %v6696
      %7480 = vmatmul.mubr.bf16.gmra.mrb[0].mxu0 %v6695
      %v7481 = vpop.f32.mrb[0].mxu0
      %v7482 = vadd.f32 0.0, %v7481
      %v7483 = vpop.f32.mrb[0].mxu0
      %v7484 = vpop.f32.mrb[0].mxu0
      %v7485 = vadd.f32 0.0, %v7484
      %v7486 = vpop.f32.mrb[0].mxu0
      %7487 = vmatprep.mubr.bf16.mxu0 %v6701
      %7488 = vmatmul.mubr.bf16.gmra.mrb[0].mxu0 %v6700
      %v7489 = vpop.f32.mrb[0].mxu0
      %v7490 = vadd.f32 0.0, %v7489
      %v7491 = vpop.f32.mrb[0].mxu0
      %v7492 = vpop.f32.mrb[0].mxu0
      %v7493 = vadd.f32 0.0, %v7492
      %v7494 = vpop.f32.mrb[0].mxu0
      %7495 = vdwg.mxu0
      %7496 = vmatprep.subr.bf16.mxu0 0
      %7497 = vmatpush1.bf16.msra.mxu0 %v7009
      %7498 = vmatprep.subr.bf16.mxu0 0
      %7499 = vmatpush1.bf16.msra.mxu0 %v7010
      %7500 = vmatprep.subr.bf16.mxu0 0
      %7501 = vmatpush1.bf16.msra.mxu0 %v7011
      %7502 = vmatprep.subr.bf16.mxu0 0
      %7503 = vmatpush1.bf16.msra.mxu0 %v7012
      %7504 = vmatprep.subr.bf16.mxu0 0
      %7505 = vmatpush1.bf16.msra.mxu0 %v7013
      %7506 = vmatprep.subr.bf16.mxu0 0
      %7507 = vmatpush1.bf16.msra.mxu0 %v7014
      %7508 = vmatprep.subr.bf16.mxu0 0
      %7509 = vmatpush1.bf16.msra.mxu0 %v7015
      %7510 = vmatprep.subr.bf16.mxu0 0
      %7511 = vmatpush1.bf16.msra.mxu0 %v7016
      %7512 = vmatprep.subr.bf16.mxu0 0
      %7513 = vmatpush1.bf16.msra.mxu0 %v7017
      %7514 = vmatprep.subr.bf16.mxu0 0
      %7515 = vmatpush1.bf16.msra.mxu0 %v7018
      %7516 = vmatprep.subr.bf16.mxu0 0
      %7517 = vmatpush1.bf16.msra.mxu0 %v7019
      %7518 = vmatprep.subr.bf16.mxu0 0
      %7519 = vmatpush1.bf16.msra.mxu0 %v7020
      %7520 = vmatprep.subr.bf16.mxu0 0
      %7521 = vmatpush1.bf16.msra.mxu0 %v7021
      %7522 = vmatprep.subr.bf16.mxu0 0
      %7523 = vmatpush1.bf16.msra.mxu0 %v7022
      %7524 = vmatprep.subr.bf16.mxu0 0
      %7525 = vmatpush1.bf16.msra.mxu0 %v7023
      %7526 = vmatprep.subr.bf16.mxu0 0
      %7527 = vmatpush1.bf16.msra.mxu0 %v7024
      %7528 = vmatprep.mubr.bf16.mxu0 %v6528
      %7529 = vmatmul.mubr.bf16.gmra.mrb[0].mxu0 %v6527
      %v7530 = vpop.f32.mrb[0].mxu0
      %v7531 = vadd.f32 %v7210, %v7530
      %v7532 = vpop.f32.mrb[0].mxu0
      %v7533 = vpop.f32.mrb[0].mxu0
      %v7534 = vadd.f32 %v7213, %v7533
      %v7535 = vpop.f32.mrb[0].mxu0
      %7536 = vmatprep.mubr.bf16.mxu0 %v6533
      %7537 = vmatmul.mubr.bf16.gmra.mrb[0].mxu0 %v6532
      %v7538 = vpop.f32.mrb[0].mxu0
      %v7539 = vadd.f32 %v7218, %v7538
      %v7540 = vpop.f32.mrb[0].mxu0
      %v7541 = vpop.f32.mrb[0].mxu0
      %v7542 = vadd.f32 %v7221, %v7541
      %v7543 = vpop.f32.mrb[0].mxu0
      %7544 = vmatprep.mubr.bf16.mxu0 %v6538
      %7545 = vmatmul.mubr.bf16.gmra.mrb[0].mxu0 %v6537
      %v7546 = vpop.f32.mrb[0].mxu0
      %v7547 = vadd.f32 %v7226, %v7546
      %v7548 = vpop.f32.mrb[0].mxu0
      %v7549 = vpop.f32.mrb[0].mxu0
      %v7550 = vadd.f32 %v7229, %v7549
      %v7551 = vpop.f32.mrb[0].mxu0
      %7552 = vmatprep.mubr.bf16.mxu0 %v6543
      %7553 = vmatmul.mubr.bf16.gmra.mrb[0].mxu0 %v6542
      %v7554 = vpop.f32.mrb[0].mxu0
      %v7555 = vadd.f32 %v7234, %v7554
      %v7556 = vpop.f32.mrb[0].mxu0
      %v7557 = vpop.f32.mrb[0].mxu0
      %v7558 = vadd.f32 %v7237, %v7557
      %v7559 = vpop.f32.mrb[0].mxu0
      %7560 = vmatprep.mubr.bf16.mxu0 %v6548
      %7561 = vmatmul.mubr.bf16.gmra.mrb[0].mxu0 %v6547
      %v7562 = vpop.f32.mrb[0].mxu0
      %v7563 = vadd.f32 %v7242, %v7562
      %v7564 = vpop.f32.mrb[0].mxu0
      %v7565 = vpop.f32.mrb[0].mxu0
      %v7566 = vadd.f32 %v7245, %v7565
      %v7567 = vpop.f32.mrb[0].mxu0
      %7568 = vmatprep.mubr.bf16.mxu0 %v6553
      %7569 = vmatmul.mubr.bf16.gmra.mrb[0].mxu0 %v6552
      %v7570 = vpop.f32.mrb[0].mxu0
      %v7571 = vadd.f32 %v7250, %v7570
      %v7572 = vpop.f32.mrb[0].mxu0
      %v7573 = vpop.f32.mrb[0].mxu0
      %v7574 = vadd.f32 %v7253, %v7573
      %v7575 = vpop.f32.mrb[0].mxu0
      %7576 = vmatprep.mubr.bf16.mxu0 %v6558
      %7577 = vmatmul.mubr.bf16.gmra.mrb[0].mxu0 %v6557
      %v7578 = vpop.f32.mrb[0].mxu0
      %v7579 = vadd.f32 %v7258, %v7578
      %v7580 = vpop.f32.mrb[0].mxu0
      %v7581 = vpop.f32.mrb[0].mxu0
      %v7582 = vadd.f32 %v7261, %v7581
      %v7583 = vpop.f32.mrb[0].mxu0
      %7584 = vmatprep.mubr.bf16.mxu0 %v6563
      %7585 = vmatmul.mubr.bf16.gmra.mrb[0].mxu0 %v6562
      %v7586 = vpop.f32.mrb[0].mxu0
      %v7587 = vadd.f32 %v7266, %v7586
      %v7588 = vpop.f32.mrb[0].mxu0
      %v7589 = vpop.f32.mrb[0].mxu0
      %v7590 = vadd.f32 %v7269, %v7589
      %v7591 = vpop.f32.mrb[0].mxu0
      %7592 = vmatprep.mubr.bf16.mxu0 %v6568
      %7593 = vmatmul.mubr.bf16.gmra.mrb[0].mxu0 %v6567
      %v7594 = vpop.f32.mrb[0].mxu0
      %v7595 = vadd.f32 %v7274, %v7594
      %v7596 = vpop.f32.mrb[0].mxu0
      %v7597 = vpop.f32.mrb[0].mxu0
      %v7598 = vadd.f32 %v7277, %v7597
      %v7599 = vpop.f32.mrb[0].mxu0
      %7600 = vmatprep.mubr.bf16.mxu0 %v6573
      %7601 = vmatmul.mubr.bf16.gmra.mrb[0].mxu0 %v6572
      %v7602 = vpop.f32.mrb[0].mxu0
      %v7603 = vadd.f32 %v7282, %v7602
      %v7604 = vpop.f32.mrb[0].mxu0
      %v7605 = vpop.f32.mrb[0].mxu0
      %v7606 = vadd.f32 %v7285, %v7605
      %v7607 = vpop.f32.mrb[0].mxu0
      %7608 = vmatprep.mubr.bf16.mxu0 %v6578
      %7609 = vmatmul.mubr.bf16.gmra.mrb[0].mxu0 %v6577
      %v7610 = vpop.f32.mrb[0].mxu0
      %v7611 = vadd.f32 %v7290, %v7610
      %v7612 = vpop.f32.mrb[0].mxu0
      %v7613 = vpop.f32.mrb[0].mxu0
      %v7614 = vadd.f32 %v7293, %v7613
      %v7615 = vpop.f32.mrb[0].mxu0
      %7616 = vmatprep.mubr.bf16.mxu0 %v6583
      %7617 = vmatmul.mubr.bf16.gmra.mrb[0].mxu0 %v6582
      %v7618 = vpop.f32.mrb[0].mxu0
      %v7619 = vadd.f32 %v7298, %v7618
      %v7620 = vpop.f32.mrb[0].mxu0
      %v7621 = vpop.f32.mrb[0].mxu0
      %v7622 = vadd.f32 %v7301, %v7621
      %v7623 = vpop.f32.mrb[0].mxu0
      %7624 = vmatprep.mubr.bf16.mxu0 %v6588
      %7625 = vmatmul.mubr.bf16.gmra.mrb[0].mxu0 %v6587
      %v7626 = vpop.f32.mrb[0].mxu0
      %v7627 = vadd.f32 %v7306, %v7626
      %v7628 = vpop.f32.mrb[0].mxu0
      %v7629 = vpop.f32.mrb[0].mxu0
      %v7630 = vadd.f32 %v7309, %v7629
      %v7631 = vpop.f32.mrb[0].mxu0
      %7632 = vmatprep.mubr.bf16.mxu0 %v6593
      %7633 = vmatmul.mubr.bf16.gmra.mrb[0].mxu0 %v6592
      %v7634 = vpop.f32.mrb[0].mxu0
      %v7635 = vadd.f32 %v7314, %v7634
      %v7636 = vpop.f32.mrb[0].mxu0
      %v7637 = vpop.f32.mrb[0].mxu0
      %v7638 = vadd.f32 %v7317, %v7637
      %v7639 = vpop.f32.mrb[0].mxu0
      %7640 = vmatprep.mubr.bf16.mxu0 %v6598
      %7641 = vmatmul.mubr.bf16.gmra.mrb[0].mxu0 %v6597
      %v7642 = vpop.f32.mrb[0].mxu0
      %v7643 = vadd.f32 %v7322, %v7642
      %v7644 = vpop.f32.mrb[0].mxu0
      %v7645 = vpop.f32.mrb[0].mxu0
      %v7646 = vadd.f32 %v7325, %v7645
      %v7647 = vpop.f32.mrb[0].mxu0
      %7648 = vmatprep.mubr.bf16.mxu0 %v6603
      %7649 = vmatmul.mubr.bf16.gmra.mrb[0].mxu0 %v6602
      %v7650 = vpop.f32.mrb[0].mxu0
      %v7651 = vadd.f32 %v7330, %v7650
      %v7652 = vpop.f32.mrb[0].mxu0
      %v7653 = vpop.f32.mrb[0].mxu0
      %v7654 = vadd.f32 %v7333, %v7653
      %v7655 = vpop.f32.mrb[0].mxu0
      %7656 = vmatprep.mubr.bf16.mxu0 %v6608
      %7657 = vmatmul.mubr.bf16.gmra.mrb[0].mxu0 %v6607
      %v7658 = vpop.f32.mrb[0].mxu0
      %v7659 = vadd.f32 %v7338, %v7658
      %v7660 = vpop.f32.mrb[0].mxu0
      %v7661 = vpop.f32.mrb[0].mxu0
      %v7662 = vadd.f32 %v7341, %v7661
      %v7663 = vpop.f32.mrb[0].mxu0
      %7664 = vmatprep.mubr.bf16.mxu0 %v6613
      %7665 = vmatmul.mubr.bf16.gmra.mrb[0].mxu0 %v6612
      %v7666 = vpop.f32.mrb[0].mxu0
      %v7667 = vadd.f32 %v7346, %v7666
      %v7668 = vpop.f32.mrb[0].mxu0
      %v7669 = vpop.f32.mrb[0].mxu0
      %v7670 = vadd.f32 %v7349, %v7669
      %v7671 = vpop.f32.mrb[0].mxu0
      %7672 = vmatprep.mubr.bf16.mxu0 %v6618
      %7673 = vmatmul.mubr.bf16.gmra.mrb[0].mxu0 %v6617
      %v7674 = vpop.f32.mrb[0].mxu0
      %v7675 = vadd.f32 %v7354, %v7674
      %v7676 = vpop.f32.mrb[0].mxu0
      %v7677 = vpop.f32.mrb[0].mxu0
      %v7678 = vadd.f32 %v7357, %v7677
      %v7679 = vpop.f32.mrb[0].mxu0
      %7680 = vmatprep.mubr.bf16.mxu0 %v6623
      %7681 = vmatmul.mubr.bf16.gmra.mrb[0].mxu0 %v6622
      %v7682 = vpop.f32.mrb[0].mxu0
      %v7683 = vadd.f32 %v7362, %v7682
      %v7684 = vpop.f32.mrb[0].mxu0
      %v7685 = vpop.f32.mrb[0].mxu0
      %v7686 = vadd.f32 %v7365, %v7685
      %v7687 = vpop.f32.mrb[0].mxu0
      %7688 = vmatprep.mubr.bf16.mxu0 %v6628
      %7689 = vmatmul.mubr.bf16.gmra.mrb[0].mxu0 %v6627
      %v7690 = vpop.f32.mrb[0].mxu0
      %v7691 = vadd.f32 %v7370, %v7690
      %v7692 = vpop.f32.mrb[0].mxu0
      %v7693 = vpop.f32.mrb[0].mxu0
      %v7694 = vadd.f32 %v7373, %v7693
      %v7695 = vpop.f32.mrb[0].mxu0
      %7696 = vmatprep.mubr.bf16.mxu0 %v6633
      %7697 = vmatmul.mubr.bf16.gmra.mrb[0].mxu0 %v6632
      %v7698 = vpop.f32.mrb[0].mxu0
      %v7699 = vadd.f32 %v7378, %v7698
      %v7700 = vpop.f32.mrb[0].mxu0
      %v7701 = vpop.f32.mrb[0].mxu0
      %v7702 = vadd.f32 %v7381, %v7701
      %v7703 = vpop.f32.mrb[0].mxu0
      %7704 = vmatprep.mubr.bf16.mxu0 %v6638
      %7705 = vmatmul.mubr.bf16.gmra.mrb[0].mxu0 %v6637
      %v7706 = vpop.f32.mrb[0].mxu0
      %v7707 = vadd.f32 %v7386, %v7706
      %v7708 = vpop.f32.mrb[0].mxu0
      %v7709 = vpop.f32.mrb[0].mxu0
      %v7710 = vadd.f32 %v7389, %v7709
      %v7711 = vpop.f32.mrb[0].mxu0
      %7712 = vmatprep.mubr.bf16.mxu0 %v6643
      %7713 = vmatmul.mubr.bf16.gmra.mrb[0].mxu0 %v6642
      %v7714 = vpop.f32.mrb[0].mxu0
      %v7715 = vadd.f32 %v7394, %v7714
      %v7716 = vpop.f32.mrb[0].mxu0
      %v7717 = vpop.f32.mrb[0].mxu0
      %v7718 = vadd.f32 %v7397, %v7717
      %v7719 = vpop.f32.mrb[0].mxu0
      %7720 = vmatprep.mubr.bf16.mxu0 %v6648
      %7721 = vmatmul.mubr.bf16.gmra.mrb[0].mxu0 %v6647
      %v7722 = vpop.f32.mrb[0].mxu0
      %v7723 = vadd.f32 %v7402, %v7722
      %v7724 = vpop.f32.mrb[0].mxu0
      %v7725 = vpop.f32.mrb[0].mxu0
      %v7726 = vadd.f32 %v7405, %v7725
      %v7727 = vpop.f32.mrb[0].mxu0
      %7728 = vmatprep.mubr.bf16.mxu0 %v6653
      %7729 = vmatmul.mubr.bf16.gmra.mrb[0].mxu0 %v6652
      %v7730 = vpop.f32.mrb[0].mxu0
      %v7731 = vadd.f32 %v7410, %v7730
      %v7732 = vpop.f32.mrb[0].mxu0
      %v7733 = vpop.f32.mrb[0].mxu0
      %v7734 = vadd.f32 %v7413, %v7733
      %v7735 = vpop.f32.mrb[0].mxu0
      %7736 = vmatprep.mubr.bf16.mxu0 %v6658
      %7737 = vmatmul.mubr.bf16.gmra.mrb[0].mxu0 %v6657
      %v7738 = vpop.f32.mrb[0].mxu0
      %v7739 = vadd.f32 %v7418, %v7738
      %v7740 = vpop.f32.mrb[0].mxu0
      %v7741 = vpop.f32.mrb[0].mxu0
      %v7742 = vadd.f32 %v7421, %v7741
      %v7743 = vpop.f32.mrb[0].mxu0
      %7744 = vmatprep.mubr.bf16.mxu0 %v6663
      %7745 = vmatmul.mubr.bf16.gmra.mrb[0].mxu0 %v6662
      %v7746 = vpop.f32.mrb[0].mxu0
      %v7747 = vadd.f32 %v7426, %v7746
      %v7748 = vpop.f32.mrb[0].mxu0
      %v7749 = vpop.f32.mrb[0].mxu0
      %v7750 = vadd.f32 %v7429, %v7749
      %v7751 = vpop.f32.mrb[0].mxu0
      %7752 = vmatprep.mubr.bf16.mxu0 %v6668
      %7753 = vmatmul.mubr.bf16.gmra.mrb[0].mxu0 %v6667
      %v7754 = vpop.f32.mrb[0].mxu0
      %v7755 = vadd.f32 %v7434, %v7754
      %v7756 = vpop.f32.mrb[0].mxu0
      %v7757 = vpop.f32.mrb[0].mxu0
      %v7758 = vadd.f32 %v7437, %v7757
      %v7759 = vpop.f32.mrb[0].mxu0
      %7760 = vmatprep.mubr.bf16.mxu0 %v6673
      %7761 = vmatmul.mubr.bf16.gmra.mrb[0].mxu0 %v6672
      %v7762 = vpop.f32.mrb[0].mxu0
      %v7763 = vadd.f32 %v7442, %v7762
      %v7764 = vpop.f32.mrb[0].mxu0
      %v7765 = vpop.f32.mrb[0].mxu0
      %v7766 = vadd.f32 %v7445, %v7765
      %v7767 = vpop.f32.mrb[0].mxu0
      %7768 = vmatprep.mubr.bf16.mxu0 %v6678
      %7769 = vmatmul.mubr.bf16.gmra.mrb[0].mxu0 %v6677
      %v7770 = vpop.f32.mrb[0].mxu0
      %v7771 = vadd.f32 %v7450, %v7770
      %v7772 = vpop.f32.mrb[0].mxu0
      %v7773 = vpop.f32.mrb[0].mxu0
      %v7774 = vadd.f32 %v7453, %v7773
      %v7775 = vpop.f32.mrb[0].mxu0
      %7776 = vmatprep.mubr.bf16.mxu0 %v6683
      %7777 = vmatmul.mubr.bf16.gmra.mrb[0].mxu0 %v6682
      %v7778 = vpop.f32.mrb[0].mxu0
      %v7779 = vadd.f32 %v7458, %v7778
      %v7780 = vpop.f32.mrb[0].mxu0
      %v7781 = vpop.f32.mrb[0].mxu0
      %v7782 = vadd.f32 %v7461, %v7781
      %v7783 = vpop.f32.mrb[0].mxu0
      %7784 = vmatprep.mubr.bf16.mxu0 %v6688
      %7785 = vmatmul.mubr.bf16.gmra.mrb[0].mxu0 %v6687
      %v7786 = vpop.f32.mrb[0].mxu0
      %v7787 = vadd.f32 %v7466, %v7786
      %v7788 = vpop.f32.mrb[0].mxu0
      %v7789 = vpop.f32.mrb[0].mxu0
      %v7790 = vadd.f32 %v7469, %v7789
      %v7791 = vpop.f32.mrb[0].mxu0
      %7792 = vmatprep.mubr.bf16.mxu0 %v6693
      %7793 = vmatmul.mubr.bf16.gmra.mrb[0].mxu0 %v6692
      %v7794 = vpop.f32.mrb[0].mxu0
      %v7795 = vadd.f32 %v7474, %v7794
      %v7796 = vpop.f32.mrb[0].mxu0
      %v7797 = vpop.f32.mrb[0].mxu0
      %v7798 = vadd.f32 %v7477, %v7797
      %v7799 = vpop.f32.mrb[0].mxu0
      %7800 = vmatprep.mubr.bf16.mxu0 %v6698
      %7801 = vmatmul.mubr.bf16.gmra.mrb[0].mxu0 %v6697
      %v7802 = vpop.f32.mrb[0].mxu0
      %v7803 = vadd.f32 %v7482, %v7802
      %v7804 = vpop.f32.mrb[0].mxu0
      %v7805 = vpop.f32.mrb[0].mxu0
      %v7806 = vadd.f32 %v7485, %v7805
      %v7807 = vpop.f32.mrb[0].mxu0
      %7808 = vmatprep.mubr.bf16.mxu0 %v6703
      %7809 = vmatmul.mubr.bf16.gmra.mrb[0].mxu0 %v6702
      %v7810 = vpop.f32.mrb[0].mxu0
      %v7811 = vadd.f32 %v7490, %v7810
      %v7812 = vpop.f32.mrb[0].mxu0
      %v7813 = vpop.f32.mrb[0].mxu0
      %v7814 = vadd.f32 %v7493, %v7813
      %v7815 = vpop.f32.mrb[0].mxu0
      %7816 = vdwg.mxu0
      %7817 = vmatprep.subr.bf16.mxu0 0
      %7818 = vmatpush1.bf16.msra.mxu0 %v7025
      %7819 = vmatprep.subr.bf16.mxu0 0
      %7820 = vmatpush1.bf16.msra.mxu0 %v7026
      %7821 = vmatprep.subr.bf16.mxu0 0
      %7822 = vmatpush1.bf16.msra.mxu0 %v7027
      %7823 = vmatprep.subr.bf16.mxu0 0
      %7824 = vmatpush1.bf16.msra.mxu0 %v7173
      %7825 = vmatprep.subr.bf16.mxu0 0
      %7826 = vmatpush1.bf16.msra.mxu0 0
      %7827 = vmatprep.subr.bf16.mxu0 0
      %7828 = vmatpush1.bf16.msra.mxu0 0
      %7829 = vmatprep.subr.bf16.mxu0 0
      %7830 = vmatpush1.bf16.msra.mxu0 0
      %7831 = vmatprep.subr.bf16.mxu0 0
      %7832 = vmatpush1.bf16.msra.mxu0 0
      %7833 = vmatprep.subr.bf16.mxu0 0
      %7834 = vmatpush1.bf16.msra.mxu0 0
      %7835 = vmatprep.subr.bf16.mxu0 0
      %7836 = vmatpush1.bf16.msra.mxu0 0
      %7837 = vmatprep.subr.bf16.mxu0 0
      %7838 = vmatpush1.bf16.msra.mxu0 0
      %7839 = vmatprep.subr.bf16.mxu0 0
      %7840 = vmatpush1.bf16.msra.mxu0 0
      %7841 = vmatprep.subr.bf16.mxu0 0
      %7842 = vmatpush1.bf16.msra.mxu0 0
      %7843 = vmatprep.subr.bf16.mxu0 0
      %7844 = vmatpush1.bf16.msra.mxu0 0
      %7845 = vmatprep.subr.bf16.mxu0 0
      %7846 = vmatpush1.bf16.msra.mxu0 0
      %7847 = vmatprep.subr.bf16.mxu0 0
      %7848 = vmatpush1.bf16.msra.mxu0 0
      %7849 = vmatprep.mubr.bf16.mxu0 0
      %7850 = vmatmul.mubr.bf16.gmra.mrb[0].mxu0 %v7065
      %v7851 = vpop.f32.mrb[0].mxu0
      %v7852 = vadd.f32 %v7531, %v7851
      %v7853 = vpop.f32.mrb[0].mxu0
      %v7854 = vpop.f32.mrb[0].mxu0
      %v7855 = vadd.f32 %v7534, %v7854
      %v7856 = vpop.f32.mrb[0].mxu0
      %7857 = vmatprep.mubr.bf16.mxu0 0
      %7858 = vmatmul.mubr.bf16.gmra.mrb[0].mxu0 %v7068
      %v7859 = vpop.f32.mrb[0].mxu0
      %v7860 = vadd.f32 %v7539, %v7859
      %v7861 = vpop.f32.mrb[0].mxu0
      %v7862 = vpop.f32.mrb[0].mxu0
      %v7863 = vadd.f32 %v7542, %v7862
      %v7864 = vpop.f32.mrb[0].mxu0
      %7865 = vmatprep.mubr.bf16.mxu0 0
      %7866 = vmatmul.mubr.bf16.gmra.mrb[0].mxu0 %v7071
      %v7867 = vpop.f32.mrb[0].mxu0
      %v7868 = vadd.f32 %v7547, %v7867
      %v7869 = vpop.f32.mrb[0].mxu0
      %v7870 = vpop.f32.mrb[0].mxu0
      %v7871 = vadd.f32 %v7550, %v7870
      %v7872 = vpop.f32.mrb[0].mxu0
      %7873 = vmatprep.mubr.bf16.mxu0 0
      %7874 = vmatmul.mubr.bf16.gmra.mrb[0].mxu0 %v7074
      %v7875 = vpop.f32.mrb[0].mxu0
      %v7876 = vadd.f32 %v7555, %v7875
      %v7877 = vpop.f32.mrb[0].mxu0
      %v7878 = vpop.f32.mrb[0].mxu0
      %v7879 = vadd.f32 %v7558, %v7878
      %v7880 = vpop.f32.mrb[0].mxu0
      %7881 = vmatprep.mubr.bf16.mxu0 0
      %7882 = vmatmul.mubr.bf16.gmra.mrb[0].mxu0 %v7077
      %v7883 = vpop.f32.mrb[0].mxu0
      %v7884 = vadd.f32 %v7563, %v7883
      %v7885 = vpop.f32.mrb[0].mxu0
      %v7886 = vpop.f32.mrb[0].mxu0
      %v7887 = vadd.f32 %v7566, %v7886
      %v7888 = vpop.f32.mrb[0].mxu0
      %7889 = vmatprep.mubr.bf16.mxu0 0
      %7890 = vmatmul.mubr.bf16.gmra.mrb[0].mxu0 %v7080
      %v7891 = vpop.f32.mrb[0].mxu0
      %v7892 = vadd.f32 %v7571, %v7891
      %v7893 = vpop.f32.mrb[0].mxu0
      %v7894 = vpop.f32.mrb[0].mxu0
      %v7895 = vadd.f32 %v7574, %v7894
      %v7896 = vpop.f32.mrb[0].mxu0
      %7897 = vmatprep.mubr.bf16.mxu0 0
      %7898 = vmatmul.mubr.bf16.gmra.mrb[0].mxu0 %v7083
      %v7899 = vpop.f32.mrb[0].mxu0
      %v7900 = vadd.f32 %v7579, %v7899
      %v7901 = vpop.f32.mrb[0].mxu0
      %v7902 = vpop.f32.mrb[0].mxu0
      %v7903 = vadd.f32 %v7582, %v7902
      %v7904 = vpop.f32.mrb[0].mxu0
      %7905 = vmatprep.mubr.bf16.mxu0 0
      %7906 = vmatmul.mubr.bf16.gmra.mrb[0].mxu0 %v7086
      %v7907 = vpop.f32.mrb[0].mxu0
      %v7908 = vadd.f32 %v7587, %v7907
      %v7909 = vpop.f32.mrb[0].mxu0
      %v7910 = vpop.f32.mrb[0].mxu0
      %v7911 = vadd.f32 %v7590, %v7910
      %v7912 = vpop.f32.mrb[0].mxu0
      %7913 = vmatprep.mubr.bf16.mxu0 0
      %7914 = vmatmul.mubr.bf16.gmra.mrb[0].mxu0 %v7089
      %v7915 = vpop.f32.mrb[0].mxu0
      %v7916 = vadd.f32 %v7595, %v7915
      %v7917 = vpop.f32.mrb[0].mxu0
      %v7918 = vpop.f32.mrb[0].mxu0
      %v7919 = vadd.f32 %v7598, %v7918
      %v7920 = vpop.f32.mrb[0].mxu0
      %7921 = vmatprep.mubr.bf16.mxu0 0
      %7922 = vmatmul.mubr.bf16.gmra.mrb[0].mxu0 %v7092
      %v7923 = vpop.f32.mrb[0].mxu0
      %v7924 = vadd.f32 %v7603, %v7923
      %v7925 = vpop.f32.mrb[0].mxu0
      %v7926 = vpop.f32.mrb[0].mxu0
      %v7927 = vadd.f32 %v7606, %v7926
      %v7928 = vpop.f32.mrb[0].mxu0
      %7929 = vmatprep.mubr.bf16.mxu0 0
      %7930 = vmatmul.mubr.bf16.gmra.mrb[0].mxu0 %v7095
      %v7931 = vpop.f32.mrb[0].mxu0
      %v7932 = vadd.f32 %v7611, %v7931
      %v7933 = vpop.f32.mrb[0].mxu0
      %v7934 = vpop.f32.mrb[0].mxu0
      %v7935 = vadd.f32 %v7614, %v7934
      %v7936 = vpop.f32.mrb[0].mxu0
      %7937 = vmatprep.mubr.bf16.mxu0 0
      %7938 = vmatmul.mubr.bf16.gmra.mrb[0].mxu0 %v7098
      %v7939 = vpop.f32.mrb[0].mxu0
      %v7940 = vadd.f32 %v7619, %v7939
      %v7941 = vpop.f32.mrb[0].mxu0
      %v7942 = vpop.f32.mrb[0].mxu0
      %v7943 = vadd.f32 %v7622, %v7942
      %v7944 = vpop.f32.mrb[0].mxu0
      %7945 = vmatprep.mubr.bf16.mxu0 0
      %7946 = vmatmul.mubr.bf16.gmra.mrb[0].mxu0 %v7101
      %v7947 = vpop.f32.mrb[0].mxu0
      %v7948 = vadd.f32 %v7627, %v7947
      %v7949 = vpop.f32.mrb[0].mxu0
      %v7950 = vpop.f32.mrb[0].mxu0
      %v7951 = vadd.f32 %v7630, %v7950
      %v7952 = vpop.f32.mrb[0].mxu0
      %7953 = vmatprep.mubr.bf16.mxu0 0
      %7954 = vmatmul.mubr.bf16.gmra.mrb[0].mxu0 %v7104
      %v7955 = vpop.f32.mrb[0].mxu0
      %v7956 = vadd.f32 %v7635, %v7955
      %v7957 = vpop.f32.mrb[0].mxu0
      %v7958 = vpop.f32.mrb[0].mxu0
      %v7959 = vadd.f32 %v7638, %v7958
      %v7960 = vpop.f32.mrb[0].mxu0
      %7961 = vmatprep.mubr.bf16.mxu0 0
      %7962 = vmatmul.mubr.bf16.gmra.mrb[0].mxu0 %v7107
      %v7963 = vpop.f32.mrb[0].mxu0
      %v7964 = vadd.f32 %v7643, %v7963
      %v7965 = vpop.f32.mrb[0].mxu0
      %v7966 = vpop.f32.mrb[0].mxu0
      %v7967 = vadd.f32 %v7646, %v7966
      %v7968 = vpop.f32.mrb[0].mxu0
      %7969 = vmatprep.mubr.bf16.mxu0 0
      %7970 = vmatmul.mubr.bf16.gmra.mrb[0].mxu0 %v7110
      %v7971 = vpop.f32.mrb[0].mxu0
      %v7972 = vadd.f32 %v7651, %v7971
      %v7973 = vpop.f32.mrb[0].mxu0
      %v7974 = vpop.f32.mrb[0].mxu0
      %v7975 = vadd.f32 %v7654, %v7974
      %v7976 = vpop.f32.mrb[0].mxu0
      %7977 = vmatprep.mubr.bf16.mxu0 0
      %7978 = vmatmul.mubr.bf16.gmra.mrb[0].mxu0 %v7113
      %v7979 = vpop.f32.mrb[0].mxu0
      %v7980 = vadd.f32 %v7659, %v7979
      %v7981 = vpop.f32.mrb[0].mxu0
      %v7982 = vpop.f32.mrb[0].mxu0
      %v7983 = vadd.f32 %v7662, %v7982
      %v7984 = vpop.f32.mrb[0].mxu0
      %7985 = vmatprep.mubr.bf16.mxu0 0
      %7986 = vmatmul.mubr.bf16.gmra.mrb[0].mxu0 %v7116
      %v7987 = vpop.f32.mrb[0].mxu0
      %v7988 = vadd.f32 %v7667, %v7987
      %v7989 = vpop.f32.mrb[0].mxu0
      %v7990 = vpop.f32.mrb[0].mxu0
      %v7991 = vadd.f32 %v7670, %v7990
      %v7992 = vpop.f32.mrb[0].mxu0
      %7993 = vmatprep.mubr.bf16.mxu0 0
      %7994 = vmatmul.mubr.bf16.gmra.mrb[0].mxu0 %v7119
      %v7995 = vpop.f32.mrb[0].mxu0
      %v7996 = vadd.f32 %v7675, %v7995
      %v7997 = vpop.f32.mrb[0].mxu0
      %v7998 = vpop.f32.mrb[0].mxu0
      %v7999 = vadd.f32 %v7678, %v7998
      %v8000 = vpop.f32.mrb[0].mxu0
      %8001 = vmatprep.mubr.bf16.mxu0 0
      %8002 = vmatmul.mubr.bf16.gmra.mrb[0].mxu0 %v7122
      %v8003 = vpop.f32.mrb[0].mxu0
      %v8004 = vadd.f32 %v7683, %v8003
      %v8005 = vpop.f32.mrb[0].mxu0
      %v8006 = vpop.f32.mrb[0].mxu0
      %v8007 = vadd.f32 %v7686, %v8006
      %v8008 = vpop.f32.mrb[0].mxu0
      %8009 = vmatprep.mubr.bf16.mxu0 0
      %8010 = vmatmul.mubr.bf16.gmra.mrb[0].mxu0 %v7125
      %v8011 = vpop.f32.mrb[0].mxu0
      %v8012 = vadd.f32 %v7691, %v8011
      %v8013 = vpop.f32.mrb[0].mxu0
      %v8014 = vpop.f32.mrb[0].mxu0
      %v8015 = vadd.f32 %v7694, %v8014
      %v8016 = vpop.f32.mrb[0].mxu0
      %8017 = vmatprep.mubr.bf16.mxu0 0
      %8018 = vmatmul.mubr.bf16.gmra.mrb[0].mxu0 %v7128
      %v8019 = vpop.f32.mrb[0].mxu0
      %v8020 = vadd.f32 %v7699, %v8019
      %v8021 = vpop.f32.mrb[0].mxu0
      %v8022 = vpop.f32.mrb[0].mxu0
      %v8023 = vadd.f32 %v7702, %v8022
      %v8024 = vpop.f32.mrb[0].mxu0
      %8025 = vmatprep.mubr.bf16.mxu0 0
      %8026 = vmatmul.mubr.bf16.gmra.mrb[0].mxu0 %v7131
      %v8027 = vpop.f32.mrb[0].mxu0
      %v8028 = vadd.f32 %v7707, %v8027
      %v8029 = vpop.f32.mrb[0].mxu0
      %v8030 = vpop.f32.mrb[0].mxu0
      %v8031 = vadd.f32 %v7710, %v8030
      %v8032 = vpop.f32.mrb[0].mxu0
      %8033 = vmatprep.mubr.bf16.mxu0 0
      %8034 = vmatmul.mubr.bf16.gmra.mrb[0].mxu0 %v7134
      %v8035 = vpop.f32.mrb[0].mxu0
      %v8036 = vadd.f32 %v7715, %v8035
      %v8037 = vpop.f32.mrb[0].mxu0
      %v8038 = vpop.f32.mrb[0].mxu0
      %v8039 = vadd.f32 %v7718, %v8038
      %v8040 = vpop.f32.mrb[0].mxu0
      %8041 = vmatprep.mubr.bf16.mxu0 0
      %8042 = vmatmul.mubr.bf16.gmra.mrb[0].mxu0 %v7137
      %v8043 = vpop.f32.mrb[0].mxu0
      %v8044 = vadd.f32 %v7723, %v8043
      %v8045 = vpop.f32.mrb[0].mxu0
      %v8046 = vpop.f32.mrb[0].mxu0
      %v8047 = vadd.f32 %v7726, %v8046
      %v8048 = vpop.f32.mrb[0].mxu0
      %8049 = vmatprep.mubr.bf16.mxu0 0
      %8050 = vmatmul.mubr.bf16.gmra.mrb[0].mxu0 %v7140
      %v8051 = vpop.f32.mrb[0].mxu0
      %v8052 = vadd.f32 %v7731, %v8051
      %v8053 = vpop.f32.mrb[0].mxu0
      %v8054 = vpop.f32.mrb[0].mxu0
      %v8055 = vadd.f32 %v7734, %v8054
      %v8056 = vpop.f32.mrb[0].mxu0
      %8057 = vmatprep.mubr.bf16.mxu0 0
      %8058 = vmatmul.mubr.bf16.gmra.mrb[0].mxu0 %v7143
      %v8059 = vpop.f32.mrb[0].mxu0
      %v8060 = vadd.f32 %v7739, %v8059
      %v8061 = vpop.f32.mrb[0].mxu0
      %v8062 = vpop.f32.mrb[0].mxu0
      %v8063 = vadd.f32 %v7742, %v8062
      %v8064 = vpop.f32.mrb[0].mxu0
      %8065 = vmatprep.mubr.bf16.mxu0 0
      %8066 = vmatmul.mubr.bf16.gmra.mrb[0].mxu0 %v7146
      %v8067 = vpop.f32.mrb[0].mxu0
      %v8068 = vadd.f32 %v7747, %v8067
      %v8069 = vpop.f32.mrb[0].mxu0
      %v8070 = vpop.f32.mrb[0].mxu0
      %v8071 = vadd.f32 %v7750, %v8070
      %v8072 = vpop.f32.mrb[0].mxu0
      %8073 = vmatprep.mubr.bf16.mxu0 0
      %8074 = vmatmul.mubr.bf16.gmra.mrb[0].mxu0 %v7149
      %v8075 = vpop.f32.mrb[0].mxu0
      %v8076 = vadd.f32 %v7755, %v8075
      %v8077 = vpop.f32.mrb[0].mxu0
      %v8078 = vpop.f32.mrb[0].mxu0
      %v8079 = vadd.f32 %v7758, %v8078
      %v8080 = vpop.f32.mrb[0].mxu0
      %8081 = vmatprep.mubr.bf16.mxu0 0
      %8082 = vmatmul.mubr.bf16.gmra.mrb[0].mxu0 %v7152
      %v8083 = vpop.f32.mrb[0].mxu0
      %v8084 = vadd.f32 %v7763, %v8083
      %v8085 = vpop.f32.mrb[0].mxu0
      %v8086 = vpop.f32.mrb[0].mxu0
      %v8087 = vadd.f32 %v7766, %v8086
      %v8088 = vpop.f32.mrb[0].mxu0
      %8089 = vmatprep.mubr.bf16.mxu0 0
      %8090 = vmatmul.mubr.bf16.gmra.mrb[0].mxu0 %v7155
      %v8091 = vpop.f32.mrb[0].mxu0
      %v8092 = vadd.f32 %v7771, %v8091
      %v8093 = vpop.f32.mrb[0].mxu0
      %v8094 = vpop.f32.mrb[0].mxu0
      %v8095 = vadd.f32 %v7774, %v8094
      %v8096 = vpop.f32.mrb[0].mxu0
      %8097 = vmatprep.mubr.bf16.mxu0 0
      %8098 = vmatmul.mubr.bf16.gmra.mrb[0].mxu0 %v7158
      %v8099 = vpop.f32.mrb[0].mxu0
      %v8100 = vadd.f32 %v7779, %v8099
      %v8101 = vpop.f32.mrb[0].mxu0
      %v8102 = vpop.f32.mrb[0].mxu0
      %v8103 = vadd.f32 %v7782, %v8102
      %v8104 = vpop.f32.mrb[0].mxu0
      %8105 = vmatprep.mubr.bf16.mxu0 0
      %8106 = vmatmul.mubr.bf16.gmra.mrb[0].mxu0 %v7161
      %v8107 = vpop.f32.mrb[0].mxu0
      %v8108 = vadd.f32 %v7787, %v8107
      %v8109 = vpop.f32.mrb[0].mxu0
      %v8110 = vpop.f32.mrb[0].mxu0
      %v8111 = vadd.f32 %v7790, %v8110
      %v8112 = vpop.f32.mrb[0].mxu0
      %8113 = vmatprep.mubr.bf16.mxu0 0
      %8114 = vmatmul.mubr.bf16.gmra.mrb[0].mxu0 %v7164
      %v8115 = vpop.f32.mrb[0].mxu0
      %v8116 = vadd.f32 %v7795, %v8115
      %v8117 = vpop.f32.mrb[0].mxu0
      %v8118 = vpop.f32.mrb[0].mxu0
      %v8119 = vadd.f32 %v7798, %v8118
      %v8120 = vpop.f32.mrb[0].mxu0
      %8121 = vmatprep.mubr.bf16.mxu0 0
      %8122 = vmatmul.mubr.bf16.gmra.mrb[0].mxu0 %v7167
      %v8123 = vpop.f32.mrb[0].mxu0
      %v8124 = vadd.f32 %v7803, %v8123
      %v8125 = vpop.f32.mrb[0].mxu0
      %v8126 = vpop.f32.mrb[0].mxu0
      %v8127 = vadd.f32 %v7806, %v8126
      %v8128 = vpop.f32.mrb[0].mxu0
      %8129 = vmatprep.mubr.bf16.mxu0 0
      %8130 = vmatmul.mubr.bf16.gmra.mrb[0].mxu0 %v7170
      %v8131 = vpop.f32.mrb[0].mxu0
      %v8132 = vadd.f32 %v7811, %v8131
      %v8133 = vpop.f32.mrb[0].mxu0
      %v8134 = vpop.f32.mrb[0].mxu0
      %v8135 = vadd.f32 %v7814, %v8134
      %v8136 = vpop.f32.mrb[0].mxu0
      %8137 = vdwg.mxu0
      %8139 = vset.pattern.permute.xlu0 0
      %8140 = vperm.xlu0 %8139, %v7852
      %v8141 = vpop.permute.xlu0 %8140
      %8144 = vset.pattern.permute.xlu0 0
      %8145 = vperm.xlu0 %8144, %v7855
      %v8146 = vpop.permute.xlu0 %8145
      %8149 = vset.pattern.permute.xlu0 0
      %8150 = vperm.xlu0 %8149, %v7860
      %v8151 = vpop.permute.xlu0 %8150
      %8154 = vset.pattern.permute.xlu0 0
      %8155 = vperm.xlu0 %8154, %v7863
      %v8156 = vpop.permute.xlu0 %8155
      %8159 = vset.pattern.permute.xlu0 0
      %8160 = vperm.xlu0 %8159, %v7868
      %v8161 = vpop.permute.xlu0 %8160
      %8164 = vset.pattern.permute.xlu0 0
      %8165 = vperm.xlu0 %8164, %v7871
      %v8166 = vpop.permute.xlu0 %8165
      %8169 = vset.pattern.permute.xlu0 0
      %8170 = vperm.xlu0 %8169, %v7876
      %v8171 = vpop.permute.xlu0 %8170
      %8174 = vset.pattern.permute.xlu0 0
      %8175 = vperm.xlu0 %8174, %v7879
      %v8176 = vpop.permute.xlu0 %8175
      %8179 = vset.pattern.permute.xlu0 0
      %8180 = vperm.xlu0 %8179, %v7884
      %v8181 = vpop.permute.xlu0 %8180
      %8184 = vset.pattern.permute.xlu0 0
      %8185 = vperm.xlu0 %8184, %v7887
      %v8186 = vpop.permute.xlu0 %8185
      %8189 = vset.pattern.permute.xlu0 0
      %8190 = vperm.xlu0 %8189, %v7892
      %v8191 = vpop.permute.xlu0 %8190
      %8194 = vset.pattern.permute.xlu0 0
      %8195 = vperm.xlu0 %8194, %v7895
      %v8196 = vpop.permute.xlu0 %8195
      %8199 = vset.pattern.permute.xlu0 0
      %8200 = vperm.xlu0 %8199, %v7900
      %v8201 = vpop.permute.xlu0 %8200
      %8204 = vset.pattern.permute.xlu0 0
      %8205 = vperm.xlu0 %8204, %v7903
      %v8206 = vpop.permute.xlu0 %8205
      %8209 = vset.pattern.permute.xlu0 0
      %8210 = vperm.xlu0 %8209, %v7908
      %v8211 = vpop.permute.xlu0 %8210
      %8214 = vset.pattern.permute.xlu0 0
      %8215 = vperm.xlu0 %8214, %v7911
      %v8216 = vpop.permute.xlu0 %8215
      %8219 = vset.pattern.permute.xlu0 0
      %8220 = vperm.xlu0 %8219, %v7916
      %v8221 = vpop.permute.xlu0 %8220
      %8224 = vset.pattern.permute.xlu0 0
      %8225 = vperm.xlu0 %8224, %v7919
      %v8226 = vpop.permute.xlu0 %8225
      %8229 = vset.pattern.permute.xlu0 0
      %8230 = vperm.xlu0 %8229, %v7924
      %v8231 = vpop.permute.xlu0 %8230
      %8234 = vset.pattern.permute.xlu0 0
      %8235 = vperm.xlu0 %8234, %v7927
      %v8236 = vpop.permute.xlu0 %8235
      %8239 = vset.pattern.permute.xlu0 0
      %8240 = vperm.xlu0 %8239, %v7932
      %v8241 = vpop.permute.xlu0 %8240
      %8244 = vset.pattern.permute.xlu0 0
      %8245 = vperm.xlu0 %8244, %v7935
      %v8246 = vpop.permute.xlu0 %8245
      %8249 = vset.pattern.permute.xlu0 0
      %8250 = vperm.xlu0 %8249, %v7940
      %v8251 = vpop.permute.xlu0 %8250
      %8254 = vset.pattern.permute.xlu0 0
      %8255 = vperm.xlu0 %8254, %v7943
      %v8256 = vpop.permute.xlu0 %8255
      %8259 = vset.pattern.permute.xlu0 0
      %8260 = vperm.xlu0 %8259, %v7948
      %v8261 = vpop.permute.xlu0 %8260
      %8264 = vset.pattern.permute.xlu0 0
      %8265 = vperm.xlu0 %8264, %v7951
      %v8266 = vpop.permute.xlu0 %8265
      %8269 = vset.pattern.permute.xlu0 0
      %8270 = vperm.xlu0 %8269, %v7956
      %v8271 = vpop.permute.xlu0 %8270
      %8274 = vset.pattern.permute.xlu0 0
      %8275 = vperm.xlu0 %8274, %v7959
      %v8276 = vpop.permute.xlu0 %8275
      %8279 = vset.pattern.permute.xlu0 0
      %8280 = vperm.xlu0 %8279, %v7964
      %v8281 = vpop.permute.xlu0 %8280
      %8284 = vset.pattern.permute.xlu0 0
      %8285 = vperm.xlu0 %8284, %v7967
      %v8286 = vpop.permute.xlu0 %8285
      %8289 = vset.pattern.permute.xlu0 0
      %8290 = vperm.xlu0 %8289, %v7972
      %v8291 = vpop.permute.xlu0 %8290
      %8294 = vset.pattern.permute.xlu0 0
      %8295 = vperm.xlu0 %8294, %v7975
      %v8296 = vpop.permute.xlu0 %8295
      %8299 = vset.pattern.permute.xlu0 0
      %8300 = vperm.xlu0 %8299, %v7980
      %v8301 = vpop.permute.xlu0 %8300
      %8304 = vset.pattern.permute.xlu0 0
      %8305 = vperm.xlu0 %8304, %v7983
      %v8306 = vpop.permute.xlu0 %8305
      %8309 = vset.pattern.permute.xlu0 0
      %8310 = vperm.xlu0 %8309, %v7988
      %v8311 = vpop.permute.xlu0 %8310
      %8314 = vset.pattern.permute.xlu0 0
      %8315 = vperm.xlu0 %8314, %v7991
      %v8316 = vpop.permute.xlu0 %8315
      %8319 = vset.pattern.permute.xlu0 0
      %8320 = vperm.xlu0 %8319, %v7996
      %v8321 = vpop.permute.xlu0 %8320
      %8324 = vset.pattern.permute.xlu0 0
      %8325 = vperm.xlu0 %8324, %v7999
      %v8326 = vpop.permute.xlu0 %8325
      %8329 = vset.pattern.permute.xlu0 0
      %8330 = vperm.xlu0 %8329, %v8004
      %v8331 = vpop.permute.xlu0 %8330
      %8334 = vset.pattern.permute.xlu0 0
      %8335 = vperm.xlu0 %8334, %v8007
      %v8336 = vpop.permute.xlu0 %8335
      %8339 = vset.pattern.permute.xlu0 0
      %8340 = vperm.xlu0 %8339, %v8012
      %v8341 = vpop.permute.xlu0 %8340
      %8344 = vset.pattern.permute.xlu0 0
      %8345 = vperm.xlu0 %8344, %v8015
      %v8346 = vpop.permute.xlu0 %8345
      %8349 = vset.pattern.permute.xlu0 0
      %8350 = vperm.xlu0 %8349, %v8020
      %v8351 = vpop.permute.xlu0 %8350
      %8354 = vset.pattern.permute.xlu0 0
      %8355 = vperm.xlu0 %8354, %v8023
      %v8356 = vpop.permute.xlu0 %8355
      %8359 = vset.pattern.permute.xlu0 0
      %8360 = vperm.xlu0 %8359, %v8028
      %v8361 = vpop.permute.xlu0 %8360
      %8364 = vset.pattern.permute.xlu0 0
      %8365 = vperm.xlu0 %8364, %v8031
      %v8366 = vpop.permute.xlu0 %8365
      %8369 = vset.pattern.permute.xlu0 0
      %8370 = vperm.xlu0 %8369, %v8036
      %v8371 = vpop.permute.xlu0 %8370
      %8374 = vset.pattern.permute.xlu0 0
      %8375 = vperm.xlu0 %8374, %v8039
      %v8376 = vpop.permute.xlu0 %8375
      %8379 = vset.pattern.permute.xlu0 0
      %8380 = vperm.xlu0 %8379, %v8044
      %v8381 = vpop.permute.xlu0 %8380
      %8384 = vset.pattern.permute.xlu0 0
      %8385 = vperm.xlu0 %8384, %v8047
      %v8386 = vpop.permute.xlu0 %8385
      %8389 = vset.pattern.permute.xlu0 0
      %8390 = vperm.xlu0 %8389, %v8052
      %v8391 = vpop.permute.xlu0 %8390
      %8394 = vset.pattern.permute.xlu0 0
      %8395 = vperm.xlu0 %8394, %v8055
      %v8396 = vpop.permute.xlu0 %8395
      %8399 = vset.pattern.permute.xlu0 0
      %8400 = vperm.xlu0 %8399, %v8060
      %v8401 = vpop.permute.xlu0 %8400
      %8404 = vset.pattern.permute.xlu0 0
      %8405 = vperm.xlu0 %8404, %v8063
      %v8406 = vpop.permute.xlu0 %8405
      %8409 = vset.pattern.permute.xlu0 0
      %8410 = vperm.xlu0 %8409, %v8068
      %v8411 = vpop.permute.xlu0 %8410
      %8414 = vset.pattern.permute.xlu0 0
      %8415 = vperm.xlu0 %8414, %v8071
      %v8416 = vpop.permute.xlu0 %8415
      %8419 = vset.pattern.permute.xlu0 0
      %8420 = vperm.xlu0 %8419, %v8076
      %v8421 = vpop.permute.xlu0 %8420
      %8424 = vset.pattern.permute.xlu0 0
      %8425 = vperm.xlu0 %8424, %v8079
      %v8426 = vpop.permute.xlu0 %8425
      %8429 = vset.pattern.permute.xlu0 0
      %8430 = vperm.xlu0 %8429, %v8084
      %v8431 = vpop.permute.xlu0 %8430
      %8434 = vset.pattern.permute.xlu0 0
      %8435 = vperm.xlu0 %8434, %v8087
      %v8436 = vpop.permute.xlu0 %8435
      %8439 = vset.pattern.permute.xlu0 0
      %8440 = vperm.xlu0 %8439, %v8092
      %v8441 = vpop.permute.xlu0 %8440
      %8444 = vset.pattern.permute.xlu0 0
      %8445 = vperm.xlu0 %8444, %v8095
      %v8446 = vpop.permute.xlu0 %8445
      %8449 = vset.pattern.permute.xlu0 0
      %8450 = vperm.xlu0 %8449, %v8100
      %v8451 = vpop.permute.xlu0 %8450
      %8454 = vset.pattern.permute.xlu0 0
      %8455 = vperm.xlu0 %8454, %v8103
      %v8456 = vpop.permute.xlu0 %8455
      %8459 = vset.pattern.permute.xlu0 0
      %8460 = vperm.xlu0 %8459, %v8108
      %v8461 = vpop.permute.xlu0 %8460
      %8464 = vset.pattern.permute.xlu0 0
      %8465 = vperm.xlu0 %8464, %v8111
      %v8466 = vpop.permute.xlu0 %8465
      %8469 = vset.pattern.permute.xlu0 0
      %8470 = vperm.xlu0 %8469, %v8116
      %v8471 = vpop.permute.xlu0 %8470
      %8474 = vset.pattern.permute.xlu0 0
      %8475 = vperm.xlu0 %8474, %v8119
      %v8476 = vpop.permute.xlu0 %8475
      %8479 = vset.pattern.permute.xlu0 0
      %8480 = vperm.xlu0 %8479, %v8124
      %v8481 = vpop.permute.xlu0 %8480
      %8484 = vset.pattern.permute.xlu0 0
      %8485 = vperm.xlu0 %8484, %v8127
      %v8486 = vpop.permute.xlu0 %8485
      %8489 = vset.pattern.permute.xlu0 0
      %8490 = vperm.xlu0 %8489, %v8132
      %v8491 = vpop.permute.xlu0 %8490
      %8494 = vset.pattern.permute.xlu0 0
      %8495 = vperm.xlu0 %8494, %v8135
      %v8496 = vpop.permute.xlu0 %8495
      %v8498 = vmul.f32 %v8141, %v3135
      %v8499 = vmul.f32 %v8146, %v3135
      %v8500 = vmul.f32 %v8151, %v3135
      %v8501 = vmul.f32 %v8156, %v3135
      %v8502 = vmul.f32 %v8161, %v3135
      %v8503 = vmul.f32 %v8166, %v3135
      %v8504 = vmul.f32 %v8171, %v3135
      %v8505 = vmul.f32 %v8176, %v3135
      %v8506 = vmul.f32 %v8181, %v3135
      %v8507 = vmul.f32 %v8186, %v3135
      %v8508 = vmul.f32 %v8191, %v3135
      %v8509 = vmul.f32 %v8196, %v3135
      %v8510 = vmul.f32 %v8201, %v3135
      %v8511 = vmul.f32 %v8206, %v3135
      %v8512 = vmul.f32 %v8211, %v3135
      %v8513 = vmul.f32 %v8216, %v3135
      %v8514 = vmul.f32 %v8221, %v3135
      %v8515 = vmul.f32 %v8226, %v3135
      %v8516 = vmul.f32 %v8231, %v3135
      %v8517 = vmul.f32 %v8236, %v3135
      %v8518 = vmul.f32 %v8241, %v3135
      %v8519 = vmul.f32 %v8246, %v3135
      %v8520 = vmul.f32 %v8251, %v3135
      %v8521 = vmul.f32 %v8256, %v3135
      %v8522 = vmul.f32 %v8261, %v3135
      %v8523 = vmul.f32 %v8266, %v3135
      %v8524 = vmul.f32 %v8271, %v3135
      %v8525 = vmul.f32 %v8276, %v3135
      %v8526 = vmul.f32 %v8281, %v3135
      %v8527 = vmul.f32 %v8286, %v3135
      %v8528 = vmul.f32 %v8291, %v3135
      %v8529 = vmul.f32 %v8296, %v3135
      %v8530 = vmul.f32 %v8301, %v3135
      %v8531 = vmul.f32 %v8306, %v3135
      %v8532 = vmul.f32 %v8311, %v3135
      %v8533 = vmul.f32 %v8316, %v3135
      %v8534 = vmul.f32 %v8321, %v3135
      %v8535 = vmul.f32 %v8326, %v3135
      %v8536 = vmul.f32 %v8331, %v3135
      %v8537 = vmul.f32 %v8336, %v3135
      %v8538 = vmul.f32 %v8341, %v3135
      %v8539 = vmul.f32 %v8346, %v3135
      %v8540 = vmul.f32 %v8351, %v3135
      %v8541 = vmul.f32 %v8356, %v3135
      %v8542 = vmul.f32 %v8361, %v3135
      %v8543 = vmul.f32 %v8366, %v3135
      %v8544 = vmul.f32 %v8371, %v3135
      %v8545 = vmul.f32 %v8376, %v3135
      %v8546 = vmul.f32 %v8381, %v3135
      %v8547 = vmul.f32 %v8386, %v3135
      %v8548 = vmul.f32 %v8391, %v3135
      %v8549 = vmul.f32 %v8396, %v3135
      %v8550 = vmul.f32 %v8401, %v3135
      %v8551 = vmul.f32 %v8406, %v3135
      %v8552 = vmul.f32 %v8411, %v3135
      %v8553 = vmul.f32 %v8416, %v3135
      %v8554 = vmul.f32 %v8421, %v3135
      %v8555 = vmul.f32 %v8426, %v3135
      %v8556 = vmul.f32 %v8431, %v3135
      %v8557 = vmul.f32 %v8436, %v3135
      %v8558 = vmul.f32 %v8441, %v3135
      %v8559 = vmul.f32 %v8446, %v3135
      %v8560 = vmul.f32 %v8451, %v3135
      %v8561 = vmul.f32 %v8456, %v3135
      %v8562 = vmul.f32 %v8461, %v3135
      %v8563 = vmul.f32 %v8466, %v3135
      %v8564 = vmul.f32 %v8471, %v3135
      %v8565 = vmul.f32 %v8476, %v3135
      %v8566 = vmul.f32 %v8481, %v3135
      %v8567 = vmul.f32 %v8486, %v3135
      %v8568 = vmul.f32 %v8491, %v3135
      %v8569 = vmul.f32 %v8496, %v3135
      %v8570 = vadd.f32 %v8498, %v3213
      %v8571 = vadd.f32 %v8499, %v3213
      %v8572 = vadd.f32 %v8500, %v3213
      %v8573 = vadd.f32 %v8501, %v3213
      %v8574 = vadd.f32 %v8502, %v3213
      %v8575 = vadd.f32 %v8503, %v3213
      %v8576 = vadd.f32 %v8504, %v3213
      %v8577 = vadd.f32 %v8505, %v3213
      %v8578 = vadd.f32 %v8506, %v3213
      %v8579 = vadd.f32 %v8507, %v3213
      %v8580 = vadd.f32 %v8508, %v3213
      %v8581 = vadd.f32 %v8509, %v3213
      %v8582 = vadd.f32 %v8510, %v3213
      %v8583 = vadd.f32 %v8511, %v3213
      %v8584 = vadd.f32 %v8512, %v3213
      %v8585 = vadd.f32 %v8513, %v3213
      %v8586 = vadd.f32 %v8514, %v3213
      %v8587 = vadd.f32 %v8515, %v3213
      %v8588 = vadd.f32 %v8516, %v3213
      %v8589 = vadd.f32 %v8517, %v3213
      %v8590 = vadd.f32 %v8518, %v3213
      %v8591 = vadd.f32 %v8519, %v3213
      %v8592 = vadd.f32 %v8520, %v3213
      %v8593 = vadd.f32 %v8521, %v3213
      %v8594 = vadd.f32 %v8522, %v3213
      %v8595 = vadd.f32 %v8523, %v3213
      %v8596 = vadd.f32 %v8524, %v3213
      %v8597 = vadd.f32 %v8525, %v3213
      %v8598 = vadd.f32 %v8526, %v3213
      %v8599 = vadd.f32 %v8527, %v3213
      %v8600 = vadd.f32 %v8528, %v3213
      %v8601 = vadd.f32 %v8529, %v3213
      %v8602 = vadd.f32 %v8530, %v3213
      %v8603 = vadd.f32 %v8531, %v3213
      %v8604 = vadd.f32 %v8532, %v3213
      %v8605 = vadd.f32 %v8533, %v3213
      %v8606 = vadd.f32 %v8534, %v3213
      %v8607 = vadd.f32 %v8535, %v3213
      %v8608 = vadd.f32 %v8536, %v3213
      %v8609 = vadd.f32 %v8537, %v3213
      %v8610 = vadd.f32 %v8538, %v3213
      %v8611 = vadd.f32 %v8539, %v3213
      %v8612 = vadd.f32 %v8540, %v3213
      %v8613 = vadd.f32 %v8541, %v3213
      %v8614 = vadd.f32 %v8542, %v3213
      %v8615 = vadd.f32 %v8543, %v3213
      %v8616 = vadd.f32 %v8544, %v3213
      %v8617 = vadd.f32 %v8545, %v3213
      %v8618 = vadd.f32 %v8546, %v3213
      %v8619 = vadd.f32 %v8547, %v3213
      %v8620 = vadd.f32 %v8548, %v3213
      %v8621 = vadd.f32 %v8549, %v3213
      %v8622 = vadd.f32 %v8550, %v3213
      %v8623 = vadd.f32 %v8551, %v3213
      %v8624 = vadd.f32 %v8552, %v3213
      %v8625 = vadd.f32 %v8553, %v3213
      %v8626 = vadd.f32 %v8554, %v3213
      %v8627 = vadd.f32 %v8555, %v3213
      %v8628 = vadd.f32 %v8556, %v3213
      %v8629 = vadd.f32 %v8557, %v3213
      %v8630 = vadd.f32 %v8558, %v3213
      %v8631 = vadd.f32 %v8559, %v3213
      %v8632 = vadd.f32 %v8560, %v3213
      %v8633 = vadd.f32 %v8561, %v3213
      %v8634 = vadd.f32 %v8562, %v3213
      %v8635 = vadd.f32 %v8563, %v3213
      %v8636 = vadd.f32 %v8564, %v3213
      %v8637 = vadd.f32 %v8565, %v3213
      %v8638 = vadd.f32 %v8566, %v3213
      %v8639 = vadd.f32 %v8567, %v3213
      %v8640 = vadd.f32 %v8568, %v3213
      %v8641 = vadd.f32 %v8569, %v3213
      %v8642 = vmax.f32 %v8570, 0.0
      %v8643 = vmax.f32 %v8571, 0.0
      %v8644 = vmax.f32 %v8572, 0.0
      %v8645 = vmax.f32 %v8573, 0.0
      %v8646 = vmax.f32 %v8574, 0.0
      %v8647 = vmax.f32 %v8575, 0.0
      %v8648 = vmax.f32 %v8576, 0.0
      %v8649 = vmax.f32 %v8577, 0.0
      %v8650 = vmax.f32 %v8578, 0.0
      %v8651 = vmax.f32 %v8579, 0.0
      %v8652 = vmax.f32 %v8580, 0.0
      %v8653 = vmax.f32 %v8581, 0.0
      %v8654 = vmax.f32 %v8582, 0.0
      %v8655 = vmax.f32 %v8583, 0.0
      %v8656 = vmax.f32 %v8584, 0.0
      %v8657 = vmax.f32 %v8585, 0.0
      %v8658 = vmax.f32 %v8586, 0.0
      %v8659 = vmax.f32 %v8587, 0.0
      %v8660 = vmax.f32 %v8588, 0.0
      %v8661 = vmax.f32 %v8589, 0.0
      %v8662 = vmax.f32 %v8590, 0.0
      %v8663 = vmax.f32 %v8591, 0.0
      %v8664 = vmax.f32 %v8592, 0.0
      %v8665 = vmax.f32 %v8593, 0.0
      %v8666 = vmax.f32 %v8594, 0.0
      %v8667 = vmax.f32 %v8595, 0.0
      %v8668 = vmax.f32 %v8596, 0.0
      %v8669 = vmax.f32 %v8597, 0.0
      %v8670 = vmax.f32 %v8598, 0.0
      %v8671 = vmax.f32 %v8599, 0.0
      %v8672 = vmax.f32 %v8600, 0.0
      %v8673 = vmax.f32 %v8601, 0.0
      %v8674 = vmax.f32 %v8602, 0.0
      %v8675 = vmax.f32 %v8603, 0.0
      %v8676 = vmax.f32 %v8604, 0.0
      %v8677 = vmax.f32 %v8605, 0.0
      %v8678 = vmax.f32 %v8606, 0.0
      %v8679 = vmax.f32 %v8607, 0.0
      %v8680 = vmax.f32 %v8608, 0.0
      %v8681 = vmax.f32 %v8609, 0.0
      %v8682 = vmax.f32 %v8610, 0.0
      %v8683 = vmax.f32 %v8611, 0.0
      %v8684 = vmax.f32 %v8612, 0.0
      %v8685 = vmax.f32 %v8613, 0.0
      %v8686 = vmax.f32 %v8614, 0.0
      %v8687 = vmax.f32 %v8615, 0.0
      %v8688 = vmax.f32 %v8616, 0.0
      %v8689 = vmax.f32 %v8617, 0.0
      %v8690 = vmax.f32 %v8618, 0.0
      %v8691 = vmax.f32 %v8619, 0.0
      %v8692 = vmax.f32 %v8620, 0.0
      %v8693 = vmax.f32 %v8621, 0.0
      %v8694 = vmax.f32 %v8622, 0.0
      %v8695 = vmax.f32 %v8623, 0.0
      %v8696 = vmax.f32 %v8624, 0.0
      %v8697 = vmax.f32 %v8625, 0.0
      %v8698 = vmax.f32 %v8626, 0.0
      %v8699 = vmax.f32 %v8627, 0.0
      %v8700 = vmax.f32 %v8628, 0.0
      %v8701 = vmax.f32 %v8629, 0.0
      %v8702 = vmax.f32 %v8630, 0.0
      %v8703 = vmax.f32 %v8631, 0.0
      %v8704 = vmax.f32 %v8632, 0.0
      %v8705 = vmax.f32 %v8633, 0.0
      %v8706 = vmax.f32 %v8634, 0.0
      %v8707 = vmax.f32 %v8635, 0.0
      %v8708 = vmax.f32 %v8636, 0.0
      %v8709 = vmax.f32 %v8637, 0.0
      %v8710 = vmax.f32 %v8638, 0.0
      %v8711 = vmax.f32 %v8639, 0.0
      %v8712 = vmax.f32 %v8640, 0.0
      %v8713 = vmax.f32 %v8641, 0.0
      %v8715 = vsel %vm3359, %v8642, 0
      %v8718 = vsel %vm3359, %v8643, 0
      %v8721 = vsel %vm3359, %v8644, 0
      %v8724 = vsel %vm3359, %v8645, 0
      %v8727 = vsel %vm3359, %v8646, 0
      %v8730 = vsel %vm3359, %v8647, 0
      %v8733 = vsel %vm3359, %v8648, 0
      %v8736 = vsel %vm3359, %v8649, 0
      %v8739 = vsel %vm3359, %v8650, 0
      %v8742 = vsel %vm3359, %v8651, 0
      %v8745 = vsel %vm3359, %v8652, 0
      %v8748 = vsel %vm3359, %v8653, 0
      %v8751 = vsel %vm3359, %v8654, 0
      %v8754 = vsel %vm3359, %v8655, 0
      %v8757 = vsel %vm3359, %v8656, 0
      %v8760 = vsel %vm3359, %v8657, 0
      %v8763 = vsel %vm3359, %v8658, 0
      %v8766 = vsel %vm3359, %v8659, 0
      %v8769 = vsel %vm3359, %v8660, 0
      %v8772 = vsel %vm3359, %v8661, 0
      %v8775 = vsel %vm3359, %v8662, 0
      %v8778 = vsel %vm3359, %v8663, 0
      %v8781 = vsel %vm3359, %v8664, 0
      %v8784 = vsel %vm3359, %v8665, 0
      %v8787 = vsel %vm3359, %v8666, 0
      %v8790 = vsel %vm3359, %v8667, 0
      %v8793 = vsel %vm3359, %v8668, 0
      %v8796 = vsel %vm3359, %v8669, 0
      %v8799 = vsel %vm3359, %v8670, 0
      %v8802 = vsel %vm3359, %v8671, 0
      %v8805 = vsel %vm3359, %v8672, 0
      %v8808 = vsel %vm3359, %v8673, 0
      %v8811 = vsel %vm3359, %v8674, 0
      %v8814 = vsel %vm3359, %v8675, 0
      %v8817 = vsel %vm3359, %v8676, 0
      %v8820 = vsel %vm3359, %v8677, 0
      %v8823 = vsel %vm3359, %v8678, 0
      %v8826 = vsel %vm3359, %v8679, 0
      %v8829 = vsel %vm3359, %v8680, 0
      %v8832 = vsel %vm3359, %v8681, 0
      %v8835 = vsel %vm3359, %v8682, 0
      %v8838 = vsel %vm3359, %v8683, 0
      %v8841 = vsel %vm3359, %v8684, 0
      %v8844 = vsel %vm3359, %v8685, 0
      %v8847 = vsel %vm3359, %v8686, 0
      %v8850 = vsel %vm3359, %v8687, 0
      %v8853 = vsel %vm3359, %v8688, 0
      %v8856 = vsel %vm3359, %v8689, 0
      %v8859 = vsel %vm3359, %v8690, 0
      %v8862 = vsel %vm3359, %v8691, 0
      %v8865 = vsel %vm3359, %v8692, 0
      %v8868 = vsel %vm3359, %v8693, 0
      %v8871 = vsel %vm3359, %v8694, 0
      %v8874 = vsel %vm3359, %v8695, 0
      %v8877 = vsel %vm3359, %v8696, 0
      %v8880 = vsel %vm3359, %v8697, 0
      %v8883 = vsel %vm3359, %v8698, 0
      %v8886 = vsel %vm3359, %v8699, 0
      %v8889 = vsel %vm3359, %v8700, 0
      %v8892 = vsel %vm3359, %v8701, 0
      %v8895 = vsel %vm3359, %v8702, 0
      %v8898 = vsel %vm3359, %v8703, 0
      %v8901 = vsel %vm3359, %v8704, 0
      %v8904 = vsel %vm3359, %v8705, 0
      %v8907 = vsel %vm3359, %v8706, 0
      %v8910 = vsel %vm3359, %v8707, 0
      %v8913 = vsel %vm3359, %v8708, 0
      %v8916 = vsel %vm3359, %v8709, 0
      %v8919 = vsel %vm3359, %v8710, 0
      %v8922 = vsel %vm3359, %v8711, 0
      %v8925 = vsel %vm3359, %v8712, 0
      %v8928 = vsel %vm3359, %v8713, 0
      %8930 = vmatprep.subr.mxu0 0.0
      %8931 = vmatpush1.msra.mxu0 %v290
      %8932 = vmatprep.subr.mxu0 0.0
      %8933 = vmatpush1.msra.mxu0 0.0
      %8934 = vmatprep.subr.mxu0 0.0
      %8935 = vmatpush1.msra.mxu0 0.0
      %8936 = vmatprep.subr.mxu0 0.0
      %8937 = vmatpush1.msra.mxu0 0.0
      %8938 = vmatprep.subr.mxu0 0.0
      %8939 = vmatpush1.msra.mxu0 0.0
      %8940 = vmatprep.subr.mxu0 0.0
      %8941 = vmatpush1.msra.mxu0 0.0
      %8942 = vmatprep.subr.mxu0 0.0
      %8943 = vmatpush1.msra.mxu0 0.0
      %8944 = vmatprep.subr.mxu0 0.0
      %8945 = vmatpush1.msra.mxu0 0.0
      %8946 = vmatprep.subr.mxu0 0.0
      %8947 = vmatpush1.msra.mxu0 0.0
      %8948 = vmatprep.subr.mxu0 0.0
      %8949 = vmatpush1.msra.mxu0 0.0
      %8950 = vmatprep.subr.mxu0 0.0
      %8951 = vmatpush1.msra.mxu0 0.0
      %8952 = vmatprep.subr.mxu0 0.0
      %8953 = vmatpush1.msra.mxu0 0.0
      %8954 = vmatprep.subr.mxu0 0.0
      %8955 = vmatpush1.msra.mxu0 0.0
      %8956 = vmatprep.subr.mxu0 0.0
      %8957 = vmatpush1.msra.mxu0 0.0
      %8958 = vmatprep.subr.mxu0 0.0
      %8959 = vmatpush1.msra.mxu0 0.0
      %8960 = vmatprep.subr.mxu0 0.0
      %8961 = vmatpush1.msra.mxu0 0.0
      %8962 = vmatprep.subr.mxu0 0.0
      %8963 = vmatpush1.msra.mxu0 0.0
      %8964 = vmatprep.subr.mxu0 0.0
      %8965 = vmatpush1.msra.mxu0 0.0
      %8966 = vmatprep.subr.mxu0 0.0
      %8967 = vmatpush1.msra.mxu0 0.0
      %8968 = vmatprep.subr.mxu0 0.0
      %8969 = vmatpush1.msra.mxu0 0.0
      %8970 = vmatprep.subr.mxu0 0.0
      %8971 = vmatpush1.msra.mxu0 0.0
      %8972 = vmatprep.subr.mxu0 0.0
      %8973 = vmatpush1.msra.mxu0 0.0
      %8974 = vmatprep.subr.mxu0 0.0
      %8975 = vmatpush1.msra.mxu0 0.0
      %8976 = vmatprep.subr.mxu0 0.0
      %8977 = vmatpush1.msra.mxu0 0.0
      %8978 = vmatprep.subr.mxu0 0.0
      %8979 = vmatpush1.msra.mxu0 0.0
      %8980 = vmatprep.subr.mxu0 0.0
      %8981 = vmatpush1.msra.mxu0 0.0
      %8982 = vmatprep.subr.mxu0 0.0
      %8983 = vmatpush1.msra.mxu0 0.0
      %8984 = vmatprep.subr.mxu0 0.0
      %8985 = vmatpush1.msra.mxu0 0.0
      %8986 = vmatprep.subr.mxu0 0.0
      %8987 = vmatpush1.msra.mxu0 0.0
      %8988 = vmatprep.subr.mxu0 0.0
      %8989 = vmatpush1.msra.mxu0 0.0
      %8990 = vmatprep.subr.mxu0 0.0
      %8991 = vmatpush1.msra.mxu0 0.0
      %8992 = vmatprep.subr.mxu0 0.0
      %8993 = vmatpush1.msra.mxu0 0.0
      %8994 = vmatprep.mubr.f32.mxu0 0.0
      %8995 = vmatmul.mubr.f32.gmra.mrb[0].mxu0 %v8715
      %v8996 = vpop.f32.mrb[0].mxu0
      %v8997 = vadd.f32 0.0, %v8996
      %v8998 = vpop.f32.mrb[0].mxu0
      %8999 = vmatprep.mubr.f32.mxu0 0.0
      %9000 = vmatmul.mubr.f32.gmra.mrb[0].mxu0 %v8718
      %v9001 = vpop.f32.mrb[0].mxu0
      %v9002 = vadd.f32 0.0, %v9001
      %v9003 = vpop.f32.mrb[0].mxu0
      %9004 = vmatprep.mubr.f32.mxu0 0.0
      %9005 = vmatmul.mubr.f32.gmra.mrb[0].mxu0 %v8721
      %v9006 = vpop.f32.mrb[0].mxu0
      %v9007 = vadd.f32 0.0, %v9006
      %v9008 = vpop.f32.mrb[0].mxu0
      %9009 = vmatprep.mubr.f32.mxu0 0.0
      %9010 = vmatmul.mubr.f32.gmra.mrb[0].mxu0 %v8724
      %v9011 = vpop.f32.mrb[0].mxu0
      %v9012 = vadd.f32 0.0, %v9011
      %v9013 = vpop.f32.mrb[0].mxu0
      %9014 = vmatprep.mubr.f32.mxu0 0.0
      %9015 = vmatmul.mubr.f32.gmra.mrb[0].mxu0 %v8727
      %v9016 = vpop.f32.mrb[0].mxu0
      %v9017 = vadd.f32 0.0, %v9016
      %v9018 = vpop.f32.mrb[0].mxu0
      %9019 = vmatprep.mubr.f32.mxu0 0.0
      %9020 = vmatmul.mubr.f32.gmra.mrb[0].mxu0 %v8730
      %v9021 = vpop.f32.mrb[0].mxu0
      %v9022 = vadd.f32 0.0, %v9021
      %v9023 = vpop.f32.mrb[0].mxu0
      %9024 = vmatprep.mubr.f32.mxu0 0.0
      %9025 = vmatmul.mubr.f32.gmra.mrb[0].mxu0 %v8733
      %v9026 = vpop.f32.mrb[0].mxu0
      %v9027 = vadd.f32 0.0, %v9026
      %v9028 = vpop.f32.mrb[0].mxu0
      %9029 = vmatprep.mubr.f32.mxu0 0.0
      %9030 = vmatmul.mubr.f32.gmra.mrb[0].mxu0 %v8736
      %v9031 = vpop.f32.mrb[0].mxu0
      %v9032 = vadd.f32 0.0, %v9031
      %v9033 = vpop.f32.mrb[0].mxu0
      %9034 = vmatprep.mubr.f32.mxu0 0.0
      %9035 = vmatmul.mubr.f32.gmra.mrb[0].mxu0 %v8739
      %v9036 = vpop.f32.mrb[0].mxu0
      %v9037 = vadd.f32 0.0, %v9036
      %v9038 = vpop.f32.mrb[0].mxu0
      %9039 = vmatprep.mubr.f32.mxu0 0.0
      %9040 = vmatmul.mubr.f32.gmra.mrb[0].mxu0 %v8742
      %v9041 = vpop.f32.mrb[0].mxu0
      %v9042 = vadd.f32 0.0, %v9041
      %v9043 = vpop.f32.mrb[0].mxu0
      %9044 = vmatprep.mubr.f32.mxu0 0.0
      %9045 = vmatmul.mubr.f32.gmra.mrb[0].mxu0 %v8745
      %v9046 = vpop.f32.mrb[0].mxu0
      %v9047 = vadd.f32 0.0, %v9046
      %v9048 = vpop.f32.mrb[0].mxu0
      %9049 = vmatprep.mubr.f32.mxu0 0.0
      %9050 = vmatmul.mubr.f32.gmra.mrb[0].mxu0 %v8748
      %v9051 = vpop.f32.mrb[0].mxu0
      %v9052 = vadd.f32 0.0, %v9051
      %v9053 = vpop.f32.mrb[0].mxu0
      %9054 = vmatprep.mubr.f32.mxu0 0.0
      %9055 = vmatmul.mubr.f32.gmra.mrb[0].mxu0 %v8751
      %v9056 = vpop.f32.mrb[0].mxu0
      %v9057 = vadd.f32 0.0, %v9056
      %v9058 = vpop.f32.mrb[0].mxu0
      %9059 = vmatprep.mubr.f32.mxu0 0.0
      %9060 = vmatmul.mubr.f32.gmra.mrb[0].mxu0 %v8754
      %v9061 = vpop.f32.mrb[0].mxu0
      %v9062 = vadd.f32 0.0, %v9061
      %v9063 = vpop.f32.mrb[0].mxu0
      %9064 = vmatprep.mubr.f32.mxu0 0.0
      %9065 = vmatmul.mubr.f32.gmra.mrb[0].mxu0 %v8757
      %v9066 = vpop.f32.mrb[0].mxu0
      %v9067 = vadd.f32 0.0, %v9066
      %v9068 = vpop.f32.mrb[0].mxu0
      %9069 = vmatprep.mubr.f32.mxu0 0.0
      %9070 = vmatmul.mubr.f32.gmra.mrb[0].mxu0 %v8760
      %v9071 = vpop.f32.mrb[0].mxu0
      %v9072 = vadd.f32 0.0, %v9071
      %v9073 = vpop.f32.mrb[0].mxu0
      %9074 = vmatprep.mubr.f32.mxu0 0.0
      %9075 = vmatmul.mubr.f32.gmra.mrb[0].mxu0 %v8763
      %v9076 = vpop.f32.mrb[0].mxu0
      %v9077 = vadd.f32 0.0, %v9076
      %v9078 = vpop.f32.mrb[0].mxu0
      %9079 = vmatprep.mubr.f32.mxu0 0.0
      %9080 = vmatmul.mubr.f32.gmra.mrb[0].mxu0 %v8766
      %v9081 = vpop.f32.mrb[0].mxu0
      %v9082 = vadd.f32 0.0, %v9081
      %v9083 = vpop.f32.mrb[0].mxu0
      %9084 = vmatprep.mubr.f32.mxu0 0.0
      %9085 = vmatmul.mubr.f32.gmra.mrb[0].mxu0 %v8769
      %v9086 = vpop.f32.mrb[0].mxu0
      %v9087 = vadd.f32 0.0, %v9086
      %v9088 = vpop.f32.mrb[0].mxu0
      %9089 = vmatprep.mubr.f32.mxu0 0.0
      %9090 = vmatmul.mubr.f32.gmra.mrb[0].mxu0 %v8772
      %v9091 = vpop.f32.mrb[0].mxu0
      %v9092 = vadd.f32 0.0, %v9091
      %v9093 = vpop.f32.mrb[0].mxu0
      %9094 = vmatprep.mubr.f32.mxu0 0.0
      %9095 = vmatmul.mubr.f32.gmra.mrb[0].mxu0 %v8775
      %v9096 = vpop.f32.mrb[0].mxu0
      %v9097 = vadd.f32 0.0, %v9096
      %v9098 = vpop.f32.mrb[0].mxu0
      %9099 = vmatprep.mubr.f32.mxu0 0.0
      %9100 = vmatmul.mubr.f32.gmra.mrb[0].mxu0 %v8778
      %v9101 = vpop.f32.mrb[0].mxu0
      %v9102 = vadd.f32 0.0, %v9101
      %v9103 = vpop.f32.mrb[0].mxu0
      %9104 = vmatprep.mubr.f32.mxu0 0.0
      %9105 = vmatmul.mubr.f32.gmra.mrb[0].mxu0 %v8781
      %v9106 = vpop.f32.mrb[0].mxu0
      %v9107 = vadd.f32 0.0, %v9106
      %v9108 = vpop.f32.mrb[0].mxu0
      %9109 = vmatprep.mubr.f32.mxu0 0.0
      %9110 = vmatmul.mubr.f32.gmra.mrb[0].mxu0 %v8784
      %v9111 = vpop.f32.mrb[0].mxu0
      %v9112 = vadd.f32 0.0, %v9111
      %v9113 = vpop.f32.mrb[0].mxu0
      %9114 = vmatprep.mubr.f32.mxu0 0.0
      %9115 = vmatmul.mubr.f32.gmra.mrb[0].mxu0 %v8787
      %v9116 = vpop.f32.mrb[0].mxu0
      %v9117 = vadd.f32 0.0, %v9116
      %v9118 = vpop.f32.mrb[0].mxu0
      %9119 = vmatprep.mubr.f32.mxu0 0.0
      %9120 = vmatmul.mubr.f32.gmra.mrb[0].mxu0 %v8790
      %v9121 = vpop.f32.mrb[0].mxu0
      %v9122 = vadd.f32 0.0, %v9121
      %v9123 = vpop.f32.mrb[0].mxu0
      %9124 = vmatprep.mubr.f32.mxu0 0.0
      %9125 = vmatmul.mubr.f32.gmra.mrb[0].mxu0 %v8793
      %v9126 = vpop.f32.mrb[0].mxu0
      %v9127 = vadd.f32 0.0, %v9126
      %v9128 = vpop.f32.mrb[0].mxu0
      %9129 = vmatprep.mubr.f32.mxu0 0.0
      %9130 = vmatmul.mubr.f32.gmra.mrb[0].mxu0 %v8796
      %v9131 = vpop.f32.mrb[0].mxu0
      %v9132 = vadd.f32 0.0, %v9131
      %v9133 = vpop.f32.mrb[0].mxu0
      %9134 = vmatprep.mubr.f32.mxu0 0.0
      %9135 = vmatmul.mubr.f32.gmra.mrb[0].mxu0 %v8799
      %v9136 = vpop.f32.mrb[0].mxu0
      %v9137 = vadd.f32 0.0, %v9136
      %v9138 = vpop.f32.mrb[0].mxu0
      %9139 = vmatprep.mubr.f32.mxu0 0.0
      %9140 = vmatmul.mubr.f32.gmra.mrb[0].mxu0 %v8802
      %v9141 = vpop.f32.mrb[0].mxu0
      %v9142 = vadd.f32 0.0, %v9141
      %v9143 = vpop.f32.mrb[0].mxu0
      %9144 = vmatprep.mubr.f32.mxu0 0.0
      %9145 = vmatmul.mubr.f32.gmra.mrb[0].mxu0 %v8805
      %v9146 = vpop.f32.mrb[0].mxu0
      %v9147 = vadd.f32 0.0, %v9146
      %v9148 = vpop.f32.mrb[0].mxu0
      %9149 = vmatprep.mubr.f32.mxu0 0.0
      %9150 = vmatmul.mubr.f32.gmra.mrb[0].mxu0 %v8808
      %v9151 = vpop.f32.mrb[0].mxu0
      %v9152 = vadd.f32 0.0, %v9151
      %v9153 = vpop.f32.mrb[0].mxu0
      %9154 = vmatprep.mubr.f32.mxu0 0.0
      %9155 = vmatmul.mubr.f32.gmra.mrb[0].mxu0 %v8811
      %v9156 = vpop.f32.mrb[0].mxu0
      %v9157 = vadd.f32 0.0, %v9156
      %v9158 = vpop.f32.mrb[0].mxu0
      %9159 = vmatprep.mubr.f32.mxu0 0.0
      %9160 = vmatmul.mubr.f32.gmra.mrb[0].mxu0 %v8814
      %v9161 = vpop.f32.mrb[0].mxu0
      %v9162 = vadd.f32 0.0, %v9161
      %v9163 = vpop.f32.mrb[0].mxu0
      %9164 = vmatprep.mubr.f32.mxu0 0.0
      %9165 = vmatmul.mubr.f32.gmra.mrb[0].mxu0 %v8817
      %v9166 = vpop.f32.mrb[0].mxu0
      %v9167 = vadd.f32 0.0, %v9166
      %v9168 = vpop.f32.mrb[0].mxu0
      %9169 = vmatprep.mubr.f32.mxu0 0.0
      %9170 = vmatmul.mubr.f32.gmra.mrb[0].mxu0 %v8820
      %v9171 = vpop.f32.mrb[0].mxu0
      %v9172 = vadd.f32 0.0, %v9171
      %v9173 = vpop.f32.mrb[0].mxu0
      %9174 = vmatprep.mubr.f32.mxu0 0.0
      %9175 = vmatmul.mubr.f32.gmra.mrb[0].mxu0 %v8823
      %v9176 = vpop.f32.mrb[0].mxu0
      %v9177 = vadd.f32 0.0, %v9176
      %v9178 = vpop.f32.mrb[0].mxu0
      %9179 = vmatprep.mubr.f32.mxu0 0.0
      %9180 = vmatmul.mubr.f32.gmra.mrb[0].mxu0 %v8826
      %v9181 = vpop.f32.mrb[0].mxu0
      %v9182 = vadd.f32 0.0, %v9181
      %v9183 = vpop.f32.mrb[0].mxu0
      %9184 = vmatprep.mubr.f32.mxu0 0.0
      %9185 = vmatmul.mubr.f32.gmra.mrb[0].mxu0 %v8829
      %v9186 = vpop.f32.mrb[0].mxu0
      %v9187 = vadd.f32 0.0, %v9186
      %v9188 = vpop.f32.mrb[0].mxu0
      %9189 = vmatprep.mubr.f32.mxu0 0.0
      %9190 = vmatmul.mubr.f32.gmra.mrb[0].mxu0 %v8832
      %v9191 = vpop.f32.mrb[0].mxu0
      %v9192 = vadd.f32 0.0, %v9191
      %v9193 = vpop.f32.mrb[0].mxu0
      %9194 = vmatprep.mubr.f32.mxu0 0.0
      %9195 = vmatmul.mubr.f32.gmra.mrb[0].mxu0 %v8835
      %v9196 = vpop.f32.mrb[0].mxu0
      %v9197 = vadd.f32 0.0, %v9196
      %v9198 = vpop.f32.mrb[0].mxu0
      %9199 = vmatprep.mubr.f32.mxu0 0.0
      %9200 = vmatmul.mubr.f32.gmra.mrb[0].mxu0 %v8838
      %v9201 = vpop.f32.mrb[0].mxu0
      %v9202 = vadd.f32 0.0, %v9201
      %v9203 = vpop.f32.mrb[0].mxu0
      %9204 = vmatprep.mubr.f32.mxu0 0.0
      %9205 = vmatmul.mubr.f32.gmra.mrb[0].mxu0 %v8841
      %v9206 = vpop.f32.mrb[0].mxu0
      %v9207 = vadd.f32 0.0, %v9206
      %v9208 = vpop.f32.mrb[0].mxu0
      %9209 = vmatprep.mubr.f32.mxu0 0.0
      %9210 = vmatmul.mubr.f32.gmra.mrb[0].mxu0 %v8844
      %v9211 = vpop.f32.mrb[0].mxu0
      %v9212 = vadd.f32 0.0, %v9211
      %v9213 = vpop.f32.mrb[0].mxu0
      %9214 = vmatprep.mubr.f32.mxu0 0.0
      %9215 = vmatmul.mubr.f32.gmra.mrb[0].mxu0 %v8847
      %v9216 = vpop.f32.mrb[0].mxu0
      %v9217 = vadd.f32 0.0, %v9216
      %v9218 = vpop.f32.mrb[0].mxu0
      %9219 = vmatprep.mubr.f32.mxu0 0.0
      %9220 = vmatmul.mubr.f32.gmra.mrb[0].mxu0 %v8850
      %v9221 = vpop.f32.mrb[0].mxu0
      %v9222 = vadd.f32 0.0, %v9221
      %v9223 = vpop.f32.mrb[0].mxu0
      %9224 = vmatprep.mubr.f32.mxu0 0.0
      %9225 = vmatmul.mubr.f32.gmra.mrb[0].mxu0 %v8853
      %v9226 = vpop.f32.mrb[0].mxu0
      %v9227 = vadd.f32 0.0, %v9226
      %v9228 = vpop.f32.mrb[0].mxu0
      %9229 = vmatprep.mubr.f32.mxu0 0.0
      %9230 = vmatmul.mubr.f32.gmra.mrb[0].mxu0 %v8856
      %v9231 = vpop.f32.mrb[0].mxu0
      %v9232 = vadd.f32 0.0, %v9231
      %v9233 = vpop.f32.mrb[0].mxu0
      %9234 = vmatprep.mubr.f32.mxu0 0.0
      %9235 = vmatmul.mubr.f32.gmra.mrb[0].mxu0 %v8859
      %v9236 = vpop.f32.mrb[0].mxu0
      %v9237 = vadd.f32 0.0, %v9236
      %v9238 = vpop.f32.mrb[0].mxu0
      %9239 = vmatprep.mubr.f32.mxu0 0.0
      %9240 = vmatmul.mubr.f32.gmra.mrb[0].mxu0 %v8862
      %v9241 = vpop.f32.mrb[0].mxu0
      %v9242 = vadd.f32 0.0, %v9241
      %v9243 = vpop.f32.mrb[0].mxu0
      %9244 = vmatprep.mubr.f32.mxu0 0.0
      %9245 = vmatmul.mubr.f32.gmra.mrb[0].mxu0 %v8865
      %v9246 = vpop.f32.mrb[0].mxu0
      %v9247 = vadd.f32 0.0, %v9246
      %v9248 = vpop.f32.mrb[0].mxu0
      %9249 = vmatprep.mubr.f32.mxu0 0.0
      %9250 = vmatmul.mubr.f32.gmra.mrb[0].mxu0 %v8868
      %v9251 = vpop.f32.mrb[0].mxu0
      %v9252 = vadd.f32 0.0, %v9251
      %v9253 = vpop.f32.mrb[0].mxu0
      %9254 = vmatprep.mubr.f32.mxu0 0.0
      %9255 = vmatmul.mubr.f32.gmra.mrb[0].mxu0 %v8871
      %v9256 = vpop.f32.mrb[0].mxu0
      %v9257 = vadd.f32 0.0, %v9256
      %v9258 = vpop.f32.mrb[0].mxu0
      %9259 = vmatprep.mubr.f32.mxu0 0.0
      %9260 = vmatmul.mubr.f32.gmra.mrb[0].mxu0 %v8874
      %v9261 = vpop.f32.mrb[0].mxu0
      %v9262 = vadd.f32 0.0, %v9261
      %v9263 = vpop.f32.mrb[0].mxu0
      %9264 = vmatprep.mubr.f32.mxu0 0.0
      %9265 = vmatmul.mubr.f32.gmra.mrb[0].mxu0 %v8877
      %v9266 = vpop.f32.mrb[0].mxu0
      %v9267 = vadd.f32 0.0, %v9266
      %v9268 = vpop.f32.mrb[0].mxu0
      %9269 = vmatprep.mubr.f32.mxu0 0.0
      %9270 = vmatmul.mubr.f32.gmra.mrb[0].mxu0 %v8880
      %v9271 = vpop.f32.mrb[0].mxu0
      %v9272 = vadd.f32 0.0, %v9271
      %v9273 = vpop.f32.mrb[0].mxu0
      %9274 = vmatprep.mubr.f32.mxu0 0.0
      %9275 = vmatmul.mubr.f32.gmra.mrb[0].mxu0 %v8883
      %v9276 = vpop.f32.mrb[0].mxu0
      %v9277 = vadd.f32 0.0, %v9276
      %v9278 = vpop.f32.mrb[0].mxu0
      %9279 = vmatprep.mubr.f32.mxu0 0.0
      %9280 = vmatmul.mubr.f32.gmra.mrb[0].mxu0 %v8886
      %v9281 = vpop.f32.mrb[0].mxu0
      %v9282 = vadd.f32 0.0, %v9281
      %v9283 = vpop.f32.mrb[0].mxu0
      %9284 = vmatprep.mubr.f32.mxu0 0.0
      %9285 = vmatmul.mubr.f32.gmra.mrb[0].mxu0 %v8889
      %v9286 = vpop.f32.mrb[0].mxu0
      %v9287 = vadd.f32 0.0, %v9286
      %v9288 = vpop.f32.mrb[0].mxu0
      %9289 = vmatprep.mubr.f32.mxu0 0.0
      %9290 = vmatmul.mubr.f32.gmra.mrb[0].mxu0 %v8892
      %v9291 = vpop.f32.mrb[0].mxu0
      %v9292 = vadd.f32 0.0, %v9291
      %v9293 = vpop.f32.mrb[0].mxu0
      %9294 = vmatprep.mubr.f32.mxu0 0.0
      %9295 = vmatmul.mubr.f32.gmra.mrb[0].mxu0 %v8895
      %v9296 = vpop.f32.mrb[0].mxu0
      %v9297 = vadd.f32 0.0, %v9296
      %v9298 = vpop.f32.mrb[0].mxu0
      %9299 = vmatprep.mubr.f32.mxu0 0.0
      %9300 = vmatmul.mubr.f32.gmra.mrb[0].mxu0 %v8898
      %v9301 = vpop.f32.mrb[0].mxu0
      %v9302 = vadd.f32 0.0, %v9301
      %v9303 = vpop.f32.mrb[0].mxu0
      %9304 = vmatprep.mubr.f32.mxu0 0.0
      %9305 = vmatmul.mubr.f32.gmra.mrb[0].mxu0 %v8901
      %v9306 = vpop.f32.mrb[0].mxu0
      %v9307 = vadd.f32 0.0, %v9306
      %v9308 = vpop.f32.mrb[0].mxu0
      %9309 = vmatprep.mubr.f32.mxu0 0.0
      %9310 = vmatmul.mubr.f32.gmra.mrb[0].mxu0 %v8904
      %v9311 = vpop.f32.mrb[0].mxu0
      %v9312 = vadd.f32 0.0, %v9311
      %v9313 = vpop.f32.mrb[0].mxu0
      %9314 = vmatprep.mubr.f32.mxu0 0.0
      %9315 = vmatmul.mubr.f32.gmra.mrb[0].mxu0 %v8907
      %v9316 = vpop.f32.mrb[0].mxu0
      %v9317 = vadd.f32 0.0, %v9316
      %v9318 = vpop.f32.mrb[0].mxu0
      %9319 = vmatprep.mubr.f32.mxu0 0.0
      %9320 = vmatmul.mubr.f32.gmra.mrb[0].mxu0 %v8910
      %v9321 = vpop.f32.mrb[0].mxu0
      %v9322 = vadd.f32 0.0, %v9321
      %v9323 = vpop.f32.mrb[0].mxu0
      %9324 = vmatprep.mubr.f32.mxu0 0.0
      %9325 = vmatmul.mubr.f32.gmra.mrb[0].mxu0 %v8913
      %v9326 = vpop.f32.mrb[0].mxu0
      %v9327 = vadd.f32 0.0, %v9326
      %v9328 = vpop.f32.mrb[0].mxu0
      %9329 = vmatprep.mubr.f32.mxu0 0.0
      %9330 = vmatmul.mubr.f32.gmra.mrb[0].mxu0 %v8916
      %v9331 = vpop.f32.mrb[0].mxu0
      %v9332 = vadd.f32 0.0, %v9331
      %v9333 = vpop.f32.mrb[0].mxu0
      %9334 = vmatprep.mubr.f32.mxu0 0.0
      %9335 = vmatmul.mubr.f32.gmra.mrb[0].mxu0 %v8919
      %v9336 = vpop.f32.mrb[0].mxu0
      %v9337 = vadd.f32 0.0, %v9336
      %v9338 = vpop.f32.mrb[0].mxu0
      %9339 = vmatprep.mubr.f32.mxu0 0.0
      %9340 = vmatmul.mubr.f32.gmra.mrb[0].mxu0 %v8922
      %v9341 = vpop.f32.mrb[0].mxu0
      %v9342 = vadd.f32 0.0, %v9341
      %v9343 = vpop.f32.mrb[0].mxu0
      %9344 = vmatprep.mubr.f32.mxu0 0.0
      %9345 = vmatmul.mubr.f32.gmra.mrb[0].mxu0 %v8925
      %v9346 = vpop.f32.mrb[0].mxu0
      %v9347 = vadd.f32 0.0, %v9346
      %v9348 = vpop.f32.mrb[0].mxu0
      %9349 = vmatprep.mubr.f32.mxu0 0.0
      %9350 = vmatmul.mubr.f32.gmra.mrb[0].mxu0 %v8928
      %v9351 = vpop.f32.mrb[0].mxu0
      %v9352 = vadd.f32 0.0, %v9351
      %v9353 = vpop.f32.mrb[0].mxu0
      %9354 = vdwg.mxu0
      %v9355 = vpack.c.bf16 %v9002, %v8997
      %v9356 = vpack.c.bf16 %v9012, %v9007
      %v9357 = vpack.c.bf16 %v9022, %v9017
      %v9358 = vpack.c.bf16 %v9032, %v9027
      %v9359 = vpack.c.bf16 %v9042, %v9037
      %v9360 = vpack.c.bf16 %v9052, %v9047
      %v9361 = vpack.c.bf16 %v9062, %v9057
      %v9362 = vpack.c.bf16 %v9072, %v9067
      %v9363 = vpack.c.bf16 %v9082, %v9077
      %v9364 = vpack.c.bf16 %v9092, %v9087
      %v9365 = vpack.c.bf16 %v9102, %v9097
      %v9366 = vpack.c.bf16 %v9112, %v9107
      %v9367 = vpack.c.bf16 %v9122, %v9117
      %v9368 = vpack.c.bf16 %v9132, %v9127
      %v9369 = vpack.c.bf16 %v9142, %v9137
      %v9370 = vpack.c.bf16 %v9152, %v9147
      %v9371 = vpack.c.bf16 %v9162, %v9157
      %v9372 = vpack.c.bf16 %v9172, %v9167
      %v9373 = vpack.c.bf16 %v9182, %v9177
      %v9374 = vpack.c.bf16 %v9192, %v9187
      %v9375 = vpack.c.bf16 %v9202, %v9197
      %v9376 = vpack.c.bf16 %v9212, %v9207
      %v9377 = vpack.c.bf16 %v9222, %v9217
      %v9378 = vpack.c.bf16 %v9232, %v9227
      %v9379 = vpack.c.bf16 %v9242, %v9237
      %v9380 = vpack.c.bf16 %v9252, %v9247
      %v9381 = vpack.c.bf16 %v9262, %v9257
      %v9382 = vpack.c.bf16 %v9272, %v9267
      %v9383 = vpack.c.bf16 %v9282, %v9277
      %v9384 = vpack.c.bf16 %v9292, %v9287
      %v9385 = vpack.c.bf16 %v9302, %v9297
      %v9386 = vpack.c.bf16 %v9312, %v9307
      %v9387 = vpack.c.bf16 %v9322, %v9317
      %v9388 = vpack.c.bf16 %v9332, %v9327
      %v9389 = vpack.c.bf16 %v9342, %v9337
      %v9390 = vpack.c.bf16 %v9352, %v9347
      %v9392 = vsel %vm1804, %v9390, 0
      %9394 = vmatprep.subr.bf16.mxu0 0
      %9395 = vmatpush1.bf16.msra.mxu0 %v9355
      %9396 = vmatprep.subr.bf16.mxu0 0
      %9397 = vmatpush1.bf16.msra.mxu0 %v9356
      %9398 = vmatprep.subr.bf16.mxu0 0
      %9399 = vmatpush1.bf16.msra.mxu0 %v9357
      %9400 = vmatprep.subr.bf16.mxu0 0
      %9401 = vmatpush1.bf16.msra.mxu0 %v9358
      %9402 = vmatprep.subr.bf16.mxu0 0
      %9403 = vmatpush1.bf16.msra.mxu0 %v9359
      %9404 = vmatprep.subr.bf16.mxu0 0
      %9405 = vmatpush1.bf16.msra.mxu0 %v9360
      %9406 = vmatprep.subr.bf16.mxu0 0
      %9407 = vmatpush1.bf16.msra.mxu0 %v9361
      %9408 = vmatprep.subr.bf16.mxu0 0
      %9409 = vmatpush1.bf16.msra.mxu0 %v9362
      %9410 = vmatprep.subr.bf16.mxu0 0
      %9411 = vmatpush1.bf16.msra.mxu0 %v9363
      %9412 = vmatprep.subr.bf16.mxu0 0
      %9413 = vmatpush1.bf16.msra.mxu0 %v9364
      %9414 = vmatprep.subr.bf16.mxu0 0
      %9415 = vmatpush1.bf16.msra.mxu0 %v9365
      %9416 = vmatprep.subr.bf16.mxu0 0
      %9417 = vmatpush1.bf16.msra.mxu0 %v9366
      %9418 = vmatprep.subr.bf16.mxu0 0
      %9419 = vmatpush1.bf16.msra.mxu0 %v9367
      %9420 = vmatprep.subr.bf16.mxu0 0
      %9421 = vmatpush1.bf16.msra.mxu0 %v9368
      %9422 = vmatprep.subr.bf16.mxu0 0
      %9423 = vmatpush1.bf16.msra.mxu0 %v9369
      %9424 = vmatprep.subr.bf16.mxu0 0
      %9425 = vmatpush1.bf16.msra.mxu0 %v9370
      %9426 = vmatprep.mubr.bf16.mxu0 %v6526
      %9427 = vmatmul.mubr.bf16.gmra.mrb[0].mxu0 %v6525
      %v9428 = vpop.f32.mrb[0].mxu0
      %v9429 = vadd.f32 %v4041, %v9428
      %v9430 = vpop.f32.mrb[0].mxu0
      %v9431 = vpop.f32.mrb[0].mxu0
      %v9432 = vadd.f32 %v4041, %v9431
      %v9433 = vpop.f32.mrb[0].mxu0
      %9434 = vmatprep.mubr.bf16.mxu0 %v6531
      %9435 = vmatmul.mubr.bf16.gmra.mrb[0].mxu0 %v6530
      %v9436 = vpop.f32.mrb[0].mxu0
      %v9437 = vadd.f32 %v4041, %v9436
      %v9438 = vpop.f32.mrb[0].mxu0
      %v9439 = vpop.f32.mrb[0].mxu0
      %v9440 = vadd.f32 %v4041, %v9439
      %v9441 = vpop.f32.mrb[0].mxu0
      %9442 = vmatprep.mubr.bf16.mxu0 %v6536
      %9443 = vmatmul.mubr.bf16.gmra.mrb[0].mxu0 %v6535
      %v9444 = vpop.f32.mrb[0].mxu0
      %v9445 = vadd.f32 %v4041, %v9444
      %v9446 = vpop.f32.mrb[0].mxu0
      %v9447 = vpop.f32.mrb[0].mxu0
      %v9448 = vadd.f32 %v4041, %v9447
      %v9449 = vpop.f32.mrb[0].mxu0
      %9450 = vmatprep.mubr.bf16.mxu0 %v6541
      %9451 = vmatmul.mubr.bf16.gmra.mrb[0].mxu0 %v6540
      %v9452 = vpop.f32.mrb[0].mxu0
      %v9453 = vadd.f32 %v4041, %v9452
      %v9454 = vpop.f32.mrb[0].mxu0
      %v9455 = vpop.f32.mrb[0].mxu0
      %v9456 = vadd.f32 %v4041, %v9455
      %v9457 = vpop.f32.mrb[0].mxu0
      %9458 = vmatprep.mubr.bf16.mxu0 %v6546
      %9459 = vmatmul.mubr.bf16.gmra.mrb[0].mxu0 %v6545
      %v9460 = vpop.f32.mrb[0].mxu0
      %v9461 = vadd.f32 %v4041, %v9460
      %v9462 = vpop.f32.mrb[0].mxu0
      %v9463 = vpop.f32.mrb[0].mxu0
      %v9464 = vadd.f32 %v4041, %v9463
      %v9465 = vpop.f32.mrb[0].mxu0
      %9466 = vmatprep.mubr.bf16.mxu0 %v6551
      %9467 = vmatmul.mubr.bf16.gmra.mrb[0].mxu0 %v6550
      %v9468 = vpop.f32.mrb[0].mxu0
      %v9469 = vadd.f32 %v4041, %v9468
      %v9470 = vpop.f32.mrb[0].mxu0
      %v9471 = vpop.f32.mrb[0].mxu0
      %v9472 = vadd.f32 %v4041, %v9471
      %v9473 = vpop.f32.mrb[0].mxu0
      %9474 = vmatprep.mubr.bf16.mxu0 %v6556
      %9475 = vmatmul.mubr.bf16.gmra.mrb[0].mxu0 %v6555
      %v9476 = vpop.f32.mrb[0].mxu0
      %v9477 = vadd.f32 %v4041, %v9476
      %v9478 = vpop.f32.mrb[0].mxu0
      %v9479 = vpop.f32.mrb[0].mxu0
      %v9480 = vadd.f32 %v4041, %v9479
      %v9481 = vpop.f32.mrb[0].mxu0
      %9482 = vmatprep.mubr.bf16.mxu0 %v6561
      %9483 = vmatmul.mubr.bf16.gmra.mrb[0].mxu0 %v6560
      %v9484 = vpop.f32.mrb[0].mxu0
      %v9485 = vadd.f32 %v4041, %v9484
      %v9486 = vpop.f32.mrb[0].mxu0
      %v9487 = vpop.f32.mrb[0].mxu0
      %v9488 = vadd.f32 %v4041, %v9487
      %v9489 = vpop.f32.mrb[0].mxu0
      %9490 = vmatprep.mubr.bf16.mxu0 %v6566
      %9491 = vmatmul.mubr.bf16.gmra.mrb[0].mxu0 %v6565
      %v9492 = vpop.f32.mrb[0].mxu0
      %v9493 = vadd.f32 %v4041, %v9492
      %v9494 = vpop.f32.mrb[0].mxu0
      %v9495 = vpop.f32.mrb[0].mxu0
      %v9496 = vadd.f32 %v4041, %v9495
      %v9497 = vpop.f32.mrb[0].mxu0
      %9498 = vmatprep.mubr.bf16.mxu0 %v6571
      %9499 = vmatmul.mubr.bf16.gmra.mrb[0].mxu0 %v6570
      %v9500 = vpop.f32.mrb[0].mxu0
      %v9501 = vadd.f32 %v4041, %v9500
      %v9502 = vpop.f32.mrb[0].mxu0
      %v9503 = vpop.f32.mrb[0].mxu0
      %v9504 = vadd.f32 %v4041, %v9503
      %v9505 = vpop.f32.mrb[0].mxu0
      %9506 = vmatprep.mubr.bf16.mxu0 %v6576
      %9507 = vmatmul.mubr.bf16.gmra.mrb[0].mxu0 %v6575
      %v9508 = vpop.f32.mrb[0].mxu0
      %v9509 = vadd.f32 %v4041, %v9508
      %v9510 = vpop.f32.mrb[0].mxu0
      %v9511 = vpop.f32.mrb[0].mxu0
      %v9512 = vadd.f32 %v4041, %v9511
      %v9513 = vpop.f32.mrb[0].mxu0
      %9514 = vmatprep.mubr.bf16.mxu0 %v6581
      %9515 = vmatmul.mubr.bf16.gmra.mrb[0].mxu0 %v6580
      %v9516 = vpop.f32.mrb[0].mxu0
      %v9517 = vadd.f32 %v4041, %v9516
      %v9518 = vpop.f32.mrb[0].mxu0
      %v9519 = vpop.f32.mrb[0].mxu0
      %v9520 = vadd.f32 %v4041, %v9519
      %v9521 = vpop.f32.mrb[0].mxu0
      %9522 = vmatprep.mubr.bf16.mxu0 %v6586
      %9523 = vmatmul.mubr.bf16.gmra.mrb[0].mxu0 %v6585
      %v9524 = vpop.f32.mrb[0].mxu0
      %v9525 = vadd.f32 %v4041, %v9524
      %v9526 = vpop.f32.mrb[0].mxu0
      %v9527 = vpop.f32.mrb[0].mxu0
      %v9528 = vadd.f32 %v4041, %v9527
      %v9529 = vpop.f32.mrb[0].mxu0
      %9530 = vmatprep.mubr.bf16.mxu0 %v6591
      %9531 = vmatmul.mubr.bf16.gmra.mrb[0].mxu0 %v6590
      %v9532 = vpop.f32.mrb[0].mxu0
      %v9533 = vadd.f32 %v4041, %v9532
      %v9534 = vpop.f32.mrb[0].mxu0
      %v9535 = vpop.f32.mrb[0].mxu0
      %v9536 = vadd.f32 %v4041, %v9535
      %v9537 = vpop.f32.mrb[0].mxu0
      %9538 = vmatprep.mubr.bf16.mxu0 %v6596
      %9539 = vmatmul.mubr.bf16.gmra.mrb[0].mxu0 %v6595
      %v9540 = vpop.f32.mrb[0].mxu0
      %v9541 = vadd.f32 %v4041, %v9540
      %v9542 = vpop.f32.mrb[0].mxu0
      %v9543 = vpop.f32.mrb[0].mxu0
      %v9544 = vadd.f32 %v4041, %v9543
      %v9545 = vpop.f32.mrb[0].mxu0
      %9546 = vmatprep.mubr.bf16.mxu0 %v6601
      %9547 = vmatmul.mubr.bf16.gmra.mrb[0].mxu0 %v6600
      %v9548 = vpop.f32.mrb[0].mxu0
      %v9549 = vadd.f32 %v4041, %v9548
      %v9550 = vpop.f32.mrb[0].mxu0
      %v9551 = vpop.f32.mrb[0].mxu0
      %v9552 = vadd.f32 %v4041, %v9551
      %v9553 = vpop.f32.mrb[0].mxu0
      %9554 = vmatprep.mubr.bf16.mxu0 %v6606
      %9555 = vmatmul.mubr.bf16.gmra.mrb[0].mxu0 %v6605
      %v9556 = vpop.f32.mrb[0].mxu0
      %v9557 = vadd.f32 %v4041, %v9556
      %v9558 = vpop.f32.mrb[0].mxu0
      %v9559 = vpop.f32.mrb[0].mxu0
      %v9560 = vadd.f32 %v4041, %v9559
      %v9561 = vpop.f32.mrb[0].mxu0
      %9562 = vmatprep.mubr.bf16.mxu0 %v6611
      %9563 = vmatmul.mubr.bf16.gmra.mrb[0].mxu0 %v6610
      %v9564 = vpop.f32.mrb[0].mxu0
      %v9565 = vadd.f32 %v4041, %v9564
      %v9566 = vpop.f32.mrb[0].mxu0
      %v9567 = vpop.f32.mrb[0].mxu0
      %v9568 = vadd.f32 %v4041, %v9567
      %v9569 = vpop.f32.mrb[0].mxu0
      %9570 = vmatprep.mubr.bf16.mxu0 %v6616
      %9571 = vmatmul.mubr.bf16.gmra.mrb[0].mxu0 %v6615
      %v9572 = vpop.f32.mrb[0].mxu0
      %v9573 = vadd.f32 %v4041, %v9572
      %v9574 = vpop.f32.mrb[0].mxu0
      %v9575 = vpop.f32.mrb[0].mxu0
      %v9576 = vadd.f32 %v4041, %v9575
      %v9577 = vpop.f32.mrb[0].mxu0
      %9578 = vmatprep.mubr.bf16.mxu0 %v6621
      %9579 = vmatmul.mubr.bf16.gmra.mrb[0].mxu0 %v6620
      %v9580 = vpop.f32.mrb[0].mxu0
      %v9581 = vadd.f32 %v4041, %v9580
      %v9582 = vpop.f32.mrb[0].mxu0
      %v9583 = vpop.f32.mrb[0].mxu0
      %v9584 = vadd.f32 %v4041, %v9583
      %v9585 = vpop.f32.mrb[0].mxu0
      %9586 = vmatprep.mubr.bf16.mxu0 %v6626
      %9587 = vmatmul.mubr.bf16.gmra.mrb[0].mxu0 %v6625
      %v9588 = vpop.f32.mrb[0].mxu0
      %v9589 = vadd.f32 %v4041, %v9588
      %v9590 = vpop.f32.mrb[0].mxu0
      %v9591 = vpop.f32.mrb[0].mxu0
      %v9592 = vadd.f32 %v4041, %v9591
      %v9593 = vpop.f32.mrb[0].mxu0
      %9594 = vmatprep.mubr.bf16.mxu0 %v6631
      %9595 = vmatmul.mubr.bf16.gmra.mrb[0].mxu0 %v6630
      %v9596 = vpop.f32.mrb[0].mxu0
      %v9597 = vadd.f32 %v4041, %v9596
      %v9598 = vpop.f32.mrb[0].mxu0
      %v9599 = vpop.f32.mrb[0].mxu0
      %v9600 = vadd.f32 %v4041, %v9599
      %v9601 = vpop.f32.mrb[0].mxu0
      %9602 = vmatprep.mubr.bf16.mxu0 %v6636
      %9603 = vmatmul.mubr.bf16.gmra.mrb[0].mxu0 %v6635
      %v9604 = vpop.f32.mrb[0].mxu0
      %v9605 = vadd.f32 %v4041, %v9604
      %v9606 = vpop.f32.mrb[0].mxu0
      %v9607 = vpop.f32.mrb[0].mxu0
      %v9608 = vadd.f32 %v4041, %v9607
      %v9609 = vpop.f32.mrb[0].mxu0
      %9610 = vmatprep.mubr.bf16.mxu0 %v6641
      %9611 = vmatmul.mubr.bf16.gmra.mrb[0].mxu0 %v6640
      %v9612 = vpop.f32.mrb[0].mxu0
      %v9613 = vadd.f32 %v4041, %v9612
      %v9614 = vpop.f32.mrb[0].mxu0
      %v9615 = vpop.f32.mrb[0].mxu0
      %v9616 = vadd.f32 %v4041, %v9615
      %v9617 = vpop.f32.mrb[0].mxu0
      %9618 = vmatprep.mubr.bf16.mxu0 %v6646
      %9619 = vmatmul.mubr.bf16.gmra.mrb[0].mxu0 %v6645
      %v9620 = vpop.f32.mrb[0].mxu0
      %v9621 = vadd.f32 %v4041, %v9620
      %v9622 = vpop.f32.mrb[0].mxu0
      %v9623 = vpop.f32.mrb[0].mxu0
      %v9624 = vadd.f32 %v4041, %v9623
      %v9625 = vpop.f32.mrb[0].mxu0
      %9626 = vmatprep.mubr.bf16.mxu0 %v6651
      %9627 = vmatmul.mubr.bf16.gmra.mrb[0].mxu0 %v6650
      %v9628 = vpop.f32.mrb[0].mxu0
      %v9629 = vadd.f32 %v4041, %v9628
      %v9630 = vpop.f32.mrb[0].mxu0
      %v9631 = vpop.f32.mrb[0].mxu0
      %v9632 = vadd.f32 %v4041, %v9631
      %v9633 = vpop.f32.mrb[0].mxu0
      %9634 = vmatprep.mubr.bf16.mxu0 %v6656
      %9635 = vmatmul.mubr.bf16.gmra.mrb[0].mxu0 %v6655
      %v9636 = vpop.f32.mrb[0].mxu0
      %v9637 = vadd.f32 %v4041, %v9636
      %v9638 = vpop.f32.mrb[0].mxu0
      %v9639 = vpop.f32.mrb[0].mxu0
      %v9640 = vadd.f32 %v4041, %v9639
      %v9641 = vpop.f32.mrb[0].mxu0
      %9642 = vmatprep.mubr.bf16.mxu0 %v6661
      %9643 = vmatmul.mubr.bf16.gmra.mrb[0].mxu0 %v6660
      %v9644 = vpop.f32.mrb[0].mxu0
      %v9645 = vadd.f32 %v4041, %v9644
      %v9646 = vpop.f32.mrb[0].mxu0
      %v9647 = vpop.f32.mrb[0].mxu0
      %v9648 = vadd.f32 %v4041, %v9647
      %v9649 = vpop.f32.mrb[0].mxu0
      %9650 = vmatprep.mubr.bf16.mxu0 %v6666
      %9651 = vmatmul.mubr.bf16.gmra.mrb[0].mxu0 %v6665
      %v9652 = vpop.f32.mrb[0].mxu0
      %v9653 = vadd.f32 %v4041, %v9652
      %v9654 = vpop.f32.mrb[0].mxu0
      %v9655 = vpop.f32.mrb[0].mxu0
      %v9656 = vadd.f32 %v4041, %v9655
      %v9657 = vpop.f32.mrb[0].mxu0
      %9658 = vmatprep.mubr.bf16.mxu0 %v6671
      %9659 = vmatmul.mubr.bf16.gmra.mrb[0].mxu0 %v6670
      %v9660 = vpop.f32.mrb[0].mxu0
      %v9661 = vadd.f32 %v4041, %v9660
      %v9662 = vpop.f32.mrb[0].mxu0
      %v9663 = vpop.f32.mrb[0].mxu0
      %v9664 = vadd.f32 %v4041, %v9663
      %v9665 = vpop.f32.mrb[0].mxu0
      %9666 = vmatprep.mubr.bf16.mxu0 %v6676
      %9667 = vmatmul.mubr.bf16.gmra.mrb[0].mxu0 %v6675
      %v9668 = vpop.f32.mrb[0].mxu0
      %v9669 = vadd.f32 %v4041, %v9668
      %v9670 = vpop.f32.mrb[0].mxu0
      %v9671 = vpop.f32.mrb[0].mxu0
      %v9672 = vadd.f32 %v4041, %v9671
      %v9673 = vpop.f32.mrb[0].mxu0
      %9674 = vmatprep.mubr.bf16.mxu0 %v6681
      %9675 = vmatmul.mubr.bf16.gmra.mrb[0].mxu0 %v6680
      %v9676 = vpop.f32.mrb[0].mxu0
      %v9677 = vadd.f32 %v4041, %v9676
      %v9678 = vpop.f32.mrb[0].mxu0
      %v9679 = vpop.f32.mrb[0].mxu0
      %v9680 = vadd.f32 %v4041, %v9679
      %v9681 = vpop.f32.mrb[0].mxu0
      %9682 = vmatprep.mubr.bf16.mxu0 %v6686
      %9683 = vmatmul.mubr.bf16.gmra.mrb[0].mxu0 %v6685
      %v9684 = vpop.f32.mrb[0].mxu0
      %v9685 = vadd.f32 %v4041, %v9684
      %v9686 = vpop.f32.mrb[0].mxu0
      %v9687 = vpop.f32.mrb[0].mxu0
      %v9688 = vadd.f32 %v4041, %v9687
      %v9689 = vpop.f32.mrb[0].mxu0
      %9690 = vmatprep.mubr.bf16.mxu0 %v6691
      %9691 = vmatmul.mubr.bf16.gmra.mrb[0].mxu0 %v6690
      %v9692 = vpop.f32.mrb[0].mxu0
      %v9693 = vadd.f32 %v4041, %v9692
      %v9694 = vpop.f32.mrb[0].mxu0
      %v9695 = vpop.f32.mrb[0].mxu0
      %v9696 = vadd.f32 %v4041, %v9695
      %v9697 = vpop.f32.mrb[0].mxu0
      %9698 = vmatprep.mubr.bf16.mxu0 %v6696
      %9699 = vmatmul.mubr.bf16.gmra.mrb[0].mxu0 %v6695
      %v9700 = vpop.f32.mrb[0].mxu0
      %v9701 = vadd.f32 %v4041, %v9700
      %v9702 = vpop.f32.mrb[0].mxu0
      %v9703 = vpop.f32.mrb[0].mxu0
      %v9704 = vadd.f32 %v4041, %v9703
      %v9705 = vpop.f32.mrb[0].mxu0
      %9706 = vmatprep.mubr.bf16.mxu0 %v6701
      %9707 = vmatmul.mubr.bf16.gmra.mrb[0].mxu0 %v6700
      %v9708 = vpop.f32.mrb[0].mxu0
      %v9709 = vadd.f32 %v4041, %v9708
      %v9710 = vpop.f32.mrb[0].mxu0
      %v9711 = vpop.f32.mrb[0].mxu0
      %v9712 = vadd.f32 %v4041, %v9711
      %v9713 = vpop.f32.mrb[0].mxu0
      %9714 = vdwg.mxu0
      %9715 = vmatprep.subr.bf16.mxu0 0
      %9716 = vmatpush1.bf16.msra.mxu0 %v9371
      %9717 = vmatprep.subr.bf16.mxu0 0
      %9718 = vmatpush1.bf16.msra.mxu0 %v9372
      %9719 = vmatprep.subr.bf16.mxu0 0
      %9720 = vmatpush1.bf16.msra.mxu0 %v9373
      %9721 = vmatprep.subr.bf16.mxu0 0
      %9722 = vmatpush1.bf16.msra.mxu0 %v9374
      %9723 = vmatprep.subr.bf16.mxu0 0
      %9724 = vmatpush1.bf16.msra.mxu0 %v9375
      %9725 = vmatprep.subr.bf16.mxu0 0
      %9726 = vmatpush1.bf16.msra.mxu0 %v9376
      %9727 = vmatprep.subr.bf16.mxu0 0
      %9728 = vmatpush1.bf16.msra.mxu0 %v9377
      %9729 = vmatprep.subr.bf16.mxu0 0
      %9730 = vmatpush1.bf16.msra.mxu0 %v9378
      %9731 = vmatprep.subr.bf16.mxu0 0
      %9732 = vmatpush1.bf16.msra.mxu0 %v9379
      %9733 = vmatprep.subr.bf16.mxu0 0
      %9734 = vmatpush1.bf16.msra.mxu0 %v9380
      %9735 = vmatprep.subr.bf16.mxu0 0
      %9736 = vmatpush1.bf16.msra.mxu0 %v9381
      %9737 = vmatprep.subr.bf16.mxu0 0
      %9738 = vmatpush1.bf16.msra.mxu0 %v9382
      %9739 = vmatprep.subr.bf16.mxu0 0
      %9740 = vmatpush1.bf16.msra.mxu0 %v9383
      %9741 = vmatprep.subr.bf16.mxu0 0
      %9742 = vmatpush1.bf16.msra.mxu0 %v9384
      %9743 = vmatprep.subr.bf16.mxu0 0
      %9744 = vmatpush1.bf16.msra.mxu0 %v9385
      %9745 = vmatprep.subr.bf16.mxu0 0
      %9746 = vmatpush1.bf16.msra.mxu0 %v9386
      %9747 = vmatprep.mubr.bf16.mxu0 %v6528
      %9748 = vmatmul.mubr.bf16.gmra.mrb[0].mxu0 %v6527
      %v9749 = vpop.f32.mrb[0].mxu0
      %v9750 = vadd.f32 %v9429, %v9749
      %v9751 = vpop.f32.mrb[0].mxu0
      %v9752 = vpop.f32.mrb[0].mxu0
      %v9753 = vadd.f32 %v9432, %v9752
      %v9754 = vpop.f32.mrb[0].mxu0
      %9755 = vmatprep.mubr.bf16.mxu0 %v6533
      %9756 = vmatmul.mubr.bf16.gmra.mrb[0].mxu0 %v6532
      %v9757 = vpop.f32.mrb[0].mxu0
      %v9758 = vadd.f32 %v9437, %v9757
      %v9759 = vpop.f32.mrb[0].mxu0
      %v9760 = vpop.f32.mrb[0].mxu0
      %v9761 = vadd.f32 %v9440, %v9760
      %v9762 = vpop.f32.mrb[0].mxu0
      %9763 = vmatprep.mubr.bf16.mxu0 %v6538
      %9764 = vmatmul.mubr.bf16.gmra.mrb[0].mxu0 %v6537
      %v9765 = vpop.f32.mrb[0].mxu0
      %v9766 = vadd.f32 %v9445, %v9765
      %v9767 = vpop.f32.mrb[0].mxu0
      %v9768 = vpop.f32.mrb[0].mxu0
      %v9769 = vadd.f32 %v9448, %v9768
      %v9770 = vpop.f32.mrb[0].mxu0
      %9771 = vmatprep.mubr.bf16.mxu0 %v6543
      %9772 = vmatmul.mubr.bf16.gmra.mrb[0].mxu0 %v6542
      %v9773 = vpop.f32.mrb[0].mxu0
      %v9774 = vadd.f32 %v9453, %v9773
      %v9775 = vpop.f32.mrb[0].mxu0
      %v9776 = vpop.f32.mrb[0].mxu0
      %v9777 = vadd.f32 %v9456, %v9776
      %v9778 = vpop.f32.mrb[0].mxu0
      %9779 = vmatprep.mubr.bf16.mxu0 %v6548
      %9780 = vmatmul.mubr.bf16.gmra.mrb[0].mxu0 %v6547
      %v9781 = vpop.f32.mrb[0].mxu0
      %v9782 = vadd.f32 %v9461, %v9781
      %v9783 = vpop.f32.mrb[0].mxu0
      %v9784 = vpop.f32.mrb[0].mxu0
      %v9785 = vadd.f32 %v9464, %v9784
      %v9786 = vpop.f32.mrb[0].mxu0
      %9787 = vmatprep.mubr.bf16.mxu0 %v6553
      %9788 = vmatmul.mubr.bf16.gmra.mrb[0].mxu0 %v6552
      %v9789 = vpop.f32.mrb[0].mxu0
      %v9790 = vadd.f32 %v9469, %v9789
      %v9791 = vpop.f32.mrb[0].mxu0
      %v9792 = vpop.f32.mrb[0].mxu0
      %v9793 = vadd.f32 %v9472, %v9792
      %v9794 = vpop.f32.mrb[0].mxu0
      %9795 = vmatprep.mubr.bf16.mxu0 %v6558
      %9796 = vmatmul.mubr.bf16.gmra.mrb[0].mxu0 %v6557
      %v9797 = vpop.f32.mrb[0].mxu0
      %v9798 = vadd.f32 %v9477, %v9797
      %v9799 = vpop.f32.mrb[0].mxu0
      %v9800 = vpop.f32.mrb[0].mxu0
      %v9801 = vadd.f32 %v9480, %v9800
      %v9802 = vpop.f32.mrb[0].mxu0
      %9803 = vmatprep.mubr.bf16.mxu0 %v6563
      %9804 = vmatmul.mubr.bf16.gmra.mrb[0].mxu0 %v6562
      %v9805 = vpop.f32.mrb[0].mxu0
      %v9806 = vadd.f32 %v9485, %v9805
      %v9807 = vpop.f32.mrb[0].mxu0
      %v9808 = vpop.f32.mrb[0].mxu0
      %v9809 = vadd.f32 %v9488, %v9808
      %v9810 = vpop.f32.mrb[0].mxu0
      %9811 = vmatprep.mubr.bf16.mxu0 %v6568
      %9812 = vmatmul.mubr.bf16.gmra.mrb[0].mxu0 %v6567
      %v9813 = vpop.f32.mrb[0].mxu0
      %v9814 = vadd.f32 %v9493, %v9813
      %v9815 = vpop.f32.mrb[0].mxu0
      %v9816 = vpop.f32.mrb[0].mxu0
      %v9817 = vadd.f32 %v9496, %v9816
      %v9818 = vpop.f32.mrb[0].mxu0
      %9819 = vmatprep.mubr.bf16.mxu0 %v6573
      %9820 = vmatmul.mubr.bf16.gmra.mrb[0].mxu0 %v6572
      %v9821 = vpop.f32.mrb[0].mxu0
      %v9822 = vadd.f32 %v9501, %v9821
      %v9823 = vpop.f32.mrb[0].mxu0
      %v9824 = vpop.f32.mrb[0].mxu0
      %v9825 = vadd.f32 %v9504, %v9824
      %v9826 = vpop.f32.mrb[0].mxu0
      %9827 = vmatprep.mubr.bf16.mxu0 %v6578
      %9828 = vmatmul.mubr.bf16.gmra.mrb[0].mxu0 %v6577
      %v9829 = vpop.f32.mrb[0].mxu0
      %v9830 = vadd.f32 %v9509, %v9829
      %v9831 = vpop.f32.mrb[0].mxu0
      %v9832 = vpop.f32.mrb[0].mxu0
      %v9833 = vadd.f32 %v9512, %v9832
      %v9834 = vpop.f32.mrb[0].mxu0
      %9835 = vmatprep.mubr.bf16.mxu0 %v6583
      %9836 = vmatmul.mubr.bf16.gmra.mrb[0].mxu0 %v6582
      %v9837 = vpop.f32.mrb[0].mxu0
      %v9838 = vadd.f32 %v9517, %v9837
      %v9839 = vpop.f32.mrb[0].mxu0
      %v9840 = vpop.f32.mrb[0].mxu0
      %v9841 = vadd.f32 %v9520, %v9840
      %v9842 = vpop.f32.mrb[0].mxu0
      %9843 = vmatprep.mubr.bf16.mxu0 %v6588
      %9844 = vmatmul.mubr.bf16.gmra.mrb[0].mxu0 %v6587
      %v9845 = vpop.f32.mrb[0].mxu0
      %v9846 = vadd.f32 %v9525, %v9845
      %v9847 = vpop.f32.mrb[0].mxu0
      %v9848 = vpop.f32.mrb[0].mxu0
      %v9849 = vadd.f32 %v9528, %v9848
      %v9850 = vpop.f32.mrb[0].mxu0
      %9851 = vmatprep.mubr.bf16.mxu0 %v6593
      %9852 = vmatmul.mubr.bf16.gmra.mrb[0].mxu0 %v6592
      %v9853 = vpop.f32.mrb[0].mxu0
      %v9854 = vadd.f32 %v9533, %v9853
      %v9855 = vpop.f32.mrb[0].mxu0
      %v9856 = vpop.f32.mrb[0].mxu0
      %v9857 = vadd.f32 %v9536, %v9856
      %v9858 = vpop.f32.mrb[0].mxu0
      %9859 = vmatprep.mubr.bf16.mxu0 %v6598
      %9860 = vmatmul.mubr.bf16.gmra.mrb[0].mxu0 %v6597
      %v9861 = vpop.f32.mrb[0].mxu0
      %v9862 = vadd.f32 %v9541, %v9861
      %v9863 = vpop.f32.mrb[0].mxu0
      %v9864 = vpop.f32.mrb[0].mxu0
      %v9865 = vadd.f32 %v9544, %v9864
      %v9866 = vpop.f32.mrb[0].mxu0
      %9867 = vmatprep.mubr.bf16.mxu0 %v6603
      %9868 = vmatmul.mubr.bf16.gmra.mrb[0].mxu0 %v6602
      %v9869 = vpop.f32.mrb[0].mxu0
      %v9870 = vadd.f32 %v9549, %v9869
      %v9871 = vpop.f32.mrb[0].mxu0
      %v9872 = vpop.f32.mrb[0].mxu0
      %v9873 = vadd.f32 %v9552, %v9872
      %v9874 = vpop.f32.mrb[0].mxu0
      %9875 = vmatprep.mubr.bf16.mxu0 %v6608
      %9876 = vmatmul.mubr.bf16.gmra.mrb[0].mxu0 %v6607
      %v9877 = vpop.f32.mrb[0].mxu0
      %v9878 = vadd.f32 %v9557, %v9877
      %v9879 = vpop.f32.mrb[0].mxu0
      %v9880 = vpop.f32.mrb[0].mxu0
      %v9881 = vadd.f32 %v9560, %v9880
      %v9882 = vpop.f32.mrb[0].mxu0
      %9883 = vmatprep.mubr.bf16.mxu0 %v6613
      %9884 = vmatmul.mubr.bf16.gmra.mrb[0].mxu0 %v6612
      %v9885 = vpop.f32.mrb[0].mxu0
      %v9886 = vadd.f32 %v9565, %v9885
      %v9887 = vpop.f32.mrb[0].mxu0
      %v9888 = vpop.f32.mrb[0].mxu0
      %v9889 = vadd.f32 %v9568, %v9888
      %v9890 = vpop.f32.mrb[0].mxu0
      %9891 = vmatprep.mubr.bf16.mxu0 %v6618
      %9892 = vmatmul.mubr.bf16.gmra.mrb[0].mxu0 %v6617
      %v9893 = vpop.f32.mrb[0].mxu0
      %v9894 = vadd.f32 %v9573, %v9893
      %v9895 = vpop.f32.mrb[0].mxu0
      %v9896 = vpop.f32.mrb[0].mxu0
      %v9897 = vadd.f32 %v9576, %v9896
      %v9898 = vpop.f32.mrb[0].mxu0
      %9899 = vmatprep.mubr.bf16.mxu0 %v6623
      %9900 = vmatmul.mubr.bf16.gmra.mrb[0].mxu0 %v6622
      %v9901 = vpop.f32.mrb[0].mxu0
      %v9902 = vadd.f32 %v9581, %v9901
      %v9903 = vpop.f32.mrb[0].mxu0
      %v9904 = vpop.f32.mrb[0].mxu0
      %v9905 = vadd.f32 %v9584, %v9904
      %v9906 = vpop.f32.mrb[0].mxu0
      %9907 = vmatprep.mubr.bf16.mxu0 %v6628
      %9908 = vmatmul.mubr.bf16.gmra.mrb[0].mxu0 %v6627
      %v9909 = vpop.f32.mrb[0].mxu0
      %v9910 = vadd.f32 %v9589, %v9909
      %v9911 = vpop.f32.mrb[0].mxu0
      %v9912 = vpop.f32.mrb[0].mxu0
      %v9913 = vadd.f32 %v9592, %v9912
      %v9914 = vpop.f32.mrb[0].mxu0
      %9915 = vmatprep.mubr.bf16.mxu0 %v6633
      %9916 = vmatmul.mubr.bf16.gmra.mrb[0].mxu0 %v6632
      %v9917 = vpop.f32.mrb[0].mxu0
      %v9918 = vadd.f32 %v9597, %v9917
      %v9919 = vpop.f32.mrb[0].mxu0
      %v9920 = vpop.f32.mrb[0].mxu0
      %v9921 = vadd.f32 %v9600, %v9920
      %v9922 = vpop.f32.mrb[0].mxu0
      %9923 = vmatprep.mubr.bf16.mxu0 %v6638
      %9924 = vmatmul.mubr.bf16.gmra.mrb[0].mxu0 %v6637
      %v9925 = vpop.f32.mrb[0].mxu0
      %v9926 = vadd.f32 %v9605, %v9925
      %v9927 = vpop.f32.mrb[0].mxu0
      %v9928 = vpop.f32.mrb[0].mxu0
      %v9929 = vadd.f32 %v9608, %v9928
      %v9930 = vpop.f32.mrb[0].mxu0
      %9931 = vmatprep.mubr.bf16.mxu0 %v6643
      %9932 = vmatmul.mubr.bf16.gmra.mrb[0].mxu0 %v6642
      %v9933 = vpop.f32.mrb[0].mxu0
      %v9934 = vadd.f32 %v9613, %v9933
      %v9935 = vpop.f32.mrb[0].mxu0
      %v9936 = vpop.f32.mrb[0].mxu0
      %v9937 = vadd.f32 %v9616, %v9936
      %v9938 = vpop.f32.mrb[0].mxu0
      %9939 = vmatprep.mubr.bf16.mxu0 %v6648
      %9940 = vmatmul.mubr.bf16.gmra.mrb[0].mxu0 %v6647
      %v9941 = vpop.f32.mrb[0].mxu0
      %v9942 = vadd.f32 %v9621, %v9941
      %v9943 = vpop.f32.mrb[0].mxu0
      %v9944 = vpop.f32.mrb[0].mxu0
      %v9945 = vadd.f32 %v9624, %v9944
      %v9946 = vpop.f32.mrb[0].mxu0
      %9947 = vmatprep.mubr.bf16.mxu0 %v6653
      %9948 = vmatmul.mubr.bf16.gmra.mrb[0].mxu0 %v6652
      %v9949 = vpop.f32.mrb[0].mxu0
      %v9950 = vadd.f32 %v9629, %v9949
      %v9951 = vpop.f32.mrb[0].mxu0
      %v9952 = vpop.f32.mrb[0].mxu0
      %v9953 = vadd.f32 %v9632, %v9952
      %v9954 = vpop.f32.mrb[0].mxu0
      %9955 = vmatprep.mubr.bf16.mxu0 %v6658
      %9956 = vmatmul.mubr.bf16.gmra.mrb[0].mxu0 %v6657
      %v9957 = vpop.f32.mrb[0].mxu0
      %v9958 = vadd.f32 %v9637, %v9957
      %v9959 = vpop.f32.mrb[0].mxu0
      %v9960 = vpop.f32.mrb[0].mxu0
      %v9961 = vadd.f32 %v9640, %v9960
      %v9962 = vpop.f32.mrb[0].mxu0
      %9963 = vmatprep.mubr.bf16.mxu0 %v6663
      %9964 = vmatmul.mubr.bf16.gmra.mrb[0].mxu0 %v6662
      %v9965 = vpop.f32.mrb[0].mxu0
      %v9966 = vadd.f32 %v9645, %v9965
      %v9967 = vpop.f32.mrb[0].mxu0
      %v9968 = vpop.f32.mrb[0].mxu0
      %v9969 = vadd.f32 %v9648, %v9968
      %v9970 = vpop.f32.mrb[0].mxu0
      %9971 = vmatprep.mubr.bf16.mxu0 %v6668
      %9972 = vmatmul.mubr.bf16.gmra.mrb[0].mxu0 %v6667
      %v9973 = vpop.f32.mrb[0].mxu0
      %v9974 = vadd.f32 %v9653, %v9973
      %v9975 = vpop.f32.mrb[0].mxu0
      %v9976 = vpop.f32.mrb[0].mxu0
      %v9977 = vadd.f32 %v9656, %v9976
      %v9978 = vpop.f32.mrb[0].mxu0
      %9979 = vmatprep.mubr.bf16.mxu0 %v6673
      %9980 = vmatmul.mubr.bf16.gmra.mrb[0].mxu0 %v6672
      %v9981 = vpop.f32.mrb[0].mxu0
      %v9982 = vadd.f32 %v9661, %v9981
      %v9983 = vpop.f32.mrb[0].mxu0
      %v9984 = vpop.f32.mrb[0].mxu0
      %v9985 = vadd.f32 %v9664, %v9984
      %v9986 = vpop.f32.mrb[0].mxu0
      %9987 = vmatprep.mubr.bf16.mxu0 %v6678
      %9988 = vmatmul.mubr.bf16.gmra.mrb[0].mxu0 %v6677
      %v9989 = vpop.f32.mrb[0].mxu0
      %v9990 = vadd.f32 %v9669, %v9989
      %v9991 = vpop.f32.mrb[0].mxu0
      %v9992 = vpop.f32.mrb[0].mxu0
      %v9993 = vadd.f32 %v9672, %v9992
      %v9994 = vpop.f32.mrb[0].mxu0
      %9995 = vmatprep.mubr.bf16.mxu0 %v6683
      %9996 = vmatmul.mubr.bf16.gmra.mrb[0].mxu0 %v6682
      %v9997 = vpop.f32.mrb[0].mxu0
      %v9998 = vadd.f32 %v9677, %v9997
      %v9999 = vpop.f32.mrb[0].mxu0
      %v10000 = vpop.f32.mrb[0].mxu0
      %v10001 = vadd.f32 %v9680, %v10000
      %v10002 = vpop.f32.mrb[0].mxu0
      %10003 = vmatprep.mubr.bf16.mxu0 %v6688
      %10004 = vmatmul.mubr.bf16.gmra.mrb[0].mxu0 %v6687
      %v10005 = vpop.f32.mrb[0].mxu0
      %v10006 = vadd.f32 %v9685, %v10005
      %v10007 = vpop.f32.mrb[0].mxu0
      %v10008 = vpop.f32.mrb[0].mxu0
      %v10009 = vadd.f32 %v9688, %v10008
      %v10010 = vpop.f32.mrb[0].mxu0
      %10011 = vmatprep.mubr.bf16.mxu0 %v6693
      %10012 = vmatmul.mubr.bf16.gmra.mrb[0].mxu0 %v6692
      %v10013 = vpop.f32.mrb[0].mxu0
      %v10014 = vadd.f32 %v9693, %v10013
      %v10015 = vpop.f32.mrb[0].mxu0
      %v10016 = vpop.f32.mrb[0].mxu0
      %v10017 = vadd.f32 %v9696, %v10016
      %v10018 = vpop.f32.mrb[0].mxu0
      %10019 = vmatprep.mubr.bf16.mxu0 %v6698
      %10020 = vmatmul.mubr.bf16.gmra.mrb[0].mxu0 %v6697
      %v10021 = vpop.f32.mrb[0].mxu0
      %v10022 = vadd.f32 %v9701, %v10021
      %v10023 = vpop.f32.mrb[0].mxu0
      %v10024 = vpop.f32.mrb[0].mxu0
      %v10025 = vadd.f32 %v9704, %v10024
      %v10026 = vpop.f32.mrb[0].mxu0
      %10027 = vmatprep.mubr.bf16.mxu0 %v6703
      %10028 = vmatmul.mubr.bf16.gmra.mrb[0].mxu0 %v6702
      %v10029 = vpop.f32.mrb[0].mxu0
      %v10030 = vadd.f32 %v9709, %v10029
      %v10031 = vpop.f32.mrb[0].mxu0
      %v10032 = vpop.f32.mrb[0].mxu0
      %v10033 = vadd.f32 %v9712, %v10032
      %v10034 = vpop.f32.mrb[0].mxu0
      %10035 = vdwg.mxu0
      %10036 = vmatprep.subr.bf16.mxu0 0
      %10037 = vmatpush1.bf16.msra.mxu0 %v9387
      %10038 = vmatprep.subr.bf16.mxu0 0
      %10039 = vmatpush1.bf16.msra.mxu0 %v9388
      %10040 = vmatprep.subr.bf16.mxu0 0
      %10041 = vmatpush1.bf16.msra.mxu0 %v9389
      %10042 = vmatprep.subr.bf16.mxu0 0
      %10043 = vmatpush1.bf16.msra.mxu0 %v9392
      %10044 = vmatprep.subr.bf16.mxu0 0
      %10045 = vmatpush1.bf16.msra.mxu0 0
      %10046 = vmatprep.subr.bf16.mxu0 0
      %10047 = vmatpush1.bf16.msra.mxu0 0
      %10048 = vmatprep.subr.bf16.mxu0 0
      %10049 = vmatpush1.bf16.msra.mxu0 0
      %10050 = vmatprep.subr.bf16.mxu0 0
      %10051 = vmatpush1.bf16.msra.mxu0 0
      %10052 = vmatprep.subr.bf16.mxu0 0
      %10053 = vmatpush1.bf16.msra.mxu0 0
      %10054 = vmatprep.subr.bf16.mxu0 0
      %10055 = vmatpush1.bf16.msra.mxu0 0
      %10056 = vmatprep.subr.bf16.mxu0 0
      %10057 = vmatpush1.bf16.msra.mxu0 0
      %10058 = vmatprep.subr.bf16.mxu0 0
      %10059 = vmatpush1.bf16.msra.mxu0 0
      %10060 = vmatprep.subr.bf16.mxu0 0
      %10061 = vmatpush1.bf16.msra.mxu0 0
      %10062 = vmatprep.subr.bf16.mxu0 0
      %10063 = vmatpush1.bf16.msra.mxu0 0
      %10064 = vmatprep.subr.bf16.mxu0 0
      %10065 = vmatpush1.bf16.msra.mxu0 0
      %10066 = vmatprep.subr.bf16.mxu0 0
      %10067 = vmatpush1.bf16.msra.mxu0 0
      %10068 = vmatprep.mubr.bf16.mxu0 0
      %10069 = vmatmul.mubr.bf16.gmra.mrb[0].mxu0 %v7065
      %v10070 = vpop.f32.mrb[0].mxu0
      %v10071 = vadd.f32 %v9750, %v10070
      %v10072 = vpop.f32.mrb[0].mxu0
      %v10073 = vpop.f32.mrb[0].mxu0
      %v10074 = vadd.f32 %v9753, %v10073
      %v10075 = vpop.f32.mrb[0].mxu0
      %10076 = vmatprep.mubr.bf16.mxu0 0
      %10077 = vmatmul.mubr.bf16.gmra.mrb[0].mxu0 %v7068
      %v10078 = vpop.f32.mrb[0].mxu0
      %v10079 = vadd.f32 %v9758, %v10078
      %v10080 = vpop.f32.mrb[0].mxu0
      %v10081 = vpop.f32.mrb[0].mxu0
      %v10082 = vadd.f32 %v9761, %v10081
      %v10083 = vpop.f32.mrb[0].mxu0
      %10084 = vmatprep.mubr.bf16.mxu0 0
      %10085 = vmatmul.mubr.bf16.gmra.mrb[0].mxu0 %v7071
      %v10086 = vpop.f32.mrb[0].mxu0
      %v10087 = vadd.f32 %v9766, %v10086
      %v10088 = vpop.f32.mrb[0].mxu0
      %v10089 = vpop.f32.mrb[0].mxu0
      %v10090 = vadd.f32 %v9769, %v10089
      %v10091 = vpop.f32.mrb[0].mxu0
      %10092 = vmatprep.mubr.bf16.mxu0 0
      %10093 = vmatmul.mubr.bf16.gmra.mrb[0].mxu0 %v7074
      %v10094 = vpop.f32.mrb[0].mxu0
      %v10095 = vadd.f32 %v9774, %v10094
      %v10096 = vpop.f32.mrb[0].mxu0
      %v10097 = vpop.f32.mrb[0].mxu0
      %v10098 = vadd.f32 %v9777, %v10097
      %v10099 = vpop.f32.mrb[0].mxu0
      %10100 = vmatprep.mubr.bf16.mxu0 0
      %10101 = vmatmul.mubr.bf16.gmra.mrb[0].mxu0 %v7077
      %v10102 = vpop.f32.mrb[0].mxu0
      %v10103 = vadd.f32 %v9782, %v10102
      %v10104 = vpop.f32.mrb[0].mxu0
      %v10105 = vpop.f32.mrb[0].mxu0
      %v10106 = vadd.f32 %v9785, %v10105
      %v10107 = vpop.f32.mrb[0].mxu0
      %10108 = vmatprep.mubr.bf16.mxu0 0
      %10109 = vmatmul.mubr.bf16.gmra.mrb[0].mxu0 %v7080
      %v10110 = vpop.f32.mrb[0].mxu0
      %v10111 = vadd.f32 %v9790, %v10110
      %v10112 = vpop.f32.mrb[0].mxu0
      %v10113 = vpop.f32.mrb[0].mxu0
      %v10114 = vadd.f32 %v9793, %v10113
      %v10115 = vpop.f32.mrb[0].mxu0
      %10116 = vmatprep.mubr.bf16.mxu0 0
      %10117 = vmatmul.mubr.bf16.gmra.mrb[0].mxu0 %v7083
      %v10118 = vpop.f32.mrb[0].mxu0
      %v10119 = vadd.f32 %v9798, %v10118
      %v10120 = vpop.f32.mrb[0].mxu0
      %v10121 = vpop.f32.mrb[0].mxu0
      %v10122 = vadd.f32 %v9801, %v10121
      %v10123 = vpop.f32.mrb[0].mxu0
      %10124 = vmatprep.mubr.bf16.mxu0 0
      %10125 = vmatmul.mubr.bf16.gmra.mrb[0].mxu0 %v7086
      %v10126 = vpop.f32.mrb[0].mxu0
      %v10127 = vadd.f32 %v9806, %v10126
      %v10128 = vpop.f32.mrb[0].mxu0
      %v10129 = vpop.f32.mrb[0].mxu0
      %v10130 = vadd.f32 %v9809, %v10129
      %v10131 = vpop.f32.mrb[0].mxu0
      %10132 = vmatprep.mubr.bf16.mxu0 0
      %10133 = vmatmul.mubr.bf16.gmra.mrb[0].mxu0 %v7089
      %v10134 = vpop.f32.mrb[0].mxu0
      %v10135 = vadd.f32 %v9814, %v10134
      %v10136 = vpop.f32.mrb[0].mxu0
      %v10137 = vpop.f32.mrb[0].mxu0
      %v10138 = vadd.f32 %v9817, %v10137
      %v10139 = vpop.f32.mrb[0].mxu0
      %10140 = vmatprep.mubr.bf16.mxu0 0
      %10141 = vmatmul.mubr.bf16.gmra.mrb[0].mxu0 %v7092
      %v10142 = vpop.f32.mrb[0].mxu0
      %v10143 = vadd.f32 %v9822, %v10142
      %v10144 = vpop.f32.mrb[0].mxu0
      %v10145 = vpop.f32.mrb[0].mxu0
      %v10146 = vadd.f32 %v9825, %v10145
      %v10147 = vpop.f32.mrb[0].mxu0
      %10148 = vmatprep.mubr.bf16.mxu0 0
      %10149 = vmatmul.mubr.bf16.gmra.mrb[0].mxu0 %v7095
      %v10150 = vpop.f32.mrb[0].mxu0
      %v10151 = vadd.f32 %v9830, %v10150
      %v10152 = vpop.f32.mrb[0].mxu0
      %v10153 = vpop.f32.mrb[0].mxu0
      %v10154 = vadd.f32 %v9833, %v10153
      %v10155 = vpop.f32.mrb[0].mxu0
      %10156 = vmatprep.mubr.bf16.mxu0 0
      %10157 = vmatmul.mubr.bf16.gmra.mrb[0].mxu0 %v7098
      %v10158 = vpop.f32.mrb[0].mxu0
      %v10159 = vadd.f32 %v9838, %v10158
      %v10160 = vpop.f32.mrb[0].mxu0
      %v10161 = vpop.f32.mrb[0].mxu0
      %v10162 = vadd.f32 %v9841, %v10161
      %v10163 = vpop.f32.mrb[0].mxu0
      %10164 = vmatprep.mubr.bf16.mxu0 0
      %10165 = vmatmul.mubr.bf16.gmra.mrb[0].mxu0 %v7101
      %v10166 = vpop.f32.mrb[0].mxu0
      %v10167 = vadd.f32 %v9846, %v10166
      %v10168 = vpop.f32.mrb[0].mxu0
      %v10169 = vpop.f32.mrb[0].mxu0
      %v10170 = vadd.f32 %v9849, %v10169
      %v10171 = vpop.f32.mrb[0].mxu0
      %10172 = vmatprep.mubr.bf16.mxu0 0
      %10173 = vmatmul.mubr.bf16.gmra.mrb[0].mxu0 %v7104
      %v10174 = vpop.f32.mrb[0].mxu0
      %v10175 = vadd.f32 %v9854, %v10174
      %v10176 = vpop.f32.mrb[0].mxu0
      %v10177 = vpop.f32.mrb[0].mxu0
      %v10178 = vadd.f32 %v9857, %v10177
      %v10179 = vpop.f32.mrb[0].mxu0
      %10180 = vmatprep.mubr.bf16.mxu0 0
      %10181 = vmatmul.mubr.bf16.gmra.mrb[0].mxu0 %v7107
      %v10182 = vpop.f32.mrb[0].mxu0
      %v10183 = vadd.f32 %v9862, %v10182
      %v10184 = vpop.f32.mrb[0].mxu0
      %v10185 = vpop.f32.mrb[0].mxu0
      %v10186 = vadd.f32 %v9865, %v10185
      %v10187 = vpop.f32.mrb[0].mxu0
      %10188 = vmatprep.mubr.bf16.mxu0 0
      %10189 = vmatmul.mubr.bf16.gmra.mrb[0].mxu0 %v7110
      %v10190 = vpop.f32.mrb[0].mxu0
      %v10191 = vadd.f32 %v9870, %v10190
      %v10192 = vpop.f32.mrb[0].mxu0
      %v10193 = vpop.f32.mrb[0].mxu0
      %v10194 = vadd.f32 %v9873, %v10193
      %v10195 = vpop.f32.mrb[0].mxu0
      %10196 = vmatprep.mubr.bf16.mxu0 0
      %10197 = vmatmul.mubr.bf16.gmra.mrb[0].mxu0 %v7113
      %v10198 = vpop.f32.mrb[0].mxu0
      %v10199 = vadd.f32 %v9878, %v10198
      %v10200 = vpop.f32.mrb[0].mxu0
      %v10201 = vpop.f32.mrb[0].mxu0
      %v10202 = vadd.f32 %v9881, %v10201
      %v10203 = vpop.f32.mrb[0].mxu0
      %10204 = vmatprep.mubr.bf16.mxu0 0
      %10205 = vmatmul.mubr.bf16.gmra.mrb[0].mxu0 %v7116
      %v10206 = vpop.f32.mrb[0].mxu0
      %v10207 = vadd.f32 %v9886, %v10206
      %v10208 = vpop.f32.mrb[0].mxu0
      %v10209 = vpop.f32.mrb[0].mxu0
      %v10210 = vadd.f32 %v9889, %v10209
      %v10211 = vpop.f32.mrb[0].mxu0
      %10212 = vmatprep.mubr.bf16.mxu0 0
      %10213 = vmatmul.mubr.bf16.gmra.mrb[0].mxu0 %v7119
      %v10214 = vpop.f32.mrb[0].mxu0
      %v10215 = vadd.f32 %v9894, %v10214
      %v10216 = vpop.f32.mrb[0].mxu0
      %v10217 = vpop.f32.mrb[0].mxu0
      %v10218 = vadd.f32 %v9897, %v10217
      %v10219 = vpop.f32.mrb[0].mxu0
      %10220 = vmatprep.mubr.bf16.mxu0 0
      %10221 = vmatmul.mubr.bf16.gmra.mrb[0].mxu0 %v7122
      %v10222 = vpop.f32.mrb[0].mxu0
      %v10223 = vadd.f32 %v9902, %v10222
      %v10224 = vpop.f32.mrb[0].mxu0
      %v10225 = vpop.f32.mrb[0].mxu0
      %v10226 = vadd.f32 %v9905, %v10225
      %v10227 = vpop.f32.mrb[0].mxu0
      %10228 = vmatprep.mubr.bf16.mxu0 0
      %10229 = vmatmul.mubr.bf16.gmra.mrb[0].mxu0 %v7125
      %v10230 = vpop.f32.mrb[0].mxu0
      %v10231 = vadd.f32 %v9910, %v10230
      %v10232 = vpop.f32.mrb[0].mxu0
      %v10233 = vpop.f32.mrb[0].mxu0
      %v10234 = vadd.f32 %v9913, %v10233
      %v10235 = vpop.f32.mrb[0].mxu0
      %10236 = vmatprep.mubr.bf16.mxu0 0
      %10237 = vmatmul.mubr.bf16.gmra.mrb[0].mxu0 %v7128
      %v10238 = vpop.f32.mrb[0].mxu0
      %v10239 = vadd.f32 %v9918, %v10238
      %v10240 = vpop.f32.mrb[0].mxu0
      %v10241 = vpop.f32.mrb[0].mxu0
      %v10242 = vadd.f32 %v9921, %v10241
      %v10243 = vpop.f32.mrb[0].mxu0
      %10244 = vmatprep.mubr.bf16.mxu0 0
      %10245 = vmatmul.mubr.bf16.gmra.mrb[0].mxu0 %v7131
      %v10246 = vpop.f32.mrb[0].mxu0
      %v10247 = vadd.f32 %v9926, %v10246
      %v10248 = vpop.f32.mrb[0].mxu0
      %v10249 = vpop.f32.mrb[0].mxu0
      %v10250 = vadd.f32 %v9929, %v10249
      %v10251 = vpop.f32.mrb[0].mxu0
      %10252 = vmatprep.mubr.bf16.mxu0 0
      %10253 = vmatmul.mubr.bf16.gmra.mrb[0].mxu0 %v7134
      %v10254 = vpop.f32.mrb[0].mxu0
      %v10255 = vadd.f32 %v9934, %v10254
      %v10256 = vpop.f32.mrb[0].mxu0
      %v10257 = vpop.f32.mrb[0].mxu0
      %v10258 = vadd.f32 %v9937, %v10257
      %v10259 = vpop.f32.mrb[0].mxu0
      %10260 = vmatprep.mubr.bf16.mxu0 0
      %10261 = vmatmul.mubr.bf16.gmra.mrb[0].mxu0 %v7137
      %v10262 = vpop.f32.mrb[0].mxu0
      %v10263 = vadd.f32 %v9942, %v10262
      %v10264 = vpop.f32.mrb[0].mxu0
      %v10265 = vpop.f32.mrb[0].mxu0
      %v10266 = vadd.f32 %v9945, %v10265
      %v10267 = vpop.f32.mrb[0].mxu0
      %10268 = vmatprep.mubr.bf16.mxu0 0
      %10269 = vmatmul.mubr.bf16.gmra.mrb[0].mxu0 %v7140
      %v10270 = vpop.f32.mrb[0].mxu0
      %v10271 = vadd.f32 %v9950, %v10270
      %v10272 = vpop.f32.mrb[0].mxu0
      %v10273 = vpop.f32.mrb[0].mxu0
      %v10274 = vadd.f32 %v9953, %v10273
      %v10275 = vpop.f32.mrb[0].mxu0
      %10276 = vmatprep.mubr.bf16.mxu0 0
      %10277 = vmatmul.mubr.bf16.gmra.mrb[0].mxu0 %v7143
      %v10278 = vpop.f32.mrb[0].mxu0
      %v10279 = vadd.f32 %v9958, %v10278
      %v10280 = vpop.f32.mrb[0].mxu0
      %v10281 = vpop.f32.mrb[0].mxu0
      %v10282 = vadd.f32 %v9961, %v10281
      %v10283 = vpop.f32.mrb[0].mxu0
      %10284 = vmatprep.mubr.bf16.mxu0 0
      %10285 = vmatmul.mubr.bf16.gmra.mrb[0].mxu0 %v7146
      %v10286 = vpop.f32.mrb[0].mxu0
      %v10287 = vadd.f32 %v9966, %v10286
      %v10288 = vpop.f32.mrb[0].mxu0
      %v10289 = vpop.f32.mrb[0].mxu0
      %v10290 = vadd.f32 %v9969, %v10289
      %v10291 = vpop.f32.mrb[0].mxu0
      %10292 = vmatprep.mubr.bf16.mxu0 0
      %10293 = vmatmul.mubr.bf16.gmra.mrb[0].mxu0 %v7149
      %v10294 = vpop.f32.mrb[0].mxu0
      %v10295 = vadd.f32 %v9974, %v10294
      %v10296 = vpop.f32.mrb[0].mxu0
      %v10297 = vpop.f32.mrb[0].mxu0
      %v10298 = vadd.f32 %v9977, %v10297
      %v10299 = vpop.f32.mrb[0].mxu0
      %10300 = vmatprep.mubr.bf16.mxu0 0
      %10301 = vmatmul.mubr.bf16.gmra.mrb[0].mxu0 %v7152
      %v10302 = vpop.f32.mrb[0].mxu0
      %v10303 = vadd.f32 %v9982, %v10302
      %v10304 = vpop.f32.mrb[0].mxu0
      %v10305 = vpop.f32.mrb[0].mxu0
      %v10306 = vadd.f32 %v9985, %v10305
      %v10307 = vpop.f32.mrb[0].mxu0
      %10308 = vmatprep.mubr.bf16.mxu0 0
      %10309 = vmatmul.mubr.bf16.gmra.mrb[0].mxu0 %v7155
      %v10310 = vpop.f32.mrb[0].mxu0
      %v10311 = vadd.f32 %v9990, %v10310
      %v10312 = vpop.f32.mrb[0].mxu0
      %v10313 = vpop.f32.mrb[0].mxu0
      %v10314 = vadd.f32 %v9993, %v10313
      %v10315 = vpop.f32.mrb[0].mxu0
      %10316 = vmatprep.mubr.bf16.mxu0 0
      %10317 = vmatmul.mubr.bf16.gmra.mrb[0].mxu0 %v7158
      %v10318 = vpop.f32.mrb[0].mxu0
      %v10319 = vadd.f32 %v9998, %v10318
      %v10320 = vpop.f32.mrb[0].mxu0
      %v10321 = vpop.f32.mrb[0].mxu0
      %v10322 = vadd.f32 %v10001, %v10321
      %v10323 = vpop.f32.mrb[0].mxu0
      %10324 = vmatprep.mubr.bf16.mxu0 0
      %10325 = vmatmul.mubr.bf16.gmra.mrb[0].mxu0 %v7161
      %v10326 = vpop.f32.mrb[0].mxu0
      %v10327 = vadd.f32 %v10006, %v10326
      %v10328 = vpop.f32.mrb[0].mxu0
      %v10329 = vpop.f32.mrb[0].mxu0
      %v10330 = vadd.f32 %v10009, %v10329
      %v10331 = vpop.f32.mrb[0].mxu0
      %10332 = vmatprep.mubr.bf16.mxu0 0
      %10333 = vmatmul.mubr.bf16.gmra.mrb[0].mxu0 %v7164
      %v10334 = vpop.f32.mrb[0].mxu0
      %v10335 = vadd.f32 %v10014, %v10334
      %v10336 = vpop.f32.mrb[0].mxu0
      %v10337 = vpop.f32.mrb[0].mxu0
      %v10338 = vadd.f32 %v10017, %v10337
      %v10339 = vpop.f32.mrb[0].mxu0
      %10340 = vmatprep.mubr.bf16.mxu0 0
      %10341 = vmatmul.mubr.bf16.gmra.mrb[0].mxu0 %v7167
      %v10342 = vpop.f32.mrb[0].mxu0
      %v10343 = vadd.f32 %v10022, %v10342
      %v10344 = vpop.f32.mrb[0].mxu0
      %v10345 = vpop.f32.mrb[0].mxu0
      %v10346 = vadd.f32 %v10025, %v10345
      %v10347 = vpop.f32.mrb[0].mxu0
      %10348 = vmatprep.mubr.bf16.mxu0 0
      %10349 = vmatmul.mubr.bf16.gmra.mrb[0].mxu0 %v7170
      %v10350 = vpop.f32.mrb[0].mxu0
      %v10351 = vadd.f32 %v10030, %v10350
      %v10352 = vpop.f32.mrb[0].mxu0
      %v10353 = vpop.f32.mrb[0].mxu0
      %v10354 = vadd.f32 %v10033, %v10353
      %v10355 = vpop.f32.mrb[0].mxu0
      %10356 = vdwg.mxu0
      %v10357 = vsub.f32 %v10071, %v10071
      %v10358 = vsub.f32 %v10074, %v10074
      %v10359 = vsub.f32 %v10079, %v10079
      %v10360 = vsub.f32 %v10082, %v10082
      %v10361 = vsub.f32 %v10087, %v10087
      %v10362 = vsub.f32 %v10090, %v10090
      %v10363 = vsub.f32 %v10095, %v10095
      %v10364 = vsub.f32 %v10098, %v10098
      %v10365 = vsub.f32 %v10103, %v10103
      %v10366 = vsub.f32 %v10106, %v10106
      %v10367 = vsub.f32 %v10111, %v10111
      %v10368 = vsub.f32 %v10114, %v10114
      %v10369 = vsub.f32 %v10119, %v10119
      %v10370 = vsub.f32 %v10122, %v10122
      %v10371 = vsub.f32 %v10127, %v10127
      %v10372 = vsub.f32 %v10130, %v10130
      %v10373 = vsub.f32 %v10135, %v10135
      %v10374 = vsub.f32 %v10138, %v10138
      %v10375 = vsub.f32 %v10143, %v10143
      %v10376 = vsub.f32 %v10146, %v10146
      %v10377 = vsub.f32 %v10151, %v10151
      %v10378 = vsub.f32 %v10154, %v10154
      %v10379 = vsub.f32 %v10159, %v10159
      %v10380 = vsub.f32 %v10162, %v10162
      %v10381 = vsub.f32 %v10167, %v10167
      %v10382 = vsub.f32 %v10170, %v10170
      %v10383 = vsub.f32 %v10175, %v10175
      %v10384 = vsub.f32 %v10178, %v10178
      %v10385 = vsub.f32 %v10183, %v10183
      %v10386 = vsub.f32 %v10186, %v10186
      %v10387 = vsub.f32 %v10191, %v10191
      %v10388 = vsub.f32 %v10194, %v10194
      %v10389 = vsub.f32 %v10199, %v10199
      %v10390 = vsub.f32 %v10202, %v10202
      %v10391 = vsub.f32 %v10207, %v10207
      %v10392 = vsub.f32 %v10210, %v10210
      %v10393 = vsub.f32 %v10215, %v10215
      %v10394 = vsub.f32 %v10218, %v10218
      %v10395 = vsub.f32 %v10223, %v10223
      %v10396 = vsub.f32 %v10226, %v10226
      %v10397 = vsub.f32 %v10231, %v10231
      %v10398 = vsub.f32 %v10234, %v10234
      %v10399 = vsub.f32 %v10239, %v10239
      %v10400 = vsub.f32 %v10242, %v10242
      %v10401 = vsub.f32 %v10247, %v10247
      %v10402 = vsub.f32 %v10250, %v10250
      %v10403 = vsub.f32 %v10255, %v10255
      %v10404 = vsub.f32 %v10258, %v10258
      %v10405 = vsub.f32 %v10263, %v10263
      %v10406 = vsub.f32 %v10266, %v10266
      %v10407 = vsub.f32 %v10271, %v10271
      %v10408 = vsub.f32 %v10274, %v10274
      %v10409 = vsub.f32 %v10279, %v10279
      %v10410 = vsub.f32 %v10282, %v10282
      %v10411 = vsub.f32 %v10287, %v10287
      %v10412 = vsub.f32 %v10290, %v10290
      %v10413 = vsub.f32 %v10295, %v10295
      %v10414 = vsub.f32 %v10298, %v10298
      %v10415 = vsub.f32 %v10303, %v10303
      %v10416 = vsub.f32 %v10306, %v10306
      %v10417 = vsub.f32 %v10311, %v10311
      %v10418 = vsub.f32 %v10314, %v10314
      %v10419 = vsub.f32 %v10319, %v10319
      %v10420 = vsub.f32 %v10322, %v10322
      %v10421 = vsub.f32 %v10327, %v10327
      %v10422 = vsub.f32 %v10330, %v10330
      %v10423 = vsub.f32 %v10335, %v10335
      %v10424 = vsub.f32 %v10338, %v10338
      %v10425 = vsub.f32 %v10343, %v10343
      %v10426 = vsub.f32 %v10346, %v10346
      %v10427 = vsub.f32 %v10351, %v10351
      %v10428 = vsub.f32 %v10354, %v10354
      %v10429 = vmul.f32 %v10357, 1.442695
      %v10430 = vpow.pop %v10429
      %v10431 = vmul.f32 %v10358, 1.442695
      %v10432 = vpow.pop %v10431
      %v10433 = vmul.f32 %v10359, 1.442695
      %v10434 = vpow.pop %v10433
      %v10435 = vmul.f32 %v10360, 1.442695
      %v10436 = vpow.pop %v10435
      %v10437 = vmul.f32 %v10361, 1.442695
      %v10438 = vpow.pop %v10437
      %v10439 = vmul.f32 %v10362, 1.442695
      %v10440 = vpow.pop %v10439
      %v10441 = vmul.f32 %v10363, 1.442695
      %v10442 = vpow.pop %v10441
      %v10443 = vmul.f32 %v10364, 1.442695
      %v10444 = vpow.pop %v10443
      %v10445 = vmul.f32 %v10365, 1.442695
      %v10446 = vpow.pop %v10445
      %v10447 = vmul.f32 %v10366, 1.442695
      %v10448 = vpow.pop %v10447
      %v10449 = vmul.f32 %v10367, 1.442695
      %v10450 = vpow.pop %v10449
      %v10451 = vmul.f32 %v10368, 1.442695
      %v10452 = vpow.pop %v10451
      %v10453 = vmul.f32 %v10369, 1.442695
      %v10454 = vpow.pop %v10453
      %v10455 = vmul.f32 %v10370, 1.442695
      %v10456 = vpow.pop %v10455
      %v10457 = vmul.f32 %v10371, 1.442695
      %v10458 = vpow.pop %v10457
      %v10459 = vmul.f32 %v10372, 1.442695
      %v10460 = vpow.pop %v10459
      %v10461 = vmul.f32 %v10373, 1.442695
      %v10462 = vpow.pop %v10461
      %v10463 = vmul.f32 %v10374, 1.442695
      %v10464 = vpow.pop %v10463
      %v10465 = vmul.f32 %v10375, 1.442695
      %v10466 = vpow.pop %v10465
      %v10467 = vmul.f32 %v10376, 1.442695
      %v10468 = vpow.pop %v10467
      %v10469 = vmul.f32 %v10377, 1.442695
      %v10470 = vpow.pop %v10469
      %v10471 = vmul.f32 %v10378, 1.442695
      %v10472 = vpow.pop %v10471
      %v10473 = vmul.f32 %v10379, 1.442695
      %v10474 = vpow.pop %v10473
      %v10475 = vmul.f32 %v10380, 1.442695
      %v10476 = vpow.pop %v10475
      %v10477 = vmul.f32 %v10381, 1.442695
      %v10478 = vpow.pop %v10477
      %v10479 = vmul.f32 %v10382, 1.442695
      %v10480 = vpow.pop %v10479
      %v10481 = vmul.f32 %v10383, 1.442695
      %v10482 = vpow.pop %v10481
      %v10483 = vmul.f32 %v10384, 1.442695
      %v10484 = vpow.pop %v10483
      %v10485 = vmul.f32 %v10385, 1.442695
      %v10486 = vpow.pop %v10485
      %v10487 = vmul.f32 %v10386, 1.442695
      %v10488 = vpow.pop %v10487
      %v10489 = vmul.f32 %v10387, 1.442695
      %v10490 = vpow.pop %v10489
      %v10491 = vmul.f32 %v10388, 1.442695
      %v10492 = vpow.pop %v10491
      %v10493 = vmul.f32 %v10389, 1.442695
      %v10494 = vpow.pop %v10493
      %v10495 = vmul.f32 %v10390, 1.442695
      %v10496 = vpow.pop %v10495
      %v10497 = vmul.f32 %v10391, 1.442695
      %v10498 = vpow.pop %v10497
      %v10499 = vmul.f32 %v10392, 1.442695
      %v10500 = vpow.pop %v10499
      %v10501 = vmul.f32 %v10393, 1.442695
      %v10502 = vpow.pop %v10501
      %v10503 = vmul.f32 %v10394, 1.442695
      %v10504 = vpow.pop %v10503
      %v10505 = vmul.f32 %v10395, 1.442695
      %v10506 = vpow.pop %v10505
      %v10507 = vmul.f32 %v10396, 1.442695
      %v10508 = vpow.pop %v10507
      %v10509 = vmul.f32 %v10397, 1.442695
      %v10510 = vpow.pop %v10509
      %v10511 = vmul.f32 %v10398, 1.442695
      %v10512 = vpow.pop %v10511
      %v10513 = vmul.f32 %v10399, 1.442695
      %v10514 = vpow.pop %v10513
      %v10515 = vmul.f32 %v10400, 1.442695
      %v10516 = vpow.pop %v10515
      %v10517 = vmul.f32 %v10401, 1.442695
      %v10518 = vpow.pop %v10517
      %v10519 = vmul.f32 %v10402, 1.442695
      %v10520 = vpow.pop %v10519
      %v10521 = vmul.f32 %v10403, 1.442695
      %v10522 = vpow.pop %v10521
      %v10523 = vmul.f32 %v10404, 1.442695
      %v10524 = vpow.pop %v10523
      %v10525 = vmul.f32 %v10405, 1.442695
      %v10526 = vpow.pop %v10525
      %v10527 = vmul.f32 %v10406, 1.442695
      %v10528 = vpow.pop %v10527
      %v10529 = vmul.f32 %v10407, 1.442695
      %v10530 = vpow.pop %v10529
      %v10531 = vmul.f32 %v10408, 1.442695
      %v10532 = vpow.pop %v10531
      %v10533 = vmul.f32 %v10409, 1.442695
      %v10534 = vpow.pop %v10533
      %v10535 = vmul.f32 %v10410, 1.442695
      %v10536 = vpow.pop %v10535
      %v10537 = vmul.f32 %v10411, 1.442695
      %v10538 = vpow.pop %v10537
      %v10539 = vmul.f32 %v10412, 1.442695
      %v10540 = vpow.pop %v10539
      %v10541 = vmul.f32 %v10413, 1.442695
      %v10542 = vpow.pop %v10541
      %v10543 = vmul.f32 %v10414, 1.442695
      %v10544 = vpow.pop %v10543
      %v10545 = vmul.f32 %v10415, 1.442695
      %v10546 = vpow.pop %v10545
      %v10547 = vmul.f32 %v10416, 1.442695
      %v10548 = vpow.pop %v10547
      %v10549 = vmul.f32 %v10417, 1.442695
      %v10550 = vpow.pop %v10549
      %v10551 = vmul.f32 %v10418, 1.442695
      %v10552 = vpow.pop %v10551
      %v10553 = vmul.f32 %v10419, 1.442695
      %v10554 = vpow.pop %v10553
      %v10555 = vmul.f32 %v10420, 1.442695
      %v10556 = vpow.pop %v10555
      %v10557 = vmul.f32 %v10421, 1.442695
      %v10558 = vpow.pop %v10557
      %v10559 = vmul.f32 %v10422, 1.442695
      %v10560 = vpow.pop %v10559
      %v10561 = vmul.f32 %v10423, 1.442695
      %v10562 = vpow.pop %v10561
      %v10563 = vmul.f32 %v10424, 1.442695
      %v10564 = vpow.pop %v10563
      %v10565 = vmul.f32 %v10425, 1.442695
      %v10566 = vpow.pop %v10565
      %v10567 = vmul.f32 %v10426, 1.442695
      %v10568 = vpow.pop %v10567
      %v10569 = vmul.f32 %v10427, 1.442695
      %v10570 = vpow.pop %v10569
      %v10571 = vmul.f32 %v10428, 1.442695
      %v10572 = vpow.pop %v10571
      %v10573 = vadd.f32 %v10430, 0.0
      %v10574 = vadd.f32 %v10432, 0.0
      %v10575 = vadd.f32 %v10434, 0.0
      %v10576 = vadd.f32 %v10436, 0.0
      %v10577 = vadd.f32 %v10438, 0.0
      %v10578 = vadd.f32 %v10440, 0.0
      %v10579 = vadd.f32 %v10442, 0.0
      %v10580 = vadd.f32 %v10444, 0.0
      %v10581 = vadd.f32 %v10446, 0.0
      %v10582 = vadd.f32 %v10448, 0.0
      %v10583 = vadd.f32 %v10450, 0.0
      %v10584 = vadd.f32 %v10452, 0.0
      %v10585 = vadd.f32 %v10454, 0.0
      %v10586 = vadd.f32 %v10456, 0.0
      %v10587 = vadd.f32 %v10458, 0.0
      %v10588 = vadd.f32 %v10460, 0.0
      %v10589 = vadd.f32 %v10462, 0.0
      %v10590 = vadd.f32 %v10464, 0.0
      %v10591 = vadd.f32 %v10466, 0.0
      %v10592 = vadd.f32 %v10468, 0.0
      %v10593 = vadd.f32 %v10470, 0.0
      %v10594 = vadd.f32 %v10472, 0.0
      %v10595 = vadd.f32 %v10474, 0.0
      %v10596 = vadd.f32 %v10476, 0.0
      %v10597 = vadd.f32 %v10478, 0.0
      %v10598 = vadd.f32 %v10480, 0.0
      %v10599 = vadd.f32 %v10482, 0.0
      %v10600 = vadd.f32 %v10484, 0.0
      %v10601 = vadd.f32 %v10486, 0.0
      %v10602 = vadd.f32 %v10488, 0.0
      %v10603 = vadd.f32 %v10490, 0.0
      %v10604 = vadd.f32 %v10492, 0.0
      %v10605 = vadd.f32 %v10494, 0.0
      %v10606 = vadd.f32 %v10496, 0.0
      %v10607 = vadd.f32 %v10498, 0.0
      %v10608 = vadd.f32 %v10500, 0.0
      %v10609 = vadd.f32 %v10502, 0.0
      %v10610 = vadd.f32 %v10504, 0.0
      %v10611 = vadd.f32 %v10506, 0.0
      %v10612 = vadd.f32 %v10508, 0.0
      %v10613 = vadd.f32 %v10510, 0.0
      %v10614 = vadd.f32 %v10512, 0.0
      %v10615 = vadd.f32 %v10514, 0.0
      %v10616 = vadd.f32 %v10516, 0.0
      %v10617 = vadd.f32 %v10518, 0.0
      %v10618 = vadd.f32 %v10520, 0.0
      %v10619 = vadd.f32 %v10522, 0.0
      %v10620 = vadd.f32 %v10524, 0.0
      %v10621 = vadd.f32 %v10526, 0.0
      %v10622 = vadd.f32 %v10528, 0.0
      %v10623 = vadd.f32 %v10530, 0.0
      %v10624 = vadd.f32 %v10532, 0.0
      %v10625 = vadd.f32 %v10534, 0.0
      %v10626 = vadd.f32 %v10536, 0.0
      %v10627 = vadd.f32 %v10538, 0.0
      %v10628 = vadd.f32 %v10540, 0.0
      %v10629 = vadd.f32 %v10542, 0.0
      %v10630 = vadd.f32 %v10544, 0.0
      %v10631 = vadd.f32 %v10546, 0.0
      %v10632 = vadd.f32 %v10548, 0.0
      %v10633 = vadd.f32 %v10550, 0.0
      %v10634 = vadd.f32 %v10552, 0.0
      %v10635 = vadd.f32 %v10554, 0.0
      %v10636 = vadd.f32 %v10556, 0.0
      %v10637 = vadd.f32 %v10558, 0.0
      %v10638 = vadd.f32 %v10560, 0.0
      %v10639 = vadd.f32 %v10562, 0.0
      %v10640 = vadd.f32 %v10564, 0.0
      %v10641 = vadd.f32 %v10566, 0.0
      %v10642 = vadd.f32 %v10568, 0.0
      %v10643 = vadd.f32 %v10570, 0.0
      %v10644 = vadd.f32 %v10572, 0.0
      %v10645 = vlog2.pop %v10573
      %v10646 = vmul.f32 %v10645, 0.6931472
      %v10647 = vlog2.pop %v10574
      %v10648 = vmul.f32 %v10647, 0.6931472
      %v10649 = vlog2.pop %v10575
      %v10650 = vmul.f32 %v10649, 0.6931472
      %v10651 = vlog2.pop %v10576
      %v10652 = vmul.f32 %v10651, 0.6931472
      %v10653 = vlog2.pop %v10577
      %v10654 = vmul.f32 %v10653, 0.6931472
      %v10655 = vlog2.pop %v10578
      %v10656 = vmul.f32 %v10655, 0.6931472
      %v10657 = vlog2.pop %v10579
      %v10658 = vmul.f32 %v10657, 0.6931472
      %v10659 = vlog2.pop %v10580
      %v10660 = vmul.f32 %v10659, 0.6931472
      %v10661 = vlog2.pop %v10581
      %v10662 = vmul.f32 %v10661, 0.6931472
      %v10663 = vlog2.pop %v10582
      %v10664 = vmul.f32 %v10663, 0.6931472
      %v10665 = vlog2.pop %v10583
      %v10666 = vmul.f32 %v10665, 0.6931472
      %v10667 = vlog2.pop %v10584
      %v10668 = vmul.f32 %v10667, 0.6931472
      %v10669 = vlog2.pop %v10585
      %v10670 = vmul.f32 %v10669, 0.6931472
      %v10671 = vlog2.pop %v10586
      %v10672 = vmul.f32 %v10671, 0.6931472
      %v10673 = vlog2.pop %v10587
      %v10674 = vmul.f32 %v10673, 0.6931472
      %v10675 = vlog2.pop %v10588
      %v10676 = vmul.f32 %v10675, 0.6931472
      %v10677 = vlog2.pop %v10589
      %v10678 = vmul.f32 %v10677, 0.6931472
      %v10679 = vlog2.pop %v10590
      %v10680 = vmul.f32 %v10679, 0.6931472
      %v10681 = vlog2.pop %v10591
      %v10682 = vmul.f32 %v10681, 0.6931472
      %v10683 = vlog2.pop %v10592
      %v10684 = vmul.f32 %v10683, 0.6931472
      %v10685 = vlog2.pop %v10593
      %v10686 = vmul.f32 %v10685, 0.6931472
      %v10687 = vlog2.pop %v10594
      %v10688 = vmul.f32 %v10687, 0.6931472
      %v10689 = vlog2.pop %v10595
      %v10690 = vmul.f32 %v10689, 0.6931472
      %v10691 = vlog2.pop %v10596
      %v10692 = vmul.f32 %v10691, 0.6931472
      %v10693 = vlog2.pop %v10597
      %v10694 = vmul.f32 %v10693, 0.6931472
      %v10695 = vlog2.pop %v10598
      %v10696 = vmul.f32 %v10695, 0.6931472
      %v10697 = vlog2.pop %v10599
      %v10698 = vmul.f32 %v10697, 0.6931472
      %v10699 = vlog2.pop %v10600
      %v10700 = vmul.f32 %v10699, 0.6931472
      %v10701 = vlog2.pop %v10601
      %v10702 = vmul.f32 %v10701, 0.6931472
      %v10703 = vlog2.pop %v10602
      %v10704 = vmul.f32 %v10703, 0.6931472
      %v10705 = vlog2.pop %v10603
      %v10706 = vmul.f32 %v10705, 0.6931472
      %v10707 = vlog2.pop %v10604
      %v10708 = vmul.f32 %v10707, 0.6931472
      %v10709 = vlog2.pop %v10605
      %v10710 = vmul.f32 %v10709, 0.6931472
      %v10711 = vlog2.pop %v10606
      %v10712 = vmul.f32 %v10711, 0.6931472
      %v10713 = vlog2.pop %v10607
      %v10714 = vmul.f32 %v10713, 0.6931472
      %v10715 = vlog2.pop %v10608
      %v10716 = vmul.f32 %v10715, 0.6931472
      %v10717 = vlog2.pop %v10609
      %v10718 = vmul.f32 %v10717, 0.6931472
      %v10719 = vlog2.pop %v10610
      %v10720 = vmul.f32 %v10719, 0.6931472
      %v10721 = vlog2.pop %v10611
      %v10722 = vmul.f32 %v10721, 0.6931472
      %v10723 = vlog2.pop %v10612
      %v10724 = vmul.f32 %v10723, 0.6931472
      %v10725 = vlog2.pop %v10613
      %v10726 = vmul.f32 %v10725, 0.6931472
      %v10727 = vlog2.pop %v10614
      %v10728 = vmul.f32 %v10727, 0.6931472
      %v10729 = vlog2.pop %v10615
      %v10730 = vmul.f32 %v10729, 0.6931472
      %v10731 = vlog2.pop %v10616
      %v10732 = vmul.f32 %v10731, 0.6931472
      %v10733 = vlog2.pop %v10617
      %v10734 = vmul.f32 %v10733, 0.6931472
      %v10735 = vlog2.pop %v10618
      %v10736 = vmul.f32 %v10735, 0.6931472
      %v10737 = vlog2.pop %v10619
      %v10738 = vmul.f32 %v10737, 0.6931472
      %v10739 = vlog2.pop %v10620
      %v10740 = vmul.f32 %v10739, 0.6931472
      %v10741 = vlog2.pop %v10621
      %v10742 = vmul.f32 %v10741, 0.6931472
      %v10743 = vlog2.pop %v10622
      %v10744 = vmul.f32 %v10743, 0.6931472
      %v10745 = vlog2.pop %v10623
      %v10746 = vmul.f32 %v10745, 0.6931472
      %v10747 = vlog2.pop %v10624
      %v10748 = vmul.f32 %v10747, 0.6931472
      %v10749 = vlog2.pop %v10625
      %v10750 = vmul.f32 %v10749, 0.6931472
      %v10751 = vlog2.pop %v10626
      %v10752 = vmul.f32 %v10751, 0.6931472
      %v10753 = vlog2.pop %v10627
      %v10754 = vmul.f32 %v10753, 0.6931472
      %v10755 = vlog2.pop %v10628
      %v10756 = vmul.f32 %v10755, 0.6931472
      %v10757 = vlog2.pop %v10629
      %v10758 = vmul.f32 %v10757, 0.6931472
      %v10759 = vlog2.pop %v10630
      %v10760 = vmul.f32 %v10759, 0.6931472
      %v10761 = vlog2.pop %v10631
      %v10762 = vmul.f32 %v10761, 0.6931472
      %v10763 = vlog2.pop %v10632
      %v10764 = vmul.f32 %v10763, 0.6931472
      %v10765 = vlog2.pop %v10633
      %v10766 = vmul.f32 %v10765, 0.6931472
      %v10767 = vlog2.pop %v10634
      %v10768 = vmul.f32 %v10767, 0.6931472
      %v10769 = vlog2.pop %v10635
      %v10770 = vmul.f32 %v10769, 0.6931472
      %v10771 = vlog2.pop %v10636
      %v10772 = vmul.f32 %v10771, 0.6931472
      %v10773 = vlog2.pop %v10637
      %v10774 = vmul.f32 %v10773, 0.6931472
      %v10775 = vlog2.pop %v10638
      %v10776 = vmul.f32 %v10775, 0.6931472
      %v10777 = vlog2.pop %v10639
      %v10778 = vmul.f32 %v10777, 0.6931472
      %v10779 = vlog2.pop %v10640
      %v10780 = vmul.f32 %v10779, 0.6931472
      %v10781 = vlog2.pop %v10641
      %v10782 = vmul.f32 %v10781, 0.6931472
      %v10783 = vlog2.pop %v10642
      %v10784 = vmul.f32 %v10783, 0.6931472
      %v10785 = vlog2.pop %v10643
      %v10786 = vmul.f32 %v10785, 0.6931472
      %v10787 = vlog2.pop %v10644
      %v10788 = vmul.f32 %v10787, 0.6931472
      %v10789 = vadd.f32 %v10071, %v10646
      %v10790 = vadd.f32 %v10074, %v10648
      %v10791 = vadd.f32 %v10079, %v10650
      %v10792 = vadd.f32 %v10082, %v10652
      %v10793 = vadd.f32 %v10087, %v10654
      %v10794 = vadd.f32 %v10090, %v10656
      %v10795 = vadd.f32 %v10095, %v10658
      %v10796 = vadd.f32 %v10098, %v10660
      %v10797 = vadd.f32 %v10103, %v10662
      %v10798 = vadd.f32 %v10106, %v10664
      %v10799 = vadd.f32 %v10111, %v10666
      %v10800 = vadd.f32 %v10114, %v10668
      %v10801 = vadd.f32 %v10119, %v10670
      %v10802 = vadd.f32 %v10122, %v10672
      %v10803 = vadd.f32 %v10127, %v10674
      %v10804 = vadd.f32 %v10130, %v10676
      %v10805 = vadd.f32 %v10135, %v10678
      %v10806 = vadd.f32 %v10138, %v10680
      %v10807 = vadd.f32 %v10143, %v10682
      %v10808 = vadd.f32 %v10146, %v10684
      %v10809 = vadd.f32 %v10151, %v10686
      %v10810 = vadd.f32 %v10154, %v10688
      %v10811 = vadd.f32 %v10159, %v10690
      %v10812 = vadd.f32 %v10162, %v10692
      %v10813 = vadd.f32 %v10167, %v10694
      %v10814 = vadd.f32 %v10170, %v10696
      %v10815 = vadd.f32 %v10175, %v10698
      %v10816 = vadd.f32 %v10178, %v10700
      %v10817 = vadd.f32 %v10183, %v10702
      %v10818 = vadd.f32 %v10186, %v10704
      %v10819 = vadd.f32 %v10191, %v10706
      %v10820 = vadd.f32 %v10194, %v10708
      %v10821 = vadd.f32 %v10199, %v10710
      %v10822 = vadd.f32 %v10202, %v10712
      %v10823 = vadd.f32 %v10207, %v10714
      %v10824 = vadd.f32 %v10210, %v10716
      %v10825 = vadd.f32 %v10215, %v10718
      %v10826 = vadd.f32 %v10218, %v10720
      %v10827 = vadd.f32 %v10223, %v10722
      %v10828 = vadd.f32 %v10226, %v10724
      %v10829 = vadd.f32 %v10231, %v10726
      %v10830 = vadd.f32 %v10234, %v10728
      %v10831 = vadd.f32 %v10239, %v10730
      %v10832 = vadd.f32 %v10242, %v10732
      %v10833 = vadd.f32 %v10247, %v10734
      %v10834 = vadd.f32 %v10250, %v10736
      %v10835 = vadd.f32 %v10255, %v10738
      %v10836 = vadd.f32 %v10258, %v10740
      %v10837 = vadd.f32 %v10263, %v10742
      %v10838 = vadd.f32 %v10266, %v10744
      %v10839 = vadd.f32 %v10271, %v10746
      %v10840 = vadd.f32 %v10274, %v10748
      %v10841 = vadd.f32 %v10279, %v10750
      %v10842 = vadd.f32 %v10282, %v10752
      %v10843 = vadd.f32 %v10287, %v10754
      %v10844 = vadd.f32 %v10290, %v10756
      %v10845 = vadd.f32 %v10295, %v10758
      %v10846 = vadd.f32 %v10298, %v10760
      %v10847 = vadd.f32 %v10303, %v10762
      %v10848 = vadd.f32 %v10306, %v10764
      %v10849 = vadd.f32 %v10311, %v10766
      %v10850 = vadd.f32 %v10314, %v10768
      %v10851 = vadd.f32 %v10319, %v10770
      %v10852 = vadd.f32 %v10322, %v10772
      %v10853 = vadd.f32 %v10327, %v10774
      %v10854 = vadd.f32 %v10330, %v10776
      %v10855 = vadd.f32 %v10335, %v10778
      %v10856 = vadd.f32 %v10338, %v10780
      %v10857 = vadd.f32 %v10343, %v10782
      %v10858 = vadd.f32 %v10346, %v10784
      %v10859 = vadd.f32 %v10351, %v10786
      %v10860 = vadd.f32 %v10354, %v10788
      %v10861 = vsub.f32 %v10071, %v10789
      %v10862 = vsub.f32 %v10074, %v10790
      %v10863 = vsub.f32 %v10079, %v10791
      %v10864 = vsub.f32 %v10082, %v10792
      %v10865 = vsub.f32 %v10087, %v10793
      %v10866 = vsub.f32 %v10090, %v10794
      %v10867 = vsub.f32 %v10095, %v10795
      %v10868 = vsub.f32 %v10098, %v10796
      %v10869 = vsub.f32 %v10103, %v10797
      %v10870 = vsub.f32 %v10106, %v10798
      %v10871 = vsub.f32 %v10111, %v10799
      %v10872 = vsub.f32 %v10114, %v10800
      %v10873 = vsub.f32 %v10119, %v10801
      %v10874 = vsub.f32 %v10122, %v10802
      %v10875 = vsub.f32 %v10127, %v10803
      %v10876 = vsub.f32 %v10130, %v10804
      %v10877 = vsub.f32 %v10135, %v10805
      %v10878 = vsub.f32 %v10138, %v10806
      %v10879 = vsub.f32 %v10143, %v10807
      %v10880 = vsub.f32 %v10146, %v10808
      %v10881 = vsub.f32 %v10151, %v10809
      %v10882 = vsub.f32 %v10154, %v10810
      %v10883 = vsub.f32 %v10159, %v10811
      %v10884 = vsub.f32 %v10162, %v10812
      %v10885 = vsub.f32 %v10167, %v10813
      %v10886 = vsub.f32 %v10170, %v10814
      %v10887 = vsub.f32 %v10175, %v10815
      %v10888 = vsub.f32 %v10178, %v10816
      %v10889 = vsub.f32 %v10183, %v10817
      %v10890 = vsub.f32 %v10186, %v10818
      %v10891 = vsub.f32 %v10191, %v10819
      %v10892 = vsub.f32 %v10194, %v10820
      %v10893 = vsub.f32 %v10199, %v10821
      %v10894 = vsub.f32 %v10202, %v10822
      %v10895 = vsub.f32 %v10207, %v10823
      %v10896 = vsub.f32 %v10210, %v10824
      %v10897 = vsub.f32 %v10215, %v10825
      %v10898 = vsub.f32 %v10218, %v10826
      %v10899 = vsub.f32 %v10223, %v10827
      %v10900 = vsub.f32 %v10226, %v10828
      %v10901 = vsub.f32 %v10231, %v10829
      %v10902 = vsub.f32 %v10234, %v10830
      %v10903 = vsub.f32 %v10239, %v10831
      %v10904 = vsub.f32 %v10242, %v10832
      %v10905 = vsub.f32 %v10247, %v10833
      %v10906 = vsub.f32 %v10250, %v10834
      %v10907 = vsub.f32 %v10255, %v10835
      %v10908 = vsub.f32 %v10258, %v10836
      %v10909 = vsub.f32 %v10263, %v10837
      %v10910 = vsub.f32 %v10266, %v10838
      %v10911 = vsub.f32 %v10271, %v10839
      %v10912 = vsub.f32 %v10274, %v10840
      %v10913 = vsub.f32 %v10279, %v10841
      %v10914 = vsub.f32 %v10282, %v10842
      %v10915 = vsub.f32 %v10287, %v10843
      %v10916 = vsub.f32 %v10290, %v10844
      %v10917 = vsub.f32 %v10295, %v10845
      %v10918 = vsub.f32 %v10298, %v10846
      %v10919 = vsub.f32 %v10303, %v10847
      %v10920 = vsub.f32 %v10306, %v10848
      %v10921 = vsub.f32 %v10311, %v10849
      %v10922 = vsub.f32 %v10314, %v10850
      %v10923 = vsub.f32 %v10319, %v10851
      %v10924 = vsub.f32 %v10322, %v10852
      %v10925 = vsub.f32 %v10327, %v10853
      %v10926 = vsub.f32 %v10330, %v10854
      %v10927 = vsub.f32 %v10335, %v10855
      %v10928 = vsub.f32 %v10338, %v10856
      %v10929 = vsub.f32 %v10343, %v10857
      %v10930 = vsub.f32 %v10346, %v10858
      %v10931 = vsub.f32 %v10351, %v10859
      %v10932 = vsub.f32 %v10354, %v10860
      %s10933 = scalar_lea.vmem %s285, 576
      %10934 = vst.msk [vmem:[%s10933] sm:$0xff] %vm5585, %v10861
      %10935 = vst.msk [vmem:[%s10933 + $0x8] sm:$0xff] %vm5585, %v10862
      %10936 = vst.msk [vmem:[%s10933 + $0x10] sm:$0xff] %vm5585, %v10863
      %10937 = vst.msk [vmem:[%s10933 + $0x18] sm:$0xff] %vm5585, %v10864
      %10938 = vst.msk [vmem:[%s10933 + $0x20] sm:$0xff] %vm5585, %v10865
      %10939 = vst.msk [vmem:[%s10933 + $0x28] sm:$0xff] %vm5585, %v10866
      %10940 = vst.msk [vmem:[%s10933 + $0x30] sm:$0xff] %vm5585, %v10867
      %10941 = vst.msk [vmem:[%s10933 + $0x38] sm:$0xff] %vm5585, %v10868
      %10942 = vst.msk [vmem:[%s10933 + $0x40] sm:$0xff] %vm5585, %v10869
      %10943 = vst.msk [vmem:[%s10933 + $0x48] sm:$0xff] %vm5585, %v10870
      %10944 = vst.msk [vmem:[%s10933 + $0x50] sm:$0xff] %vm5585, %v10871
      %10945 = vst.msk [vmem:[%s10933 + $0x58] sm:$0xff] %vm5585, %v10872
      %10946 = vst.msk [vmem:[%s10933 + $0x60] sm:$0xff] %vm5585, %v10873
      %10947 = vst.msk [vmem:[%s10933 + $0x68] sm:$0xff] %vm5585, %v10874
      %10948 = vst.msk [vmem:[%s10933 + $0x70] sm:$0xff] %vm5585, %v10875
      %10949 = vst.msk [vmem:[%s10933 + $0x78] sm:$0xff] %vm5585, %v10876
      %10950 = vst.msk [vmem:[%s10933 + $0x80] sm:$0xff] %vm5585, %v10877
      %10951 = vst.msk [vmem:[%s10933 + $0x88] sm:$0xff] %vm5585, %v10878
      %10952 = vst.msk [vmem:[%s10933 + $0x90] sm:$0xff] %vm5585, %v10879
      %10953 = vst.msk [vmem:[%s10933 + $0x98] sm:$0xff] %vm5585, %v10880
      %10954 = vst.msk [vmem:[%s10933 + $0xa0] sm:$0xff] %vm5585, %v10881
      %10955 = vst.msk [vmem:[%s10933 + $0xa8] sm:$0xff] %vm5585, %v10882
      %10956 = vst.msk [vmem:[%s10933 + $0xb0] sm:$0xff] %vm5585, %v10883
      %10957 = vst.msk [vmem:[%s10933 + $0xb8] sm:$0xff] %vm5585, %v10884
      %10958 = vst.msk [vmem:[%s10933 + $0xc0] sm:$0xff] %vm5585, %v10885
      %10959 = vst.msk [vmem:[%s10933 + $0xc8] sm:$0xff] %vm5585, %v10886
      %10960 = vst.msk [vmem:[%s10933 + $0xd0] sm:$0xff] %vm5585, %v10887
      %10961 = vst.msk [vmem:[%s10933 + $0xd8] sm:$0xff] %vm5585, %v10888
      %10962 = vst.msk [vmem:[%s10933 + $0xe0] sm:$0xff] %vm5585, %v10889
      %10963 = vst.msk [vmem:[%s10933 + $0xe8] sm:$0xff] %vm5585, %v10890
      %10964 = vst.msk [vmem:[%s10933 + $0xf0] sm:$0xff] %vm5585, %v10891
      %10965 = vst.msk [vmem:[%s10933 + $0xf8] sm:$0xff] %vm5585, %v10892
      %10966 = vst.msk [vmem:[%s10933 + $0x100] sm:$0xff] %vm5585, %v10893
      %10967 = vst.msk [vmem:[%s10933 + $0x108] sm:$0xff] %vm5585, %v10894
      %10968 = vst.msk [vmem:[%s10933 + $0x110] sm:$0xff] %vm5585, %v10895
      %10969 = vst.msk [vmem:[%s10933 + $0x118] sm:$0xff] %vm5585, %v10896
      %10970 = vst.msk [vmem:[%s10933 + $0x120] sm:$0xff] %vm5585, %v10897
      %10971 = vst.msk [vmem:[%s10933 + $0x128] sm:$0xff] %vm5585, %v10898
      %10972 = vst.msk [vmem:[%s10933 + $0x130] sm:$0xff] %vm5585, %v10899
      %10973 = vst.msk [vmem:[%s10933 + $0x138] sm:$0xff] %vm5585, %v10900
      %10974 = vst.msk [vmem:[%s10933 + $0x140] sm:$0xff] %vm5585, %v10901
      %10975 = vst.msk [vmem:[%s10933 + $0x148] sm:$0xff] %vm5585, %v10902
      %10976 = vst.msk [vmem:[%s10933 + $0x150] sm:$0xff] %vm5585, %v10903
      %10977 = vst.msk [vmem:[%s10933 + $0x158] sm:$0xff] %vm5585, %v10904
      %10978 = vst.msk [vmem:[%s10933 + $0x160] sm:$0xff] %vm5585, %v10905
      %10979 = vst.msk [vmem:[%s10933 + $0x168] sm:$0xff] %vm5585, %v10906
      %10980 = vst.msk [vmem:[%s10933 + $0x170] sm:$0xff] %vm5585, %v10907
      %10981 = vst.msk [vmem:[%s10933 + $0x178] sm:$0xff] %vm5585, %v10908
      %10982 = vst.msk [vmem:[%s10933 + $0x180] sm:$0xff] %vm5585, %v10909
      %10983 = vst.msk [vmem:[%s10933 + $0x188] sm:$0xff] %vm5585, %v10910
      %10984 = vst.msk [vmem:[%s10933 + $0x190] sm:$0xff] %vm5585, %v10911
      %10985 = vst.msk [vmem:[%s10933 + $0x198] sm:$0xff] %vm5585, %v10912
      %10986 = vst.msk [vmem:[%s10933 + $0x1a0] sm:$0xff] %vm5585, %v10913
      %10987 = vst.msk [vmem:[%s10933 + $0x1a8] sm:$0xff] %vm5585, %v10914
      %10988 = vst.msk [vmem:[%s10933 + $0x1b0] sm:$0xff] %vm5585, %v10915
      %10989 = vst.msk [vmem:[%s10933 + $0x1b8] sm:$0xff] %vm5585, %v10916
      %10990 = vst.msk [vmem:[%s10933 + $0x1c0] sm:$0xff] %vm5585, %v10917
      %10991 = vst.msk [vmem:[%s10933 + $0x1c8] sm:$0xff] %vm5585, %v10918
      %10992 = vst.msk [vmem:[%s10933 + $0x1d0] sm:$0xff] %vm5585, %v10919
      %10993 = vst.msk [vmem:[%s10933 + $0x1d8] sm:$0xff] %vm5585, %v10920
      %10994 = vst.msk [vmem:[%s10933 + $0x1e0] sm:$0xff] %vm5585, %v10921
      %10995 = vst.msk [vmem:[%s10933 + $0x1e8] sm:$0xff] %vm5585, %v10922
      %10996 = vst.msk [vmem:[%s10933 + $0x1f0] sm:$0xff] %vm5585, %v10923
      %10997 = vst.msk [vmem:[%s10933 + $0x1f8] sm:$0xff] %vm5585, %v10924
      %10998 = vst.msk [vmem:[%s10933 + $0x200] sm:$0xff] %vm5585, %v10925
      %10999 = vst.msk [vmem:[%s10933 + $0x208] sm:$0xff] %vm5585, %v10926
      %11000 = vst.msk [vmem:[%s10933 + $0x210] sm:$0xff] %vm5585, %v10927
      %11001 = vst.msk [vmem:[%s10933 + $0x218] sm:$0xff] %vm5585, %v10928
      %11002 = vst.msk [vmem:[%s10933 + $0x220] sm:$0xff] %vm5585, %v10929
      %11003 = vst.msk [vmem:[%s10933 + $0x228] sm:$0xff] %vm5585, %v10930
      %11004 = vst.msk [vmem:[%s10933 + $0x230] sm:$0xff] %vm5585, %v10931
      %11005 = vst.msk [vmem:[%s10933 + $0x238] sm:$0xf] %vm5657, %v10932
      %s11006 = smul.u32 2, %s19
      %p11007 = scmp.lt.s32.totalorder %s11006, 3
      %s11008 = scalar_select %p11007, %s11006, 3
      %s11009 = smul.addr %s11008, 72
      %s11010 = smul.addr %s11009, 8
      %s11011 = scalar_lea.vmem %s6, %s11010
      // Predicated region
      $region45: #{tpu_custom_call.1} parent=43 // pred_check
        %p11012 = pneg %p173
      $region46: #{tpu_custom_call.1} parent=43 // pred_check_branch
        %11014 = sbr.rel (%p11012) target = $region48
      $region47: #{tpu_custom_call.1} parent=43 // pred_region
        %s11015 = smul.u32 2, %s19
      $region48: #{tpu_custom_call.1} parent=43 // pred_fallthru
        _
    $region44: #{tpu_custom_call.1} parent=5 // pred_fallthru
      _
    %p11016 = scmp.le.s32.totalorder 2, %s14
    // Predicated region
    $region49: #{tpu_custom_call.1} parent=5 // pred_check
      %p11017 = pneg %p11016
    $region50: #{tpu_custom_call.1} parent=5 // pred_check_branch
      %11019 = sbr.rel (%p11017) target = $region52
    $region51: #{tpu_custom_call.1} parent=5 // pred_region
      %s11020 = ssub.s32 %s14, 2
      // Predicated region
      $region53: #{tpu_custom_call.1} parent=51 // pred_check
        %p11021 = pneg %p179
      $region54: #{tpu_custom_call.1} parent=51 // pred_check_branch
        %11023 = sbr.rel (%p11021) target = $region56
      $region55: #{tpu_custom_call.1} parent=51 // pred_region
        %s11024 = smul.u32 2, %s20
        %p11025 = scmp.lt.s32.totalorder %s11024, 3
        %s11026 = scalar_select %p11025, %s11024, 3
        %s11027 = smul.addr %s11026, 72
        %s11028 = smul.addr %s11027, 8
        %s11029 = scalar_lea.vmem %s6, %s11028
      $region56: #{tpu_custom_call.1} parent=51 // pred_fallthru
        _
    $region52: #{tpu_custom_call.1} parent=5 // pred_fallthru
      _
  $region6: #{tpu_custom_call.1} parent=0 // loop_footer
    %s18 = sadd.s32 1, %s14
  $region7: #{tpu_custom_call.1} parent=0 // loop_footer_branch
    %13 = sbr.rel target = $region3
  $region8: #{tpu_custom_call.1} parent=0 // loop_exit
    _

</llo_original>
